<compile_context>
chip_gen: v7x
topology: tpu7x:2x2x1
jax: 0.10.0
libtpu: 0.0.40
codegen_flags: <defaults>
</compile_context>

<pallas_src>
import functools

import numpy as np
import jax
import jax.numpy as jnp
from jax.experimental import pallas as pl
from jax.experimental.pallas import tpu as pltpu

F32 = jnp.float32
BF16 = jnp.bfloat16
EPS = 1e-5          # nn.GroupNorm default
NUM_GROUPS = 4      # gate_norm groups


# ----------------------------- in-kernel helpers -----------------------------

def _gelu_tanh(v):
    # TODO(synk): nn.GELU() defaults to the erf form; tanh approximation is used
    # here (EUP-friendly), accepted tolerance ~1e-3 on the tail outputs.
    c = 0.7978845608028654  # sqrt(2/pi)
    return 0.5 * v * (1.0 + jnp.tanh(c * (v + 0.044715 * v * v * v)))


# --------------------- depthwise-conv rotation schedule ----------------------

def _conv_shift_buckets(Hp, Wp, k):
    """Group the k*k depthwise taps by their flattened-row rotation amount.

    Returns (shifts, buckets): `shifts` is a sorted tuple of static rotation
    amounts s (zr[p] must equal z[(p+s) % HW]); buckets[s] is a list of
    (tap_index, validity_mask[HW]) whose folded (mask * per-channel tap weight)
    coefficients are merged per s at init time.
    """
    HW = Hp * Wp
    pad = k // 2
    buckets = {}
    for i in range(k):
        for j in range(k):
            di, dj = i - pad, j - pad
            s = (di * Wp + dj) % HW
            mask = np.zeros((HW,), np.float32)
            for y in range(Hp):
                for x in range(Wp):
                    if 0 <= y + di < Hp and 0 <= x + dj < Wp:
                        mask[y * Wp + x] = 1.0
            if mask.any():
                buckets.setdefault(s, []).append((i * k + j, mask))
    shifts = tuple(sorted(buckets.keys()))
    return shifts, buckets


# ------------------------------- Pallas kernel -------------------------------

def _cell_step(x, h, c, mw_ref, dwb, cmw, cmb, ong, onb, idx, *, HW, C, shifts):
    """One SwinLSTM cell update on (HW, C) token values; returns (h_new, c_new).

    x may be None (decoder layer-0 input), matching the PyTorch module.
    cmw/cmb already carry the 0.5 pre-scale on the i/f/o gate columns so the
    whole (HW, 4C) gate pre-activation goes through a single tanh.
    """
    z = h if x is None else x + h

    # --- spatial_mixing: depthwise k x k 'same' conv as static sublane
    #     rotations (pltpu.roll -> XLU) with init-time folded coefficients,
    #     accumulated into 4 partial accumulators for ILP. ---
    n_acc = 4
    parts = [None] * n_acc
    for si, s in enumerate(shifts):
        # need zr[p] == z[(p + s) % HW]  ==  jnp.roll(z, -s)  ==  roll by HW-s.
        zr = z if s == 0 else pltpu.roll(z, shift=(HW - s) % HW, axis=0)
        term = zr * mw_ref[idx, si]
        k = si % n_acc
        parts[k] = term if parts[k] is None else parts[k] + term
    acc = None
    for p_ in parts:
        if p_ is not None:
            acc = p_ if acc is None else acc + p_
    acc = acc + dwb                                   # depthwise bias

    # --- gate_norm: GroupNorm(num_groups=4, affine=False); scalar group stats,
    #     normalize each static channel slice in place, one concat. ---
    Cg = C // NUM_GROUPS
    inv_n = 1.0 / float(HW * Cg)
    segs = []
    for g in range(NUM_GROUPS):
        seg = acc[:, g * Cg:(g + 1) * Cg]
        mu = jnp.sum(seg) * inv_n
        var = jnp.maximum(jnp.sum(seg * seg) * inv_n - mu * mu, 0.0)
        segs.append((seg - mu) * jax.lax.rsqrt(var + EPS))
    zn = jnp.concatenate(segs, axis=1)

    # --- channel_mixing + gates: one (HW, C) @ (C, 4C=128) matmul and ONE
    #     lane-dense tanh (sigmoid pre-scale folded into the weights). ---
    pre = jnp.dot(zn.astype(BF16), cmw, preferred_element_type=F32) + cmb
    t_all = jnp.tanh(pre)                             # (HW, 4C)
    t_i = t_all[:, 0 * C:1 * C]
    t_f = t_all[:, 1 * C:2 * C]
    t_o = t_all[:, 2 * C:3 * C]
    t_g = t_all[:, 3 * C:4 * C]
    # sigmoid(v) = 0.5*(tanh(v/2)+1); v/2 already folded into pre.
    c_new = 0.5 * ((t_f + 1.0) * c + (t_i + 1.0) * t_g)

    # --- output_norm: GroupNorm(num_groups=1, affine=True); fused scale/bias ---
    inv_nc = 1.0 / float(HW * C)
    mu = jnp.sum(c_new) * inv_nc
    var = jnp.maximum(jnp.sum(c_new * c_new) * inv_nc - mu * mu, 0.0)
    scale = ong * jax.lax.rsqrt(var + EPS)            # (1, C)
    bias = onb - mu * scale                           # (1, C)
    h_new = 0.5 * (t_o + 1.0) * jnp.tanh(c_new * scale + bias)
    return h_new, c_new


def fused_forward_kernel(xtok_ref, wlat_ref, blat_ref, mw_ref, dwb_ref,
                         cmw_ref, cmb_ref, ong_ref, onb_ref,
                         tw1_ref, tb1_ref, tw2_ref, tb2_ref, out_ref,
                         *, T, horizon, L, HW, C, shifts):
    """Whole forward pass for one batch element; grid = (B,) 'parallel'."""
    # to_latent: every encoder patch embedding in one (T*HW, PD) @ (PD, C) matmul.
    patches = (jnp.dot(xtok_ref[...].astype(BF16), wlat_ref[...],
                       preferred_element_type=F32) + blat_ref[...])  # (T*HW, C)

    def cell(x, h, c, phase, layer):
        idx = phase * L + layer
        return _cell_step(x, h, c, mw_ref, dwb_ref[idx], cmw_ref[idx],
                          cmb_ref[idx], ong_ref[idx], onb_ref[idx], idx,
                          HW=HW, C=C, shifts=shifts)

    hs = [jnp.zeros((HW, C), F32) for _ in range(L)]
    cs = [jnp.zeros((HW, C), F32) for _ in range(L)]

    # ---- encoder phase ----
    for t in range(T):
        z = patches[t * HW:(t + 1) * HW, :]
        for i in range(L):
            hs[i], cs[i] = cell(z, hs[i], cs[i], 0, i)
            z = z + hs[i]

    # ---- decoder phase (x = None for layer 0) ----
    z_dec = []
    for _t in range(horizon):
        z = None
        for i in range(L):
            hs[i], cs[i] = cell(z, hs[i], cs[i], 1, i)
            z = hs[i] if z is None else z + hs[i]
        z_dec.append(z)
    zcat = jnp.concatenate(z_dec, axis=0)                      # (horizon*HW, C)

    # ---- to_data: TailEnsemble fused (conv1 -> GELU -> folded conv2∘deconv) ----
    hdn = (jnp.dot(zcat.astype(BF16), tw1_ref[...],
                   preferred_element_type=F32) + tb1_ref[...])  # (hz*HW, nt*C)
    hdn = _gelu_tanh(hdn)
    out_ref[...] = (jnp.dot(hdn.astype(BF16), tw2_ref[...],
                            preferred_element_type=F32) + tb2_ref[...])


# ------------------------------- kernel wrapper -------------------------------

def fused_forward_pallas(xtok, params, *, T, horizon, L, HW, C, shifts):
    """xtok: (B, T*HW, PD) f32 patch tokens. Returns (B, horizon*HW, K2pad)."""
    B = xtok.shape[0]
    tp = params["tails"]
    K2p = tp["w2"].shape[1]

    kern = functools.partial(
        fused_forward_kernel, T=T, horizon=horizon, L=L, HW=HW, C=C,
        shifts=tuple(int(s) for s in shifts))

    def const_spec(a):
        zeros = (0,) * a.ndim

        def imap(b):
            return zeros
        return pl.BlockSpec(a.shape, imap)

    args = (xtok, params["wlat"], params["blat"], params["mw_all"],
            params["dwb_all"], params["cmw_all"], params["cmb_all"],
            params["ong_all"], params["onb_all"],
            tp["w1"], tp["b1"], tp["w2"], tp["b2"])

    in_specs = [pl.BlockSpec((None,) + tuple(xtok.shape[1:]),
                             lambda b: (b, 0, 0))]
    in_specs += [const_spec(a) for a in args[1:]]

    return pl.pallas_call(
        kern,
        grid=(B,),
        in_specs=in_specs,
        out_specs=pl.BlockSpec((None, horizon * HW, K2p), lambda b: (b, 0, 0)),
        out_shape=jax.ShapeDtypeStruct((B, horizon * HW, K2p), F32),
        compiler_params=pltpu.CompilerParams(
            dimension_semantics=("parallel",)),
    )(*args)


# ------------------------------ params & forward ------------------------------

def init_params(key, *, input_dim, num_channels, output_dim, patch_size,
                num_layers, num_tails, k_conv, Hp, Wp):
    C = num_channels
    ph, pw = patch_size
    Do = output_dim
    HW = Hp * Wp
    P = Do * ph * pw                    # TailEnsemble patch_dim with (1, ph, pw)
    PD = input_dim * ph * pw

    def rnd(k, shape, scale=0.1):
        return scale * jax.random.normal(k, shape, F32)

    keys = iter(jax.random.split(key, 64))
    params = {}

    # to_latent: Conv3d(input_dim, C, kernel=(1, ph, pw), stride=(1, ph, pw))
    w = rnd(next(keys), (C, input_dim, 1, ph, pw))
    b = rnd(next(keys), (C,))
    params["wlat"] = w.reshape(C, PD).T.astype(BF16)     # (Cin*ph*pw, C)
    params["blat"] = b.reshape(1, C)

    shifts, buckets = _conv_shift_buckets(Hp, Wp, k_conv)
    NS = len(shifts)

    def make_cell(k):
        ks = jax.random.split(k, 6)
        sm_w = rnd(ks[0], (C, 1, k_conv, k_conv))        # depthwise Conv2d weight
        sm_b = rnd(ks[1], (C,))
        cm_w = rnd(ks[2], (4 * C, C, 1, 1))              # 1x1 Conv2d (C -> 4C)
        cm_b = rnd(ks[3], (4 * C,))
        on_g = 1.0 + rnd(ks[4], (C,))                    # output GroupNorm affine
        on_b = rnd(ks[5], (C,))
        # Fold boundary masks and per-channel tap weights into one coefficient
        # tensor per rotation amount (taps sharing a flattened-row shift merge).
        w_tap = np.asarray(sm_w).reshape(C, k_conv * k_conv).T   # (k*k, C)
        mw = np.zeros((NS, HW, C), np.float32)
        for si, s in enumerate(shifts):
            for tap, mask in buckets[s]:
                mw[si] += mask[:, None] * w_tap[tap][None, :]
        # columns ordered out_channel = gate*C + c, matching separate_gates.
        cmw = np.asarray(cm_w).reshape(4 * C, C).T       # (C, 4C)
        cmb = np.asarray(cm_b).reshape(1, 4 * C)
        # Fold the 1/2 of sigmoid(v)=0.5*tanh(v/2)+0.5 into the i/f/o columns so
        # the in-kernel gate activation is one lane-dense tanh over (HW, 4C).
        gate_scale = np.concatenate([np.full((3 * C,), 0.5, np.float32),
                                     np.ones((C,), np.float32)])
        cmw = cmw * gate_scale[None, :]
        cmb = cmb * gate_scale[None, :]
        return {
            "mw": jnp.asarray(mw),                        # (NS, HW, C)
            "dwb": sm_b.reshape(1, C),
            "cmw": jnp.asarray(cmw).astype(BF16),         # (C, 4C)
            "cmb": jnp.asarray(cmb),
            "ong": on_g.reshape(1, C),
            "onb": on_b.reshape(1, C),
        }

    enc = [make_cell(next(keys)) for _ in range(num_layers)]
    dec = [make_cell(next(keys)) for _ in range(num_layers)]
    cells = enc + dec                                     # idx = phase*L + layer

    def stack(name):
        return jnp.stack([cl[name] for cl in cells])

    params["mw_all"] = stack("mw")        # (2L, NS, HW, C)
    params["dwb_all"] = stack("dwb")      # (2L, 1, C)
    params["cmw_all"] = stack("cmw")      # (2L, C, 4C) bf16
    params["cmb_all"] = stack("cmb")      # (2L, 1, 4C)
    params["ong_all"] = stack("ong")      # (2L, 1, C)
    params["onb_all"] = stack("onb")      # (2L, 1, C)

    # TailEnsemble: per tail Conv3d(C,C,1) -> GELU -> Conv3d(C,P,1) ->
    # grouped ConvTranspose3d(P, Do, (1,ph,pw), stride same, groups=Do).
    # conv2 and the deconv are linear back-to-back -> folded into one (C, P) map.
    eye = np.eye(Do, dtype=np.float32)
    w1_cols, b1_cols, w23_blocks, b23_cols = [], [], [], []
    for _ in range(num_tails):
        ks = jax.random.split(next(keys), 6)
        c1_w, c1_b = rnd(ks[0], (C, C, 1, 1, 1)), rnd(ks[1], (C,))
        c2_w, c2_b = rnd(ks[2], (P, C, 1, 1, 1)), rnd(ks[3], (P,))
        dt_w, dt_b = rnd(ks[4], (P, 1, 1, ph, pw)), rnd(ks[5], (Do,))
        W1 = np.asarray(c1_w).reshape(C, C).T                    # (C, C)
        W2 = np.asarray(c2_w).reshape(P, C).T                    # (C, P)
        wt = np.asarray(dt_w).reshape(Do, ph * pw, ph * pw)      # [grp, in-grp, dy*pw+dx]
        W3 = (wt[:, :, None, :] * eye[:, None, :, None]).reshape(P, P)  # block-diag
        b3 = np.repeat(np.asarray(dt_b), ph * pw).reshape(1, P)
        W23 = W2 @ W3
        b23 = np.asarray(c2_b).reshape(1, P) @ W3 + b3
        w1_cols.append(W1)
        b1_cols.append(np.asarray(c1_b).reshape(1, C))
        w23_blocks.append(W23)
        b23_cols.append(b23)

    nt = num_tails
    K2 = nt * P
    K2p = ((K2 + 127) // 128) * 128       # pad output lanes to a 128 multiple
    w2 = np.zeros((nt * C, K2p), np.float32)
    b2 = np.zeros((1, K2p), np.float32)
    for ti in range(nt):                  # block-diagonal over tails
        w2[ti * C:(ti + 1) * C, ti * P:(ti + 1) * P] = w23_blocks[ti]
        b2[:, ti * P:(ti + 1) * P] = b23_cols[ti]
    params["tails"] = {
        "w1": jnp.asarray(np.concatenate(w1_cols, axis=1)).astype(BF16),  # (C, nt*C)
        "b1": jnp.asarray(np.concatenate(b1_cols, axis=1)),               # (1, nt*C)
        "w2": jnp.asarray(w2).astype(BF16),                               # (nt*C, K2p)
        "b2": jnp.asarray(b2),                                            # (1, K2p)
    }
    return params


def encdec_swinlstm_forward(x, context, params, *, num_channels, patch_size,
                            num_layers, num_tails, output_dim, k_conv):
    # TODO(synk): FiLM conditioning path (num_conditions > 0) not exercised; the
    # module default num_conditions=-1 disables it, so `context` only sets horizon.
    B, Cin, T, H, W = x.shape
    horizon = context.shape[1] - T
    ph, pw = patch_size
    Hp, Wp = H // ph, W // pw
    HW = Hp * Wp
    C = num_channels
    Do = output_dim
    PD = Cin * ph * pw
    P = Do * ph * pw
    nt = num_tails

    # Static rotation schedule (pure geometry, evaluated at trace time).
    shifts, _ = _conv_shift_buckets(Hp, Wp, k_conv)

    # ---- to_latent tokens: (1, ph, pw) patches, channels-last, time-flattened.
    xr = x.reshape(B, Cin, T, Hp, ph, Wp, pw).transpose(0, 2, 3, 5, 1, 4, 6)
    xtok = xr.reshape(B, T * HW, PD)

    # ---- fused encoder + decoder recurrence + TailEnsemble (one pallas_call) --
    out = fused_forward_pallas(xtok, params, T=T, horizon=horizon,
                               L=num_layers, HW=HW, C=C, shifts=shifts)

    # ---- un-pad lanes, undo token layout -> (B, nt, Do, horizon, H, W) ----
    y = out.reshape(B, horizon, Hp, Wp, out.shape[-1])[..., :nt * P]
    y = y.reshape(B, horizon, Hp, Wp, nt, Do, ph, pw)
    y = y.transpose(0, 4, 5, 1, 2, 6, 3, 7)   # (B, nt, Do, t, Hp, dy, Wp, dx)
    x_pred = y.reshape(B, nt, Do, horizon, H, W)

    if num_tails == 2:   # mean / softplus(sigma) head (inactive for num_tails != 2)
        mean, sigma = jnp.split(x_pred, 2, axis=1)
        x_pred = jnp.concatenate([mean, jax.nn.softplus(sigma)], axis=1)
    return x_pred


# ------------------------------------ main ------------------------------------

if __name__ == "__main__":
    batch, input_dim, num_channels, output_dim = 2, 4, 32, 3
    patch_size = (4, 4)
    num_layers, num_tails, k_conv = 2, 4, 7
    history, horizon = 3, 2
    H = W = 16
    Hp, Wp = H // patch_size[0], W // patch_size[1]

    key = jax.random.PRNGKey(0)
    kx, kc, kp = jax.random.split(key, 3)
    x = jax.random.normal(kx, (batch, input_dim, history, H, W), F32)
    # context: (batch, history + horizon); only its length is used (FiLM disabled).
    context = jax.random.randint(kc, (batch, history + horizon), 0, 12)

    params = init_params(kp, input_dim=input_dim, num_channels=num_channels,
                         output_dim=output_dim, patch_size=patch_size,
                         num_layers=num_layers, num_tails=num_tails,
                         k_conv=k_conv, Hp=Hp, Wp=Wp)

    fwd = jax.jit(functools.partial(
        encdec_swinlstm_forward, num_channels=num_channels,
        patch_size=patch_size, num_layers=num_layers, num_tails=num_tails,
        output_dim=output_dim, k_conv=k_conv))

    out = fwd(x, context, params)
    jax.block_until_ready(out)
    assert out.shape == (batch, num_tails, output_dim, horizon, H, W), out.shape
    assert bool(jnp.all(jnp.isfinite(out)))
    print("KERNEL_OK")
</pallas_src>

<mosaic_0001>
module attributes {stable_mosaic.version = 11 : i64} {
  func.func @fused_forward_kernel(%arg0: i32, %arg1: memref<1x48x64xf32, #tpu.memory_space<vmem>>, %arg2: memref<64x32xbf16, #tpu.memory_space<vmem>>, %arg3: memref<1x32xf32, #tpu.memory_space<vmem>>, %arg4: memref<4x16x16x32xf32, #tpu.memory_space<vmem>>, %arg5: memref<4x1x32xf32, #tpu.memory_space<vmem>>, %arg6: memref<4x32x128xbf16, #tpu.memory_space<vmem>>, %arg7: memref<4x1x128xf32, #tpu.memory_space<vmem>>, %arg8: memref<4x1x32xf32, #tpu.memory_space<vmem>>, %arg9: memref<4x1x32xf32, #tpu.memory_space<vmem>>, %arg10: memref<32x128xbf16, #tpu.memory_space<vmem>>, %arg11: memref<1x128xf32, #tpu.memory_space<vmem>>, %arg12: memref<128x256xbf16, #tpu.memory_space<vmem>>, %arg13: memref<1x256xf32, #tpu.memory_space<vmem>>, %arg14: memref<1x32x256xf32, #tpu.memory_space<vmem>>) attributes {dimension_semantics = [#tpu.dimension_semantics<parallel>], iteration_bounds = array<i64: 2>, scalar_prefetch = 0 : i64, scratch_operands = 0 : i64, tpu.core_type = #tpu.core_type<tc>, window_params = [{transform_indices = @transform_0, window_bounds = array<i64: 1, 48, 64>}, {pipeline_mode = #tpu.pipeline_mode<synchronous>, transform_indices = @transform_1, window_bounds = array<i64: 64, 32>}, {pipeline_mode = #tpu.pipeline_mode<synchronous>, transform_indices = @transform_2, window_bounds = array<i64: 1, 32>}, {pipeline_mode = #tpu.pipeline_mode<synchronous>, transform_indices = @transform_3, window_bounds = array<i64: 4, 16, 16, 32>}, {pipeline_mode = #tpu.pipeline_mode<synchronous>, transform_indices = @transform_4, window_bounds = array<i64: 4, 1, 32>}, {pipeline_mode = #tpu.pipeline_mode<synchronous>, transform_indices = @transform_5, window_bounds = array<i64: 4, 32, 128>}, {pipeline_mode = #tpu.pipeline_mode<synchronous>, transform_indices = @transform_6, window_bounds = array<i64: 4, 1, 128>}, {pipeline_mode = #tpu.pipeline_mode<synchronous>, transform_indices = @transform_7, window_bounds = array<i64: 4, 1, 32>}, {pipeline_mode = #tpu.pipeline_mode<synchronous>, transform_indices = @transform_8, window_bounds = array<i64: 4, 1, 32>}, {pipeline_mode = #tpu.pipeline_mode<synchronous>, transform_indices = @transform_9, window_bounds = array<i64: 32, 128>}, {pipeline_mode = #tpu.pipeline_mode<synchronous>, transform_indices = @transform_10, window_bounds = array<i64: 1, 128>}, {pipeline_mode = #tpu.pipeline_mode<synchronous>, transform_indices = @transform_11, window_bounds = array<i64: 128, 256>}, {pipeline_mode = #tpu.pipeline_mode<synchronous>, transform_indices = @transform_12, window_bounds = array<i64: 1, 256>}, {transform_indices = @transform_13, window_bounds = array<i64: 1, 32, 256>}]} {
    %c0 = arith.constant 0 : index
    %c0_0 = arith.constant 0 : index
    %c0_1 = arith.constant 0 : index
    %0 = vector.load %arg1[%c0, %c0_0, %c0_1] : memref<1x48x64xf32, #tpu.memory_space<vmem>>, vector<1x48x64xf32>
    %1 = vector.shape_cast %0 : vector<1x48x64xf32> to vector<48x64xf32>
    %2 = arith.truncf %1 : vector<48x64xf32> to vector<48x64xbf16>
    %c0_2 = arith.constant 0 : index
    %c0_3 = arith.constant 0 : index
    %3 = vector.load %arg2[%c0_2, %c0_3] : memref<64x32xbf16, #tpu.memory_space<vmem>>, vector<64x32xbf16>
    %cst = arith.constant dense<0.000000e+00> : vector<48x32xf32>
    %4 = tpu.matmul %2, %3, %cst {dimension_numbers = #tpu.dot_dimension_numbers<[1], [0], [0], [1], [0, 0, 1, 1], [], []>} : vector<48x64xbf16>, vector<64x32xbf16>, vector<48x32xf32> -> vector<48x32xf32>
    %c0_4 = arith.constant 0 : index
    %c0_5 = arith.constant 0 : index
    %5 = vector.load %arg3[%c0_4, %c0_5] : memref<1x32xf32, #tpu.memory_space<vmem>>, vector<1x32xf32>
    %6 = vector.broadcast %5 : vector<1x32xf32> to vector<48x32xf32>
    %7 = arith.addf %4, %6 : vector<48x32xf32>
    %cst_6 = arith.constant 0.000000e+00 : f32
    %8 = vector.broadcast %cst_6 : f32 to vector<16x32xf32>
    %cst_7 = arith.constant 0.000000e+00 : f32
    %9 = vector.broadcast %cst_7 : f32 to vector<16x32xf32>
    %cst_8 = arith.constant 0.000000e+00 : f32
    %10 = vector.broadcast %cst_8 : f32 to vector<16x32xf32>
    %cst_9 = arith.constant 0.000000e+00 : f32
    %11 = vector.broadcast %cst_9 : f32 to vector<16x32xf32>
    %12 = vector.extract_strided_slice %7 {offsets = [0, 0], sizes = [16, 32], strides = [1, 1]} : vector<48x32xf32> to vector<16x32xf32>
    %c0_10 = arith.constant 0 : index
    %c0_11 = arith.constant 0 : index
    %c0_12 = arith.constant 0 : index
    %13 = vector.load %arg5[%c0_10, %c0_11, %c0_12] : memref<4x1x32xf32, #tpu.memory_space<vmem>>, vector<1x1x32xf32>
    %14 = vector.shape_cast %13 : vector<1x1x32xf32> to vector<1x32xf32>
    %c0_13 = arith.constant 0 : index
    %c0_14 = arith.constant 0 : index
    %c0_15 = arith.constant 0 : index
    %15 = vector.load %arg6[%c0_13, %c0_14, %c0_15] : memref<4x32x128xbf16, #tpu.memory_space<vmem>>, vector<1x32x128xbf16>
    %16 = vector.shape_cast %15 : vector<1x32x128xbf16> to vector<32x128xbf16>
    %c0_16 = arith.constant 0 : index
    %c0_17 = arith.constant 0 : index
    %c0_18 = arith.constant 0 : index
    %17 = vector.load %arg7[%c0_16, %c0_17, %c0_18] : memref<4x1x128xf32, #tpu.memory_space<vmem>>, vector<1x1x128xf32>
    %18 = vector.shape_cast %17 : vector<1x1x128xf32> to vector<1x128xf32>
    %c0_19 = arith.constant 0 : index
    %c0_20 = arith.constant 0 : index
    %c0_21 = arith.constant 0 : index
    %19 = vector.load %arg8[%c0_19, %c0_20, %c0_21] : memref<4x1x32xf32, #tpu.memory_space<vmem>>, vector<1x1x32xf32>
    %20 = vector.shape_cast %19 : vector<1x1x32xf32> to vector<1x32xf32>
    %c0_22 = arith.constant 0 : index
    %c0_23 = arith.constant 0 : index
    %c0_24 = arith.constant 0 : index
    %21 = vector.load %arg9[%c0_22, %c0_23, %c0_24] : memref<4x1x32xf32, #tpu.memory_space<vmem>>, vector<1x1x32xf32>
    %22 = vector.shape_cast %21 : vector<1x1x32xf32> to vector<1x32xf32>
    %23 = arith.addf %12, %8 : vector<16x32xf32>
    %c0_25 = arith.constant 0 : index
    %c0_26 = arith.constant 0 : index
    %c0_27 = arith.constant 0 : index
    %c0_28 = arith.constant 0 : index
    %24 = vector.load %arg4[%c0_25, %c0_26, %c0_27, %c0_28] : memref<4x16x16x32xf32, #tpu.memory_space<vmem>>, vector<1x1x16x32xf32>
    %25 = vector.shape_cast %24 : vector<1x1x16x32xf32> to vector<16x32xf32>
    %26 = arith.mulf %23, %25 : vector<16x32xf32>
    %c15_i32 = arith.constant 15 : i32
    %27 = tpu.dynamic_rotate %23 by %c15_i32 dim 0 : vector<16x32xf32>, i32 -> vector<16x32xf32>
    %c0_29 = arith.constant 0 : index
    %c1 = arith.constant 1 : index
    %c0_30 = arith.constant 0 : index
    %c0_31 = arith.constant 0 : index
    %28 = vector.load %arg4[%c0_29, %c1, %c0_30, %c0_31] : memref<4x16x16x32xf32, #tpu.memory_space<vmem>>, vector<1x1x16x32xf32>
    %29 = vector.shape_cast %28 : vector<1x1x16x32xf32> to vector<16x32xf32>
    %30 = arith.mulf %27, %29 : vector<16x32xf32>
    %c14_i32 = arith.constant 14 : i32
    %31 = tpu.dynamic_rotate %23 by %c14_i32 dim 0 : vector<16x32xf32>, i32 -> vector<16x32xf32>
    %c0_32 = arith.constant 0 : index
    %c2 = arith.constant 2 : index
    %c0_33 = arith.constant 0 : index
    %c0_34 = arith.constant 0 : index
    %32 = vector.load %arg4[%c0_32, %c2, %c0_33, %c0_34] : memref<4x16x16x32xf32, #tpu.memory_space<vmem>>, vector<1x1x16x32xf32>
    %33 = vector.shape_cast %32 : vector<1x1x16x32xf32> to vector<16x32xf32>
    %34 = arith.mulf %31, %33 : vector<16x32xf32>
    %c13_i32 = arith.constant 13 : i32
    %35 = tpu.dynamic_rotate %23 by %c13_i32 dim 0 : vector<16x32xf32>, i32 -> vector<16x32xf32>
    %c0_35 = arith.constant 0 : index
    %c3 = arith.constant 3 : index
    %c0_36 = arith.constant 0 : index
    %c0_37 = arith.constant 0 : index
    %36 = vector.load %arg4[%c0_35, %c3, %c0_36, %c0_37] : memref<4x16x16x32xf32, #tpu.memory_space<vmem>>, vector<1x1x16x32xf32>
    %37 = vector.shape_cast %36 : vector<1x1x16x32xf32> to vector<16x32xf32>
    %38 = arith.mulf %35, %37 : vector<16x32xf32>
    %c12_i32 = arith.constant 12 : i32
    %39 = tpu.dynamic_rotate %23 by %c12_i32 dim 0 : vector<16x32xf32>, i32 -> vector<16x32xf32>
    %c0_38 = arith.constant 0 : index
    %c4 = arith.constant 4 : index
    %c0_39 = arith.constant 0 : index
    %c0_40 = arith.constant 0 : index
    %40 = vector.load %arg4[%c0_38, %c4, %c0_39, %c0_40] : memref<4x16x16x32xf32, #tpu.memory_space<vmem>>, vector<1x1x16x32xf32>
    %41 = vector.shape_cast %40 : vector<1x1x16x32xf32> to vector<16x32xf32>
    %42 = arith.mulf %39, %41 : vector<16x32xf32>
    %43 = arith.addf %26, %42 : vector<16x32xf32>
    %c11_i32 = arith.constant 11 : i32
    %44 = tpu.dynamic_rotate %23 by %c11_i32 dim 0 : vector<16x32xf32>, i32 -> vector<16x32xf32>
    %c0_41 = arith.constant 0 : index
    %c5 = arith.constant 5 : index
    %c0_42 = arith.constant 0 : index
    %c0_43 = arith.constant 0 : index
    %45 = vector.load %arg4[%c0_41, %c5, %c0_42, %c0_43] : memref<4x16x16x32xf32, #tpu.memory_space<vmem>>, vector<1x1x16x32xf32>
    %46 = vector.shape_cast %45 : vector<1x1x16x32xf32> to vector<16x32xf32>
    %47 = arith.mulf %44, %46 : vector<16x32xf32>
    %48 = arith.addf %30, %47 : vector<16x32xf32>
    %c10_i32 = arith.constant 10 : i32
    %49 = tpu.dynamic_rotate %23 by %c10_i32 dim 0 : vector<16x32xf32>, i32 -> vector<16x32xf32>
    %c0_44 = arith.constant 0 : index
    %c6 = arith.constant 6 : index
    %c0_45 = arith.constant 0 : index
    %c0_46 = arith.constant 0 : index
    %50 = vector.load %arg4[%c0_44, %c6, %c0_45, %c0_46] : memref<4x16x16x32xf32, #tpu.memory_space<vmem>>, vector<1x1x16x32xf32>
    %51 = vector.shape_cast %50 : vector<1x1x16x32xf32> to vector<16x32xf32>
    %52 = arith.mulf %49, %51 : vector<16x32xf32>
    %53 = arith.addf %34, %52 : vector<16x32xf32>
    %c9_i32 = arith.constant 9 : i32
    %54 = tpu.dynamic_rotate %23 by %c9_i32 dim 0 : vector<16x32xf32>, i32 -> vector<16x32xf32>
    %c0_47 = arith.constant 0 : index
    %c7 = arith.constant 7 : index
    %c0_48 = arith.constant 0 : index
    %c0_49 = arith.constant 0 : index
    %55 = vector.load %arg4[%c0_47, %c7, %c0_48, %c0_49] : memref<4x16x16x32xf32, #tpu.memory_space<vmem>>, vector<1x1x16x32xf32>
    %56 = vector.shape_cast %55 : vector<1x1x16x32xf32> to vector<16x32xf32>
    %57 = arith.mulf %54, %56 : vector<16x32xf32>
    %58 = arith.addf %38, %57 : vector<16x32xf32>
    %c8_i32 = arith.constant 8 : i32
    %59 = tpu.dynamic_rotate %23 by %c8_i32 dim 0 : vector<16x32xf32>, i32 -> vector<16x32xf32>
    %c0_50 = arith.constant 0 : index
    %c8 = arith.constant 8 : index
    %c0_51 = arith.constant 0 : index
    %c0_52 = arith.constant 0 : index
    %60 = vector.load %arg4[%c0_50, %c8, %c0_51, %c0_52] : memref<4x16x16x32xf32, #tpu.memory_space<vmem>>, vector<1x1x16x32xf32>
    %61 = vector.shape_cast %60 : vector<1x1x16x32xf32> to vector<16x32xf32>
    %62 = arith.mulf %59, %61 : vector<16x32xf32>
    %63 = arith.addf %43, %62 : vector<16x32xf32>
    %c7_i32 = arith.constant 7 : i32
    %64 = tpu.dynamic_rotate %23 by %c7_i32 dim 0 : vector<16x32xf32>, i32 -> vector<16x32xf32>
    %c0_53 = arith.constant 0 : index
    %c9 = arith.constant 9 : index
    %c0_54 = arith.constant 0 : index
    %c0_55 = arith.constant 0 : index
    %65 = vector.load %arg4[%c0_53, %c9, %c0_54, %c0_55] : memref<4x16x16x32xf32, #tpu.memory_space<vmem>>, vector<1x1x16x32xf32>
    %66 = vector.shape_cast %65 : vector<1x1x16x32xf32> to vector<16x32xf32>
    %67 = arith.mulf %64, %66 : vector<16x32xf32>
    %68 = arith.addf %48, %67 : vector<16x32xf32>
    %c6_i32 = arith.constant 6 : i32
    %69 = tpu.dynamic_rotate %23 by %c6_i32 dim 0 : vector<16x32xf32>, i32 -> vector<16x32xf32>
    %c0_56 = arith.constant 0 : index
    %c10 = arith.constant 10 : index
    %c0_57 = arith.constant 0 : index
    %c0_58 = arith.constant 0 : index
    %70 = vector.load %arg4[%c0_56, %c10, %c0_57, %c0_58] : memref<4x16x16x32xf32, #tpu.memory_space<vmem>>, vector<1x1x16x32xf32>
    %71 = vector.shape_cast %70 : vector<1x1x16x32xf32> to vector<16x32xf32>
    %72 = arith.mulf %69, %71 : vector<16x32xf32>
    %73 = arith.addf %53, %72 : vector<16x32xf32>
    %c5_i32 = arith.constant 5 : i32
    %74 = tpu.dynamic_rotate %23 by %c5_i32 dim 0 : vector<16x32xf32>, i32 -> vector<16x32xf32>
    %c0_59 = arith.constant 0 : index
    %c11 = arith.constant 11 : index
    %c0_60 = arith.constant 0 : index
    %c0_61 = arith.constant 0 : index
    %75 = vector.load %arg4[%c0_59, %c11, %c0_60, %c0_61] : memref<4x16x16x32xf32, #tpu.memory_space<vmem>>, vector<1x1x16x32xf32>
    %76 = vector.shape_cast %75 : vector<1x1x16x32xf32> to vector<16x32xf32>
    %77 = arith.mulf %74, %76 : vector<16x32xf32>
    %78 = arith.addf %58, %77 : vector<16x32xf32>
    %c4_i32 = arith.constant 4 : i32
    %79 = tpu.dynamic_rotate %23 by %c4_i32 dim 0 : vector<16x32xf32>, i32 -> vector<16x32xf32>
    %c0_62 = arith.constant 0 : index
    %c12 = arith.constant 12 : index
    %c0_63 = arith.constant 0 : index
    %c0_64 = arith.constant 0 : index
    %80 = vector.load %arg4[%c0_62, %c12, %c0_63, %c0_64] : memref<4x16x16x32xf32, #tpu.memory_space<vmem>>, vector<1x1x16x32xf32>
    %81 = vector.shape_cast %80 : vector<1x1x16x32xf32> to vector<16x32xf32>
    %82 = arith.mulf %79, %81 : vector<16x32xf32>
    %83 = arith.addf %63, %82 : vector<16x32xf32>
    %c3_i32 = arith.constant 3 : i32
    %84 = tpu.dynamic_rotate %23 by %c3_i32 dim 0 : vector<16x32xf32>, i32 -> vector<16x32xf32>
    %c0_65 = arith.constant 0 : index
    %c13 = arith.constant 13 : index
    %c0_66 = arith.constant 0 : index
    %c0_67 = arith.constant 0 : index
    %85 = vector.load %arg4[%c0_65, %c13, %c0_66, %c0_67] : memref<4x16x16x32xf32, #tpu.memory_space<vmem>>, vector<1x1x16x32xf32>
    %86 = vector.shape_cast %85 : vector<1x1x16x32xf32> to vector<16x32xf32>
    %87 = arith.mulf %84, %86 : vector<16x32xf32>
    %88 = arith.addf %68, %87 : vector<16x32xf32>
    %c2_i32 = arith.constant 2 : i32
    %89 = tpu.dynamic_rotate %23 by %c2_i32 dim 0 : vector<16x32xf32>, i32 -> vector<16x32xf32>
    %c0_68 = arith.constant 0 : index
    %c14 = arith.constant 14 : index
    %c0_69 = arith.constant 0 : index
    %c0_70 = arith.constant 0 : index
    %90 = vector.load %arg4[%c0_68, %c14, %c0_69, %c0_70] : memref<4x16x16x32xf32, #tpu.memory_space<vmem>>, vector<1x1x16x32xf32>
    %91 = vector.shape_cast %90 : vector<1x1x16x32xf32> to vector<16x32xf32>
    %92 = arith.mulf %89, %91 : vector<16x32xf32>
    %93 = arith.addf %73, %92 : vector<16x32xf32>
    %c1_i32 = arith.constant 1 : i32
    %94 = tpu.dynamic_rotate %23 by %c1_i32 dim 0 : vector<16x32xf32>, i32 -> vector<16x32xf32>
    %c0_71 = arith.constant 0 : index
    %c15 = arith.constant 15 : index
    %c0_72 = arith.constant 0 : index
    %c0_73 = arith.constant 0 : index
    %95 = vector.load %arg4[%c0_71, %c15, %c0_72, %c0_73] : memref<4x16x16x32xf32, #tpu.memory_space<vmem>>, vector<1x1x16x32xf32>
    %96 = vector.shape_cast %95 : vector<1x1x16x32xf32> to vector<16x32xf32>
    %97 = arith.mulf %94, %96 : vector<16x32xf32>
    %98 = arith.addf %78, %97 : vector<16x32xf32>
    %99 = arith.addf %83, %88 : vector<16x32xf32>
    %100 = arith.addf %99, %93 : vector<16x32xf32>
    %101 = arith.addf %100, %98 : vector<16x32xf32>
    %102 = vector.broadcast %14 : vector<1x32xf32> to vector<16x32xf32>
    %103 = arith.addf %101, %102 : vector<16x32xf32>
    %104 = vector.extract_strided_slice %103 {offsets = [0, 0], sizes = [16, 8], strides = [1, 1]} : vector<16x32xf32> to vector<16x8xf32>
    %105 = vector.shape_cast %104 : vector<16x8xf32> to vector<1x16x8xf32>
    %cst_74 = arith.constant dense<0.000000e+00> : vector<1xf32>
    %106 = vector.multi_reduction <add>, %105, %cst_74 [1, 2] : vector<1x16x8xf32> to vector<1xf32>
    %107 = vector.shape_cast %106 : vector<1xf32> to vector<1x1x1xf32>
    %108 = vector.extract %107[0, 0, 0] : f32 from vector<1x1x1xf32>
    %cst_75 = arith.constant 7.812500e-03 : f32
    %109 = arith.mulf %108, %cst_75 : f32
    %110 = arith.mulf %104, %104 : vector<16x8xf32>
    %111 = vector.shape_cast %110 : vector<16x8xf32> to vector<1x16x8xf32>
    %cst_76 = arith.constant dense<0.000000e+00> : vector<1xf32>
    %112 = vector.multi_reduction <add>, %111, %cst_76 [1, 2] : vector<1x16x8xf32> to vector<1xf32>
    %113 = vector.shape_cast %112 : vector<1xf32> to vector<1x1x1xf32>
    %114 = vector.extract %113[0, 0, 0] : f32 from vector<1x1x1xf32>
    %cst_77 = arith.constant 7.812500e-03 : f32
    %115 = arith.mulf %114, %cst_77 : f32
    %116 = arith.mulf %109, %109 : f32
    %117 = arith.subf %115, %116 : f32
    %cst_78 = arith.constant 0.000000e+00 : f32
    %118 = arith.maximumf %117, %cst_78 : f32
    %119 = vector.broadcast %109 : f32 to vector<16x8xf32>
    %120 = arith.subf %104, %119 : vector<16x8xf32>
    %cst_79 = arith.constant 9.99999974E-6 : f32
    %121 = arith.addf %118, %cst_79 : f32
    %122 = math.rsqrt %121 : f32
    %123 = vector.broadcast %122 : f32 to vector<16x8xf32>
    %124 = arith.mulf %120, %123 : vector<16x8xf32>
    %125 = vector.extract_strided_slice %103 {offsets = [0, 8], sizes = [16, 8], strides = [1, 1]} : vector<16x32xf32> to vector<16x8xf32>
    %126 = vector.shape_cast %125 : vector<16x8xf32> to vector<1x16x8xf32>
    %cst_80 = arith.constant dense<0.000000e+00> : vector<1xf32>
    %127 = vector.multi_reduction <add>, %126, %cst_80 [1, 2] : vector<1x16x8xf32> to vector<1xf32>
    %128 = vector.shape_cast %127 : vector<1xf32> to vector<1x1x1xf32>
    %129 = vector.extract %128[0, 0, 0] : f32 from vector<1x1x1xf32>
    %cst_81 = arith.constant 7.812500e-03 : f32
    %130 = arith.mulf %129, %cst_81 : f32
    %131 = arith.mulf %125, %125 : vector<16x8xf32>
    %132 = vector.shape_cast %131 : vector<16x8xf32> to vector<1x16x8xf32>
    %cst_82 = arith.constant dense<0.000000e+00> : vector<1xf32>
    %133 = vector.multi_reduction <add>, %132, %cst_82 [1, 2] : vector<1x16x8xf32> to vector<1xf32>
    %134 = vector.shape_cast %133 : vector<1xf32> to vector<1x1x1xf32>
    %135 = vector.extract %134[0, 0, 0] : f32 from vector<1x1x1xf32>
    %cst_83 = arith.constant 7.812500e-03 : f32
    %136 = arith.mulf %135, %cst_83 : f32
    %137 = arith.mulf %130, %130 : f32
    %138 = arith.subf %136, %137 : f32
    %cst_84 = arith.constant 0.000000e+00 : f32
    %139 = arith.maximumf %138, %cst_84 : f32
    %140 = vector.broadcast %130 : f32 to vector<16x8xf32>
    %141 = arith.subf %125, %140 : vector<16x8xf32>
    %cst_85 = arith.constant 9.99999974E-6 : f32
    %142 = arith.addf %139, %cst_85 : f32
    %143 = math.rsqrt %142 : f32
    %144 = vector.broadcast %143 : f32 to vector<16x8xf32>
    %145 = arith.mulf %141, %144 : vector<16x8xf32>
    %146 = vector.extract_strided_slice %103 {offsets = [0, 16], sizes = [16, 8], strides = [1, 1]} : vector<16x32xf32> to vector<16x8xf32>
    %147 = vector.shape_cast %146 : vector<16x8xf32> to vector<1x16x8xf32>
    %cst_86 = arith.constant dense<0.000000e+00> : vector<1xf32>
    %148 = vector.multi_reduction <add>, %147, %cst_86 [1, 2] : vector<1x16x8xf32> to vector<1xf32>
    %149 = vector.shape_cast %148 : vector<1xf32> to vector<1x1x1xf32>
    %150 = vector.extract %149[0, 0, 0] : f32 from vector<1x1x1xf32>
    %cst_87 = arith.constant 7.812500e-03 : f32
    %151 = arith.mulf %150, %cst_87 : f32
    %152 = arith.mulf %146, %146 : vector<16x8xf32>
    %153 = vector.shape_cast %152 : vector<16x8xf32> to vector<1x16x8xf32>
    %cst_88 = arith.constant dense<0.000000e+00> : vector<1xf32>
    %154 = vector.multi_reduction <add>, %153, %cst_88 [1, 2] : vector<1x16x8xf32> to vector<1xf32>
    %155 = vector.shape_cast %154 : vector<1xf32> to vector<1x1x1xf32>
    %156 = vector.extract %155[0, 0, 0] : f32 from vector<1x1x1xf32>
    %cst_89 = arith.constant 7.812500e-03 : f32
    %157 = arith.mulf %156, %cst_89 : f32
    %158 = arith.mulf %151, %151 : f32
    %159 = arith.subf %157, %158 : f32
    %cst_90 = arith.constant 0.000000e+00 : f32
    %160 = arith.maximumf %159, %cst_90 : f32
    %161 = vector.broadcast %151 : f32 to vector<16x8xf32>
    %162 = arith.subf %146, %161 : vector<16x8xf32>
    %cst_91 = arith.constant 9.99999974E-6 : f32
    %163 = arith.addf %160, %cst_91 : f32
    %164 = math.rsqrt %163 : f32
    %165 = vector.broadcast %164 : f32 to vector<16x8xf32>
    %166 = arith.mulf %162, %165 : vector<16x8xf32>
    %167 = vector.extract_strided_slice %103 {offsets = [0, 24], sizes = [16, 8], strides = [1, 1]} : vector<16x32xf32> to vector<16x8xf32>
    %168 = vector.shape_cast %167 : vector<16x8xf32> to vector<1x16x8xf32>
    %cst_92 = arith.constant dense<0.000000e+00> : vector<1xf32>
    %169 = vector.multi_reduction <add>, %168, %cst_92 [1, 2] : vector<1x16x8xf32> to vector<1xf32>
    %170 = vector.shape_cast %169 : vector<1xf32> to vector<1x1x1xf32>
    %171 = vector.extract %170[0, 0, 0] : f32 from vector<1x1x1xf32>
    %cst_93 = arith.constant 7.812500e-03 : f32
    %172 = arith.mulf %171, %cst_93 : f32
    %173 = arith.mulf %167, %167 : vector<16x8xf32>
    %174 = vector.shape_cast %173 : vector<16x8xf32> to vector<1x16x8xf32>
    %cst_94 = arith.constant dense<0.000000e+00> : vector<1xf32>
    %175 = vector.multi_reduction <add>, %174, %cst_94 [1, 2] : vector<1x16x8xf32> to vector<1xf32>
    %176 = vector.shape_cast %175 : vector<1xf32> to vector<1x1x1xf32>
    %177 = vector.extract %176[0, 0, 0] : f32 from vector<1x1x1xf32>
    %cst_95 = arith.constant 7.812500e-03 : f32
    %178 = arith.mulf %177, %cst_95 : f32
    %179 = arith.mulf %172, %172 : f32
    %180 = arith.subf %178, %179 : f32
    %cst_96 = arith.constant 0.000000e+00 : f32
    %181 = arith.maximumf %180, %cst_96 : f32
    %182 = vector.broadcast %172 : f32 to vector<16x8xf32>
    %183 = arith.subf %167, %182 : vector<16x8xf32>
    %cst_97 = arith.constant 9.99999974E-6 : f32
    %184 = arith.addf %181, %cst_97 : f32
    %185 = math.rsqrt %184 : f32
    %186 = vector.broadcast %185 : f32 to vector<16x8xf32>
    %187 = arith.mulf %183, %186 : vector<16x8xf32>
    %188 = tpu.concatenate %124, %145, %166, %187 in 1 : vector<16x8xf32>, vector<16x8xf32>, vector<16x8xf32>, vector<16x8xf32> -> vector<16x32xf32>
    %189 = arith.truncf %188 : vector<16x32xf32> to vector<16x32xbf16>
    %cst_98 = arith.constant dense<0.000000e+00> : vector<16x128xf32>
    %190 = tpu.matmul %189, %16, %cst_98 {dimension_numbers = #tpu.dot_dimension_numbers<[1], [0], [0], [1], [0, 0, 1, 1], [], []>} : vector<16x32xbf16>, vector<32x128xbf16>, vector<16x128xf32> -> vector<16x128xf32>
    %191 = vector.broadcast %18 : vector<1x128xf32> to vector<16x128xf32>
    %192 = arith.addf %190, %191 : vector<16x128xf32>
    %193 = math.tanh %192 : vector<16x128xf32>
    %194 = vector.extract_strided_slice %193 {offsets = [0, 0], sizes = [16, 32], strides = [1, 1]} : vector<16x128xf32> to vector<16x32xf32>
    %195 = vector.extract_strided_slice %193 {offsets = [0, 32], sizes = [16, 32], strides = [1, 1]} : vector<16x128xf32> to vector<16x32xf32>
    %196 = vector.extract_strided_slice %193 {offsets = [0, 64], sizes = [16, 32], strides = [1, 1]} : vector<16x128xf32> to vector<16x32xf32>
    %197 = vector.extract_strided_slice %193 {offsets = [0, 96], sizes = [16, 32], strides = [1, 1]} : vector<16x128xf32> to vector<16x32xf32>
    %cst_99 = arith.constant 1.000000e+00 : f32
    %198 = vector.broadcast %cst_99 : f32 to vector<16x32xf32>
    %199 = arith.addf %195, %198 : vector<16x32xf32>
    %200 = arith.mulf %199, %10 : vector<16x32xf32>
    %cst_100 = arith.constant 1.000000e+00 : f32
    %201 = vector.broadcast %cst_100 : f32 to vector<16x32xf32>
    %202 = arith.addf %194, %201 : vector<16x32xf32>
    %203 = arith.mulf %202, %197 : vector<16x32xf32>
    %204 = arith.addf %200, %203 : vector<16x32xf32>
    %cst_101 = arith.constant 5.000000e-01 : f32
    %205 = vector.broadcast %cst_101 : f32 to vector<16x32xf32>
    %206 = arith.mulf %205, %204 : vector<16x32xf32>
    %207 = vector.shape_cast %206 : vector<16x32xf32> to vector<1x16x32xf32>
    %cst_102 = arith.constant dense<0.000000e+00> : vector<1xf32>
    %208 = vector.multi_reduction <add>, %207, %cst_102 [1, 2] : vector<1x16x32xf32> to vector<1xf32>
    %209 = vector.shape_cast %208 : vector<1xf32> to vector<1x1x1xf32>
    %210 = vector.extract %209[0, 0, 0] : f32 from vector<1x1x1xf32>
    %cst_103 = arith.constant 0.001953125 : f32
    %211 = arith.mulf %210, %cst_103 : f32
    %212 = arith.mulf %206, %206 : vector<16x32xf32>
    %213 = vector.shape_cast %212 : vector<16x32xf32> to vector<1x16x32xf32>
    %cst_104 = arith.constant dense<0.000000e+00> : vector<1xf32>
    %214 = vector.multi_reduction <add>, %213, %cst_104 [1, 2] : vector<1x16x32xf32> to vector<1xf32>
    %215 = vector.shape_cast %214 : vector<1xf32> to vector<1x1x1xf32>
    %216 = vector.extract %215[0, 0, 0] : f32 from vector<1x1x1xf32>
    %cst_105 = arith.constant 0.001953125 : f32
    %217 = arith.mulf %216, %cst_105 : f32
    %218 = arith.mulf %211, %211 : f32
    %219 = arith.subf %217, %218 : f32
    %cst_106 = arith.constant 0.000000e+00 : f32
    %220 = arith.maximumf %219, %cst_106 : f32
    %cst_107 = arith.constant 9.99999974E-6 : f32
    %221 = arith.addf %220, %cst_107 : f32
    %222 = math.rsqrt %221 : f32
    %223 = vector.broadcast %222 : f32 to vector<1x32xf32>
    %224 = arith.mulf %20, %223 : vector<1x32xf32>
    %225 = vector.broadcast %211 : f32 to vector<1x32xf32>
    %226 = arith.mulf %225, %224 : vector<1x32xf32>
    %227 = arith.subf %22, %226 : vector<1x32xf32>
    %cst_108 = arith.constant 1.000000e+00 : f32
    %228 = vector.broadcast %cst_108 : f32 to vector<16x32xf32>
    %229 = arith.addf %196, %228 : vector<16x32xf32>
    %cst_109 = arith.constant 5.000000e-01 : f32
    %230 = vector.broadcast %cst_109 : f32 to vector<16x32xf32>
    %231 = arith.mulf %230, %229 : vector<16x32xf32>
    %232 = vector.broadcast %224 : vector<1x32xf32> to vector<16x32xf32>
    %233 = arith.mulf %206, %232 : vector<16x32xf32>
    %234 = vector.broadcast %227 : vector<1x32xf32> to vector<16x32xf32>
    %235 = arith.addf %233, %234 : vector<16x32xf32>
    %236 = math.tanh %235 : vector<16x32xf32>
    %237 = arith.mulf %231, %236 : vector<16x32xf32>
    %238 = arith.addf %12, %237 : vector<16x32xf32>
    %c1_110 = arith.constant 1 : index
    %c0_111 = arith.constant 0 : index
    %c0_112 = arith.constant 0 : index
    %239 = vector.load %arg5[%c1_110, %c0_111, %c0_112] : memref<4x1x32xf32, #tpu.memory_space<vmem>>, vector<1x1x32xf32>
    %240 = vector.shape_cast %239 : vector<1x1x32xf32> to vector<1x32xf32>
    %c1_113 = arith.constant 1 : index
    %c0_114 = arith.constant 0 : index
    %c0_115 = arith.constant 0 : index
    %241 = vector.load %arg6[%c1_113, %c0_114, %c0_115] : memref<4x32x128xbf16, #tpu.memory_space<vmem>>, vector<1x32x128xbf16>
    %242 = vector.shape_cast %241 : vector<1x32x128xbf16> to vector<32x128xbf16>
    %c1_116 = arith.constant 1 : index
    %c0_117 = arith.constant 0 : index
    %c0_118 = arith.constant 0 : index
    %243 = vector.load %arg7[%c1_116, %c0_117, %c0_118] : memref<4x1x128xf32, #tpu.memory_space<vmem>>, vector<1x1x128xf32>
    %244 = vector.shape_cast %243 : vector<1x1x128xf32> to vector<1x128xf32>
    %c1_119 = arith.constant 1 : index
    %c0_120 = arith.constant 0 : index
    %c0_121 = arith.constant 0 : index
    %245 = vector.load %arg8[%c1_119, %c0_120, %c0_121] : memref<4x1x32xf32, #tpu.memory_space<vmem>>, vector<1x1x32xf32>
    %246 = vector.shape_cast %245 : vector<1x1x32xf32> to vector<1x32xf32>
    %c1_122 = arith.constant 1 : index
    %c0_123 = arith.constant 0 : index
    %c0_124 = arith.constant 0 : index
    %247 = vector.load %arg9[%c1_122, %c0_123, %c0_124] : memref<4x1x32xf32, #tpu.memory_space<vmem>>, vector<1x1x32xf32>
    %248 = vector.shape_cast %247 : vector<1x1x32xf32> to vector<1x32xf32>
    %249 = arith.addf %238, %9 : vector<16x32xf32>
    %c1_125 = arith.constant 1 : index
    %c0_126 = arith.constant 0 : index
    %c0_127 = arith.constant 0 : index
    %c0_128 = arith.constant 0 : index
    %250 = vector.load %arg4[%c1_125, %c0_126, %c0_127, %c0_128] : memref<4x16x16x32xf32, #tpu.memory_space<vmem>>, vector<1x1x16x32xf32>
    %251 = vector.shape_cast %250 : vector<1x1x16x32xf32> to vector<16x32xf32>
    %252 = arith.mulf %249, %251 : vector<16x32xf32>
    %c15_i32_129 = arith.constant 15 : i32
    %253 = tpu.dynamic_rotate %249 by %c15_i32_129 dim 0 : vector<16x32xf32>, i32 -> vector<16x32xf32>
    %c1_130 = arith.constant 1 : index
    %c1_131 = arith.constant 1 : index
    %c0_132 = arith.constant 0 : index
    %c0_133 = arith.constant 0 : index
    %254 = vector.load %arg4[%c1_130, %c1_131, %c0_132, %c0_133] : memref<4x16x16x32xf32, #tpu.memory_space<vmem>>, vector<1x1x16x32xf32>
    %255 = vector.shape_cast %254 : vector<1x1x16x32xf32> to vector<16x32xf32>
    %256 = arith.mulf %253, %255 : vector<16x32xf32>
    %c14_i32_134 = arith.constant 14 : i32
    %257 = tpu.dynamic_rotate %249 by %c14_i32_134 dim 0 : vector<16x32xf32>, i32 -> vector<16x32xf32>
    %c1_135 = arith.constant 1 : index
    %c2_136 = arith.constant 2 : index
    %c0_137 = arith.constant 0 : index
    %c0_138 = arith.constant 0 : index
    %258 = vector.load %arg4[%c1_135, %c2_136, %c0_137, %c0_138] : memref<4x16x16x32xf32, #tpu.memory_space<vmem>>, vector<1x1x16x32xf32>
    %259 = vector.shape_cast %258 : vector<1x1x16x32xf32> to vector<16x32xf32>
    %260 = arith.mulf %257, %259 : vector<16x32xf32>
    %c13_i32_139 = arith.constant 13 : i32
    %261 = tpu.dynamic_rotate %249 by %c13_i32_139 dim 0 : vector<16x32xf32>, i32 -> vector<16x32xf32>
    %c1_140 = arith.constant 1 : index
    %c3_141 = arith.constant 3 : index
    %c0_142 = arith.constant 0 : index
    %c0_143 = arith.constant 0 : index
    %262 = vector.load %arg4[%c1_140, %c3_141, %c0_142, %c0_143] : memref<4x16x16x32xf32, #tpu.memory_space<vmem>>, vector<1x1x16x32xf32>
    %263 = vector.shape_cast %262 : vector<1x1x16x32xf32> to vector<16x32xf32>
    %264 = arith.mulf %261, %263 : vector<16x32xf32>
    %c12_i32_144 = arith.constant 12 : i32
    %265 = tpu.dynamic_rotate %249 by %c12_i32_144 dim 0 : vector<16x32xf32>, i32 -> vector<16x32xf32>
    %c1_145 = arith.constant 1 : index
    %c4_146 = arith.constant 4 : index
    %c0_147 = arith.constant 0 : index
    %c0_148 = arith.constant 0 : index
    %266 = vector.load %arg4[%c1_145, %c4_146, %c0_147, %c0_148] : memref<4x16x16x32xf32, #tpu.memory_space<vmem>>, vector<1x1x16x32xf32>
    %267 = vector.shape_cast %266 : vector<1x1x16x32xf32> to vector<16x32xf32>
    %268 = arith.mulf %265, %267 : vector<16x32xf32>
    %269 = arith.addf %252, %268 : vector<16x32xf32>
    %c11_i32_149 = arith.constant 11 : i32
    %270 = tpu.dynamic_rotate %249 by %c11_i32_149 dim 0 : vector<16x32xf32>, i32 -> vector<16x32xf32>
    %c1_150 = arith.constant 1 : index
    %c5_151 = arith.constant 5 : index
    %c0_152 = arith.constant 0 : index
    %c0_153 = arith.constant 0 : index
    %271 = vector.load %arg4[%c1_150, %c5_151, %c0_152, %c0_153] : memref<4x16x16x32xf32, #tpu.memory_space<vmem>>, vector<1x1x16x32xf32>
    %272 = vector.shape_cast %271 : vector<1x1x16x32xf32> to vector<16x32xf32>
    %273 = arith.mulf %270, %272 : vector<16x32xf32>
    %274 = arith.addf %256, %273 : vector<16x32xf32>
    %c10_i32_154 = arith.constant 10 : i32
    %275 = tpu.dynamic_rotate %249 by %c10_i32_154 dim 0 : vector<16x32xf32>, i32 -> vector<16x32xf32>
    %c1_155 = arith.constant 1 : index
    %c6_156 = arith.constant 6 : index
    %c0_157 = arith.constant 0 : index
    %c0_158 = arith.constant 0 : index
    %276 = vector.load %arg4[%c1_155, %c6_156, %c0_157, %c0_158] : memref<4x16x16x32xf32, #tpu.memory_space<vmem>>, vector<1x1x16x32xf32>
    %277 = vector.shape_cast %276 : vector<1x1x16x32xf32> to vector<16x32xf32>
    %278 = arith.mulf %275, %277 : vector<16x32xf32>
    %279 = arith.addf %260, %278 : vector<16x32xf32>
    %c9_i32_159 = arith.constant 9 : i32
    %280 = tpu.dynamic_rotate %249 by %c9_i32_159 dim 0 : vector<16x32xf32>, i32 -> vector<16x32xf32>
    %c1_160 = arith.constant 1 : index
    %c7_161 = arith.constant 7 : index
    %c0_162 = arith.constant 0 : index
    %c0_163 = arith.constant 0 : index
    %281 = vector.load %arg4[%c1_160, %c7_161, %c0_162, %c0_163] : memref<4x16x16x32xf32, #tpu.memory_space<vmem>>, vector<1x1x16x32xf32>
    %282 = vector.shape_cast %281 : vector<1x1x16x32xf32> to vector<16x32xf32>
    %283 = arith.mulf %280, %282 : vector<16x32xf32>
    %284 = arith.addf %264, %283 : vector<16x32xf32>
    %c8_i32_164 = arith.constant 8 : i32
    %285 = tpu.dynamic_rotate %249 by %c8_i32_164 dim 0 : vector<16x32xf32>, i32 -> vector<16x32xf32>
    %c1_165 = arith.constant 1 : index
    %c8_166 = arith.constant 8 : index
    %c0_167 = arith.constant 0 : index
    %c0_168 = arith.constant 0 : index
    %286 = vector.load %arg4[%c1_165, %c8_166, %c0_167, %c0_168] : memref<4x16x16x32xf32, #tpu.memory_space<vmem>>, vector<1x1x16x32xf32>
    %287 = vector.shape_cast %286 : vector<1x1x16x32xf32> to vector<16x32xf32>
    %288 = arith.mulf %285, %287 : vector<16x32xf32>
    %289 = arith.addf %269, %288 : vector<16x32xf32>
    %c7_i32_169 = arith.constant 7 : i32
    %290 = tpu.dynamic_rotate %249 by %c7_i32_169 dim 0 : vector<16x32xf32>, i32 -> vector<16x32xf32>
    %c1_170 = arith.constant 1 : index
    %c9_171 = arith.constant 9 : index
    %c0_172 = arith.constant 0 : index
    %c0_173 = arith.constant 0 : index
    %291 = vector.load %arg4[%c1_170, %c9_171, %c0_172, %c0_173] : memref<4x16x16x32xf32, #tpu.memory_space<vmem>>, vector<1x1x16x32xf32>
    %292 = vector.shape_cast %291 : vector<1x1x16x32xf32> to vector<16x32xf32>
    %293 = arith.mulf %290, %292 : vector<16x32xf32>
    %294 = arith.addf %274, %293 : vector<16x32xf32>
    %c6_i32_174 = arith.constant 6 : i32
    %295 = tpu.dynamic_rotate %249 by %c6_i32_174 dim 0 : vector<16x32xf32>, i32 -> vector<16x32xf32>
    %c1_175 = arith.constant 1 : index
    %c10_176 = arith.constant 10 : index
    %c0_177 = arith.constant 0 : index
    %c0_178 = arith.constant 0 : index
    %296 = vector.load %arg4[%c1_175, %c10_176, %c0_177, %c0_178] : memref<4x16x16x32xf32, #tpu.memory_space<vmem>>, vector<1x1x16x32xf32>
    %297 = vector.shape_cast %296 : vector<1x1x16x32xf32> to vector<16x32xf32>
    %298 = arith.mulf %295, %297 : vector<16x32xf32>
    %299 = arith.addf %279, %298 : vector<16x32xf32>
    %c5_i32_179 = arith.constant 5 : i32
    %300 = tpu.dynamic_rotate %249 by %c5_i32_179 dim 0 : vector<16x32xf32>, i32 -> vector<16x32xf32>
    %c1_180 = arith.constant 1 : index
    %c11_181 = arith.constant 11 : index
    %c0_182 = arith.constant 0 : index
    %c0_183 = arith.constant 0 : index
    %301 = vector.load %arg4[%c1_180, %c11_181, %c0_182, %c0_183] : memref<4x16x16x32xf32, #tpu.memory_space<vmem>>, vector<1x1x16x32xf32>
    %302 = vector.shape_cast %301 : vector<1x1x16x32xf32> to vector<16x32xf32>
    %303 = arith.mulf %300, %302 : vector<16x32xf32>
    %304 = arith.addf %284, %303 : vector<16x32xf32>
    %c4_i32_184 = arith.constant 4 : i32
    %305 = tpu.dynamic_rotate %249 by %c4_i32_184 dim 0 : vector<16x32xf32>, i32 -> vector<16x32xf32>
    %c1_185 = arith.constant 1 : index
    %c12_186 = arith.constant 12 : index
    %c0_187 = arith.constant 0 : index
    %c0_188 = arith.constant 0 : index
    %306 = vector.load %arg4[%c1_185, %c12_186, %c0_187, %c0_188] : memref<4x16x16x32xf32, #tpu.memory_space<vmem>>, vector<1x1x16x32xf32>
    %307 = vector.shape_cast %306 : vector<1x1x16x32xf32> to vector<16x32xf32>
    %308 = arith.mulf %305, %307 : vector<16x32xf32>
    %309 = arith.addf %289, %308 : vector<16x32xf32>
    %c3_i32_189 = arith.constant 3 : i32
    %310 = tpu.dynamic_rotate %249 by %c3_i32_189 dim 0 : vector<16x32xf32>, i32 -> vector<16x32xf32>
    %c1_190 = arith.constant 1 : index
    %c13_191 = arith.constant 13 : index
    %c0_192 = arith.constant 0 : index
    %c0_193 = arith.constant 0 : index
    %311 = vector.load %arg4[%c1_190, %c13_191, %c0_192, %c0_193] : memref<4x16x16x32xf32, #tpu.memory_space<vmem>>, vector<1x1x16x32xf32>
    %312 = vector.shape_cast %311 : vector<1x1x16x32xf32> to vector<16x32xf32>
    %313 = arith.mulf %310, %312 : vector<16x32xf32>
    %314 = arith.addf %294, %313 : vector<16x32xf32>
    %c2_i32_194 = arith.constant 2 : i32
    %315 = tpu.dynamic_rotate %249 by %c2_i32_194 dim 0 : vector<16x32xf32>, i32 -> vector<16x32xf32>
    %c1_195 = arith.constant 1 : index
    %c14_196 = arith.constant 14 : index
    %c0_197 = arith.constant 0 : index
    %c0_198 = arith.constant 0 : index
    %316 = vector.load %arg4[%c1_195, %c14_196, %c0_197, %c0_198] : memref<4x16x16x32xf32, #tpu.memory_space<vmem>>, vector<1x1x16x32xf32>
    %317 = vector.shape_cast %316 : vector<1x1x16x32xf32> to vector<16x32xf32>
    %318 = arith.mulf %315, %317 : vector<16x32xf32>
    %319 = arith.addf %299, %318 : vector<16x32xf32>
    %c1_i32_199 = arith.constant 1 : i32
    %320 = tpu.dynamic_rotate %249 by %c1_i32_199 dim 0 : vector<16x32xf32>, i32 -> vector<16x32xf32>
    %c1_200 = arith.constant 1 : index
    %c15_201 = arith.constant 15 : index
    %c0_202 = arith.constant 0 : index
    %c0_203 = arith.constant 0 : index
    %321 = vector.load %arg4[%c1_200, %c15_201, %c0_202, %c0_203] : memref<4x16x16x32xf32, #tpu.memory_space<vmem>>, vector<1x1x16x32xf32>
    %322 = vector.shape_cast %321 : vector<1x1x16x32xf32> to vector<16x32xf32>
    %323 = arith.mulf %320, %322 : vector<16x32xf32>
    %324 = arith.addf %304, %323 : vector<16x32xf32>
    %325 = arith.addf %309, %314 : vector<16x32xf32>
    %326 = arith.addf %325, %319 : vector<16x32xf32>
    %327 = arith.addf %326, %324 : vector<16x32xf32>
    %328 = vector.broadcast %240 : vector<1x32xf32> to vector<16x32xf32>
    %329 = arith.addf %327, %328 : vector<16x32xf32>
    %330 = vector.extract_strided_slice %329 {offsets = [0, 0], sizes = [16, 8], strides = [1, 1]} : vector<16x32xf32> to vector<16x8xf32>
    %331 = vector.shape_cast %330 : vector<16x8xf32> to vector<1x16x8xf32>
    %cst_204 = arith.constant dense<0.000000e+00> : vector<1xf32>
    %332 = vector.multi_reduction <add>, %331, %cst_204 [1, 2] : vector<1x16x8xf32> to vector<1xf32>
    %333 = vector.shape_cast %332 : vector<1xf32> to vector<1x1x1xf32>
    %334 = vector.extract %333[0, 0, 0] : f32 from vector<1x1x1xf32>
    %cst_205 = arith.constant 7.812500e-03 : f32
    %335 = arith.mulf %334, %cst_205 : f32
    %336 = arith.mulf %330, %330 : vector<16x8xf32>
    %337 = vector.shape_cast %336 : vector<16x8xf32> to vector<1x16x8xf32>
    %cst_206 = arith.constant dense<0.000000e+00> : vector<1xf32>
    %338 = vector.multi_reduction <add>, %337, %cst_206 [1, 2] : vector<1x16x8xf32> to vector<1xf32>
    %339 = vector.shape_cast %338 : vector<1xf32> to vector<1x1x1xf32>
    %340 = vector.extract %339[0, 0, 0] : f32 from vector<1x1x1xf32>
    %cst_207 = arith.constant 7.812500e-03 : f32
    %341 = arith.mulf %340, %cst_207 : f32
    %342 = arith.mulf %335, %335 : f32
    %343 = arith.subf %341, %342 : f32
    %cst_208 = arith.constant 0.000000e+00 : f32
    %344 = arith.maximumf %343, %cst_208 : f32
    %345 = vector.broadcast %335 : f32 to vector<16x8xf32>
    %346 = arith.subf %330, %345 : vector<16x8xf32>
    %cst_209 = arith.constant 9.99999974E-6 : f32
    %347 = arith.addf %344, %cst_209 : f32
    %348 = math.rsqrt %347 : f32
    %349 = vector.broadcast %348 : f32 to vector<16x8xf32>
    %350 = arith.mulf %346, %349 : vector<16x8xf32>
    %351 = vector.extract_strided_slice %329 {offsets = [0, 8], sizes = [16, 8], strides = [1, 1]} : vector<16x32xf32> to vector<16x8xf32>
    %352 = vector.shape_cast %351 : vector<16x8xf32> to vector<1x16x8xf32>
    %cst_210 = arith.constant dense<0.000000e+00> : vector<1xf32>
    %353 = vector.multi_reduction <add>, %352, %cst_210 [1, 2] : vector<1x16x8xf32> to vector<1xf32>
    %354 = vector.shape_cast %353 : vector<1xf32> to vector<1x1x1xf32>
    %355 = vector.extract %354[0, 0, 0] : f32 from vector<1x1x1xf32>
    %cst_211 = arith.constant 7.812500e-03 : f32
    %356 = arith.mulf %355, %cst_211 : f32
    %357 = arith.mulf %351, %351 : vector<16x8xf32>
    %358 = vector.shape_cast %357 : vector<16x8xf32> to vector<1x16x8xf32>
    %cst_212 = arith.constant dense<0.000000e+00> : vector<1xf32>
    %359 = vector.multi_reduction <add>, %358, %cst_212 [1, 2] : vector<1x16x8xf32> to vector<1xf32>
    %360 = vector.shape_cast %359 : vector<1xf32> to vector<1x1x1xf32>
    %361 = vector.extract %360[0, 0, 0] : f32 from vector<1x1x1xf32>
    %cst_213 = arith.constant 7.812500e-03 : f32
    %362 = arith.mulf %361, %cst_213 : f32
    %363 = arith.mulf %356, %356 : f32
    %364 = arith.subf %362, %363 : f32
    %cst_214 = arith.constant 0.000000e+00 : f32
    %365 = arith.maximumf %364, %cst_214 : f32
    %366 = vector.broadcast %356 : f32 to vector<16x8xf32>
    %367 = arith.subf %351, %366 : vector<16x8xf32>
    %cst_215 = arith.constant 9.99999974E-6 : f32
    %368 = arith.addf %365, %cst_215 : f32
    %369 = math.rsqrt %368 : f32
    %370 = vector.broadcast %369 : f32 to vector<16x8xf32>
    %371 = arith.mulf %367, %370 : vector<16x8xf32>
    %372 = vector.extract_strided_slice %329 {offsets = [0, 16], sizes = [16, 8], strides = [1, 1]} : vector<16x32xf32> to vector<16x8xf32>
    %373 = vector.shape_cast %372 : vector<16x8xf32> to vector<1x16x8xf32>
    %cst_216 = arith.constant dense<0.000000e+00> : vector<1xf32>
    %374 = vector.multi_reduction <add>, %373, %cst_216 [1, 2] : vector<1x16x8xf32> to vector<1xf32>
    %375 = vector.shape_cast %374 : vector<1xf32> to vector<1x1x1xf32>
    %376 = vector.extract %375[0, 0, 0] : f32 from vector<1x1x1xf32>
    %cst_217 = arith.constant 7.812500e-03 : f32
    %377 = arith.mulf %376, %cst_217 : f32
    %378 = arith.mulf %372, %372 : vector<16x8xf32>
    %379 = vector.shape_cast %378 : vector<16x8xf32> to vector<1x16x8xf32>
    %cst_218 = arith.constant dense<0.000000e+00> : vector<1xf32>
    %380 = vector.multi_reduction <add>, %379, %cst_218 [1, 2] : vector<1x16x8xf32> to vector<1xf32>
    %381 = vector.shape_cast %380 : vector<1xf32> to vector<1x1x1xf32>
    %382 = vector.extract %381[0, 0, 0] : f32 from vector<1x1x1xf32>
    %cst_219 = arith.constant 7.812500e-03 : f32
    %383 = arith.mulf %382, %cst_219 : f32
    %384 = arith.mulf %377, %377 : f32
    %385 = arith.subf %383, %384 : f32
    %cst_220 = arith.constant 0.000000e+00 : f32
    %386 = arith.maximumf %385, %cst_220 : f32
    %387 = vector.broadcast %377 : f32 to vector<16x8xf32>
    %388 = arith.subf %372, %387 : vector<16x8xf32>
    %cst_221 = arith.constant 9.99999974E-6 : f32
    %389 = arith.addf %386, %cst_221 : f32
    %390 = math.rsqrt %389 : f32
    %391 = vector.broadcast %390 : f32 to vector<16x8xf32>
    %392 = arith.mulf %388, %391 : vector<16x8xf32>
    %393 = vector.extract_strided_slice %329 {offsets = [0, 24], sizes = [16, 8], strides = [1, 1]} : vector<16x32xf32> to vector<16x8xf32>
    %394 = vector.shape_cast %393 : vector<16x8xf32> to vector<1x16x8xf32>
    %cst_222 = arith.constant dense<0.000000e+00> : vector<1xf32>
    %395 = vector.multi_reduction <add>, %394, %cst_222 [1, 2] : vector<1x16x8xf32> to vector<1xf32>
    %396 = vector.shape_cast %395 : vector<1xf32> to vector<1x1x1xf32>
    %397 = vector.extract %396[0, 0, 0] : f32 from vector<1x1x1xf32>
    %cst_223 = arith.constant 7.812500e-03 : f32
    %398 = arith.mulf %397, %cst_223 : f32
    %399 = arith.mulf %393, %393 : vector<16x8xf32>
    %400 = vector.shape_cast %399 : vector<16x8xf32> to vector<1x16x8xf32>
    %cst_224 = arith.constant dense<0.000000e+00> : vector<1xf32>
    %401 = vector.multi_reduction <add>, %400, %cst_224 [1, 2] : vector<1x16x8xf32> to vector<1xf32>
    %402 = vector.shape_cast %401 : vector<1xf32> to vector<1x1x1xf32>
    %403 = vector.extract %402[0, 0, 0] : f32 from vector<1x1x1xf32>
    %cst_225 = arith.constant 7.812500e-03 : f32
    %404 = arith.mulf %403, %cst_225 : f32
    %405 = arith.mulf %398, %398 : f32
    %406 = arith.subf %404, %405 : f32
    %cst_226 = arith.constant 0.000000e+00 : f32
    %407 = arith.maximumf %406, %cst_226 : f32
    %408 = vector.broadcast %398 : f32 to vector<16x8xf32>
    %409 = arith.subf %393, %408 : vector<16x8xf32>
    %cst_227 = arith.constant 9.99999974E-6 : f32
    %410 = arith.addf %407, %cst_227 : f32
    %411 = math.rsqrt %410 : f32
    %412 = vector.broadcast %411 : f32 to vector<16x8xf32>
    %413 = arith.mulf %409, %412 : vector<16x8xf32>
    %414 = tpu.concatenate %350, %371, %392, %413 in 1 : vector<16x8xf32>, vector<16x8xf32>, vector<16x8xf32>, vector<16x8xf32> -> vector<16x32xf32>
    %415 = arith.truncf %414 : vector<16x32xf32> to vector<16x32xbf16>
    %cst_228 = arith.constant dense<0.000000e+00> : vector<16x128xf32>
    %416 = tpu.matmul %415, %242, %cst_228 {dimension_numbers = #tpu.dot_dimension_numbers<[1], [0], [0], [1], [0, 0, 1, 1], [], []>} : vector<16x32xbf16>, vector<32x128xbf16>, vector<16x128xf32> -> vector<16x128xf32>
    %417 = vector.broadcast %244 : vector<1x128xf32> to vector<16x128xf32>
    %418 = arith.addf %416, %417 : vector<16x128xf32>
    %419 = math.tanh %418 : vector<16x128xf32>
    %420 = vector.extract_strided_slice %419 {offsets = [0, 0], sizes = [16, 32], strides = [1, 1]} : vector<16x128xf32> to vector<16x32xf32>
    %421 = vector.extract_strided_slice %419 {offsets = [0, 32], sizes = [16, 32], strides = [1, 1]} : vector<16x128xf32> to vector<16x32xf32>
    %422 = vector.extract_strided_slice %419 {offsets = [0, 64], sizes = [16, 32], strides = [1, 1]} : vector<16x128xf32> to vector<16x32xf32>
    %423 = vector.extract_strided_slice %419 {offsets = [0, 96], sizes = [16, 32], strides = [1, 1]} : vector<16x128xf32> to vector<16x32xf32>
    %cst_229 = arith.constant 1.000000e+00 : f32
    %424 = vector.broadcast %cst_229 : f32 to vector<16x32xf32>
    %425 = arith.addf %421, %424 : vector<16x32xf32>
    %426 = arith.mulf %425, %11 : vector<16x32xf32>
    %cst_230 = arith.constant 1.000000e+00 : f32
    %427 = vector.broadcast %cst_230 : f32 to vector<16x32xf32>
    %428 = arith.addf %420, %427 : vector<16x32xf32>
    %429 = arith.mulf %428, %423 : vector<16x32xf32>
    %430 = arith.addf %426, %429 : vector<16x32xf32>
    %cst_231 = arith.constant 5.000000e-01 : f32
    %431 = vector.broadcast %cst_231 : f32 to vector<16x32xf32>
    %432 = arith.mulf %431, %430 : vector<16x32xf32>
    %433 = vector.shape_cast %432 : vector<16x32xf32> to vector<1x16x32xf32>
    %cst_232 = arith.constant dense<0.000000e+00> : vector<1xf32>
    %434 = vector.multi_reduction <add>, %433, %cst_232 [1, 2] : vector<1x16x32xf32> to vector<1xf32>
    %435 = vector.shape_cast %434 : vector<1xf32> to vector<1x1x1xf32>
    %436 = vector.extract %435[0, 0, 0] : f32 from vector<1x1x1xf32>
    %cst_233 = arith.constant 0.001953125 : f32
    %437 = arith.mulf %436, %cst_233 : f32
    %438 = arith.mulf %432, %432 : vector<16x32xf32>
    %439 = vector.shape_cast %438 : vector<16x32xf32> to vector<1x16x32xf32>
    %cst_234 = arith.constant dense<0.000000e+00> : vector<1xf32>
    %440 = vector.multi_reduction <add>, %439, %cst_234 [1, 2] : vector<1x16x32xf32> to vector<1xf32>
    %441 = vector.shape_cast %440 : vector<1xf32> to vector<1x1x1xf32>
    %442 = vector.extract %441[0, 0, 0] : f32 from vector<1x1x1xf32>
    %cst_235 = arith.constant 0.001953125 : f32
    %443 = arith.mulf %442, %cst_235 : f32
    %444 = arith.mulf %437, %437 : f32
    %445 = arith.subf %443, %444 : f32
    %cst_236 = arith.constant 0.000000e+00 : f32
    %446 = arith.maximumf %445, %cst_236 : f32
    %cst_237 = arith.constant 9.99999974E-6 : f32
    %447 = arith.addf %446, %cst_237 : f32
    %448 = math.rsqrt %447 : f32
    %449 = vector.broadcast %448 : f32 to vector<1x32xf32>
    %450 = arith.mulf %246, %449 : vector<1x32xf32>
    %451 = vector.broadcast %437 : f32 to vector<1x32xf32>
    %452 = arith.mulf %451, %450 : vector<1x32xf32>
    %453 = arith.subf %248, %452 : vector<1x32xf32>
    %cst_238 = arith.constant 1.000000e+00 : f32
    %454 = vector.broadcast %cst_238 : f32 to vector<16x32xf32>
    %455 = arith.addf %422, %454 : vector<16x32xf32>
    %cst_239 = arith.constant 5.000000e-01 : f32
    %456 = vector.broadcast %cst_239 : f32 to vector<16x32xf32>
    %457 = arith.mulf %456, %455 : vector<16x32xf32>
    %458 = vector.broadcast %450 : vector<1x32xf32> to vector<16x32xf32>
    %459 = arith.mulf %432, %458 : vector<16x32xf32>
    %460 = vector.broadcast %453 : vector<1x32xf32> to vector<16x32xf32>
    %461 = arith.addf %459, %460 : vector<16x32xf32>
    %462 = math.tanh %461 : vector<16x32xf32>
    %463 = arith.mulf %457, %462 : vector<16x32xf32>
    %464 = vector.extract_strided_slice %7 {offsets = [16, 0], sizes = [16, 32], strides = [1, 1]} : vector<48x32xf32> to vector<16x32xf32>
    %c0_240 = arith.constant 0 : index
    %c0_241 = arith.constant 0 : index
    %c0_242 = arith.constant 0 : index
    %465 = vector.load %arg5[%c0_240, %c0_241, %c0_242] : memref<4x1x32xf32, #tpu.memory_space<vmem>>, vector<1x1x32xf32>
    %466 = vector.shape_cast %465 : vector<1x1x32xf32> to vector<1x32xf32>
    %c0_243 = arith.constant 0 : index
    %c0_244 = arith.constant 0 : index
    %c0_245 = arith.constant 0 : index
    %467 = vector.load %arg6[%c0_243, %c0_244, %c0_245] : memref<4x32x128xbf16, #tpu.memory_space<vmem>>, vector<1x32x128xbf16>
    %468 = vector.shape_cast %467 : vector<1x32x128xbf16> to vector<32x128xbf16>
    %c0_246 = arith.constant 0 : index
    %c0_247 = arith.constant 0 : index
    %c0_248 = arith.constant 0 : index
    %469 = vector.load %arg7[%c0_246, %c0_247, %c0_248] : memref<4x1x128xf32, #tpu.memory_space<vmem>>, vector<1x1x128xf32>
    %470 = vector.shape_cast %469 : vector<1x1x128xf32> to vector<1x128xf32>
    %c0_249 = arith.constant 0 : index
    %c0_250 = arith.constant 0 : index
    %c0_251 = arith.constant 0 : index
    %471 = vector.load %arg8[%c0_249, %c0_250, %c0_251] : memref<4x1x32xf32, #tpu.memory_space<vmem>>, vector<1x1x32xf32>
    %472 = vector.shape_cast %471 : vector<1x1x32xf32> to vector<1x32xf32>
    %c0_252 = arith.constant 0 : index
    %c0_253 = arith.constant 0 : index
    %c0_254 = arith.constant 0 : index
    %473 = vector.load %arg9[%c0_252, %c0_253, %c0_254] : memref<4x1x32xf32, #tpu.memory_space<vmem>>, vector<1x1x32xf32>
    %474 = vector.shape_cast %473 : vector<1x1x32xf32> to vector<1x32xf32>
    %475 = arith.addf %464, %237 : vector<16x32xf32>
    %c0_255 = arith.constant 0 : index
    %c0_256 = arith.constant 0 : index
    %c0_257 = arith.constant 0 : index
    %c0_258 = arith.constant 0 : index
    %476 = vector.load %arg4[%c0_255, %c0_256, %c0_257, %c0_258] : memref<4x16x16x32xf32, #tpu.memory_space<vmem>>, vector<1x1x16x32xf32>
    %477 = vector.shape_cast %476 : vector<1x1x16x32xf32> to vector<16x32xf32>
    %478 = arith.mulf %475, %477 : vector<16x32xf32>
    %c15_i32_259 = arith.constant 15 : i32
    %479 = tpu.dynamic_rotate %475 by %c15_i32_259 dim 0 : vector<16x32xf32>, i32 -> vector<16x32xf32>
    %c0_260 = arith.constant 0 : index
    %c1_261 = arith.constant 1 : index
    %c0_262 = arith.constant 0 : index
    %c0_263 = arith.constant 0 : index
    %480 = vector.load %arg4[%c0_260, %c1_261, %c0_262, %c0_263] : memref<4x16x16x32xf32, #tpu.memory_space<vmem>>, vector<1x1x16x32xf32>
    %481 = vector.shape_cast %480 : vector<1x1x16x32xf32> to vector<16x32xf32>
    %482 = arith.mulf %479, %481 : vector<16x32xf32>
    %c14_i32_264 = arith.constant 14 : i32
    %483 = tpu.dynamic_rotate %475 by %c14_i32_264 dim 0 : vector<16x32xf32>, i32 -> vector<16x32xf32>
    %c0_265 = arith.constant 0 : index
    %c2_266 = arith.constant 2 : index
    %c0_267 = arith.constant 0 : index
    %c0_268 = arith.constant 0 : index
    %484 = vector.load %arg4[%c0_265, %c2_266, %c0_267, %c0_268] : memref<4x16x16x32xf32, #tpu.memory_space<vmem>>, vector<1x1x16x32xf32>
    %485 = vector.shape_cast %484 : vector<1x1x16x32xf32> to vector<16x32xf32>
    %486 = arith.mulf %483, %485 : vector<16x32xf32>
    %c13_i32_269 = arith.constant 13 : i32
    %487 = tpu.dynamic_rotate %475 by %c13_i32_269 dim 0 : vector<16x32xf32>, i32 -> vector<16x32xf32>
    %c0_270 = arith.constant 0 : index
    %c3_271 = arith.constant 3 : index
    %c0_272 = arith.constant 0 : index
    %c0_273 = arith.constant 0 : index
    %488 = vector.load %arg4[%c0_270, %c3_271, %c0_272, %c0_273] : memref<4x16x16x32xf32, #tpu.memory_space<vmem>>, vector<1x1x16x32xf32>
    %489 = vector.shape_cast %488 : vector<1x1x16x32xf32> to vector<16x32xf32>
    %490 = arith.mulf %487, %489 : vector<16x32xf32>
    %c12_i32_274 = arith.constant 12 : i32
    %491 = tpu.dynamic_rotate %475 by %c12_i32_274 dim 0 : vector<16x32xf32>, i32 -> vector<16x32xf32>
    %c0_275 = arith.constant 0 : index
    %c4_276 = arith.constant 4 : index
    %c0_277 = arith.constant 0 : index
    %c0_278 = arith.constant 0 : index
    %492 = vector.load %arg4[%c0_275, %c4_276, %c0_277, %c0_278] : memref<4x16x16x32xf32, #tpu.memory_space<vmem>>, vector<1x1x16x32xf32>
    %493 = vector.shape_cast %492 : vector<1x1x16x32xf32> to vector<16x32xf32>
    %494 = arith.mulf %491, %493 : vector<16x32xf32>
    %495 = arith.addf %478, %494 : vector<16x32xf32>
    %c11_i32_279 = arith.constant 11 : i32
    %496 = tpu.dynamic_rotate %475 by %c11_i32_279 dim 0 : vector<16x32xf32>, i32 -> vector<16x32xf32>
    %c0_280 = arith.constant 0 : index
    %c5_281 = arith.constant 5 : index
    %c0_282 = arith.constant 0 : index
    %c0_283 = arith.constant 0 : index
    %497 = vector.load %arg4[%c0_280, %c5_281, %c0_282, %c0_283] : memref<4x16x16x32xf32, #tpu.memory_space<vmem>>, vector<1x1x16x32xf32>
    %498 = vector.shape_cast %497 : vector<1x1x16x32xf32> to vector<16x32xf32>
    %499 = arith.mulf %496, %498 : vector<16x32xf32>
    %500 = arith.addf %482, %499 : vector<16x32xf32>
    %c10_i32_284 = arith.constant 10 : i32
    %501 = tpu.dynamic_rotate %475 by %c10_i32_284 dim 0 : vector<16x32xf32>, i32 -> vector<16x32xf32>
    %c0_285 = arith.constant 0 : index
    %c6_286 = arith.constant 6 : index
    %c0_287 = arith.constant 0 : index
    %c0_288 = arith.constant 0 : index
    %502 = vector.load %arg4[%c0_285, %c6_286, %c0_287, %c0_288] : memref<4x16x16x32xf32, #tpu.memory_space<vmem>>, vector<1x1x16x32xf32>
    %503 = vector.shape_cast %502 : vector<1x1x16x32xf32> to vector<16x32xf32>
    %504 = arith.mulf %501, %503 : vector<16x32xf32>
    %505 = arith.addf %486, %504 : vector<16x32xf32>
    %c9_i32_289 = arith.constant 9 : i32
    %506 = tpu.dynamic_rotate %475 by %c9_i32_289 dim 0 : vector<16x32xf32>, i32 -> vector<16x32xf32>
    %c0_290 = arith.constant 0 : index
    %c7_291 = arith.constant 7 : index
    %c0_292 = arith.constant 0 : index
    %c0_293 = arith.constant 0 : index
    %507 = vector.load %arg4[%c0_290, %c7_291, %c0_292, %c0_293] : memref<4x16x16x32xf32, #tpu.memory_space<vmem>>, vector<1x1x16x32xf32>
    %508 = vector.shape_cast %507 : vector<1x1x16x32xf32> to vector<16x32xf32>
    %509 = arith.mulf %506, %508 : vector<16x32xf32>
    %510 = arith.addf %490, %509 : vector<16x32xf32>
    %c8_i32_294 = arith.constant 8 : i32
    %511 = tpu.dynamic_rotate %475 by %c8_i32_294 dim 0 : vector<16x32xf32>, i32 -> vector<16x32xf32>
    %c0_295 = arith.constant 0 : index
    %c8_296 = arith.constant 8 : index
    %c0_297 = arith.constant 0 : index
    %c0_298 = arith.constant 0 : index
    %512 = vector.load %arg4[%c0_295, %c8_296, %c0_297, %c0_298] : memref<4x16x16x32xf32, #tpu.memory_space<vmem>>, vector<1x1x16x32xf32>
    %513 = vector.shape_cast %512 : vector<1x1x16x32xf32> to vector<16x32xf32>
    %514 = arith.mulf %511, %513 : vector<16x32xf32>
    %515 = arith.addf %495, %514 : vector<16x32xf32>
    %c7_i32_299 = arith.constant 7 : i32
    %516 = tpu.dynamic_rotate %475 by %c7_i32_299 dim 0 : vector<16x32xf32>, i32 -> vector<16x32xf32>
    %c0_300 = arith.constant 0 : index
    %c9_301 = arith.constant 9 : index
    %c0_302 = arith.constant 0 : index
    %c0_303 = arith.constant 0 : index
    %517 = vector.load %arg4[%c0_300, %c9_301, %c0_302, %c0_303] : memref<4x16x16x32xf32, #tpu.memory_space<vmem>>, vector<1x1x16x32xf32>
    %518 = vector.shape_cast %517 : vector<1x1x16x32xf32> to vector<16x32xf32>
    %519 = arith.mulf %516, %518 : vector<16x32xf32>
    %520 = arith.addf %500, %519 : vector<16x32xf32>
    %c6_i32_304 = arith.constant 6 : i32
    %521 = tpu.dynamic_rotate %475 by %c6_i32_304 dim 0 : vector<16x32xf32>, i32 -> vector<16x32xf32>
    %c0_305 = arith.constant 0 : index
    %c10_306 = arith.constant 10 : index
    %c0_307 = arith.constant 0 : index
    %c0_308 = arith.constant 0 : index
    %522 = vector.load %arg4[%c0_305, %c10_306, %c0_307, %c0_308] : memref<4x16x16x32xf32, #tpu.memory_space<vmem>>, vector<1x1x16x32xf32>
    %523 = vector.shape_cast %522 : vector<1x1x16x32xf32> to vector<16x32xf32>
    %524 = arith.mulf %521, %523 : vector<16x32xf32>
    %525 = arith.addf %505, %524 : vector<16x32xf32>
    %c5_i32_309 = arith.constant 5 : i32
    %526 = tpu.dynamic_rotate %475 by %c5_i32_309 dim 0 : vector<16x32xf32>, i32 -> vector<16x32xf32>
    %c0_310 = arith.constant 0 : index
    %c11_311 = arith.constant 11 : index
    %c0_312 = arith.constant 0 : index
    %c0_313 = arith.constant 0 : index
    %527 = vector.load %arg4[%c0_310, %c11_311, %c0_312, %c0_313] : memref<4x16x16x32xf32, #tpu.memory_space<vmem>>, vector<1x1x16x32xf32>
    %528 = vector.shape_cast %527 : vector<1x1x16x32xf32> to vector<16x32xf32>
    %529 = arith.mulf %526, %528 : vector<16x32xf32>
    %530 = arith.addf %510, %529 : vector<16x32xf32>
    %c4_i32_314 = arith.constant 4 : i32
    %531 = tpu.dynamic_rotate %475 by %c4_i32_314 dim 0 : vector<16x32xf32>, i32 -> vector<16x32xf32>
    %c0_315 = arith.constant 0 : index
    %c12_316 = arith.constant 12 : index
    %c0_317 = arith.constant 0 : index
    %c0_318 = arith.constant 0 : index
    %532 = vector.load %arg4[%c0_315, %c12_316, %c0_317, %c0_318] : memref<4x16x16x32xf32, #tpu.memory_space<vmem>>, vector<1x1x16x32xf32>
    %533 = vector.shape_cast %532 : vector<1x1x16x32xf32> to vector<16x32xf32>
    %534 = arith.mulf %531, %533 : vector<16x32xf32>
    %535 = arith.addf %515, %534 : vector<16x32xf32>
    %c3_i32_319 = arith.constant 3 : i32
    %536 = tpu.dynamic_rotate %475 by %c3_i32_319 dim 0 : vector<16x32xf32>, i32 -> vector<16x32xf32>
    %c0_320 = arith.constant 0 : index
    %c13_321 = arith.constant 13 : index
    %c0_322 = arith.constant 0 : index
    %c0_323 = arith.constant 0 : index
    %537 = vector.load %arg4[%c0_320, %c13_321, %c0_322, %c0_323] : memref<4x16x16x32xf32, #tpu.memory_space<vmem>>, vector<1x1x16x32xf32>
    %538 = vector.shape_cast %537 : vector<1x1x16x32xf32> to vector<16x32xf32>
    %539 = arith.mulf %536, %538 : vector<16x32xf32>
    %540 = arith.addf %520, %539 : vector<16x32xf32>
    %c2_i32_324 = arith.constant 2 : i32
    %541 = tpu.dynamic_rotate %475 by %c2_i32_324 dim 0 : vector<16x32xf32>, i32 -> vector<16x32xf32>
    %c0_325 = arith.constant 0 : index
    %c14_326 = arith.constant 14 : index
    %c0_327 = arith.constant 0 : index
    %c0_328 = arith.constant 0 : index
    %542 = vector.load %arg4[%c0_325, %c14_326, %c0_327, %c0_328] : memref<4x16x16x32xf32, #tpu.memory_space<vmem>>, vector<1x1x16x32xf32>
    %543 = vector.shape_cast %542 : vector<1x1x16x32xf32> to vector<16x32xf32>
    %544 = arith.mulf %541, %543 : vector<16x32xf32>
    %545 = arith.addf %525, %544 : vector<16x32xf32>
    %c1_i32_329 = arith.constant 1 : i32
    %546 = tpu.dynamic_rotate %475 by %c1_i32_329 dim 0 : vector<16x32xf32>, i32 -> vector<16x32xf32>
    %c0_330 = arith.constant 0 : index
    %c15_331 = arith.constant 15 : index
    %c0_332 = arith.constant 0 : index
    %c0_333 = arith.constant 0 : index
    %547 = vector.load %arg4[%c0_330, %c15_331, %c0_332, %c0_333] : memref<4x16x16x32xf32, #tpu.memory_space<vmem>>, vector<1x1x16x32xf32>
    %548 = vector.shape_cast %547 : vector<1x1x16x32xf32> to vector<16x32xf32>
    %549 = arith.mulf %546, %548 : vector<16x32xf32>
    %550 = arith.addf %530, %549 : vector<16x32xf32>
    %551 = arith.addf %535, %540 : vector<16x32xf32>
    %552 = arith.addf %551, %545 : vector<16x32xf32>
    %553 = arith.addf %552, %550 : vector<16x32xf32>
    %554 = vector.broadcast %466 : vector<1x32xf32> to vector<16x32xf32>
    %555 = arith.addf %553, %554 : vector<16x32xf32>
    %556 = vector.extract_strided_slice %555 {offsets = [0, 0], sizes = [16, 8], strides = [1, 1]} : vector<16x32xf32> to vector<16x8xf32>
    %557 = vector.shape_cast %556 : vector<16x8xf32> to vector<1x16x8xf32>
    %cst_334 = arith.constant dense<0.000000e+00> : vector<1xf32>
    %558 = vector.multi_reduction <add>, %557, %cst_334 [1, 2] : vector<1x16x8xf32> to vector<1xf32>
    %559 = vector.shape_cast %558 : vector<1xf32> to vector<1x1x1xf32>
    %560 = vector.extract %559[0, 0, 0] : f32 from vector<1x1x1xf32>
    %cst_335 = arith.constant 7.812500e-03 : f32
    %561 = arith.mulf %560, %cst_335 : f32
    %562 = arith.mulf %556, %556 : vector<16x8xf32>
    %563 = vector.shape_cast %562 : vector<16x8xf32> to vector<1x16x8xf32>
    %cst_336 = arith.constant dense<0.000000e+00> : vector<1xf32>
    %564 = vector.multi_reduction <add>, %563, %cst_336 [1, 2] : vector<1x16x8xf32> to vector<1xf32>
    %565 = vector.shape_cast %564 : vector<1xf32> to vector<1x1x1xf32>
    %566 = vector.extract %565[0, 0, 0] : f32 from vector<1x1x1xf32>
    %cst_337 = arith.constant 7.812500e-03 : f32
    %567 = arith.mulf %566, %cst_337 : f32
    %568 = arith.mulf %561, %561 : f32
    %569 = arith.subf %567, %568 : f32
    %cst_338 = arith.constant 0.000000e+00 : f32
    %570 = arith.maximumf %569, %cst_338 : f32
    %571 = vector.broadcast %561 : f32 to vector<16x8xf32>
    %572 = arith.subf %556, %571 : vector<16x8xf32>
    %cst_339 = arith.constant 9.99999974E-6 : f32
    %573 = arith.addf %570, %cst_339 : f32
    %574 = math.rsqrt %573 : f32
    %575 = vector.broadcast %574 : f32 to vector<16x8xf32>
    %576 = arith.mulf %572, %575 : vector<16x8xf32>
    %577 = vector.extract_strided_slice %555 {offsets = [0, 8], sizes = [16, 8], strides = [1, 1]} : vector<16x32xf32> to vector<16x8xf32>
    %578 = vector.shape_cast %577 : vector<16x8xf32> to vector<1x16x8xf32>
    %cst_340 = arith.constant dense<0.000000e+00> : vector<1xf32>
    %579 = vector.multi_reduction <add>, %578, %cst_340 [1, 2] : vector<1x16x8xf32> to vector<1xf32>
    %580 = vector.shape_cast %579 : vector<1xf32> to vector<1x1x1xf32>
    %581 = vector.extract %580[0, 0, 0] : f32 from vector<1x1x1xf32>
    %cst_341 = arith.constant 7.812500e-03 : f32
    %582 = arith.mulf %581, %cst_341 : f32
    %583 = arith.mulf %577, %577 : vector<16x8xf32>
    %584 = vector.shape_cast %583 : vector<16x8xf32> to vector<1x16x8xf32>
    %cst_342 = arith.constant dense<0.000000e+00> : vector<1xf32>
    %585 = vector.multi_reduction <add>, %584, %cst_342 [1, 2] : vector<1x16x8xf32> to vector<1xf32>
    %586 = vector.shape_cast %585 : vector<1xf32> to vector<1x1x1xf32>
    %587 = vector.extract %586[0, 0, 0] : f32 from vector<1x1x1xf32>
    %cst_343 = arith.constant 7.812500e-03 : f32
    %588 = arith.mulf %587, %cst_343 : f32
    %589 = arith.mulf %582, %582 : f32
    %590 = arith.subf %588, %589 : f32
    %cst_344 = arith.constant 0.000000e+00 : f32
    %591 = arith.maximumf %590, %cst_344 : f32
    %592 = vector.broadcast %582 : f32 to vector<16x8xf32>
    %593 = arith.subf %577, %592 : vector<16x8xf32>
    %cst_345 = arith.constant 9.99999974E-6 : f32
    %594 = arith.addf %591, %cst_345 : f32
    %595 = math.rsqrt %594 : f32
    %596 = vector.broadcast %595 : f32 to vector<16x8xf32>
    %597 = arith.mulf %593, %596 : vector<16x8xf32>
    %598 = vector.extract_strided_slice %555 {offsets = [0, 16], sizes = [16, 8], strides = [1, 1]} : vector<16x32xf32> to vector<16x8xf32>
    %599 = vector.shape_cast %598 : vector<16x8xf32> to vector<1x16x8xf32>
    %cst_346 = arith.constant dense<0.000000e+00> : vector<1xf32>
    %600 = vector.multi_reduction <add>, %599, %cst_346 [1, 2] : vector<1x16x8xf32> to vector<1xf32>
    %601 = vector.shape_cast %600 : vector<1xf32> to vector<1x1x1xf32>
    %602 = vector.extract %601[0, 0, 0] : f32 from vector<1x1x1xf32>
    %cst_347 = arith.constant 7.812500e-03 : f32
    %603 = arith.mulf %602, %cst_347 : f32
    %604 = arith.mulf %598, %598 : vector<16x8xf32>
    %605 = vector.shape_cast %604 : vector<16x8xf32> to vector<1x16x8xf32>
    %cst_348 = arith.constant dense<0.000000e+00> : vector<1xf32>
    %606 = vector.multi_reduction <add>, %605, %cst_348 [1, 2] : vector<1x16x8xf32> to vector<1xf32>
    %607 = vector.shape_cast %606 : vector<1xf32> to vector<1x1x1xf32>
    %608 = vector.extract %607[0, 0, 0] : f32 from vector<1x1x1xf32>
    %cst_349 = arith.constant 7.812500e-03 : f32
    %609 = arith.mulf %608, %cst_349 : f32
    %610 = arith.mulf %603, %603 : f32
    %611 = arith.subf %609, %610 : f32
    %cst_350 = arith.constant 0.000000e+00 : f32
    %612 = arith.maximumf %611, %cst_350 : f32
    %613 = vector.broadcast %603 : f32 to vector<16x8xf32>
    %614 = arith.subf %598, %613 : vector<16x8xf32>
    %cst_351 = arith.constant 9.99999974E-6 : f32
    %615 = arith.addf %612, %cst_351 : f32
    %616 = math.rsqrt %615 : f32
    %617 = vector.broadcast %616 : f32 to vector<16x8xf32>
    %618 = arith.mulf %614, %617 : vector<16x8xf32>
    %619 = vector.extract_strided_slice %555 {offsets = [0, 24], sizes = [16, 8], strides = [1, 1]} : vector<16x32xf32> to vector<16x8xf32>
    %620 = vector.shape_cast %619 : vector<16x8xf32> to vector<1x16x8xf32>
    %cst_352 = arith.constant dense<0.000000e+00> : vector<1xf32>
    %621 = vector.multi_reduction <add>, %620, %cst_352 [1, 2] : vector<1x16x8xf32> to vector<1xf32>
    %622 = vector.shape_cast %621 : vector<1xf32> to vector<1x1x1xf32>
    %623 = vector.extract %622[0, 0, 0] : f32 from vector<1x1x1xf32>
    %cst_353 = arith.constant 7.812500e-03 : f32
    %624 = arith.mulf %623, %cst_353 : f32
    %625 = arith.mulf %619, %619 : vector<16x8xf32>
    %626 = vector.shape_cast %625 : vector<16x8xf32> to vector<1x16x8xf32>
    %cst_354 = arith.constant dense<0.000000e+00> : vector<1xf32>
    %627 = vector.multi_reduction <add>, %626, %cst_354 [1, 2] : vector<1x16x8xf32> to vector<1xf32>
    %628 = vector.shape_cast %627 : vector<1xf32> to vector<1x1x1xf32>
    %629 = vector.extract %628[0, 0, 0] : f32 from vector<1x1x1xf32>
    %cst_355 = arith.constant 7.812500e-03 : f32
    %630 = arith.mulf %629, %cst_355 : f32
    %631 = arith.mulf %624, %624 : f32
    %632 = arith.subf %630, %631 : f32
    %cst_356 = arith.constant 0.000000e+00 : f32
    %633 = arith.maximumf %632, %cst_356 : f32
    %634 = vector.broadcast %624 : f32 to vector<16x8xf32>
    %635 = arith.subf %619, %634 : vector<16x8xf32>
    %cst_357 = arith.constant 9.99999974E-6 : f32
    %636 = arith.addf %633, %cst_357 : f32
    %637 = math.rsqrt %636 : f32
    %638 = vector.broadcast %637 : f32 to vector<16x8xf32>
    %639 = arith.mulf %635, %638 : vector<16x8xf32>
    %640 = tpu.concatenate %576, %597, %618, %639 in 1 : vector<16x8xf32>, vector<16x8xf32>, vector<16x8xf32>, vector<16x8xf32> -> vector<16x32xf32>
    %641 = arith.truncf %640 : vector<16x32xf32> to vector<16x32xbf16>
    %cst_358 = arith.constant dense<0.000000e+00> : vector<16x128xf32>
    %642 = tpu.matmul %641, %468, %cst_358 {dimension_numbers = #tpu.dot_dimension_numbers<[1], [0], [0], [1], [0, 0, 1, 1], [], []>} : vector<16x32xbf16>, vector<32x128xbf16>, vector<16x128xf32> -> vector<16x128xf32>
    %643 = vector.broadcast %470 : vector<1x128xf32> to vector<16x128xf32>
    %644 = arith.addf %642, %643 : vector<16x128xf32>
    %645 = math.tanh %644 : vector<16x128xf32>
    %646 = vector.extract_strided_slice %645 {offsets = [0, 0], sizes = [16, 32], strides = [1, 1]} : vector<16x128xf32> to vector<16x32xf32>
    %647 = vector.extract_strided_slice %645 {offsets = [0, 32], sizes = [16, 32], strides = [1, 1]} : vector<16x128xf32> to vector<16x32xf32>
    %648 = vector.extract_strided_slice %645 {offsets = [0, 64], sizes = [16, 32], strides = [1, 1]} : vector<16x128xf32> to vector<16x32xf32>
    %649 = vector.extract_strided_slice %645 {offsets = [0, 96], sizes = [16, 32], strides = [1, 1]} : vector<16x128xf32> to vector<16x32xf32>
    %cst_359 = arith.constant 1.000000e+00 : f32
    %650 = vector.broadcast %cst_359 : f32 to vector<16x32xf32>
    %651 = arith.addf %647, %650 : vector<16x32xf32>
    %652 = arith.mulf %651, %206 : vector<16x32xf32>
    %cst_360 = arith.constant 1.000000e+00 : f32
    %653 = vector.broadcast %cst_360 : f32 to vector<16x32xf32>
    %654 = arith.addf %646, %653 : vector<16x32xf32>
    %655 = arith.mulf %654, %649 : vector<16x32xf32>
    %656 = arith.addf %652, %655 : vector<16x32xf32>
    %cst_361 = arith.constant 5.000000e-01 : f32
    %657 = vector.broadcast %cst_361 : f32 to vector<16x32xf32>
    %658 = arith.mulf %657, %656 : vector<16x32xf32>
    %659 = vector.shape_cast %658 : vector<16x32xf32> to vector<1x16x32xf32>
    %cst_362 = arith.constant dense<0.000000e+00> : vector<1xf32>
    %660 = vector.multi_reduction <add>, %659, %cst_362 [1, 2] : vector<1x16x32xf32> to vector<1xf32>
    %661 = vector.shape_cast %660 : vector<1xf32> to vector<1x1x1xf32>
    %662 = vector.extract %661[0, 0, 0] : f32 from vector<1x1x1xf32>
    %cst_363 = arith.constant 0.001953125 : f32
    %663 = arith.mulf %662, %cst_363 : f32
    %664 = arith.mulf %658, %658 : vector<16x32xf32>
    %665 = vector.shape_cast %664 : vector<16x32xf32> to vector<1x16x32xf32>
    %cst_364 = arith.constant dense<0.000000e+00> : vector<1xf32>
    %666 = vector.multi_reduction <add>, %665, %cst_364 [1, 2] : vector<1x16x32xf32> to vector<1xf32>
    %667 = vector.shape_cast %666 : vector<1xf32> to vector<1x1x1xf32>
    %668 = vector.extract %667[0, 0, 0] : f32 from vector<1x1x1xf32>
    %cst_365 = arith.constant 0.001953125 : f32
    %669 = arith.mulf %668, %cst_365 : f32
    %670 = arith.mulf %663, %663 : f32
    %671 = arith.subf %669, %670 : f32
    %cst_366 = arith.constant 0.000000e+00 : f32
    %672 = arith.maximumf %671, %cst_366 : f32
    %cst_367 = arith.constant 9.99999974E-6 : f32
    %673 = arith.addf %672, %cst_367 : f32
    %674 = math.rsqrt %673 : f32
    %675 = vector.broadcast %674 : f32 to vector<1x32xf32>
    %676 = arith.mulf %472, %675 : vector<1x32xf32>
    %677 = vector.broadcast %663 : f32 to vector<1x32xf32>
    %678 = arith.mulf %677, %676 : vector<1x32xf32>
    %679 = arith.subf %474, %678 : vector<1x32xf32>
    %cst_368 = arith.constant 1.000000e+00 : f32
    %680 = vector.broadcast %cst_368 : f32 to vector<16x32xf32>
    %681 = arith.addf %648, %680 : vector<16x32xf32>
    %cst_369 = arith.constant 5.000000e-01 : f32
    %682 = vector.broadcast %cst_369 : f32 to vector<16x32xf32>
    %683 = arith.mulf %682, %681 : vector<16x32xf32>
    %684 = vector.broadcast %676 : vector<1x32xf32> to vector<16x32xf32>
    %685 = arith.mulf %658, %684 : vector<16x32xf32>
    %686 = vector.broadcast %679 : vector<1x32xf32> to vector<16x32xf32>
    %687 = arith.addf %685, %686 : vector<16x32xf32>
    %688 = math.tanh %687 : vector<16x32xf32>
    %689 = arith.mulf %683, %688 : vector<16x32xf32>
    %690 = arith.addf %464, %689 : vector<16x32xf32>
    %c1_370 = arith.constant 1 : index
    %c0_371 = arith.constant 0 : index
    %c0_372 = arith.constant 0 : index
    %691 = vector.load %arg5[%c1_370, %c0_371, %c0_372] : memref<4x1x32xf32, #tpu.memory_space<vmem>>, vector<1x1x32xf32>
    %692 = vector.shape_cast %691 : vector<1x1x32xf32> to vector<1x32xf32>
    %c1_373 = arith.constant 1 : index
    %c0_374 = arith.constant 0 : index
    %c0_375 = arith.constant 0 : index
    %693 = vector.load %arg6[%c1_373, %c0_374, %c0_375] : memref<4x32x128xbf16, #tpu.memory_space<vmem>>, vector<1x32x128xbf16>
    %694 = vector.shape_cast %693 : vector<1x32x128xbf16> to vector<32x128xbf16>
    %c1_376 = arith.constant 1 : index
    %c0_377 = arith.constant 0 : index
    %c0_378 = arith.constant 0 : index
    %695 = vector.load %arg7[%c1_376, %c0_377, %c0_378] : memref<4x1x128xf32, #tpu.memory_space<vmem>>, vector<1x1x128xf32>
    %696 = vector.shape_cast %695 : vector<1x1x128xf32> to vector<1x128xf32>
    %c1_379 = arith.constant 1 : index
    %c0_380 = arith.constant 0 : index
    %c0_381 = arith.constant 0 : index
    %697 = vector.load %arg8[%c1_379, %c0_380, %c0_381] : memref<4x1x32xf32, #tpu.memory_space<vmem>>, vector<1x1x32xf32>
    %698 = vector.shape_cast %697 : vector<1x1x32xf32> to vector<1x32xf32>
    %c1_382 = arith.constant 1 : index
    %c0_383 = arith.constant 0 : index
    %c0_384 = arith.constant 0 : index
    %699 = vector.load %arg9[%c1_382, %c0_383, %c0_384] : memref<4x1x32xf32, #tpu.memory_space<vmem>>, vector<1x1x32xf32>
    %700 = vector.shape_cast %699 : vector<1x1x32xf32> to vector<1x32xf32>
    %701 = arith.addf %690, %463 : vector<16x32xf32>
    %c1_385 = arith.constant 1 : index
    %c0_386 = arith.constant 0 : index
    %c0_387 = arith.constant 0 : index
    %c0_388 = arith.constant 0 : index
    %702 = vector.load %arg4[%c1_385, %c0_386, %c0_387, %c0_388] : memref<4x16x16x32xf32, #tpu.memory_space<vmem>>, vector<1x1x16x32xf32>
    %703 = vector.shape_cast %702 : vector<1x1x16x32xf32> to vector<16x32xf32>
    %704 = arith.mulf %701, %703 : vector<16x32xf32>
    %c15_i32_389 = arith.constant 15 : i32
    %705 = tpu.dynamic_rotate %701 by %c15_i32_389 dim 0 : vector<16x32xf32>, i32 -> vector<16x32xf32>
    %c1_390 = arith.constant 1 : index
    %c1_391 = arith.constant 1 : index
    %c0_392 = arith.constant 0 : index
    %c0_393 = arith.constant 0 : index
    %706 = vector.load %arg4[%c1_390, %c1_391, %c0_392, %c0_393] : memref<4x16x16x32xf32, #tpu.memory_space<vmem>>, vector<1x1x16x32xf32>
    %707 = vector.shape_cast %706 : vector<1x1x16x32xf32> to vector<16x32xf32>
    %708 = arith.mulf %705, %707 : vector<16x32xf32>
    %c14_i32_394 = arith.constant 14 : i32
    %709 = tpu.dynamic_rotate %701 by %c14_i32_394 dim 0 : vector<16x32xf32>, i32 -> vector<16x32xf32>
    %c1_395 = arith.constant 1 : index
    %c2_396 = arith.constant 2 : index
    %c0_397 = arith.constant 0 : index
    %c0_398 = arith.constant 0 : index
    %710 = vector.load %arg4[%c1_395, %c2_396, %c0_397, %c0_398] : memref<4x16x16x32xf32, #tpu.memory_space<vmem>>, vector<1x1x16x32xf32>
    %711 = vector.shape_cast %710 : vector<1x1x16x32xf32> to vector<16x32xf32>
    %712 = arith.mulf %709, %711 : vector<16x32xf32>
    %c13_i32_399 = arith.constant 13 : i32
    %713 = tpu.dynamic_rotate %701 by %c13_i32_399 dim 0 : vector<16x32xf32>, i32 -> vector<16x32xf32>
    %c1_400 = arith.constant 1 : index
    %c3_401 = arith.constant 3 : index
    %c0_402 = arith.constant 0 : index
    %c0_403 = arith.constant 0 : index
    %714 = vector.load %arg4[%c1_400, %c3_401, %c0_402, %c0_403] : memref<4x16x16x32xf32, #tpu.memory_space<vmem>>, vector<1x1x16x32xf32>
    %715 = vector.shape_cast %714 : vector<1x1x16x32xf32> to vector<16x32xf32>
    %716 = arith.mulf %713, %715 : vector<16x32xf32>
    %c12_i32_404 = arith.constant 12 : i32
    %717 = tpu.dynamic_rotate %701 by %c12_i32_404 dim 0 : vector<16x32xf32>, i32 -> vector<16x32xf32>
    %c1_405 = arith.constant 1 : index
    %c4_406 = arith.constant 4 : index
    %c0_407 = arith.constant 0 : index
    %c0_408 = arith.constant 0 : index
    %718 = vector.load %arg4[%c1_405, %c4_406, %c0_407, %c0_408] : memref<4x16x16x32xf32, #tpu.memory_space<vmem>>, vector<1x1x16x32xf32>
    %719 = vector.shape_cast %718 : vector<1x1x16x32xf32> to vector<16x32xf32>
    %720 = arith.mulf %717, %719 : vector<16x32xf32>
    %721 = arith.addf %704, %720 : vector<16x32xf32>
    %c11_i32_409 = arith.constant 11 : i32
    %722 = tpu.dynamic_rotate %701 by %c11_i32_409 dim 0 : vector<16x32xf32>, i32 -> vector<16x32xf32>
    %c1_410 = arith.constant 1 : index
    %c5_411 = arith.constant 5 : index
    %c0_412 = arith.constant 0 : index
    %c0_413 = arith.constant 0 : index
    %723 = vector.load %arg4[%c1_410, %c5_411, %c0_412, %c0_413] : memref<4x16x16x32xf32, #tpu.memory_space<vmem>>, vector<1x1x16x32xf32>
    %724 = vector.shape_cast %723 : vector<1x1x16x32xf32> to vector<16x32xf32>
    %725 = arith.mulf %722, %724 : vector<16x32xf32>
    %726 = arith.addf %708, %725 : vector<16x32xf32>
    %c10_i32_414 = arith.constant 10 : i32
    %727 = tpu.dynamic_rotate %701 by %c10_i32_414 dim 0 : vector<16x32xf32>, i32 -> vector<16x32xf32>
    %c1_415 = arith.constant 1 : index
    %c6_416 = arith.constant 6 : index
    %c0_417 = arith.constant 0 : index
    %c0_418 = arith.constant 0 : index
    %728 = vector.load %arg4[%c1_415, %c6_416, %c0_417, %c0_418] : memref<4x16x16x32xf32, #tpu.memory_space<vmem>>, vector<1x1x16x32xf32>
    %729 = vector.shape_cast %728 : vector<1x1x16x32xf32> to vector<16x32xf32>
    %730 = arith.mulf %727, %729 : vector<16x32xf32>
    %731 = arith.addf %712, %730 : vector<16x32xf32>
    %c9_i32_419 = arith.constant 9 : i32
    %732 = tpu.dynamic_rotate %701 by %c9_i32_419 dim 0 : vector<16x32xf32>, i32 -> vector<16x32xf32>
    %c1_420 = arith.constant 1 : index
    %c7_421 = arith.constant 7 : index
    %c0_422 = arith.constant 0 : index
    %c0_423 = arith.constant 0 : index
    %733 = vector.load %arg4[%c1_420, %c7_421, %c0_422, %c0_423] : memref<4x16x16x32xf32, #tpu.memory_space<vmem>>, vector<1x1x16x32xf32>
    %734 = vector.shape_cast %733 : vector<1x1x16x32xf32> to vector<16x32xf32>
    %735 = arith.mulf %732, %734 : vector<16x32xf32>
    %736 = arith.addf %716, %735 : vector<16x32xf32>
    %c8_i32_424 = arith.constant 8 : i32
    %737 = tpu.dynamic_rotate %701 by %c8_i32_424 dim 0 : vector<16x32xf32>, i32 -> vector<16x32xf32>
    %c1_425 = arith.constant 1 : index
    %c8_426 = arith.constant 8 : index
    %c0_427 = arith.constant 0 : index
    %c0_428 = arith.constant 0 : index
    %738 = vector.load %arg4[%c1_425, %c8_426, %c0_427, %c0_428] : memref<4x16x16x32xf32, #tpu.memory_space<vmem>>, vector<1x1x16x32xf32>
    %739 = vector.shape_cast %738 : vector<1x1x16x32xf32> to vector<16x32xf32>
    %740 = arith.mulf %737, %739 : vector<16x32xf32>
    %741 = arith.addf %721, %740 : vector<16x32xf32>
    %c7_i32_429 = arith.constant 7 : i32
    %742 = tpu.dynamic_rotate %701 by %c7_i32_429 dim 0 : vector<16x32xf32>, i32 -> vector<16x32xf32>
    %c1_430 = arith.constant 1 : index
    %c9_431 = arith.constant 9 : index
    %c0_432 = arith.constant 0 : index
    %c0_433 = arith.constant 0 : index
    %743 = vector.load %arg4[%c1_430, %c9_431, %c0_432, %c0_433] : memref<4x16x16x32xf32, #tpu.memory_space<vmem>>, vector<1x1x16x32xf32>
    %744 = vector.shape_cast %743 : vector<1x1x16x32xf32> to vector<16x32xf32>
    %745 = arith.mulf %742, %744 : vector<16x32xf32>
    %746 = arith.addf %726, %745 : vector<16x32xf32>
    %c6_i32_434 = arith.constant 6 : i32
    %747 = tpu.dynamic_rotate %701 by %c6_i32_434 dim 0 : vector<16x32xf32>, i32 -> vector<16x32xf32>
    %c1_435 = arith.constant 1 : index
    %c10_436 = arith.constant 10 : index
    %c0_437 = arith.constant 0 : index
    %c0_438 = arith.constant 0 : index
    %748 = vector.load %arg4[%c1_435, %c10_436, %c0_437, %c0_438] : memref<4x16x16x32xf32, #tpu.memory_space<vmem>>, vector<1x1x16x32xf32>
    %749 = vector.shape_cast %748 : vector<1x1x16x32xf32> to vector<16x32xf32>
    %750 = arith.mulf %747, %749 : vector<16x32xf32>
    %751 = arith.addf %731, %750 : vector<16x32xf32>
    %c5_i32_439 = arith.constant 5 : i32
    %752 = tpu.dynamic_rotate %701 by %c5_i32_439 dim 0 : vector<16x32xf32>, i32 -> vector<16x32xf32>
    %c1_440 = arith.constant 1 : index
    %c11_441 = arith.constant 11 : index
    %c0_442 = arith.constant 0 : index
    %c0_443 = arith.constant 0 : index
    %753 = vector.load %arg4[%c1_440, %c11_441, %c0_442, %c0_443] : memref<4x16x16x32xf32, #tpu.memory_space<vmem>>, vector<1x1x16x32xf32>
    %754 = vector.shape_cast %753 : vector<1x1x16x32xf32> to vector<16x32xf32>
    %755 = arith.mulf %752, %754 : vector<16x32xf32>
    %756 = arith.addf %736, %755 : vector<16x32xf32>
    %c4_i32_444 = arith.constant 4 : i32
    %757 = tpu.dynamic_rotate %701 by %c4_i32_444 dim 0 : vector<16x32xf32>, i32 -> vector<16x32xf32>
    %c1_445 = arith.constant 1 : index
    %c12_446 = arith.constant 12 : index
    %c0_447 = arith.constant 0 : index
    %c0_448 = arith.constant 0 : index
    %758 = vector.load %arg4[%c1_445, %c12_446, %c0_447, %c0_448] : memref<4x16x16x32xf32, #tpu.memory_space<vmem>>, vector<1x1x16x32xf32>
    %759 = vector.shape_cast %758 : vector<1x1x16x32xf32> to vector<16x32xf32>
    %760 = arith.mulf %757, %759 : vector<16x32xf32>
    %761 = arith.addf %741, %760 : vector<16x32xf32>
    %c3_i32_449 = arith.constant 3 : i32
    %762 = tpu.dynamic_rotate %701 by %c3_i32_449 dim 0 : vector<16x32xf32>, i32 -> vector<16x32xf32>
    %c1_450 = arith.constant 1 : index
    %c13_451 = arith.constant 13 : index
    %c0_452 = arith.constant 0 : index
    %c0_453 = arith.constant 0 : index
    %763 = vector.load %arg4[%c1_450, %c13_451, %c0_452, %c0_453] : memref<4x16x16x32xf32, #tpu.memory_space<vmem>>, vector<1x1x16x32xf32>
    %764 = vector.shape_cast %763 : vector<1x1x16x32xf32> to vector<16x32xf32>
    %765 = arith.mulf %762, %764 : vector<16x32xf32>
    %766 = arith.addf %746, %765 : vector<16x32xf32>
    %c2_i32_454 = arith.constant 2 : i32
    %767 = tpu.dynamic_rotate %701 by %c2_i32_454 dim 0 : vector<16x32xf32>, i32 -> vector<16x32xf32>
    %c1_455 = arith.constant 1 : index
    %c14_456 = arith.constant 14 : index
    %c0_457 = arith.constant 0 : index
    %c0_458 = arith.constant 0 : index
    %768 = vector.load %arg4[%c1_455, %c14_456, %c0_457, %c0_458] : memref<4x16x16x32xf32, #tpu.memory_space<vmem>>, vector<1x1x16x32xf32>
    %769 = vector.shape_cast %768 : vector<1x1x16x32xf32> to vector<16x32xf32>
    %770 = arith.mulf %767, %769 : vector<16x32xf32>
    %771 = arith.addf %751, %770 : vector<16x32xf32>
    %c1_i32_459 = arith.constant 1 : i32
    %772 = tpu.dynamic_rotate %701 by %c1_i32_459 dim 0 : vector<16x32xf32>, i32 -> vector<16x32xf32>
    %c1_460 = arith.constant 1 : index
    %c15_461 = arith.constant 15 : index
    %c0_462 = arith.constant 0 : index
    %c0_463 = arith.constant 0 : index
    %773 = vector.load %arg4[%c1_460, %c15_461, %c0_462, %c0_463] : memref<4x16x16x32xf32, #tpu.memory_space<vmem>>, vector<1x1x16x32xf32>
    %774 = vector.shape_cast %773 : vector<1x1x16x32xf32> to vector<16x32xf32>
    %775 = arith.mulf %772, %774 : vector<16x32xf32>
    %776 = arith.addf %756, %775 : vector<16x32xf32>
    %777 = arith.addf %761, %766 : vector<16x32xf32>
    %778 = arith.addf %777, %771 : vector<16x32xf32>
    %779 = arith.addf %778, %776 : vector<16x32xf32>
    %780 = vector.broadcast %692 : vector<1x32xf32> to vector<16x32xf32>
    %781 = arith.addf %779, %780 : vector<16x32xf32>
    %782 = vector.extract_strided_slice %781 {offsets = [0, 0], sizes = [16, 8], strides = [1, 1]} : vector<16x32xf32> to vector<16x8xf32>
    %783 = vector.shape_cast %782 : vector<16x8xf32> to vector<1x16x8xf32>
    %cst_464 = arith.constant dense<0.000000e+00> : vector<1xf32>
    %784 = vector.multi_reduction <add>, %783, %cst_464 [1, 2] : vector<1x16x8xf32> to vector<1xf32>
    %785 = vector.shape_cast %784 : vector<1xf32> to vector<1x1x1xf32>
    %786 = vector.extract %785[0, 0, 0] : f32 from vector<1x1x1xf32>
    %cst_465 = arith.constant 7.812500e-03 : f32
    %787 = arith.mulf %786, %cst_465 : f32
    %788 = arith.mulf %782, %782 : vector<16x8xf32>
    %789 = vector.shape_cast %788 : vector<16x8xf32> to vector<1x16x8xf32>
    %cst_466 = arith.constant dense<0.000000e+00> : vector<1xf32>
    %790 = vector.multi_reduction <add>, %789, %cst_466 [1, 2] : vector<1x16x8xf32> to vector<1xf32>
    %791 = vector.shape_cast %790 : vector<1xf32> to vector<1x1x1xf32>
    %792 = vector.extract %791[0, 0, 0] : f32 from vector<1x1x1xf32>
    %cst_467 = arith.constant 7.812500e-03 : f32
    %793 = arith.mulf %792, %cst_467 : f32
    %794 = arith.mulf %787, %787 : f32
    %795 = arith.subf %793, %794 : f32
    %cst_468 = arith.constant 0.000000e+00 : f32
    %796 = arith.maximumf %795, %cst_468 : f32
    %797 = vector.broadcast %787 : f32 to vector<16x8xf32>
    %798 = arith.subf %782, %797 : vector<16x8xf32>
    %cst_469 = arith.constant 9.99999974E-6 : f32
    %799 = arith.addf %796, %cst_469 : f32
    %800 = math.rsqrt %799 : f32
    %801 = vector.broadcast %800 : f32 to vector<16x8xf32>
    %802 = arith.mulf %798, %801 : vector<16x8xf32>
    %803 = vector.extract_strided_slice %781 {offsets = [0, 8], sizes = [16, 8], strides = [1, 1]} : vector<16x32xf32> to vector<16x8xf32>
    %804 = vector.shape_cast %803 : vector<16x8xf32> to vector<1x16x8xf32>
    %cst_470 = arith.constant dense<0.000000e+00> : vector<1xf32>
    %805 = vector.multi_reduction <add>, %804, %cst_470 [1, 2] : vector<1x16x8xf32> to vector<1xf32>
    %806 = vector.shape_cast %805 : vector<1xf32> to vector<1x1x1xf32>
    %807 = vector.extract %806[0, 0, 0] : f32 from vector<1x1x1xf32>
    %cst_471 = arith.constant 7.812500e-03 : f32
    %808 = arith.mulf %807, %cst_471 : f32
    %809 = arith.mulf %803, %803 : vector<16x8xf32>
    %810 = vector.shape_cast %809 : vector<16x8xf32> to vector<1x16x8xf32>
    %cst_472 = arith.constant dense<0.000000e+00> : vector<1xf32>
    %811 = vector.multi_reduction <add>, %810, %cst_472 [1, 2] : vector<1x16x8xf32> to vector<1xf32>
    %812 = vector.shape_cast %811 : vector<1xf32> to vector<1x1x1xf32>
    %813 = vector.extract %812[0, 0, 0] : f32 from vector<1x1x1xf32>
    %cst_473 = arith.constant 7.812500e-03 : f32
    %814 = arith.mulf %813, %cst_473 : f32
    %815 = arith.mulf %808, %808 : f32
    %816 = arith.subf %814, %815 : f32
    %cst_474 = arith.constant 0.000000e+00 : f32
    %817 = arith.maximumf %816, %cst_474 : f32
    %818 = vector.broadcast %808 : f32 to vector<16x8xf32>
    %819 = arith.subf %803, %818 : vector<16x8xf32>
    %cst_475 = arith.constant 9.99999974E-6 : f32
    %820 = arith.addf %817, %cst_475 : f32
    %821 = math.rsqrt %820 : f32
    %822 = vector.broadcast %821 : f32 to vector<16x8xf32>
    %823 = arith.mulf %819, %822 : vector<16x8xf32>
    %824 = vector.extract_strided_slice %781 {offsets = [0, 16], sizes = [16, 8], strides = [1, 1]} : vector<16x32xf32> to vector<16x8xf32>
    %825 = vector.shape_cast %824 : vector<16x8xf32> to vector<1x16x8xf32>
    %cst_476 = arith.constant dense<0.000000e+00> : vector<1xf32>
    %826 = vector.multi_reduction <add>, %825, %cst_476 [1, 2] : vector<1x16x8xf32> to vector<1xf32>
    %827 = vector.shape_cast %826 : vector<1xf32> to vector<1x1x1xf32>
    %828 = vector.extract %827[0, 0, 0] : f32 from vector<1x1x1xf32>
    %cst_477 = arith.constant 7.812500e-03 : f32
    %829 = arith.mulf %828, %cst_477 : f32
    %830 = arith.mulf %824, %824 : vector<16x8xf32>
    %831 = vector.shape_cast %830 : vector<16x8xf32> to vector<1x16x8xf32>
    %cst_478 = arith.constant dense<0.000000e+00> : vector<1xf32>
    %832 = vector.multi_reduction <add>, %831, %cst_478 [1, 2] : vector<1x16x8xf32> to vector<1xf32>
    %833 = vector.shape_cast %832 : vector<1xf32> to vector<1x1x1xf32>
    %834 = vector.extract %833[0, 0, 0] : f32 from vector<1x1x1xf32>
    %cst_479 = arith.constant 7.812500e-03 : f32
    %835 = arith.mulf %834, %cst_479 : f32
    %836 = arith.mulf %829, %829 : f32
    %837 = arith.subf %835, %836 : f32
    %cst_480 = arith.constant 0.000000e+00 : f32
    %838 = arith.maximumf %837, %cst_480 : f32
    %839 = vector.broadcast %829 : f32 to vector<16x8xf32>
    %840 = arith.subf %824, %839 : vector<16x8xf32>
    %cst_481 = arith.constant 9.99999974E-6 : f32
    %841 = arith.addf %838, %cst_481 : f32
    %842 = math.rsqrt %841 : f32
    %843 = vector.broadcast %842 : f32 to vector<16x8xf32>
    %844 = arith.mulf %840, %843 : vector<16x8xf32>
    %845 = vector.extract_strided_slice %781 {offsets = [0, 24], sizes = [16, 8], strides = [1, 1]} : vector<16x32xf32> to vector<16x8xf32>
    %846 = vector.shape_cast %845 : vector<16x8xf32> to vector<1x16x8xf32>
    %cst_482 = arith.constant dense<0.000000e+00> : vector<1xf32>
    %847 = vector.multi_reduction <add>, %846, %cst_482 [1, 2] : vector<1x16x8xf32> to vector<1xf32>
    %848 = vector.shape_cast %847 : vector<1xf32> to vector<1x1x1xf32>
    %849 = vector.extract %848[0, 0, 0] : f32 from vector<1x1x1xf32>
    %cst_483 = arith.constant 7.812500e-03 : f32
    %850 = arith.mulf %849, %cst_483 : f32
    %851 = arith.mulf %845, %845 : vector<16x8xf32>
    %852 = vector.shape_cast %851 : vector<16x8xf32> to vector<1x16x8xf32>
    %cst_484 = arith.constant dense<0.000000e+00> : vector<1xf32>
    %853 = vector.multi_reduction <add>, %852, %cst_484 [1, 2] : vector<1x16x8xf32> to vector<1xf32>
    %854 = vector.shape_cast %853 : vector<1xf32> to vector<1x1x1xf32>
    %855 = vector.extract %854[0, 0, 0] : f32 from vector<1x1x1xf32>
    %cst_485 = arith.constant 7.812500e-03 : f32
    %856 = arith.mulf %855, %cst_485 : f32
    %857 = arith.mulf %850, %850 : f32
    %858 = arith.subf %856, %857 : f32
    %cst_486 = arith.constant 0.000000e+00 : f32
    %859 = arith.maximumf %858, %cst_486 : f32
    %860 = vector.broadcast %850 : f32 to vector<16x8xf32>
    %861 = arith.subf %845, %860 : vector<16x8xf32>
    %cst_487 = arith.constant 9.99999974E-6 : f32
    %862 = arith.addf %859, %cst_487 : f32
    %863 = math.rsqrt %862 : f32
    %864 = vector.broadcast %863 : f32 to vector<16x8xf32>
    %865 = arith.mulf %861, %864 : vector<16x8xf32>
    %866 = tpu.concatenate %802, %823, %844, %865 in 1 : vector<16x8xf32>, vector<16x8xf32>, vector<16x8xf32>, vector<16x8xf32> -> vector<16x32xf32>
    %867 = arith.truncf %866 : vector<16x32xf32> to vector<16x32xbf16>
    %cst_488 = arith.constant dense<0.000000e+00> : vector<16x128xf32>
    %868 = tpu.matmul %867, %694, %cst_488 {dimension_numbers = #tpu.dot_dimension_numbers<[1], [0], [0], [1], [0, 0, 1, 1], [], []>} : vector<16x32xbf16>, vector<32x128xbf16>, vector<16x128xf32> -> vector<16x128xf32>
    %869 = vector.broadcast %696 : vector<1x128xf32> to vector<16x128xf32>
    %870 = arith.addf %868, %869 : vector<16x128xf32>
    %871 = math.tanh %870 : vector<16x128xf32>
    %872 = vector.extract_strided_slice %871 {offsets = [0, 0], sizes = [16, 32], strides = [1, 1]} : vector<16x128xf32> to vector<16x32xf32>
    %873 = vector.extract_strided_slice %871 {offsets = [0, 32], sizes = [16, 32], strides = [1, 1]} : vector<16x128xf32> to vector<16x32xf32>
    %874 = vector.extract_strided_slice %871 {offsets = [0, 64], sizes = [16, 32], strides = [1, 1]} : vector<16x128xf32> to vector<16x32xf32>
    %875 = vector.extract_strided_slice %871 {offsets = [0, 96], sizes = [16, 32], strides = [1, 1]} : vector<16x128xf32> to vector<16x32xf32>
    %cst_489 = arith.constant 1.000000e+00 : f32
    %876 = vector.broadcast %cst_489 : f32 to vector<16x32xf32>
    %877 = arith.addf %873, %876 : vector<16x32xf32>
    %878 = arith.mulf %877, %432 : vector<16x32xf32>
    %cst_490 = arith.constant 1.000000e+00 : f32
    %879 = vector.broadcast %cst_490 : f32 to vector<16x32xf32>
    %880 = arith.addf %872, %879 : vector<16x32xf32>
    %881 = arith.mulf %880, %875 : vector<16x32xf32>
    %882 = arith.addf %878, %881 : vector<16x32xf32>
    %cst_491 = arith.constant 5.000000e-01 : f32
    %883 = vector.broadcast %cst_491 : f32 to vector<16x32xf32>
    %884 = arith.mulf %883, %882 : vector<16x32xf32>
    %885 = vector.shape_cast %884 : vector<16x32xf32> to vector<1x16x32xf32>
    %cst_492 = arith.constant dense<0.000000e+00> : vector<1xf32>
    %886 = vector.multi_reduction <add>, %885, %cst_492 [1, 2] : vector<1x16x32xf32> to vector<1xf32>
    %887 = vector.shape_cast %886 : vector<1xf32> to vector<1x1x1xf32>
    %888 = vector.extract %887[0, 0, 0] : f32 from vector<1x1x1xf32>
    %cst_493 = arith.constant 0.001953125 : f32
    %889 = arith.mulf %888, %cst_493 : f32
    %890 = arith.mulf %884, %884 : vector<16x32xf32>
    %891 = vector.shape_cast %890 : vector<16x32xf32> to vector<1x16x32xf32>
    %cst_494 = arith.constant dense<0.000000e+00> : vector<1xf32>
    %892 = vector.multi_reduction <add>, %891, %cst_494 [1, 2] : vector<1x16x32xf32> to vector<1xf32>
    %893 = vector.shape_cast %892 : vector<1xf32> to vector<1x1x1xf32>
    %894 = vector.extract %893[0, 0, 0] : f32 from vector<1x1x1xf32>
    %cst_495 = arith.constant 0.001953125 : f32
    %895 = arith.mulf %894, %cst_495 : f32
    %896 = arith.mulf %889, %889 : f32
    %897 = arith.subf %895, %896 : f32
    %cst_496 = arith.constant 0.000000e+00 : f32
    %898 = arith.maximumf %897, %cst_496 : f32
    %cst_497 = arith.constant 9.99999974E-6 : f32
    %899 = arith.addf %898, %cst_497 : f32
    %900 = math.rsqrt %899 : f32
    %901 = vector.broadcast %900 : f32 to vector<1x32xf32>
    %902 = arith.mulf %698, %901 : vector<1x32xf32>
    %903 = vector.broadcast %889 : f32 to vector<1x32xf32>
    %904 = arith.mulf %903, %902 : vector<1x32xf32>
    %905 = arith.subf %700, %904 : vector<1x32xf32>
    %cst_498 = arith.constant 1.000000e+00 : f32
    %906 = vector.broadcast %cst_498 : f32 to vector<16x32xf32>
    %907 = arith.addf %874, %906 : vector<16x32xf32>
    %cst_499 = arith.constant 5.000000e-01 : f32
    %908 = vector.broadcast %cst_499 : f32 to vector<16x32xf32>
    %909 = arith.mulf %908, %907 : vector<16x32xf32>
    %910 = vector.broadcast %902 : vector<1x32xf32> to vector<16x32xf32>
    %911 = arith.mulf %884, %910 : vector<16x32xf32>
    %912 = vector.broadcast %905 : vector<1x32xf32> to vector<16x32xf32>
    %913 = arith.addf %911, %912 : vector<16x32xf32>
    %914 = math.tanh %913 : vector<16x32xf32>
    %915 = arith.mulf %909, %914 : vector<16x32xf32>
    %916 = vector.extract_strided_slice %7 {offsets = [32, 0], sizes = [16, 32], strides = [1, 1]} : vector<48x32xf32> to vector<16x32xf32>
    %c0_500 = arith.constant 0 : index
    %c0_501 = arith.constant 0 : index
    %c0_502 = arith.constant 0 : index
    %917 = vector.load %arg5[%c0_500, %c0_501, %c0_502] : memref<4x1x32xf32, #tpu.memory_space<vmem>>, vector<1x1x32xf32>
    %918 = vector.shape_cast %917 : vector<1x1x32xf32> to vector<1x32xf32>
    %c0_503 = arith.constant 0 : index
    %c0_504 = arith.constant 0 : index
    %c0_505 = arith.constant 0 : index
    %919 = vector.load %arg6[%c0_503, %c0_504, %c0_505] : memref<4x32x128xbf16, #tpu.memory_space<vmem>>, vector<1x32x128xbf16>
    %920 = vector.shape_cast %919 : vector<1x32x128xbf16> to vector<32x128xbf16>
    %c0_506 = arith.constant 0 : index
    %c0_507 = arith.constant 0 : index
    %c0_508 = arith.constant 0 : index
    %921 = vector.load %arg7[%c0_506, %c0_507, %c0_508] : memref<4x1x128xf32, #tpu.memory_space<vmem>>, vector<1x1x128xf32>
    %922 = vector.shape_cast %921 : vector<1x1x128xf32> to vector<1x128xf32>
    %c0_509 = arith.constant 0 : index
    %c0_510 = arith.constant 0 : index
    %c0_511 = arith.constant 0 : index
    %923 = vector.load %arg8[%c0_509, %c0_510, %c0_511] : memref<4x1x32xf32, #tpu.memory_space<vmem>>, vector<1x1x32xf32>
    %924 = vector.shape_cast %923 : vector<1x1x32xf32> to vector<1x32xf32>
    %c0_512 = arith.constant 0 : index
    %c0_513 = arith.constant 0 : index
    %c0_514 = arith.constant 0 : index
    %925 = vector.load %arg9[%c0_512, %c0_513, %c0_514] : memref<4x1x32xf32, #tpu.memory_space<vmem>>, vector<1x1x32xf32>
    %926 = vector.shape_cast %925 : vector<1x1x32xf32> to vector<1x32xf32>
    %927 = arith.addf %916, %689 : vector<16x32xf32>
    %c0_515 = arith.constant 0 : index
    %c0_516 = arith.constant 0 : index
    %c0_517 = arith.constant 0 : index
    %c0_518 = arith.constant 0 : index
    %928 = vector.load %arg4[%c0_515, %c0_516, %c0_517, %c0_518] : memref<4x16x16x32xf32, #tpu.memory_space<vmem>>, vector<1x1x16x32xf32>
    %929 = vector.shape_cast %928 : vector<1x1x16x32xf32> to vector<16x32xf32>
    %930 = arith.mulf %927, %929 : vector<16x32xf32>
    %c15_i32_519 = arith.constant 15 : i32
    %931 = tpu.dynamic_rotate %927 by %c15_i32_519 dim 0 : vector<16x32xf32>, i32 -> vector<16x32xf32>
    %c0_520 = arith.constant 0 : index
    %c1_521 = arith.constant 1 : index
    %c0_522 = arith.constant 0 : index
    %c0_523 = arith.constant 0 : index
    %932 = vector.load %arg4[%c0_520, %c1_521, %c0_522, %c0_523] : memref<4x16x16x32xf32, #tpu.memory_space<vmem>>, vector<1x1x16x32xf32>
    %933 = vector.shape_cast %932 : vector<1x1x16x32xf32> to vector<16x32xf32>
    %934 = arith.mulf %931, %933 : vector<16x32xf32>
    %c14_i32_524 = arith.constant 14 : i32
    %935 = tpu.dynamic_rotate %927 by %c14_i32_524 dim 0 : vector<16x32xf32>, i32 -> vector<16x32xf32>
    %c0_525 = arith.constant 0 : index
    %c2_526 = arith.constant 2 : index
    %c0_527 = arith.constant 0 : index
    %c0_528 = arith.constant 0 : index
    %936 = vector.load %arg4[%c0_525, %c2_526, %c0_527, %c0_528] : memref<4x16x16x32xf32, #tpu.memory_space<vmem>>, vector<1x1x16x32xf32>
    %937 = vector.shape_cast %936 : vector<1x1x16x32xf32> to vector<16x32xf32>
    %938 = arith.mulf %935, %937 : vector<16x32xf32>
    %c13_i32_529 = arith.constant 13 : i32
    %939 = tpu.dynamic_rotate %927 by %c13_i32_529 dim 0 : vector<16x32xf32>, i32 -> vector<16x32xf32>
    %c0_530 = arith.constant 0 : index
    %c3_531 = arith.constant 3 : index
    %c0_532 = arith.constant 0 : index
    %c0_533 = arith.constant 0 : index
    %940 = vector.load %arg4[%c0_530, %c3_531, %c0_532, %c0_533] : memref<4x16x16x32xf32, #tpu.memory_space<vmem>>, vector<1x1x16x32xf32>
    %941 = vector.shape_cast %940 : vector<1x1x16x32xf32> to vector<16x32xf32>
    %942 = arith.mulf %939, %941 : vector<16x32xf32>
    %c12_i32_534 = arith.constant 12 : i32
    %943 = tpu.dynamic_rotate %927 by %c12_i32_534 dim 0 : vector<16x32xf32>, i32 -> vector<16x32xf32>
    %c0_535 = arith.constant 0 : index
    %c4_536 = arith.constant 4 : index
    %c0_537 = arith.constant 0 : index
    %c0_538 = arith.constant 0 : index
    %944 = vector.load %arg4[%c0_535, %c4_536, %c0_537, %c0_538] : memref<4x16x16x32xf32, #tpu.memory_space<vmem>>, vector<1x1x16x32xf32>
    %945 = vector.shape_cast %944 : vector<1x1x16x32xf32> to vector<16x32xf32>
    %946 = arith.mulf %943, %945 : vector<16x32xf32>
    %947 = arith.addf %930, %946 : vector<16x32xf32>
    %c11_i32_539 = arith.constant 11 : i32
    %948 = tpu.dynamic_rotate %927 by %c11_i32_539 dim 0 : vector<16x32xf32>, i32 -> vector<16x32xf32>
    %c0_540 = arith.constant 0 : index
    %c5_541 = arith.constant 5 : index
    %c0_542 = arith.constant 0 : index
    %c0_543 = arith.constant 0 : index
    %949 = vector.load %arg4[%c0_540, %c5_541, %c0_542, %c0_543] : memref<4x16x16x32xf32, #tpu.memory_space<vmem>>, vector<1x1x16x32xf32>
    %950 = vector.shape_cast %949 : vector<1x1x16x32xf32> to vector<16x32xf32>
    %951 = arith.mulf %948, %950 : vector<16x32xf32>
    %952 = arith.addf %934, %951 : vector<16x32xf32>
    %c10_i32_544 = arith.constant 10 : i32
    %953 = tpu.dynamic_rotate %927 by %c10_i32_544 dim 0 : vector<16x32xf32>, i32 -> vector<16x32xf32>
    %c0_545 = arith.constant 0 : index
    %c6_546 = arith.constant 6 : index
    %c0_547 = arith.constant 0 : index
    %c0_548 = arith.constant 0 : index
    %954 = vector.load %arg4[%c0_545, %c6_546, %c0_547, %c0_548] : memref<4x16x16x32xf32, #tpu.memory_space<vmem>>, vector<1x1x16x32xf32>
    %955 = vector.shape_cast %954 : vector<1x1x16x32xf32> to vector<16x32xf32>
    %956 = arith.mulf %953, %955 : vector<16x32xf32>
    %957 = arith.addf %938, %956 : vector<16x32xf32>
    %c9_i32_549 = arith.constant 9 : i32
    %958 = tpu.dynamic_rotate %927 by %c9_i32_549 dim 0 : vector<16x32xf32>, i32 -> vector<16x32xf32>
    %c0_550 = arith.constant 0 : index
    %c7_551 = arith.constant 7 : index
    %c0_552 = arith.constant 0 : index
    %c0_553 = arith.constant 0 : index
    %959 = vector.load %arg4[%c0_550, %c7_551, %c0_552, %c0_553] : memref<4x16x16x32xf32, #tpu.memory_space<vmem>>, vector<1x1x16x32xf32>
    %960 = vector.shape_cast %959 : vector<1x1x16x32xf32> to vector<16x32xf32>
    %961 = arith.mulf %958, %960 : vector<16x32xf32>
    %962 = arith.addf %942, %961 : vector<16x32xf32>
    %c8_i32_554 = arith.constant 8 : i32
    %963 = tpu.dynamic_rotate %927 by %c8_i32_554 dim 0 : vector<16x32xf32>, i32 -> vector<16x32xf32>
    %c0_555 = arith.constant 0 : index
    %c8_556 = arith.constant 8 : index
    %c0_557 = arith.constant 0 : index
    %c0_558 = arith.constant 0 : index
    %964 = vector.load %arg4[%c0_555, %c8_556, %c0_557, %c0_558] : memref<4x16x16x32xf32, #tpu.memory_space<vmem>>, vector<1x1x16x32xf32>
    %965 = vector.shape_cast %964 : vector<1x1x16x32xf32> to vector<16x32xf32>
    %966 = arith.mulf %963, %965 : vector<16x32xf32>
    %967 = arith.addf %947, %966 : vector<16x32xf32>
    %c7_i32_559 = arith.constant 7 : i32
    %968 = tpu.dynamic_rotate %927 by %c7_i32_559 dim 0 : vector<16x32xf32>, i32 -> vector<16x32xf32>
    %c0_560 = arith.constant 0 : index
    %c9_561 = arith.constant 9 : index
    %c0_562 = arith.constant 0 : index
    %c0_563 = arith.constant 0 : index
    %969 = vector.load %arg4[%c0_560, %c9_561, %c0_562, %c0_563] : memref<4x16x16x32xf32, #tpu.memory_space<vmem>>, vector<1x1x16x32xf32>
    %970 = vector.shape_cast %969 : vector<1x1x16x32xf32> to vector<16x32xf32>
    %971 = arith.mulf %968, %970 : vector<16x32xf32>
    %972 = arith.addf %952, %971 : vector<16x32xf32>
    %c6_i32_564 = arith.constant 6 : i32
    %973 = tpu.dynamic_rotate %927 by %c6_i32_564 dim 0 : vector<16x32xf32>, i32 -> vector<16x32xf32>
    %c0_565 = arith.constant 0 : index
    %c10_566 = arith.constant 10 : index
    %c0_567 = arith.constant 0 : index
    %c0_568 = arith.constant 0 : index
    %974 = vector.load %arg4[%c0_565, %c10_566, %c0_567, %c0_568] : memref<4x16x16x32xf32, #tpu.memory_space<vmem>>, vector<1x1x16x32xf32>
    %975 = vector.shape_cast %974 : vector<1x1x16x32xf32> to vector<16x32xf32>
    %976 = arith.mulf %973, %975 : vector<16x32xf32>
    %977 = arith.addf %957, %976 : vector<16x32xf32>
    %c5_i32_569 = arith.constant 5 : i32
    %978 = tpu.dynamic_rotate %927 by %c5_i32_569 dim 0 : vector<16x32xf32>, i32 -> vector<16x32xf32>
    %c0_570 = arith.constant 0 : index
    %c11_571 = arith.constant 11 : index
    %c0_572 = arith.constant 0 : index
    %c0_573 = arith.constant 0 : index
    %979 = vector.load %arg4[%c0_570, %c11_571, %c0_572, %c0_573] : memref<4x16x16x32xf32, #tpu.memory_space<vmem>>, vector<1x1x16x32xf32>
    %980 = vector.shape_cast %979 : vector<1x1x16x32xf32> to vector<16x32xf32>
    %981 = arith.mulf %978, %980 : vector<16x32xf32>
    %982 = arith.addf %962, %981 : vector<16x32xf32>
    %c4_i32_574 = arith.constant 4 : i32
    %983 = tpu.dynamic_rotate %927 by %c4_i32_574 dim 0 : vector<16x32xf32>, i32 -> vector<16x32xf32>
    %c0_575 = arith.constant 0 : index
    %c12_576 = arith.constant 12 : index
    %c0_577 = arith.constant 0 : index
    %c0_578 = arith.constant 0 : index
    %984 = vector.load %arg4[%c0_575, %c12_576, %c0_577, %c0_578] : memref<4x16x16x32xf32, #tpu.memory_space<vmem>>, vector<1x1x16x32xf32>
    %985 = vector.shape_cast %984 : vector<1x1x16x32xf32> to vector<16x32xf32>
    %986 = arith.mulf %983, %985 : vector<16x32xf32>
    %987 = arith.addf %967, %986 : vector<16x32xf32>
    %c3_i32_579 = arith.constant 3 : i32
    %988 = tpu.dynamic_rotate %927 by %c3_i32_579 dim 0 : vector<16x32xf32>, i32 -> vector<16x32xf32>
    %c0_580 = arith.constant 0 : index
    %c13_581 = arith.constant 13 : index
    %c0_582 = arith.constant 0 : index
    %c0_583 = arith.constant 0 : index
    %989 = vector.load %arg4[%c0_580, %c13_581, %c0_582, %c0_583] : memref<4x16x16x32xf32, #tpu.memory_space<vmem>>, vector<1x1x16x32xf32>
    %990 = vector.shape_cast %989 : vector<1x1x16x32xf32> to vector<16x32xf32>
    %991 = arith.mulf %988, %990 : vector<16x32xf32>
    %992 = arith.addf %972, %991 : vector<16x32xf32>
    %c2_i32_584 = arith.constant 2 : i32
    %993 = tpu.dynamic_rotate %927 by %c2_i32_584 dim 0 : vector<16x32xf32>, i32 -> vector<16x32xf32>
    %c0_585 = arith.constant 0 : index
    %c14_586 = arith.constant 14 : index
    %c0_587 = arith.constant 0 : index
    %c0_588 = arith.constant 0 : index
    %994 = vector.load %arg4[%c0_585, %c14_586, %c0_587, %c0_588] : memref<4x16x16x32xf32, #tpu.memory_space<vmem>>, vector<1x1x16x32xf32>
    %995 = vector.shape_cast %994 : vector<1x1x16x32xf32> to vector<16x32xf32>
    %996 = arith.mulf %993, %995 : vector<16x32xf32>
    %997 = arith.addf %977, %996 : vector<16x32xf32>
    %c1_i32_589 = arith.constant 1 : i32
    %998 = tpu.dynamic_rotate %927 by %c1_i32_589 dim 0 : vector<16x32xf32>, i32 -> vector<16x32xf32>
    %c0_590 = arith.constant 0 : index
    %c15_591 = arith.constant 15 : index
    %c0_592 = arith.constant 0 : index
    %c0_593 = arith.constant 0 : index
    %999 = vector.load %arg4[%c0_590, %c15_591, %c0_592, %c0_593] : memref<4x16x16x32xf32, #tpu.memory_space<vmem>>, vector<1x1x16x32xf32>
    %1000 = vector.shape_cast %999 : vector<1x1x16x32xf32> to vector<16x32xf32>
    %1001 = arith.mulf %998, %1000 : vector<16x32xf32>
    %1002 = arith.addf %982, %1001 : vector<16x32xf32>
    %1003 = arith.addf %987, %992 : vector<16x32xf32>
    %1004 = arith.addf %1003, %997 : vector<16x32xf32>
    %1005 = arith.addf %1004, %1002 : vector<16x32xf32>
    %1006 = vector.broadcast %918 : vector<1x32xf32> to vector<16x32xf32>
    %1007 = arith.addf %1005, %1006 : vector<16x32xf32>
    %1008 = vector.extract_strided_slice %1007 {offsets = [0, 0], sizes = [16, 8], strides = [1, 1]} : vector<16x32xf32> to vector<16x8xf32>
    %1009 = vector.shape_cast %1008 : vector<16x8xf32> to vector<1x16x8xf32>
    %cst_594 = arith.constant dense<0.000000e+00> : vector<1xf32>
    %1010 = vector.multi_reduction <add>, %1009, %cst_594 [1, 2] : vector<1x16x8xf32> to vector<1xf32>
    %1011 = vector.shape_cast %1010 : vector<1xf32> to vector<1x1x1xf32>
    %1012 = vector.extract %1011[0, 0, 0] : f32 from vector<1x1x1xf32>
    %cst_595 = arith.constant 7.812500e-03 : f32
    %1013 = arith.mulf %1012, %cst_595 : f32
    %1014 = arith.mulf %1008, %1008 : vector<16x8xf32>
    %1015 = vector.shape_cast %1014 : vector<16x8xf32> to vector<1x16x8xf32>
    %cst_596 = arith.constant dense<0.000000e+00> : vector<1xf32>
    %1016 = vector.multi_reduction <add>, %1015, %cst_596 [1, 2] : vector<1x16x8xf32> to vector<1xf32>
    %1017 = vector.shape_cast %1016 : vector<1xf32> to vector<1x1x1xf32>
    %1018 = vector.extract %1017[0, 0, 0] : f32 from vector<1x1x1xf32>
    %cst_597 = arith.constant 7.812500e-03 : f32
    %1019 = arith.mulf %1018, %cst_597 : f32
    %1020 = arith.mulf %1013, %1013 : f32
    %1021 = arith.subf %1019, %1020 : f32
    %cst_598 = arith.constant 0.000000e+00 : f32
    %1022 = arith.maximumf %1021, %cst_598 : f32
    %1023 = vector.broadcast %1013 : f32 to vector<16x8xf32>
    %1024 = arith.subf %1008, %1023 : vector<16x8xf32>
    %cst_599 = arith.constant 9.99999974E-6 : f32
    %1025 = arith.addf %1022, %cst_599 : f32
    %1026 = math.rsqrt %1025 : f32
    %1027 = vector.broadcast %1026 : f32 to vector<16x8xf32>
    %1028 = arith.mulf %1024, %1027 : vector<16x8xf32>
    %1029 = vector.extract_strided_slice %1007 {offsets = [0, 8], sizes = [16, 8], strides = [1, 1]} : vector<16x32xf32> to vector<16x8xf32>
    %1030 = vector.shape_cast %1029 : vector<16x8xf32> to vector<1x16x8xf32>
    %cst_600 = arith.constant dense<0.000000e+00> : vector<1xf32>
    %1031 = vector.multi_reduction <add>, %1030, %cst_600 [1, 2] : vector<1x16x8xf32> to vector<1xf32>
    %1032 = vector.shape_cast %1031 : vector<1xf32> to vector<1x1x1xf32>
    %1033 = vector.extract %1032[0, 0, 0] : f32 from vector<1x1x1xf32>
    %cst_601 = arith.constant 7.812500e-03 : f32
    %1034 = arith.mulf %1033, %cst_601 : f32
    %1035 = arith.mulf %1029, %1029 : vector<16x8xf32>
    %1036 = vector.shape_cast %1035 : vector<16x8xf32> to vector<1x16x8xf32>
    %cst_602 = arith.constant dense<0.000000e+00> : vector<1xf32>
    %1037 = vector.multi_reduction <add>, %1036, %cst_602 [1, 2] : vector<1x16x8xf32> to vector<1xf32>
    %1038 = vector.shape_cast %1037 : vector<1xf32> to vector<1x1x1xf32>
    %1039 = vector.extract %1038[0, 0, 0] : f32 from vector<1x1x1xf32>
    %cst_603 = arith.constant 7.812500e-03 : f32
    %1040 = arith.mulf %1039, %cst_603 : f32
    %1041 = arith.mulf %1034, %1034 : f32
    %1042 = arith.subf %1040, %1041 : f32
    %cst_604 = arith.constant 0.000000e+00 : f32
    %1043 = arith.maximumf %1042, %cst_604 : f32
    %1044 = vector.broadcast %1034 : f32 to vector<16x8xf32>
    %1045 = arith.subf %1029, %1044 : vector<16x8xf32>
    %cst_605 = arith.constant 9.99999974E-6 : f32
    %1046 = arith.addf %1043, %cst_605 : f32
    %1047 = math.rsqrt %1046 : f32
    %1048 = vector.broadcast %1047 : f32 to vector<16x8xf32>
    %1049 = arith.mulf %1045, %1048 : vector<16x8xf32>
    %1050 = vector.extract_strided_slice %1007 {offsets = [0, 16], sizes = [16, 8], strides = [1, 1]} : vector<16x32xf32> to vector<16x8xf32>
    %1051 = vector.shape_cast %1050 : vector<16x8xf32> to vector<1x16x8xf32>
    %cst_606 = arith.constant dense<0.000000e+00> : vector<1xf32>
    %1052 = vector.multi_reduction <add>, %1051, %cst_606 [1, 2] : vector<1x16x8xf32> to vector<1xf32>
    %1053 = vector.shape_cast %1052 : vector<1xf32> to vector<1x1x1xf32>
    %1054 = vector.extract %1053[0, 0, 0] : f32 from vector<1x1x1xf32>
    %cst_607 = arith.constant 7.812500e-03 : f32
    %1055 = arith.mulf %1054, %cst_607 : f32
    %1056 = arith.mulf %1050, %1050 : vector<16x8xf32>
    %1057 = vector.shape_cast %1056 : vector<16x8xf32> to vector<1x16x8xf32>
    %cst_608 = arith.constant dense<0.000000e+00> : vector<1xf32>
    %1058 = vector.multi_reduction <add>, %1057, %cst_608 [1, 2] : vector<1x16x8xf32> to vector<1xf32>
    %1059 = vector.shape_cast %1058 : vector<1xf32> to vector<1x1x1xf32>
    %1060 = vector.extract %1059[0, 0, 0] : f32 from vector<1x1x1xf32>
    %cst_609 = arith.constant 7.812500e-03 : f32
    %1061 = arith.mulf %1060, %cst_609 : f32
    %1062 = arith.mulf %1055, %1055 : f32
    %1063 = arith.subf %1061, %1062 : f32
    %cst_610 = arith.constant 0.000000e+00 : f32
    %1064 = arith.maximumf %1063, %cst_610 : f32
    %1065 = vector.broadcast %1055 : f32 to vector<16x8xf32>
    %1066 = arith.subf %1050, %1065 : vector<16x8xf32>
    %cst_611 = arith.constant 9.99999974E-6 : f32
    %1067 = arith.addf %1064, %cst_611 : f32
    %1068 = math.rsqrt %1067 : f32
    %1069 = vector.broadcast %1068 : f32 to vector<16x8xf32>
    %1070 = arith.mulf %1066, %1069 : vector<16x8xf32>
    %1071 = vector.extract_strided_slice %1007 {offsets = [0, 24], sizes = [16, 8], strides = [1, 1]} : vector<16x32xf32> to vector<16x8xf32>
    %1072 = vector.shape_cast %1071 : vector<16x8xf32> to vector<1x16x8xf32>
    %cst_612 = arith.constant dense<0.000000e+00> : vector<1xf32>
    %1073 = vector.multi_reduction <add>, %1072, %cst_612 [1, 2] : vector<1x16x8xf32> to vector<1xf32>
    %1074 = vector.shape_cast %1073 : vector<1xf32> to vector<1x1x1xf32>
    %1075 = vector.extract %1074[0, 0, 0] : f32 from vector<1x1x1xf32>
    %cst_613 = arith.constant 7.812500e-03 : f32
    %1076 = arith.mulf %1075, %cst_613 : f32
    %1077 = arith.mulf %1071, %1071 : vector<16x8xf32>
    %1078 = vector.shape_cast %1077 : vector<16x8xf32> to vector<1x16x8xf32>
    %cst_614 = arith.constant dense<0.000000e+00> : vector<1xf32>
    %1079 = vector.multi_reduction <add>, %1078, %cst_614 [1, 2] : vector<1x16x8xf32> to vector<1xf32>
    %1080 = vector.shape_cast %1079 : vector<1xf32> to vector<1x1x1xf32>
    %1081 = vector.extract %1080[0, 0, 0] : f32 from vector<1x1x1xf32>
    %cst_615 = arith.constant 7.812500e-03 : f32
    %1082 = arith.mulf %1081, %cst_615 : f32
    %1083 = arith.mulf %1076, %1076 : f32
    %1084 = arith.subf %1082, %1083 : f32
    %cst_616 = arith.constant 0.000000e+00 : f32
    %1085 = arith.maximumf %1084, %cst_616 : f32
    %1086 = vector.broadcast %1076 : f32 to vector<16x8xf32>
    %1087 = arith.subf %1071, %1086 : vector<16x8xf32>
    %cst_617 = arith.constant 9.99999974E-6 : f32
    %1088 = arith.addf %1085, %cst_617 : f32
    %1089 = math.rsqrt %1088 : f32
    %1090 = vector.broadcast %1089 : f32 to vector<16x8xf32>
    %1091 = arith.mulf %1087, %1090 : vector<16x8xf32>
    %1092 = tpu.concatenate %1028, %1049, %1070, %1091 in 1 : vector<16x8xf32>, vector<16x8xf32>, vector<16x8xf32>, vector<16x8xf32> -> vector<16x32xf32>
    %1093 = arith.truncf %1092 : vector<16x32xf32> to vector<16x32xbf16>
    %cst_618 = arith.constant dense<0.000000e+00> : vector<16x128xf32>
    %1094 = tpu.matmul %1093, %920, %cst_618 {dimension_numbers = #tpu.dot_dimension_numbers<[1], [0], [0], [1], [0, 0, 1, 1], [], []>} : vector<16x32xbf16>, vector<32x128xbf16>, vector<16x128xf32> -> vector<16x128xf32>
    %1095 = vector.broadcast %922 : vector<1x128xf32> to vector<16x128xf32>
    %1096 = arith.addf %1094, %1095 : vector<16x128xf32>
    %1097 = math.tanh %1096 : vector<16x128xf32>
    %1098 = vector.extract_strided_slice %1097 {offsets = [0, 0], sizes = [16, 32], strides = [1, 1]} : vector<16x128xf32> to vector<16x32xf32>
    %1099 = vector.extract_strided_slice %1097 {offsets = [0, 32], sizes = [16, 32], strides = [1, 1]} : vector<16x128xf32> to vector<16x32xf32>
    %1100 = vector.extract_strided_slice %1097 {offsets = [0, 64], sizes = [16, 32], strides = [1, 1]} : vector<16x128xf32> to vector<16x32xf32>
    %1101 = vector.extract_strided_slice %1097 {offsets = [0, 96], sizes = [16, 32], strides = [1, 1]} : vector<16x128xf32> to vector<16x32xf32>
    %cst_619 = arith.constant 1.000000e+00 : f32
    %1102 = vector.broadcast %cst_619 : f32 to vector<16x32xf32>
    %1103 = arith.addf %1099, %1102 : vector<16x32xf32>
    %1104 = arith.mulf %1103, %658 : vector<16x32xf32>
    %cst_620 = arith.constant 1.000000e+00 : f32
    %1105 = vector.broadcast %cst_620 : f32 to vector<16x32xf32>
    %1106 = arith.addf %1098, %1105 : vector<16x32xf32>
    %1107 = arith.mulf %1106, %1101 : vector<16x32xf32>
    %1108 = arith.addf %1104, %1107 : vector<16x32xf32>
    %cst_621 = arith.constant 5.000000e-01 : f32
    %1109 = vector.broadcast %cst_621 : f32 to vector<16x32xf32>
    %1110 = arith.mulf %1109, %1108 : vector<16x32xf32>
    %1111 = vector.shape_cast %1110 : vector<16x32xf32> to vector<1x16x32xf32>
    %cst_622 = arith.constant dense<0.000000e+00> : vector<1xf32>
    %1112 = vector.multi_reduction <add>, %1111, %cst_622 [1, 2] : vector<1x16x32xf32> to vector<1xf32>
    %1113 = vector.shape_cast %1112 : vector<1xf32> to vector<1x1x1xf32>
    %1114 = vector.extract %1113[0, 0, 0] : f32 from vector<1x1x1xf32>
    %cst_623 = arith.constant 0.001953125 : f32
    %1115 = arith.mulf %1114, %cst_623 : f32
    %1116 = arith.mulf %1110, %1110 : vector<16x32xf32>
    %1117 = vector.shape_cast %1116 : vector<16x32xf32> to vector<1x16x32xf32>
    %cst_624 = arith.constant dense<0.000000e+00> : vector<1xf32>
    %1118 = vector.multi_reduction <add>, %1117, %cst_624 [1, 2] : vector<1x16x32xf32> to vector<1xf32>
    %1119 = vector.shape_cast %1118 : vector<1xf32> to vector<1x1x1xf32>
    %1120 = vector.extract %1119[0, 0, 0] : f32 from vector<1x1x1xf32>
    %cst_625 = arith.constant 0.001953125 : f32
    %1121 = arith.mulf %1120, %cst_625 : f32
    %1122 = arith.mulf %1115, %1115 : f32
    %1123 = arith.subf %1121, %1122 : f32
    %cst_626 = arith.constant 0.000000e+00 : f32
    %1124 = arith.maximumf %1123, %cst_626 : f32
    %cst_627 = arith.constant 9.99999974E-6 : f32
    %1125 = arith.addf %1124, %cst_627 : f32
    %1126 = math.rsqrt %1125 : f32
    %1127 = vector.broadcast %1126 : f32 to vector<1x32xf32>
    %1128 = arith.mulf %924, %1127 : vector<1x32xf32>
    %1129 = vector.broadcast %1115 : f32 to vector<1x32xf32>
    %1130 = arith.mulf %1129, %1128 : vector<1x32xf32>
    %1131 = arith.subf %926, %1130 : vector<1x32xf32>
    %cst_628 = arith.constant 1.000000e+00 : f32
    %1132 = vector.broadcast %cst_628 : f32 to vector<16x32xf32>
    %1133 = arith.addf %1100, %1132 : vector<16x32xf32>
    %cst_629 = arith.constant 5.000000e-01 : f32
    %1134 = vector.broadcast %cst_629 : f32 to vector<16x32xf32>
    %1135 = arith.mulf %1134, %1133 : vector<16x32xf32>
    %1136 = vector.broadcast %1128 : vector<1x32xf32> to vector<16x32xf32>
    %1137 = arith.mulf %1110, %1136 : vector<16x32xf32>
    %1138 = vector.broadcast %1131 : vector<1x32xf32> to vector<16x32xf32>
    %1139 = arith.addf %1137, %1138 : vector<16x32xf32>
    %1140 = math.tanh %1139 : vector<16x32xf32>
    %1141 = arith.mulf %1135, %1140 : vector<16x32xf32>
    %1142 = arith.addf %916, %1141 : vector<16x32xf32>
    %c1_630 = arith.constant 1 : index
    %c0_631 = arith.constant 0 : index
    %c0_632 = arith.constant 0 : index
    %1143 = vector.load %arg5[%c1_630, %c0_631, %c0_632] : memref<4x1x32xf32, #tpu.memory_space<vmem>>, vector<1x1x32xf32>
    %1144 = vector.shape_cast %1143 : vector<1x1x32xf32> to vector<1x32xf32>
    %c1_633 = arith.constant 1 : index
    %c0_634 = arith.constant 0 : index
    %c0_635 = arith.constant 0 : index
    %1145 = vector.load %arg6[%c1_633, %c0_634, %c0_635] : memref<4x32x128xbf16, #tpu.memory_space<vmem>>, vector<1x32x128xbf16>
    %1146 = vector.shape_cast %1145 : vector<1x32x128xbf16> to vector<32x128xbf16>
    %c1_636 = arith.constant 1 : index
    %c0_637 = arith.constant 0 : index
    %c0_638 = arith.constant 0 : index
    %1147 = vector.load %arg7[%c1_636, %c0_637, %c0_638] : memref<4x1x128xf32, #tpu.memory_space<vmem>>, vector<1x1x128xf32>
    %1148 = vector.shape_cast %1147 : vector<1x1x128xf32> to vector<1x128xf32>
    %c1_639 = arith.constant 1 : index
    %c0_640 = arith.constant 0 : index
    %c0_641 = arith.constant 0 : index
    %1149 = vector.load %arg8[%c1_639, %c0_640, %c0_641] : memref<4x1x32xf32, #tpu.memory_space<vmem>>, vector<1x1x32xf32>
    %1150 = vector.shape_cast %1149 : vector<1x1x32xf32> to vector<1x32xf32>
    %c1_642 = arith.constant 1 : index
    %c0_643 = arith.constant 0 : index
    %c0_644 = arith.constant 0 : index
    %1151 = vector.load %arg9[%c1_642, %c0_643, %c0_644] : memref<4x1x32xf32, #tpu.memory_space<vmem>>, vector<1x1x32xf32>
    %1152 = vector.shape_cast %1151 : vector<1x1x32xf32> to vector<1x32xf32>
    %1153 = arith.addf %1142, %915 : vector<16x32xf32>
    %c1_645 = arith.constant 1 : index
    %c0_646 = arith.constant 0 : index
    %c0_647 = arith.constant 0 : index
    %c0_648 = arith.constant 0 : index
    %1154 = vector.load %arg4[%c1_645, %c0_646, %c0_647, %c0_648] : memref<4x16x16x32xf32, #tpu.memory_space<vmem>>, vector<1x1x16x32xf32>
    %1155 = vector.shape_cast %1154 : vector<1x1x16x32xf32> to vector<16x32xf32>
    %1156 = arith.mulf %1153, %1155 : vector<16x32xf32>
    %c15_i32_649 = arith.constant 15 : i32
    %1157 = tpu.dynamic_rotate %1153 by %c15_i32_649 dim 0 : vector<16x32xf32>, i32 -> vector<16x32xf32>
    %c1_650 = arith.constant 1 : index
    %c1_651 = arith.constant 1 : index
    %c0_652 = arith.constant 0 : index
    %c0_653 = arith.constant 0 : index
    %1158 = vector.load %arg4[%c1_650, %c1_651, %c0_652, %c0_653] : memref<4x16x16x32xf32, #tpu.memory_space<vmem>>, vector<1x1x16x32xf32>
    %1159 = vector.shape_cast %1158 : vector<1x1x16x32xf32> to vector<16x32xf32>
    %1160 = arith.mulf %1157, %1159 : vector<16x32xf32>
    %c14_i32_654 = arith.constant 14 : i32
    %1161 = tpu.dynamic_rotate %1153 by %c14_i32_654 dim 0 : vector<16x32xf32>, i32 -> vector<16x32xf32>
    %c1_655 = arith.constant 1 : index
    %c2_656 = arith.constant 2 : index
    %c0_657 = arith.constant 0 : index
    %c0_658 = arith.constant 0 : index
    %1162 = vector.load %arg4[%c1_655, %c2_656, %c0_657, %c0_658] : memref<4x16x16x32xf32, #tpu.memory_space<vmem>>, vector<1x1x16x32xf32>
    %1163 = vector.shape_cast %1162 : vector<1x1x16x32xf32> to vector<16x32xf32>
    %1164 = arith.mulf %1161, %1163 : vector<16x32xf32>
    %c13_i32_659 = arith.constant 13 : i32
    %1165 = tpu.dynamic_rotate %1153 by %c13_i32_659 dim 0 : vector<16x32xf32>, i32 -> vector<16x32xf32>
    %c1_660 = arith.constant 1 : index
    %c3_661 = arith.constant 3 : index
    %c0_662 = arith.constant 0 : index
    %c0_663 = arith.constant 0 : index
    %1166 = vector.load %arg4[%c1_660, %c3_661, %c0_662, %c0_663] : memref<4x16x16x32xf32, #tpu.memory_space<vmem>>, vector<1x1x16x32xf32>
    %1167 = vector.shape_cast %1166 : vector<1x1x16x32xf32> to vector<16x32xf32>
    %1168 = arith.mulf %1165, %1167 : vector<16x32xf32>
    %c12_i32_664 = arith.constant 12 : i32
    %1169 = tpu.dynamic_rotate %1153 by %c12_i32_664 dim 0 : vector<16x32xf32>, i32 -> vector<16x32xf32>
    %c1_665 = arith.constant 1 : index
    %c4_666 = arith.constant 4 : index
    %c0_667 = arith.constant 0 : index
    %c0_668 = arith.constant 0 : index
    %1170 = vector.load %arg4[%c1_665, %c4_666, %c0_667, %c0_668] : memref<4x16x16x32xf32, #tpu.memory_space<vmem>>, vector<1x1x16x32xf32>
    %1171 = vector.shape_cast %1170 : vector<1x1x16x32xf32> to vector<16x32xf32>
    %1172 = arith.mulf %1169, %1171 : vector<16x32xf32>
    %1173 = arith.addf %1156, %1172 : vector<16x32xf32>
    %c11_i32_669 = arith.constant 11 : i32
    %1174 = tpu.dynamic_rotate %1153 by %c11_i32_669 dim 0 : vector<16x32xf32>, i32 -> vector<16x32xf32>
    %c1_670 = arith.constant 1 : index
    %c5_671 = arith.constant 5 : index
    %c0_672 = arith.constant 0 : index
    %c0_673 = arith.constant 0 : index
    %1175 = vector.load %arg4[%c1_670, %c5_671, %c0_672, %c0_673] : memref<4x16x16x32xf32, #tpu.memory_space<vmem>>, vector<1x1x16x32xf32>
    %1176 = vector.shape_cast %1175 : vector<1x1x16x32xf32> to vector<16x32xf32>
    %1177 = arith.mulf %1174, %1176 : vector<16x32xf32>
    %1178 = arith.addf %1160, %1177 : vector<16x32xf32>
    %c10_i32_674 = arith.constant 10 : i32
    %1179 = tpu.dynamic_rotate %1153 by %c10_i32_674 dim 0 : vector<16x32xf32>, i32 -> vector<16x32xf32>
    %c1_675 = arith.constant 1 : index
    %c6_676 = arith.constant 6 : index
    %c0_677 = arith.constant 0 : index
    %c0_678 = arith.constant 0 : index
    %1180 = vector.load %arg4[%c1_675, %c6_676, %c0_677, %c0_678] : memref<4x16x16x32xf32, #tpu.memory_space<vmem>>, vector<1x1x16x32xf32>
    %1181 = vector.shape_cast %1180 : vector<1x1x16x32xf32> to vector<16x32xf32>
    %1182 = arith.mulf %1179, %1181 : vector<16x32xf32>
    %1183 = arith.addf %1164, %1182 : vector<16x32xf32>
    %c9_i32_679 = arith.constant 9 : i32
    %1184 = tpu.dynamic_rotate %1153 by %c9_i32_679 dim 0 : vector<16x32xf32>, i32 -> vector<16x32xf32>
    %c1_680 = arith.constant 1 : index
    %c7_681 = arith.constant 7 : index
    %c0_682 = arith.constant 0 : index
    %c0_683 = arith.constant 0 : index
    %1185 = vector.load %arg4[%c1_680, %c7_681, %c0_682, %c0_683] : memref<4x16x16x32xf32, #tpu.memory_space<vmem>>, vector<1x1x16x32xf32>
    %1186 = vector.shape_cast %1185 : vector<1x1x16x32xf32> to vector<16x32xf32>
    %1187 = arith.mulf %1184, %1186 : vector<16x32xf32>
    %1188 = arith.addf %1168, %1187 : vector<16x32xf32>
    %c8_i32_684 = arith.constant 8 : i32
    %1189 = tpu.dynamic_rotate %1153 by %c8_i32_684 dim 0 : vector<16x32xf32>, i32 -> vector<16x32xf32>
    %c1_685 = arith.constant 1 : index
    %c8_686 = arith.constant 8 : index
    %c0_687 = arith.constant 0 : index
    %c0_688 = arith.constant 0 : index
    %1190 = vector.load %arg4[%c1_685, %c8_686, %c0_687, %c0_688] : memref<4x16x16x32xf32, #tpu.memory_space<vmem>>, vector<1x1x16x32xf32>
    %1191 = vector.shape_cast %1190 : vector<1x1x16x32xf32> to vector<16x32xf32>
    %1192 = arith.mulf %1189, %1191 : vector<16x32xf32>
    %1193 = arith.addf %1173, %1192 : vector<16x32xf32>
    %c7_i32_689 = arith.constant 7 : i32
    %1194 = tpu.dynamic_rotate %1153 by %c7_i32_689 dim 0 : vector<16x32xf32>, i32 -> vector<16x32xf32>
    %c1_690 = arith.constant 1 : index
    %c9_691 = arith.constant 9 : index
    %c0_692 = arith.constant 0 : index
    %c0_693 = arith.constant 0 : index
    %1195 = vector.load %arg4[%c1_690, %c9_691, %c0_692, %c0_693] : memref<4x16x16x32xf32, #tpu.memory_space<vmem>>, vector<1x1x16x32xf32>
    %1196 = vector.shape_cast %1195 : vector<1x1x16x32xf32> to vector<16x32xf32>
    %1197 = arith.mulf %1194, %1196 : vector<16x32xf32>
    %1198 = arith.addf %1178, %1197 : vector<16x32xf32>
    %c6_i32_694 = arith.constant 6 : i32
    %1199 = tpu.dynamic_rotate %1153 by %c6_i32_694 dim 0 : vector<16x32xf32>, i32 -> vector<16x32xf32>
    %c1_695 = arith.constant 1 : index
    %c10_696 = arith.constant 10 : index
    %c0_697 = arith.constant 0 : index
    %c0_698 = arith.constant 0 : index
    %1200 = vector.load %arg4[%c1_695, %c10_696, %c0_697, %c0_698] : memref<4x16x16x32xf32, #tpu.memory_space<vmem>>, vector<1x1x16x32xf32>
    %1201 = vector.shape_cast %1200 : vector<1x1x16x32xf32> to vector<16x32xf32>
    %1202 = arith.mulf %1199, %1201 : vector<16x32xf32>
    %1203 = arith.addf %1183, %1202 : vector<16x32xf32>
    %c5_i32_699 = arith.constant 5 : i32
    %1204 = tpu.dynamic_rotate %1153 by %c5_i32_699 dim 0 : vector<16x32xf32>, i32 -> vector<16x32xf32>
    %c1_700 = arith.constant 1 : index
    %c11_701 = arith.constant 11 : index
    %c0_702 = arith.constant 0 : index
    %c0_703 = arith.constant 0 : index
    %1205 = vector.load %arg4[%c1_700, %c11_701, %c0_702, %c0_703] : memref<4x16x16x32xf32, #tpu.memory_space<vmem>>, vector<1x1x16x32xf32>
    %1206 = vector.shape_cast %1205 : vector<1x1x16x32xf32> to vector<16x32xf32>
    %1207 = arith.mulf %1204, %1206 : vector<16x32xf32>
    %1208 = arith.addf %1188, %1207 : vector<16x32xf32>
    %c4_i32_704 = arith.constant 4 : i32
    %1209 = tpu.dynamic_rotate %1153 by %c4_i32_704 dim 0 : vector<16x32xf32>, i32 -> vector<16x32xf32>
    %c1_705 = arith.constant 1 : index
    %c12_706 = arith.constant 12 : index
    %c0_707 = arith.constant 0 : index
    %c0_708 = arith.constant 0 : index
    %1210 = vector.load %arg4[%c1_705, %c12_706, %c0_707, %c0_708] : memref<4x16x16x32xf32, #tpu.memory_space<vmem>>, vector<1x1x16x32xf32>
    %1211 = vector.shape_cast %1210 : vector<1x1x16x32xf32> to vector<16x32xf32>
    %1212 = arith.mulf %1209, %1211 : vector<16x32xf32>
    %1213 = arith.addf %1193, %1212 : vector<16x32xf32>
    %c3_i32_709 = arith.constant 3 : i32
    %1214 = tpu.dynamic_rotate %1153 by %c3_i32_709 dim 0 : vector<16x32xf32>, i32 -> vector<16x32xf32>
    %c1_710 = arith.constant 1 : index
    %c13_711 = arith.constant 13 : index
    %c0_712 = arith.constant 0 : index
    %c0_713 = arith.constant 0 : index
    %1215 = vector.load %arg4[%c1_710, %c13_711, %c0_712, %c0_713] : memref<4x16x16x32xf32, #tpu.memory_space<vmem>>, vector<1x1x16x32xf32>
    %1216 = vector.shape_cast %1215 : vector<1x1x16x32xf32> to vector<16x32xf32>
    %1217 = arith.mulf %1214, %1216 : vector<16x32xf32>
    %1218 = arith.addf %1198, %1217 : vector<16x32xf32>
    %c2_i32_714 = arith.constant 2 : i32
    %1219 = tpu.dynamic_rotate %1153 by %c2_i32_714 dim 0 : vector<16x32xf32>, i32 -> vector<16x32xf32>
    %c1_715 = arith.constant 1 : index
    %c14_716 = arith.constant 14 : index
    %c0_717 = arith.constant 0 : index
    %c0_718 = arith.constant 0 : index
    %1220 = vector.load %arg4[%c1_715, %c14_716, %c0_717, %c0_718] : memref<4x16x16x32xf32, #tpu.memory_space<vmem>>, vector<1x1x16x32xf32>
    %1221 = vector.shape_cast %1220 : vector<1x1x16x32xf32> to vector<16x32xf32>
    %1222 = arith.mulf %1219, %1221 : vector<16x32xf32>
    %1223 = arith.addf %1203, %1222 : vector<16x32xf32>
    %c1_i32_719 = arith.constant 1 : i32
    %1224 = tpu.dynamic_rotate %1153 by %c1_i32_719 dim 0 : vector<16x32xf32>, i32 -> vector<16x32xf32>
    %c1_720 = arith.constant 1 : index
    %c15_721 = arith.constant 15 : index
    %c0_722 = arith.constant 0 : index
    %c0_723 = arith.constant 0 : index
    %1225 = vector.load %arg4[%c1_720, %c15_721, %c0_722, %c0_723] : memref<4x16x16x32xf32, #tpu.memory_space<vmem>>, vector<1x1x16x32xf32>
    %1226 = vector.shape_cast %1225 : vector<1x1x16x32xf32> to vector<16x32xf32>
    %1227 = arith.mulf %1224, %1226 : vector<16x32xf32>
    %1228 = arith.addf %1208, %1227 : vector<16x32xf32>
    %1229 = arith.addf %1213, %1218 : vector<16x32xf32>
    %1230 = arith.addf %1229, %1223 : vector<16x32xf32>
    %1231 = arith.addf %1230, %1228 : vector<16x32xf32>
    %1232 = vector.broadcast %1144 : vector<1x32xf32> to vector<16x32xf32>
    %1233 = arith.addf %1231, %1232 : vector<16x32xf32>
    %1234 = vector.extract_strided_slice %1233 {offsets = [0, 0], sizes = [16, 8], strides = [1, 1]} : vector<16x32xf32> to vector<16x8xf32>
    %1235 = vector.shape_cast %1234 : vector<16x8xf32> to vector<1x16x8xf32>
    %cst_724 = arith.constant dense<0.000000e+00> : vector<1xf32>
    %1236 = vector.multi_reduction <add>, %1235, %cst_724 [1, 2] : vector<1x16x8xf32> to vector<1xf32>
    %1237 = vector.shape_cast %1236 : vector<1xf32> to vector<1x1x1xf32>
    %1238 = vector.extract %1237[0, 0, 0] : f32 from vector<1x1x1xf32>
    %cst_725 = arith.constant 7.812500e-03 : f32
    %1239 = arith.mulf %1238, %cst_725 : f32
    %1240 = arith.mulf %1234, %1234 : vector<16x8xf32>
    %1241 = vector.shape_cast %1240 : vector<16x8xf32> to vector<1x16x8xf32>
    %cst_726 = arith.constant dense<0.000000e+00> : vector<1xf32>
    %1242 = vector.multi_reduction <add>, %1241, %cst_726 [1, 2] : vector<1x16x8xf32> to vector<1xf32>
    %1243 = vector.shape_cast %1242 : vector<1xf32> to vector<1x1x1xf32>
    %1244 = vector.extract %1243[0, 0, 0] : f32 from vector<1x1x1xf32>
    %cst_727 = arith.constant 7.812500e-03 : f32
    %1245 = arith.mulf %1244, %cst_727 : f32
    %1246 = arith.mulf %1239, %1239 : f32
    %1247 = arith.subf %1245, %1246 : f32
    %cst_728 = arith.constant 0.000000e+00 : f32
    %1248 = arith.maximumf %1247, %cst_728 : f32
    %1249 = vector.broadcast %1239 : f32 to vector<16x8xf32>
    %1250 = arith.subf %1234, %1249 : vector<16x8xf32>
    %cst_729 = arith.constant 9.99999974E-6 : f32
    %1251 = arith.addf %1248, %cst_729 : f32
    %1252 = math.rsqrt %1251 : f32
    %1253 = vector.broadcast %1252 : f32 to vector<16x8xf32>
    %1254 = arith.mulf %1250, %1253 : vector<16x8xf32>
    %1255 = vector.extract_strided_slice %1233 {offsets = [0, 8], sizes = [16, 8], strides = [1, 1]} : vector<16x32xf32> to vector<16x8xf32>
    %1256 = vector.shape_cast %1255 : vector<16x8xf32> to vector<1x16x8xf32>
    %cst_730 = arith.constant dense<0.000000e+00> : vector<1xf32>
    %1257 = vector.multi_reduction <add>, %1256, %cst_730 [1, 2] : vector<1x16x8xf32> to vector<1xf32>
    %1258 = vector.shape_cast %1257 : vector<1xf32> to vector<1x1x1xf32>
    %1259 = vector.extract %1258[0, 0, 0] : f32 from vector<1x1x1xf32>
    %cst_731 = arith.constant 7.812500e-03 : f32
    %1260 = arith.mulf %1259, %cst_731 : f32
    %1261 = arith.mulf %1255, %1255 : vector<16x8xf32>
    %1262 = vector.shape_cast %1261 : vector<16x8xf32> to vector<1x16x8xf32>
    %cst_732 = arith.constant dense<0.000000e+00> : vector<1xf32>
    %1263 = vector.multi_reduction <add>, %1262, %cst_732 [1, 2] : vector<1x16x8xf32> to vector<1xf32>
    %1264 = vector.shape_cast %1263 : vector<1xf32> to vector<1x1x1xf32>
    %1265 = vector.extract %1264[0, 0, 0] : f32 from vector<1x1x1xf32>
    %cst_733 = arith.constant 7.812500e-03 : f32
    %1266 = arith.mulf %1265, %cst_733 : f32
    %1267 = arith.mulf %1260, %1260 : f32
    %1268 = arith.subf %1266, %1267 : f32
    %cst_734 = arith.constant 0.000000e+00 : f32
    %1269 = arith.maximumf %1268, %cst_734 : f32
    %1270 = vector.broadcast %1260 : f32 to vector<16x8xf32>
    %1271 = arith.subf %1255, %1270 : vector<16x8xf32>
    %cst_735 = arith.constant 9.99999974E-6 : f32
    %1272 = arith.addf %1269, %cst_735 : f32
    %1273 = math.rsqrt %1272 : f32
    %1274 = vector.broadcast %1273 : f32 to vector<16x8xf32>
    %1275 = arith.mulf %1271, %1274 : vector<16x8xf32>
    %1276 = vector.extract_strided_slice %1233 {offsets = [0, 16], sizes = [16, 8], strides = [1, 1]} : vector<16x32xf32> to vector<16x8xf32>
    %1277 = vector.shape_cast %1276 : vector<16x8xf32> to vector<1x16x8xf32>
    %cst_736 = arith.constant dense<0.000000e+00> : vector<1xf32>
    %1278 = vector.multi_reduction <add>, %1277, %cst_736 [1, 2] : vector<1x16x8xf32> to vector<1xf32>
    %1279 = vector.shape_cast %1278 : vector<1xf32> to vector<1x1x1xf32>
    %1280 = vector.extract %1279[0, 0, 0] : f32 from vector<1x1x1xf32>
    %cst_737 = arith.constant 7.812500e-03 : f32
    %1281 = arith.mulf %1280, %cst_737 : f32
    %1282 = arith.mulf %1276, %1276 : vector<16x8xf32>
    %1283 = vector.shape_cast %1282 : vector<16x8xf32> to vector<1x16x8xf32>
    %cst_738 = arith.constant dense<0.000000e+00> : vector<1xf32>
    %1284 = vector.multi_reduction <add>, %1283, %cst_738 [1, 2] : vector<1x16x8xf32> to vector<1xf32>
    %1285 = vector.shape_cast %1284 : vector<1xf32> to vector<1x1x1xf32>
    %1286 = vector.extract %1285[0, 0, 0] : f32 from vector<1x1x1xf32>
    %cst_739 = arith.constant 7.812500e-03 : f32
    %1287 = arith.mulf %1286, %cst_739 : f32
    %1288 = arith.mulf %1281, %1281 : f32
    %1289 = arith.subf %1287, %1288 : f32
    %cst_740 = arith.constant 0.000000e+00 : f32
    %1290 = arith.maximumf %1289, %cst_740 : f32
    %1291 = vector.broadcast %1281 : f32 to vector<16x8xf32>
    %1292 = arith.subf %1276, %1291 : vector<16x8xf32>
    %cst_741 = arith.constant 9.99999974E-6 : f32
    %1293 = arith.addf %1290, %cst_741 : f32
    %1294 = math.rsqrt %1293 : f32
    %1295 = vector.broadcast %1294 : f32 to vector<16x8xf32>
    %1296 = arith.mulf %1292, %1295 : vector<16x8xf32>
    %1297 = vector.extract_strided_slice %1233 {offsets = [0, 24], sizes = [16, 8], strides = [1, 1]} : vector<16x32xf32> to vector<16x8xf32>
    %1298 = vector.shape_cast %1297 : vector<16x8xf32> to vector<1x16x8xf32>
    %cst_742 = arith.constant dense<0.000000e+00> : vector<1xf32>
    %1299 = vector.multi_reduction <add>, %1298, %cst_742 [1, 2] : vector<1x16x8xf32> to vector<1xf32>
    %1300 = vector.shape_cast %1299 : vector<1xf32> to vector<1x1x1xf32>
    %1301 = vector.extract %1300[0, 0, 0] : f32 from vector<1x1x1xf32>
    %cst_743 = arith.constant 7.812500e-03 : f32
    %1302 = arith.mulf %1301, %cst_743 : f32
    %1303 = arith.mulf %1297, %1297 : vector<16x8xf32>
    %1304 = vector.shape_cast %1303 : vector<16x8xf32> to vector<1x16x8xf32>
    %cst_744 = arith.constant dense<0.000000e+00> : vector<1xf32>
    %1305 = vector.multi_reduction <add>, %1304, %cst_744 [1, 2] : vector<1x16x8xf32> to vector<1xf32>
    %1306 = vector.shape_cast %1305 : vector<1xf32> to vector<1x1x1xf32>
    %1307 = vector.extract %1306[0, 0, 0] : f32 from vector<1x1x1xf32>
    %cst_745 = arith.constant 7.812500e-03 : f32
    %1308 = arith.mulf %1307, %cst_745 : f32
    %1309 = arith.mulf %1302, %1302 : f32
    %1310 = arith.subf %1308, %1309 : f32
    %cst_746 = arith.constant 0.000000e+00 : f32
    %1311 = arith.maximumf %1310, %cst_746 : f32
    %1312 = vector.broadcast %1302 : f32 to vector<16x8xf32>
    %1313 = arith.subf %1297, %1312 : vector<16x8xf32>
    %cst_747 = arith.constant 9.99999974E-6 : f32
    %1314 = arith.addf %1311, %cst_747 : f32
    %1315 = math.rsqrt %1314 : f32
    %1316 = vector.broadcast %1315 : f32 to vector<16x8xf32>
    %1317 = arith.mulf %1313, %1316 : vector<16x8xf32>
    %1318 = tpu.concatenate %1254, %1275, %1296, %1317 in 1 : vector<16x8xf32>, vector<16x8xf32>, vector<16x8xf32>, vector<16x8xf32> -> vector<16x32xf32>
    %1319 = arith.truncf %1318 : vector<16x32xf32> to vector<16x32xbf16>
    %cst_748 = arith.constant dense<0.000000e+00> : vector<16x128xf32>
    %1320 = tpu.matmul %1319, %1146, %cst_748 {dimension_numbers = #tpu.dot_dimension_numbers<[1], [0], [0], [1], [0, 0, 1, 1], [], []>} : vector<16x32xbf16>, vector<32x128xbf16>, vector<16x128xf32> -> vector<16x128xf32>
    %1321 = vector.broadcast %1148 : vector<1x128xf32> to vector<16x128xf32>
    %1322 = arith.addf %1320, %1321 : vector<16x128xf32>
    %1323 = math.tanh %1322 : vector<16x128xf32>
    %1324 = vector.extract_strided_slice %1323 {offsets = [0, 0], sizes = [16, 32], strides = [1, 1]} : vector<16x128xf32> to vector<16x32xf32>
    %1325 = vector.extract_strided_slice %1323 {offsets = [0, 32], sizes = [16, 32], strides = [1, 1]} : vector<16x128xf32> to vector<16x32xf32>
    %1326 = vector.extract_strided_slice %1323 {offsets = [0, 64], sizes = [16, 32], strides = [1, 1]} : vector<16x128xf32> to vector<16x32xf32>
    %1327 = vector.extract_strided_slice %1323 {offsets = [0, 96], sizes = [16, 32], strides = [1, 1]} : vector<16x128xf32> to vector<16x32xf32>
    %cst_749 = arith.constant 1.000000e+00 : f32
    %1328 = vector.broadcast %cst_749 : f32 to vector<16x32xf32>
    %1329 = arith.addf %1325, %1328 : vector<16x32xf32>
    %1330 = arith.mulf %1329, %884 : vector<16x32xf32>
    %cst_750 = arith.constant 1.000000e+00 : f32
    %1331 = vector.broadcast %cst_750 : f32 to vector<16x32xf32>
    %1332 = arith.addf %1324, %1331 : vector<16x32xf32>
    %1333 = arith.mulf %1332, %1327 : vector<16x32xf32>
    %1334 = arith.addf %1330, %1333 : vector<16x32xf32>
    %cst_751 = arith.constant 5.000000e-01 : f32
    %1335 = vector.broadcast %cst_751 : f32 to vector<16x32xf32>
    %1336 = arith.mulf %1335, %1334 : vector<16x32xf32>
    %1337 = vector.shape_cast %1336 : vector<16x32xf32> to vector<1x16x32xf32>
    %cst_752 = arith.constant dense<0.000000e+00> : vector<1xf32>
    %1338 = vector.multi_reduction <add>, %1337, %cst_752 [1, 2] : vector<1x16x32xf32> to vector<1xf32>
    %1339 = vector.shape_cast %1338 : vector<1xf32> to vector<1x1x1xf32>
    %1340 = vector.extract %1339[0, 0, 0] : f32 from vector<1x1x1xf32>
    %cst_753 = arith.constant 0.001953125 : f32
    %1341 = arith.mulf %1340, %cst_753 : f32
    %1342 = arith.mulf %1336, %1336 : vector<16x32xf32>
    %1343 = vector.shape_cast %1342 : vector<16x32xf32> to vector<1x16x32xf32>
    %cst_754 = arith.constant dense<0.000000e+00> : vector<1xf32>
    %1344 = vector.multi_reduction <add>, %1343, %cst_754 [1, 2] : vector<1x16x32xf32> to vector<1xf32>
    %1345 = vector.shape_cast %1344 : vector<1xf32> to vector<1x1x1xf32>
    %1346 = vector.extract %1345[0, 0, 0] : f32 from vector<1x1x1xf32>
    %cst_755 = arith.constant 0.001953125 : f32
    %1347 = arith.mulf %1346, %cst_755 : f32
    %1348 = arith.mulf %1341, %1341 : f32
    %1349 = arith.subf %1347, %1348 : f32
    %cst_756 = arith.constant 0.000000e+00 : f32
    %1350 = arith.maximumf %1349, %cst_756 : f32
    %cst_757 = arith.constant 9.99999974E-6 : f32
    %1351 = arith.addf %1350, %cst_757 : f32
    %1352 = math.rsqrt %1351 : f32
    %1353 = vector.broadcast %1352 : f32 to vector<1x32xf32>
    %1354 = arith.mulf %1150, %1353 : vector<1x32xf32>
    %1355 = vector.broadcast %1341 : f32 to vector<1x32xf32>
    %1356 = arith.mulf %1355, %1354 : vector<1x32xf32>
    %1357 = arith.subf %1152, %1356 : vector<1x32xf32>
    %cst_758 = arith.constant 1.000000e+00 : f32
    %1358 = vector.broadcast %cst_758 : f32 to vector<16x32xf32>
    %1359 = arith.addf %1326, %1358 : vector<16x32xf32>
    %cst_759 = arith.constant 5.000000e-01 : f32
    %1360 = vector.broadcast %cst_759 : f32 to vector<16x32xf32>
    %1361 = arith.mulf %1360, %1359 : vector<16x32xf32>
    %1362 = vector.broadcast %1354 : vector<1x32xf32> to vector<16x32xf32>
    %1363 = arith.mulf %1336, %1362 : vector<16x32xf32>
    %1364 = vector.broadcast %1357 : vector<1x32xf32> to vector<16x32xf32>
    %1365 = arith.addf %1363, %1364 : vector<16x32xf32>
    %1366 = math.tanh %1365 : vector<16x32xf32>
    %1367 = arith.mulf %1361, %1366 : vector<16x32xf32>
    %c2_760 = arith.constant 2 : index
    %c0_761 = arith.constant 0 : index
    %c0_762 = arith.constant 0 : index
    %1368 = vector.load %arg5[%c2_760, %c0_761, %c0_762] : memref<4x1x32xf32, #tpu.memory_space<vmem>>, vector<1x1x32xf32>
    %1369 = vector.shape_cast %1368 : vector<1x1x32xf32> to vector<1x32xf32>
    %c2_763 = arith.constant 2 : index
    %c0_764 = arith.constant 0 : index
    %c0_765 = arith.constant 0 : index
    %1370 = vector.load %arg6[%c2_763, %c0_764, %c0_765] : memref<4x32x128xbf16, #tpu.memory_space<vmem>>, vector<1x32x128xbf16>
    %1371 = vector.shape_cast %1370 : vector<1x32x128xbf16> to vector<32x128xbf16>
    %c2_766 = arith.constant 2 : index
    %c0_767 = arith.constant 0 : index
    %c0_768 = arith.constant 0 : index
    %1372 = vector.load %arg7[%c2_766, %c0_767, %c0_768] : memref<4x1x128xf32, #tpu.memory_space<vmem>>, vector<1x1x128xf32>
    %1373 = vector.shape_cast %1372 : vector<1x1x128xf32> to vector<1x128xf32>
    %c2_769 = arith.constant 2 : index
    %c0_770 = arith.constant 0 : index
    %c0_771 = arith.constant 0 : index
    %1374 = vector.load %arg8[%c2_769, %c0_770, %c0_771] : memref<4x1x32xf32, #tpu.memory_space<vmem>>, vector<1x1x32xf32>
    %1375 = vector.shape_cast %1374 : vector<1x1x32xf32> to vector<1x32xf32>
    %c2_772 = arith.constant 2 : index
    %c0_773 = arith.constant 0 : index
    %c0_774 = arith.constant 0 : index
    %1376 = vector.load %arg9[%c2_772, %c0_773, %c0_774] : memref<4x1x32xf32, #tpu.memory_space<vmem>>, vector<1x1x32xf32>
    %1377 = vector.shape_cast %1376 : vector<1x1x32xf32> to vector<1x32xf32>
    %c2_775 = arith.constant 2 : index
    %c0_776 = arith.constant 0 : index
    %c0_777 = arith.constant 0 : index
    %c0_778 = arith.constant 0 : index
    %1378 = vector.load %arg4[%c2_775, %c0_776, %c0_777, %c0_778] : memref<4x16x16x32xf32, #tpu.memory_space<vmem>>, vector<1x1x16x32xf32>
    %1379 = vector.shape_cast %1378 : vector<1x1x16x32xf32> to vector<16x32xf32>
    %1380 = arith.mulf %1141, %1379 : vector<16x32xf32>
    %c15_i32_779 = arith.constant 15 : i32
    %1381 = tpu.dynamic_rotate %1141 by %c15_i32_779 dim 0 : vector<16x32xf32>, i32 -> vector<16x32xf32>
    %c2_780 = arith.constant 2 : index
    %c1_781 = arith.constant 1 : index
    %c0_782 = arith.constant 0 : index
    %c0_783 = arith.constant 0 : index
    %1382 = vector.load %arg4[%c2_780, %c1_781, %c0_782, %c0_783] : memref<4x16x16x32xf32, #tpu.memory_space<vmem>>, vector<1x1x16x32xf32>
    %1383 = vector.shape_cast %1382 : vector<1x1x16x32xf32> to vector<16x32xf32>
    %1384 = arith.mulf %1381, %1383 : vector<16x32xf32>
    %c14_i32_784 = arith.constant 14 : i32
    %1385 = tpu.dynamic_rotate %1141 by %c14_i32_784 dim 0 : vector<16x32xf32>, i32 -> vector<16x32xf32>
    %c2_785 = arith.constant 2 : index
    %c2_786 = arith.constant 2 : index
    %c0_787 = arith.constant 0 : index
    %c0_788 = arith.constant 0 : index
    %1386 = vector.load %arg4[%c2_785, %c2_786, %c0_787, %c0_788] : memref<4x16x16x32xf32, #tpu.memory_space<vmem>>, vector<1x1x16x32xf32>
    %1387 = vector.shape_cast %1386 : vector<1x1x16x32xf32> to vector<16x32xf32>
    %1388 = arith.mulf %1385, %1387 : vector<16x32xf32>
    %c13_i32_789 = arith.constant 13 : i32
    %1389 = tpu.dynamic_rotate %1141 by %c13_i32_789 dim 0 : vector<16x32xf32>, i32 -> vector<16x32xf32>
    %c2_790 = arith.constant 2 : index
    %c3_791 = arith.constant 3 : index
    %c0_792 = arith.constant 0 : index
    %c0_793 = arith.constant 0 : index
    %1390 = vector.load %arg4[%c2_790, %c3_791, %c0_792, %c0_793] : memref<4x16x16x32xf32, #tpu.memory_space<vmem>>, vector<1x1x16x32xf32>
    %1391 = vector.shape_cast %1390 : vector<1x1x16x32xf32> to vector<16x32xf32>
    %1392 = arith.mulf %1389, %1391 : vector<16x32xf32>
    %c12_i32_794 = arith.constant 12 : i32
    %1393 = tpu.dynamic_rotate %1141 by %c12_i32_794 dim 0 : vector<16x32xf32>, i32 -> vector<16x32xf32>
    %c2_795 = arith.constant 2 : index
    %c4_796 = arith.constant 4 : index
    %c0_797 = arith.constant 0 : index
    %c0_798 = arith.constant 0 : index
    %1394 = vector.load %arg4[%c2_795, %c4_796, %c0_797, %c0_798] : memref<4x16x16x32xf32, #tpu.memory_space<vmem>>, vector<1x1x16x32xf32>
    %1395 = vector.shape_cast %1394 : vector<1x1x16x32xf32> to vector<16x32xf32>
    %1396 = arith.mulf %1393, %1395 : vector<16x32xf32>
    %1397 = arith.addf %1380, %1396 : vector<16x32xf32>
    %c11_i32_799 = arith.constant 11 : i32
    %1398 = tpu.dynamic_rotate %1141 by %c11_i32_799 dim 0 : vector<16x32xf32>, i32 -> vector<16x32xf32>
    %c2_800 = arith.constant 2 : index
    %c5_801 = arith.constant 5 : index
    %c0_802 = arith.constant 0 : index
    %c0_803 = arith.constant 0 : index
    %1399 = vector.load %arg4[%c2_800, %c5_801, %c0_802, %c0_803] : memref<4x16x16x32xf32, #tpu.memory_space<vmem>>, vector<1x1x16x32xf32>
    %1400 = vector.shape_cast %1399 : vector<1x1x16x32xf32> to vector<16x32xf32>
    %1401 = arith.mulf %1398, %1400 : vector<16x32xf32>
    %1402 = arith.addf %1384, %1401 : vector<16x32xf32>
    %c10_i32_804 = arith.constant 10 : i32
    %1403 = tpu.dynamic_rotate %1141 by %c10_i32_804 dim 0 : vector<16x32xf32>, i32 -> vector<16x32xf32>
    %c2_805 = arith.constant 2 : index
    %c6_806 = arith.constant 6 : index
    %c0_807 = arith.constant 0 : index
    %c0_808 = arith.constant 0 : index
    %1404 = vector.load %arg4[%c2_805, %c6_806, %c0_807, %c0_808] : memref<4x16x16x32xf32, #tpu.memory_space<vmem>>, vector<1x1x16x32xf32>
    %1405 = vector.shape_cast %1404 : vector<1x1x16x32xf32> to vector<16x32xf32>
    %1406 = arith.mulf %1403, %1405 : vector<16x32xf32>
    %1407 = arith.addf %1388, %1406 : vector<16x32xf32>
    %c9_i32_809 = arith.constant 9 : i32
    %1408 = tpu.dynamic_rotate %1141 by %c9_i32_809 dim 0 : vector<16x32xf32>, i32 -> vector<16x32xf32>
    %c2_810 = arith.constant 2 : index
    %c7_811 = arith.constant 7 : index
    %c0_812 = arith.constant 0 : index
    %c0_813 = arith.constant 0 : index
    %1409 = vector.load %arg4[%c2_810, %c7_811, %c0_812, %c0_813] : memref<4x16x16x32xf32, #tpu.memory_space<vmem>>, vector<1x1x16x32xf32>
    %1410 = vector.shape_cast %1409 : vector<1x1x16x32xf32> to vector<16x32xf32>
    %1411 = arith.mulf %1408, %1410 : vector<16x32xf32>
    %1412 = arith.addf %1392, %1411 : vector<16x32xf32>
    %c8_i32_814 = arith.constant 8 : i32
    %1413 = tpu.dynamic_rotate %1141 by %c8_i32_814 dim 0 : vector<16x32xf32>, i32 -> vector<16x32xf32>
    %c2_815 = arith.constant 2 : index
    %c8_816 = arith.constant 8 : index
    %c0_817 = arith.constant 0 : index
    %c0_818 = arith.constant 0 : index
    %1414 = vector.load %arg4[%c2_815, %c8_816, %c0_817, %c0_818] : memref<4x16x16x32xf32, #tpu.memory_space<vmem>>, vector<1x1x16x32xf32>
    %1415 = vector.shape_cast %1414 : vector<1x1x16x32xf32> to vector<16x32xf32>
    %1416 = arith.mulf %1413, %1415 : vector<16x32xf32>
    %1417 = arith.addf %1397, %1416 : vector<16x32xf32>
    %c7_i32_819 = arith.constant 7 : i32
    %1418 = tpu.dynamic_rotate %1141 by %c7_i32_819 dim 0 : vector<16x32xf32>, i32 -> vector<16x32xf32>
    %c2_820 = arith.constant 2 : index
    %c9_821 = arith.constant 9 : index
    %c0_822 = arith.constant 0 : index
    %c0_823 = arith.constant 0 : index
    %1419 = vector.load %arg4[%c2_820, %c9_821, %c0_822, %c0_823] : memref<4x16x16x32xf32, #tpu.memory_space<vmem>>, vector<1x1x16x32xf32>
    %1420 = vector.shape_cast %1419 : vector<1x1x16x32xf32> to vector<16x32xf32>
    %1421 = arith.mulf %1418, %1420 : vector<16x32xf32>
    %1422 = arith.addf %1402, %1421 : vector<16x32xf32>
    %c6_i32_824 = arith.constant 6 : i32
    %1423 = tpu.dynamic_rotate %1141 by %c6_i32_824 dim 0 : vector<16x32xf32>, i32 -> vector<16x32xf32>
    %c2_825 = arith.constant 2 : index
    %c10_826 = arith.constant 10 : index
    %c0_827 = arith.constant 0 : index
    %c0_828 = arith.constant 0 : index
    %1424 = vector.load %arg4[%c2_825, %c10_826, %c0_827, %c0_828] : memref<4x16x16x32xf32, #tpu.memory_space<vmem>>, vector<1x1x16x32xf32>
    %1425 = vector.shape_cast %1424 : vector<1x1x16x32xf32> to vector<16x32xf32>
    %1426 = arith.mulf %1423, %1425 : vector<16x32xf32>
    %1427 = arith.addf %1407, %1426 : vector<16x32xf32>
    %c5_i32_829 = arith.constant 5 : i32
    %1428 = tpu.dynamic_rotate %1141 by %c5_i32_829 dim 0 : vector<16x32xf32>, i32 -> vector<16x32xf32>
    %c2_830 = arith.constant 2 : index
    %c11_831 = arith.constant 11 : index
    %c0_832 = arith.constant 0 : index
    %c0_833 = arith.constant 0 : index
    %1429 = vector.load %arg4[%c2_830, %c11_831, %c0_832, %c0_833] : memref<4x16x16x32xf32, #tpu.memory_space<vmem>>, vector<1x1x16x32xf32>
    %1430 = vector.shape_cast %1429 : vector<1x1x16x32xf32> to vector<16x32xf32>
    %1431 = arith.mulf %1428, %1430 : vector<16x32xf32>
    %1432 = arith.addf %1412, %1431 : vector<16x32xf32>
    %c4_i32_834 = arith.constant 4 : i32
    %1433 = tpu.dynamic_rotate %1141 by %c4_i32_834 dim 0 : vector<16x32xf32>, i32 -> vector<16x32xf32>
    %c2_835 = arith.constant 2 : index
    %c12_836 = arith.constant 12 : index
    %c0_837 = arith.constant 0 : index
    %c0_838 = arith.constant 0 : index
    %1434 = vector.load %arg4[%c2_835, %c12_836, %c0_837, %c0_838] : memref<4x16x16x32xf32, #tpu.memory_space<vmem>>, vector<1x1x16x32xf32>
    %1435 = vector.shape_cast %1434 : vector<1x1x16x32xf32> to vector<16x32xf32>
    %1436 = arith.mulf %1433, %1435 : vector<16x32xf32>
    %1437 = arith.addf %1417, %1436 : vector<16x32xf32>
    %c3_i32_839 = arith.constant 3 : i32
    %1438 = tpu.dynamic_rotate %1141 by %c3_i32_839 dim 0 : vector<16x32xf32>, i32 -> vector<16x32xf32>
    %c2_840 = arith.constant 2 : index
    %c13_841 = arith.constant 13 : index
    %c0_842 = arith.constant 0 : index
    %c0_843 = arith.constant 0 : index
    %1439 = vector.load %arg4[%c2_840, %c13_841, %c0_842, %c0_843] : memref<4x16x16x32xf32, #tpu.memory_space<vmem>>, vector<1x1x16x32xf32>
    %1440 = vector.shape_cast %1439 : vector<1x1x16x32xf32> to vector<16x32xf32>
    %1441 = arith.mulf %1438, %1440 : vector<16x32xf32>
    %1442 = arith.addf %1422, %1441 : vector<16x32xf32>
    %c2_i32_844 = arith.constant 2 : i32
    %1443 = tpu.dynamic_rotate %1141 by %c2_i32_844 dim 0 : vector<16x32xf32>, i32 -> vector<16x32xf32>
    %c2_845 = arith.constant 2 : index
    %c14_846 = arith.constant 14 : index
    %c0_847 = arith.constant 0 : index
    %c0_848 = arith.constant 0 : index
    %1444 = vector.load %arg4[%c2_845, %c14_846, %c0_847, %c0_848] : memref<4x16x16x32xf32, #tpu.memory_space<vmem>>, vector<1x1x16x32xf32>
    %1445 = vector.shape_cast %1444 : vector<1x1x16x32xf32> to vector<16x32xf32>
    %1446 = arith.mulf %1443, %1445 : vector<16x32xf32>
    %1447 = arith.addf %1427, %1446 : vector<16x32xf32>
    %c1_i32_849 = arith.constant 1 : i32
    %1448 = tpu.dynamic_rotate %1141 by %c1_i32_849 dim 0 : vector<16x32xf32>, i32 -> vector<16x32xf32>
    %c2_850 = arith.constant 2 : index
    %c15_851 = arith.constant 15 : index
    %c0_852 = arith.constant 0 : index
    %c0_853 = arith.constant 0 : index
    %1449 = vector.load %arg4[%c2_850, %c15_851, %c0_852, %c0_853] : memref<4x16x16x32xf32, #tpu.memory_space<vmem>>, vector<1x1x16x32xf32>
    %1450 = vector.shape_cast %1449 : vector<1x1x16x32xf32> to vector<16x32xf32>
    %1451 = arith.mulf %1448, %1450 : vector<16x32xf32>
    %1452 = arith.addf %1432, %1451 : vector<16x32xf32>
    %1453 = arith.addf %1437, %1442 : vector<16x32xf32>
    %1454 = arith.addf %1453, %1447 : vector<16x32xf32>
    %1455 = arith.addf %1454, %1452 : vector<16x32xf32>
    %1456 = vector.broadcast %1369 : vector<1x32xf32> to vector<16x32xf32>
    %1457 = arith.addf %1455, %1456 : vector<16x32xf32>
    %1458 = vector.extract_strided_slice %1457 {offsets = [0, 0], sizes = [16, 8], strides = [1, 1]} : vector<16x32xf32> to vector<16x8xf32>
    %1459 = vector.shape_cast %1458 : vector<16x8xf32> to vector<1x16x8xf32>
    %cst_854 = arith.constant dense<0.000000e+00> : vector<1xf32>
    %1460 = vector.multi_reduction <add>, %1459, %cst_854 [1, 2] : vector<1x16x8xf32> to vector<1xf32>
    %1461 = vector.shape_cast %1460 : vector<1xf32> to vector<1x1x1xf32>
    %1462 = vector.extract %1461[0, 0, 0] : f32 from vector<1x1x1xf32>
    %cst_855 = arith.constant 7.812500e-03 : f32
    %1463 = arith.mulf %1462, %cst_855 : f32
    %1464 = arith.mulf %1458, %1458 : vector<16x8xf32>
    %1465 = vector.shape_cast %1464 : vector<16x8xf32> to vector<1x16x8xf32>
    %cst_856 = arith.constant dense<0.000000e+00> : vector<1xf32>
    %1466 = vector.multi_reduction <add>, %1465, %cst_856 [1, 2] : vector<1x16x8xf32> to vector<1xf32>
    %1467 = vector.shape_cast %1466 : vector<1xf32> to vector<1x1x1xf32>
    %1468 = vector.extract %1467[0, 0, 0] : f32 from vector<1x1x1xf32>
    %cst_857 = arith.constant 7.812500e-03 : f32
    %1469 = arith.mulf %1468, %cst_857 : f32
    %1470 = arith.mulf %1463, %1463 : f32
    %1471 = arith.subf %1469, %1470 : f32
    %cst_858 = arith.constant 0.000000e+00 : f32
    %1472 = arith.maximumf %1471, %cst_858 : f32
    %1473 = vector.broadcast %1463 : f32 to vector<16x8xf32>
    %1474 = arith.subf %1458, %1473 : vector<16x8xf32>
    %cst_859 = arith.constant 9.99999974E-6 : f32
    %1475 = arith.addf %1472, %cst_859 : f32
    %1476 = math.rsqrt %1475 : f32
    %1477 = vector.broadcast %1476 : f32 to vector<16x8xf32>
    %1478 = arith.mulf %1474, %1477 : vector<16x8xf32>
    %1479 = vector.extract_strided_slice %1457 {offsets = [0, 8], sizes = [16, 8], strides = [1, 1]} : vector<16x32xf32> to vector<16x8xf32>
    %1480 = vector.shape_cast %1479 : vector<16x8xf32> to vector<1x16x8xf32>
    %cst_860 = arith.constant dense<0.000000e+00> : vector<1xf32>
    %1481 = vector.multi_reduction <add>, %1480, %cst_860 [1, 2] : vector<1x16x8xf32> to vector<1xf32>
    %1482 = vector.shape_cast %1481 : vector<1xf32> to vector<1x1x1xf32>
    %1483 = vector.extract %1482[0, 0, 0] : f32 from vector<1x1x1xf32>
    %cst_861 = arith.constant 7.812500e-03 : f32
    %1484 = arith.mulf %1483, %cst_861 : f32
    %1485 = arith.mulf %1479, %1479 : vector<16x8xf32>
    %1486 = vector.shape_cast %1485 : vector<16x8xf32> to vector<1x16x8xf32>
    %cst_862 = arith.constant dense<0.000000e+00> : vector<1xf32>
    %1487 = vector.multi_reduction <add>, %1486, %cst_862 [1, 2] : vector<1x16x8xf32> to vector<1xf32>
    %1488 = vector.shape_cast %1487 : vector<1xf32> to vector<1x1x1xf32>
    %1489 = vector.extract %1488[0, 0, 0] : f32 from vector<1x1x1xf32>
    %cst_863 = arith.constant 7.812500e-03 : f32
    %1490 = arith.mulf %1489, %cst_863 : f32
    %1491 = arith.mulf %1484, %1484 : f32
    %1492 = arith.subf %1490, %1491 : f32
    %cst_864 = arith.constant 0.000000e+00 : f32
    %1493 = arith.maximumf %1492, %cst_864 : f32
    %1494 = vector.broadcast %1484 : f32 to vector<16x8xf32>
    %1495 = arith.subf %1479, %1494 : vector<16x8xf32>
    %cst_865 = arith.constant 9.99999974E-6 : f32
    %1496 = arith.addf %1493, %cst_865 : f32
    %1497 = math.rsqrt %1496 : f32
    %1498 = vector.broadcast %1497 : f32 to vector<16x8xf32>
    %1499 = arith.mulf %1495, %1498 : vector<16x8xf32>
    %1500 = vector.extract_strided_slice %1457 {offsets = [0, 16], sizes = [16, 8], strides = [1, 1]} : vector<16x32xf32> to vector<16x8xf32>
    %1501 = vector.shape_cast %1500 : vector<16x8xf32> to vector<1x16x8xf32>
    %cst_866 = arith.constant dense<0.000000e+00> : vector<1xf32>
    %1502 = vector.multi_reduction <add>, %1501, %cst_866 [1, 2] : vector<1x16x8xf32> to vector<1xf32>
    %1503 = vector.shape_cast %1502 : vector<1xf32> to vector<1x1x1xf32>
    %1504 = vector.extract %1503[0, 0, 0] : f32 from vector<1x1x1xf32>
    %cst_867 = arith.constant 7.812500e-03 : f32
    %1505 = arith.mulf %1504, %cst_867 : f32
    %1506 = arith.mulf %1500, %1500 : vector<16x8xf32>
    %1507 = vector.shape_cast %1506 : vector<16x8xf32> to vector<1x16x8xf32>
    %cst_868 = arith.constant dense<0.000000e+00> : vector<1xf32>
    %1508 = vector.multi_reduction <add>, %1507, %cst_868 [1, 2] : vector<1x16x8xf32> to vector<1xf32>
    %1509 = vector.shape_cast %1508 : vector<1xf32> to vector<1x1x1xf32>
    %1510 = vector.extract %1509[0, 0, 0] : f32 from vector<1x1x1xf32>
    %cst_869 = arith.constant 7.812500e-03 : f32
    %1511 = arith.mulf %1510, %cst_869 : f32
    %1512 = arith.mulf %1505, %1505 : f32
    %1513 = arith.subf %1511, %1512 : f32
    %cst_870 = arith.constant 0.000000e+00 : f32
    %1514 = arith.maximumf %1513, %cst_870 : f32
    %1515 = vector.broadcast %1505 : f32 to vector<16x8xf32>
    %1516 = arith.subf %1500, %1515 : vector<16x8xf32>
    %cst_871 = arith.constant 9.99999974E-6 : f32
    %1517 = arith.addf %1514, %cst_871 : f32
    %1518 = math.rsqrt %1517 : f32
    %1519 = vector.broadcast %1518 : f32 to vector<16x8xf32>
    %1520 = arith.mulf %1516, %1519 : vector<16x8xf32>
    %1521 = vector.extract_strided_slice %1457 {offsets = [0, 24], sizes = [16, 8], strides = [1, 1]} : vector<16x32xf32> to vector<16x8xf32>
    %1522 = vector.shape_cast %1521 : vector<16x8xf32> to vector<1x16x8xf32>
    %cst_872 = arith.constant dense<0.000000e+00> : vector<1xf32>
    %1523 = vector.multi_reduction <add>, %1522, %cst_872 [1, 2] : vector<1x16x8xf32> to vector<1xf32>
    %1524 = vector.shape_cast %1523 : vector<1xf32> to vector<1x1x1xf32>
    %1525 = vector.extract %1524[0, 0, 0] : f32 from vector<1x1x1xf32>
    %cst_873 = arith.constant 7.812500e-03 : f32
    %1526 = arith.mulf %1525, %cst_873 : f32
    %1527 = arith.mulf %1521, %1521 : vector<16x8xf32>
    %1528 = vector.shape_cast %1527 : vector<16x8xf32> to vector<1x16x8xf32>
    %cst_874 = arith.constant dense<0.000000e+00> : vector<1xf32>
    %1529 = vector.multi_reduction <add>, %1528, %cst_874 [1, 2] : vector<1x16x8xf32> to vector<1xf32>
    %1530 = vector.shape_cast %1529 : vector<1xf32> to vector<1x1x1xf32>
    %1531 = vector.extract %1530[0, 0, 0] : f32 from vector<1x1x1xf32>
    %cst_875 = arith.constant 7.812500e-03 : f32
    %1532 = arith.mulf %1531, %cst_875 : f32
    %1533 = arith.mulf %1526, %1526 : f32
    %1534 = arith.subf %1532, %1533 : f32
    %cst_876 = arith.constant 0.000000e+00 : f32
    %1535 = arith.maximumf %1534, %cst_876 : f32
    %1536 = vector.broadcast %1526 : f32 to vector<16x8xf32>
    %1537 = arith.subf %1521, %1536 : vector<16x8xf32>
    %cst_877 = arith.constant 9.99999974E-6 : f32
    %1538 = arith.addf %1535, %cst_877 : f32
    %1539 = math.rsqrt %1538 : f32
    %1540 = vector.broadcast %1539 : f32 to vector<16x8xf32>
    %1541 = arith.mulf %1537, %1540 : vector<16x8xf32>
    %1542 = tpu.concatenate %1478, %1499, %1520, %1541 in 1 : vector<16x8xf32>, vector<16x8xf32>, vector<16x8xf32>, vector<16x8xf32> -> vector<16x32xf32>
    %1543 = arith.truncf %1542 : vector<16x32xf32> to vector<16x32xbf16>
    %cst_878 = arith.constant dense<0.000000e+00> : vector<16x128xf32>
    %1544 = tpu.matmul %1543, %1371, %cst_878 {dimension_numbers = #tpu.dot_dimension_numbers<[1], [0], [0], [1], [0, 0, 1, 1], [], []>} : vector<16x32xbf16>, vector<32x128xbf16>, vector<16x128xf32> -> vector<16x128xf32>
    %1545 = vector.broadcast %1373 : vector<1x128xf32> to vector<16x128xf32>
    %1546 = arith.addf %1544, %1545 : vector<16x128xf32>
    %1547 = math.tanh %1546 : vector<16x128xf32>
    %1548 = vector.extract_strided_slice %1547 {offsets = [0, 0], sizes = [16, 32], strides = [1, 1]} : vector<16x128xf32> to vector<16x32xf32>
    %1549 = vector.extract_strided_slice %1547 {offsets = [0, 32], sizes = [16, 32], strides = [1, 1]} : vector<16x128xf32> to vector<16x32xf32>
    %1550 = vector.extract_strided_slice %1547 {offsets = [0, 64], sizes = [16, 32], strides = [1, 1]} : vector<16x128xf32> to vector<16x32xf32>
    %1551 = vector.extract_strided_slice %1547 {offsets = [0, 96], sizes = [16, 32], strides = [1, 1]} : vector<16x128xf32> to vector<16x32xf32>
    %cst_879 = arith.constant 1.000000e+00 : f32
    %1552 = vector.broadcast %cst_879 : f32 to vector<16x32xf32>
    %1553 = arith.addf %1549, %1552 : vector<16x32xf32>
    %1554 = arith.mulf %1553, %1110 : vector<16x32xf32>
    %cst_880 = arith.constant 1.000000e+00 : f32
    %1555 = vector.broadcast %cst_880 : f32 to vector<16x32xf32>
    %1556 = arith.addf %1548, %1555 : vector<16x32xf32>
    %1557 = arith.mulf %1556, %1551 : vector<16x32xf32>
    %1558 = arith.addf %1554, %1557 : vector<16x32xf32>
    %cst_881 = arith.constant 5.000000e-01 : f32
    %1559 = vector.broadcast %cst_881 : f32 to vector<16x32xf32>
    %1560 = arith.mulf %1559, %1558 : vector<16x32xf32>
    %1561 = vector.shape_cast %1560 : vector<16x32xf32> to vector<1x16x32xf32>
    %cst_882 = arith.constant dense<0.000000e+00> : vector<1xf32>
    %1562 = vector.multi_reduction <add>, %1561, %cst_882 [1, 2] : vector<1x16x32xf32> to vector<1xf32>
    %1563 = vector.shape_cast %1562 : vector<1xf32> to vector<1x1x1xf32>
    %1564 = vector.extract %1563[0, 0, 0] : f32 from vector<1x1x1xf32>
    %cst_883 = arith.constant 0.001953125 : f32
    %1565 = arith.mulf %1564, %cst_883 : f32
    %1566 = arith.mulf %1560, %1560 : vector<16x32xf32>
    %1567 = vector.shape_cast %1566 : vector<16x32xf32> to vector<1x16x32xf32>
    %cst_884 = arith.constant dense<0.000000e+00> : vector<1xf32>
    %1568 = vector.multi_reduction <add>, %1567, %cst_884 [1, 2] : vector<1x16x32xf32> to vector<1xf32>
    %1569 = vector.shape_cast %1568 : vector<1xf32> to vector<1x1x1xf32>
    %1570 = vector.extract %1569[0, 0, 0] : f32 from vector<1x1x1xf32>
    %cst_885 = arith.constant 0.001953125 : f32
    %1571 = arith.mulf %1570, %cst_885 : f32
    %1572 = arith.mulf %1565, %1565 : f32
    %1573 = arith.subf %1571, %1572 : f32
    %cst_886 = arith.constant 0.000000e+00 : f32
    %1574 = arith.maximumf %1573, %cst_886 : f32
    %cst_887 = arith.constant 9.99999974E-6 : f32
    %1575 = arith.addf %1574, %cst_887 : f32
    %1576 = math.rsqrt %1575 : f32
    %1577 = vector.broadcast %1576 : f32 to vector<1x32xf32>
    %1578 = arith.mulf %1375, %1577 : vector<1x32xf32>
    %1579 = vector.broadcast %1565 : f32 to vector<1x32xf32>
    %1580 = arith.mulf %1579, %1578 : vector<1x32xf32>
    %1581 = arith.subf %1377, %1580 : vector<1x32xf32>
    %cst_888 = arith.constant 1.000000e+00 : f32
    %1582 = vector.broadcast %cst_888 : f32 to vector<16x32xf32>
    %1583 = arith.addf %1550, %1582 : vector<16x32xf32>
    %cst_889 = arith.constant 5.000000e-01 : f32
    %1584 = vector.broadcast %cst_889 : f32 to vector<16x32xf32>
    %1585 = arith.mulf %1584, %1583 : vector<16x32xf32>
    %1586 = vector.broadcast %1578 : vector<1x32xf32> to vector<16x32xf32>
    %1587 = arith.mulf %1560, %1586 : vector<16x32xf32>
    %1588 = vector.broadcast %1581 : vector<1x32xf32> to vector<16x32xf32>
    %1589 = arith.addf %1587, %1588 : vector<16x32xf32>
    %1590 = math.tanh %1589 : vector<16x32xf32>
    %1591 = arith.mulf %1585, %1590 : vector<16x32xf32>
    %c3_890 = arith.constant 3 : index
    %c0_891 = arith.constant 0 : index
    %c0_892 = arith.constant 0 : index
    %1592 = vector.load %arg5[%c3_890, %c0_891, %c0_892] : memref<4x1x32xf32, #tpu.memory_space<vmem>>, vector<1x1x32xf32>
    %1593 = vector.shape_cast %1592 : vector<1x1x32xf32> to vector<1x32xf32>
    %c3_893 = arith.constant 3 : index
    %c0_894 = arith.constant 0 : index
    %c0_895 = arith.constant 0 : index
    %1594 = vector.load %arg6[%c3_893, %c0_894, %c0_895] : memref<4x32x128xbf16, #tpu.memory_space<vmem>>, vector<1x32x128xbf16>
    %1595 = vector.shape_cast %1594 : vector<1x32x128xbf16> to vector<32x128xbf16>
    %c3_896 = arith.constant 3 : index
    %c0_897 = arith.constant 0 : index
    %c0_898 = arith.constant 0 : index
    %1596 = vector.load %arg7[%c3_896, %c0_897, %c0_898] : memref<4x1x128xf32, #tpu.memory_space<vmem>>, vector<1x1x128xf32>
    %1597 = vector.shape_cast %1596 : vector<1x1x128xf32> to vector<1x128xf32>
    %c3_899 = arith.constant 3 : index
    %c0_900 = arith.constant 0 : index
    %c0_901 = arith.constant 0 : index
    %1598 = vector.load %arg8[%c3_899, %c0_900, %c0_901] : memref<4x1x32xf32, #tpu.memory_space<vmem>>, vector<1x1x32xf32>
    %1599 = vector.shape_cast %1598 : vector<1x1x32xf32> to vector<1x32xf32>
    %c3_902 = arith.constant 3 : index
    %c0_903 = arith.constant 0 : index
    %c0_904 = arith.constant 0 : index
    %1600 = vector.load %arg9[%c3_902, %c0_903, %c0_904] : memref<4x1x32xf32, #tpu.memory_space<vmem>>, vector<1x1x32xf32>
    %1601 = vector.shape_cast %1600 : vector<1x1x32xf32> to vector<1x32xf32>
    %1602 = arith.addf %1591, %1367 : vector<16x32xf32>
    %c3_905 = arith.constant 3 : index
    %c0_906 = arith.constant 0 : index
    %c0_907 = arith.constant 0 : index
    %c0_908 = arith.constant 0 : index
    %1603 = vector.load %arg4[%c3_905, %c0_906, %c0_907, %c0_908] : memref<4x16x16x32xf32, #tpu.memory_space<vmem>>, vector<1x1x16x32xf32>
    %1604 = vector.shape_cast %1603 : vector<1x1x16x32xf32> to vector<16x32xf32>
    %1605 = arith.mulf %1602, %1604 : vector<16x32xf32>
    %c15_i32_909 = arith.constant 15 : i32
    %1606 = tpu.dynamic_rotate %1602 by %c15_i32_909 dim 0 : vector<16x32xf32>, i32 -> vector<16x32xf32>
    %c3_910 = arith.constant 3 : index
    %c1_911 = arith.constant 1 : index
    %c0_912 = arith.constant 0 : index
    %c0_913 = arith.constant 0 : index
    %1607 = vector.load %arg4[%c3_910, %c1_911, %c0_912, %c0_913] : memref<4x16x16x32xf32, #tpu.memory_space<vmem>>, vector<1x1x16x32xf32>
    %1608 = vector.shape_cast %1607 : vector<1x1x16x32xf32> to vector<16x32xf32>
    %1609 = arith.mulf %1606, %1608 : vector<16x32xf32>
    %c14_i32_914 = arith.constant 14 : i32
    %1610 = tpu.dynamic_rotate %1602 by %c14_i32_914 dim 0 : vector<16x32xf32>, i32 -> vector<16x32xf32>
    %c3_915 = arith.constant 3 : index
    %c2_916 = arith.constant 2 : index
    %c0_917 = arith.constant 0 : index
    %c0_918 = arith.constant 0 : index
    %1611 = vector.load %arg4[%c3_915, %c2_916, %c0_917, %c0_918] : memref<4x16x16x32xf32, #tpu.memory_space<vmem>>, vector<1x1x16x32xf32>
    %1612 = vector.shape_cast %1611 : vector<1x1x16x32xf32> to vector<16x32xf32>
    %1613 = arith.mulf %1610, %1612 : vector<16x32xf32>
    %c13_i32_919 = arith.constant 13 : i32
    %1614 = tpu.dynamic_rotate %1602 by %c13_i32_919 dim 0 : vector<16x32xf32>, i32 -> vector<16x32xf32>
    %c3_920 = arith.constant 3 : index
    %c3_921 = arith.constant 3 : index
    %c0_922 = arith.constant 0 : index
    %c0_923 = arith.constant 0 : index
    %1615 = vector.load %arg4[%c3_920, %c3_921, %c0_922, %c0_923] : memref<4x16x16x32xf32, #tpu.memory_space<vmem>>, vector<1x1x16x32xf32>
    %1616 = vector.shape_cast %1615 : vector<1x1x16x32xf32> to vector<16x32xf32>
    %1617 = arith.mulf %1614, %1616 : vector<16x32xf32>
    %c12_i32_924 = arith.constant 12 : i32
    %1618 = tpu.dynamic_rotate %1602 by %c12_i32_924 dim 0 : vector<16x32xf32>, i32 -> vector<16x32xf32>
    %c3_925 = arith.constant 3 : index
    %c4_926 = arith.constant 4 : index
    %c0_927 = arith.constant 0 : index
    %c0_928 = arith.constant 0 : index
    %1619 = vector.load %arg4[%c3_925, %c4_926, %c0_927, %c0_928] : memref<4x16x16x32xf32, #tpu.memory_space<vmem>>, vector<1x1x16x32xf32>
    %1620 = vector.shape_cast %1619 : vector<1x1x16x32xf32> to vector<16x32xf32>
    %1621 = arith.mulf %1618, %1620 : vector<16x32xf32>
    %1622 = arith.addf %1605, %1621 : vector<16x32xf32>
    %c11_i32_929 = arith.constant 11 : i32
    %1623 = tpu.dynamic_rotate %1602 by %c11_i32_929 dim 0 : vector<16x32xf32>, i32 -> vector<16x32xf32>
    %c3_930 = arith.constant 3 : index
    %c5_931 = arith.constant 5 : index
    %c0_932 = arith.constant 0 : index
    %c0_933 = arith.constant 0 : index
    %1624 = vector.load %arg4[%c3_930, %c5_931, %c0_932, %c0_933] : memref<4x16x16x32xf32, #tpu.memory_space<vmem>>, vector<1x1x16x32xf32>
    %1625 = vector.shape_cast %1624 : vector<1x1x16x32xf32> to vector<16x32xf32>
    %1626 = arith.mulf %1623, %1625 : vector<16x32xf32>
    %1627 = arith.addf %1609, %1626 : vector<16x32xf32>
    %c10_i32_934 = arith.constant 10 : i32
    %1628 = tpu.dynamic_rotate %1602 by %c10_i32_934 dim 0 : vector<16x32xf32>, i32 -> vector<16x32xf32>
    %c3_935 = arith.constant 3 : index
    %c6_936 = arith.constant 6 : index
    %c0_937 = arith.constant 0 : index
    %c0_938 = arith.constant 0 : index
    %1629 = vector.load %arg4[%c3_935, %c6_936, %c0_937, %c0_938] : memref<4x16x16x32xf32, #tpu.memory_space<vmem>>, vector<1x1x16x32xf32>
    %1630 = vector.shape_cast %1629 : vector<1x1x16x32xf32> to vector<16x32xf32>
    %1631 = arith.mulf %1628, %1630 : vector<16x32xf32>
    %1632 = arith.addf %1613, %1631 : vector<16x32xf32>
    %c9_i32_939 = arith.constant 9 : i32
    %1633 = tpu.dynamic_rotate %1602 by %c9_i32_939 dim 0 : vector<16x32xf32>, i32 -> vector<16x32xf32>
    %c3_940 = arith.constant 3 : index
    %c7_941 = arith.constant 7 : index
    %c0_942 = arith.constant 0 : index
    %c0_943 = arith.constant 0 : index
    %1634 = vector.load %arg4[%c3_940, %c7_941, %c0_942, %c0_943] : memref<4x16x16x32xf32, #tpu.memory_space<vmem>>, vector<1x1x16x32xf32>
    %1635 = vector.shape_cast %1634 : vector<1x1x16x32xf32> to vector<16x32xf32>
    %1636 = arith.mulf %1633, %1635 : vector<16x32xf32>
    %1637 = arith.addf %1617, %1636 : vector<16x32xf32>
    %c8_i32_944 = arith.constant 8 : i32
    %1638 = tpu.dynamic_rotate %1602 by %c8_i32_944 dim 0 : vector<16x32xf32>, i32 -> vector<16x32xf32>
    %c3_945 = arith.constant 3 : index
    %c8_946 = arith.constant 8 : index
    %c0_947 = arith.constant 0 : index
    %c0_948 = arith.constant 0 : index
    %1639 = vector.load %arg4[%c3_945, %c8_946, %c0_947, %c0_948] : memref<4x16x16x32xf32, #tpu.memory_space<vmem>>, vector<1x1x16x32xf32>
    %1640 = vector.shape_cast %1639 : vector<1x1x16x32xf32> to vector<16x32xf32>
    %1641 = arith.mulf %1638, %1640 : vector<16x32xf32>
    %1642 = arith.addf %1622, %1641 : vector<16x32xf32>
    %c7_i32_949 = arith.constant 7 : i32
    %1643 = tpu.dynamic_rotate %1602 by %c7_i32_949 dim 0 : vector<16x32xf32>, i32 -> vector<16x32xf32>
    %c3_950 = arith.constant 3 : index
    %c9_951 = arith.constant 9 : index
    %c0_952 = arith.constant 0 : index
    %c0_953 = arith.constant 0 : index
    %1644 = vector.load %arg4[%c3_950, %c9_951, %c0_952, %c0_953] : memref<4x16x16x32xf32, #tpu.memory_space<vmem>>, vector<1x1x16x32xf32>
    %1645 = vector.shape_cast %1644 : vector<1x1x16x32xf32> to vector<16x32xf32>
    %1646 = arith.mulf %1643, %1645 : vector<16x32xf32>
    %1647 = arith.addf %1627, %1646 : vector<16x32xf32>
    %c6_i32_954 = arith.constant 6 : i32
    %1648 = tpu.dynamic_rotate %1602 by %c6_i32_954 dim 0 : vector<16x32xf32>, i32 -> vector<16x32xf32>
    %c3_955 = arith.constant 3 : index
    %c10_956 = arith.constant 10 : index
    %c0_957 = arith.constant 0 : index
    %c0_958 = arith.constant 0 : index
    %1649 = vector.load %arg4[%c3_955, %c10_956, %c0_957, %c0_958] : memref<4x16x16x32xf32, #tpu.memory_space<vmem>>, vector<1x1x16x32xf32>
    %1650 = vector.shape_cast %1649 : vector<1x1x16x32xf32> to vector<16x32xf32>
    %1651 = arith.mulf %1648, %1650 : vector<16x32xf32>
    %1652 = arith.addf %1632, %1651 : vector<16x32xf32>
    %c5_i32_959 = arith.constant 5 : i32
    %1653 = tpu.dynamic_rotate %1602 by %c5_i32_959 dim 0 : vector<16x32xf32>, i32 -> vector<16x32xf32>
    %c3_960 = arith.constant 3 : index
    %c11_961 = arith.constant 11 : index
    %c0_962 = arith.constant 0 : index
    %c0_963 = arith.constant 0 : index
    %1654 = vector.load %arg4[%c3_960, %c11_961, %c0_962, %c0_963] : memref<4x16x16x32xf32, #tpu.memory_space<vmem>>, vector<1x1x16x32xf32>
    %1655 = vector.shape_cast %1654 : vector<1x1x16x32xf32> to vector<16x32xf32>
    %1656 = arith.mulf %1653, %1655 : vector<16x32xf32>
    %1657 = arith.addf %1637, %1656 : vector<16x32xf32>
    %c4_i32_964 = arith.constant 4 : i32
    %1658 = tpu.dynamic_rotate %1602 by %c4_i32_964 dim 0 : vector<16x32xf32>, i32 -> vector<16x32xf32>
    %c3_965 = arith.constant 3 : index
    %c12_966 = arith.constant 12 : index
    %c0_967 = arith.constant 0 : index
    %c0_968 = arith.constant 0 : index
    %1659 = vector.load %arg4[%c3_965, %c12_966, %c0_967, %c0_968] : memref<4x16x16x32xf32, #tpu.memory_space<vmem>>, vector<1x1x16x32xf32>
    %1660 = vector.shape_cast %1659 : vector<1x1x16x32xf32> to vector<16x32xf32>
    %1661 = arith.mulf %1658, %1660 : vector<16x32xf32>
    %1662 = arith.addf %1642, %1661 : vector<16x32xf32>
    %c3_i32_969 = arith.constant 3 : i32
    %1663 = tpu.dynamic_rotate %1602 by %c3_i32_969 dim 0 : vector<16x32xf32>, i32 -> vector<16x32xf32>
    %c3_970 = arith.constant 3 : index
    %c13_971 = arith.constant 13 : index
    %c0_972 = arith.constant 0 : index
    %c0_973 = arith.constant 0 : index
    %1664 = vector.load %arg4[%c3_970, %c13_971, %c0_972, %c0_973] : memref<4x16x16x32xf32, #tpu.memory_space<vmem>>, vector<1x1x16x32xf32>
    %1665 = vector.shape_cast %1664 : vector<1x1x16x32xf32> to vector<16x32xf32>
    %1666 = arith.mulf %1663, %1665 : vector<16x32xf32>
    %1667 = arith.addf %1647, %1666 : vector<16x32xf32>
    %c2_i32_974 = arith.constant 2 : i32
    %1668 = tpu.dynamic_rotate %1602 by %c2_i32_974 dim 0 : vector<16x32xf32>, i32 -> vector<16x32xf32>
    %c3_975 = arith.constant 3 : index
    %c14_976 = arith.constant 14 : index
    %c0_977 = arith.constant 0 : index
    %c0_978 = arith.constant 0 : index
    %1669 = vector.load %arg4[%c3_975, %c14_976, %c0_977, %c0_978] : memref<4x16x16x32xf32, #tpu.memory_space<vmem>>, vector<1x1x16x32xf32>
    %1670 = vector.shape_cast %1669 : vector<1x1x16x32xf32> to vector<16x32xf32>
    %1671 = arith.mulf %1668, %1670 : vector<16x32xf32>
    %1672 = arith.addf %1652, %1671 : vector<16x32xf32>
    %c1_i32_979 = arith.constant 1 : i32
    %1673 = tpu.dynamic_rotate %1602 by %c1_i32_979 dim 0 : vector<16x32xf32>, i32 -> vector<16x32xf32>
    %c3_980 = arith.constant 3 : index
    %c15_981 = arith.constant 15 : index
    %c0_982 = arith.constant 0 : index
    %c0_983 = arith.constant 0 : index
    %1674 = vector.load %arg4[%c3_980, %c15_981, %c0_982, %c0_983] : memref<4x16x16x32xf32, #tpu.memory_space<vmem>>, vector<1x1x16x32xf32>
    %1675 = vector.shape_cast %1674 : vector<1x1x16x32xf32> to vector<16x32xf32>
    %1676 = arith.mulf %1673, %1675 : vector<16x32xf32>
    %1677 = arith.addf %1657, %1676 : vector<16x32xf32>
    %1678 = arith.addf %1662, %1667 : vector<16x32xf32>
    %1679 = arith.addf %1678, %1672 : vector<16x32xf32>
    %1680 = arith.addf %1679, %1677 : vector<16x32xf32>
    %1681 = vector.broadcast %1593 : vector<1x32xf32> to vector<16x32xf32>
    %1682 = arith.addf %1680, %1681 : vector<16x32xf32>
    %1683 = vector.extract_strided_slice %1682 {offsets = [0, 0], sizes = [16, 8], strides = [1, 1]} : vector<16x32xf32> to vector<16x8xf32>
    %1684 = vector.shape_cast %1683 : vector<16x8xf32> to vector<1x16x8xf32>
    %cst_984 = arith.constant dense<0.000000e+00> : vector<1xf32>
    %1685 = vector.multi_reduction <add>, %1684, %cst_984 [1, 2] : vector<1x16x8xf32> to vector<1xf32>
    %1686 = vector.shape_cast %1685 : vector<1xf32> to vector<1x1x1xf32>
    %1687 = vector.extract %1686[0, 0, 0] : f32 from vector<1x1x1xf32>
    %cst_985 = arith.constant 7.812500e-03 : f32
    %1688 = arith.mulf %1687, %cst_985 : f32
    %1689 = arith.mulf %1683, %1683 : vector<16x8xf32>
    %1690 = vector.shape_cast %1689 : vector<16x8xf32> to vector<1x16x8xf32>
    %cst_986 = arith.constant dense<0.000000e+00> : vector<1xf32>
    %1691 = vector.multi_reduction <add>, %1690, %cst_986 [1, 2] : vector<1x16x8xf32> to vector<1xf32>
    %1692 = vector.shape_cast %1691 : vector<1xf32> to vector<1x1x1xf32>
    %1693 = vector.extract %1692[0, 0, 0] : f32 from vector<1x1x1xf32>
    %cst_987 = arith.constant 7.812500e-03 : f32
    %1694 = arith.mulf %1693, %cst_987 : f32
    %1695 = arith.mulf %1688, %1688 : f32
    %1696 = arith.subf %1694, %1695 : f32
    %cst_988 = arith.constant 0.000000e+00 : f32
    %1697 = arith.maximumf %1696, %cst_988 : f32
    %1698 = vector.broadcast %1688 : f32 to vector<16x8xf32>
    %1699 = arith.subf %1683, %1698 : vector<16x8xf32>
    %cst_989 = arith.constant 9.99999974E-6 : f32
    %1700 = arith.addf %1697, %cst_989 : f32
    %1701 = math.rsqrt %1700 : f32
    %1702 = vector.broadcast %1701 : f32 to vector<16x8xf32>
    %1703 = arith.mulf %1699, %1702 : vector<16x8xf32>
    %1704 = vector.extract_strided_slice %1682 {offsets = [0, 8], sizes = [16, 8], strides = [1, 1]} : vector<16x32xf32> to vector<16x8xf32>
    %1705 = vector.shape_cast %1704 : vector<16x8xf32> to vector<1x16x8xf32>
    %cst_990 = arith.constant dense<0.000000e+00> : vector<1xf32>
    %1706 = vector.multi_reduction <add>, %1705, %cst_990 [1, 2] : vector<1x16x8xf32> to vector<1xf32>
    %1707 = vector.shape_cast %1706 : vector<1xf32> to vector<1x1x1xf32>
    %1708 = vector.extract %1707[0, 0, 0] : f32 from vector<1x1x1xf32>
    %cst_991 = arith.constant 7.812500e-03 : f32
    %1709 = arith.mulf %1708, %cst_991 : f32
    %1710 = arith.mulf %1704, %1704 : vector<16x8xf32>
    %1711 = vector.shape_cast %1710 : vector<16x8xf32> to vector<1x16x8xf32>
    %cst_992 = arith.constant dense<0.000000e+00> : vector<1xf32>
    %1712 = vector.multi_reduction <add>, %1711, %cst_992 [1, 2] : vector<1x16x8xf32> to vector<1xf32>
    %1713 = vector.shape_cast %1712 : vector<1xf32> to vector<1x1x1xf32>
    %1714 = vector.extract %1713[0, 0, 0] : f32 from vector<1x1x1xf32>
    %cst_993 = arith.constant 7.812500e-03 : f32
    %1715 = arith.mulf %1714, %cst_993 : f32
    %1716 = arith.mulf %1709, %1709 : f32
    %1717 = arith.subf %1715, %1716 : f32
    %cst_994 = arith.constant 0.000000e+00 : f32
    %1718 = arith.maximumf %1717, %cst_994 : f32
    %1719 = vector.broadcast %1709 : f32 to vector<16x8xf32>
    %1720 = arith.subf %1704, %1719 : vector<16x8xf32>
    %cst_995 = arith.constant 9.99999974E-6 : f32
    %1721 = arith.addf %1718, %cst_995 : f32
    %1722 = math.rsqrt %1721 : f32
    %1723 = vector.broadcast %1722 : f32 to vector<16x8xf32>
    %1724 = arith.mulf %1720, %1723 : vector<16x8xf32>
    %1725 = vector.extract_strided_slice %1682 {offsets = [0, 16], sizes = [16, 8], strides = [1, 1]} : vector<16x32xf32> to vector<16x8xf32>
    %1726 = vector.shape_cast %1725 : vector<16x8xf32> to vector<1x16x8xf32>
    %cst_996 = arith.constant dense<0.000000e+00> : vector<1xf32>
    %1727 = vector.multi_reduction <add>, %1726, %cst_996 [1, 2] : vector<1x16x8xf32> to vector<1xf32>
    %1728 = vector.shape_cast %1727 : vector<1xf32> to vector<1x1x1xf32>
    %1729 = vector.extract %1728[0, 0, 0] : f32 from vector<1x1x1xf32>
    %cst_997 = arith.constant 7.812500e-03 : f32
    %1730 = arith.mulf %1729, %cst_997 : f32
    %1731 = arith.mulf %1725, %1725 : vector<16x8xf32>
    %1732 = vector.shape_cast %1731 : vector<16x8xf32> to vector<1x16x8xf32>
    %cst_998 = arith.constant dense<0.000000e+00> : vector<1xf32>
    %1733 = vector.multi_reduction <add>, %1732, %cst_998 [1, 2] : vector<1x16x8xf32> to vector<1xf32>
    %1734 = vector.shape_cast %1733 : vector<1xf32> to vector<1x1x1xf32>
    %1735 = vector.extract %1734[0, 0, 0] : f32 from vector<1x1x1xf32>
    %cst_999 = arith.constant 7.812500e-03 : f32
    %1736 = arith.mulf %1735, %cst_999 : f32
    %1737 = arith.mulf %1730, %1730 : f32
    %1738 = arith.subf %1736, %1737 : f32
    %cst_1000 = arith.constant 0.000000e+00 : f32
    %1739 = arith.maximumf %1738, %cst_1000 : f32
    %1740 = vector.broadcast %1730 : f32 to vector<16x8xf32>
    %1741 = arith.subf %1725, %1740 : vector<16x8xf32>
    %cst_1001 = arith.constant 9.99999974E-6 : f32
    %1742 = arith.addf %1739, %cst_1001 : f32
    %1743 = math.rsqrt %1742 : f32
    %1744 = vector.broadcast %1743 : f32 to vector<16x8xf32>
    %1745 = arith.mulf %1741, %1744 : vector<16x8xf32>
    %1746 = vector.extract_strided_slice %1682 {offsets = [0, 24], sizes = [16, 8], strides = [1, 1]} : vector<16x32xf32> to vector<16x8xf32>
    %1747 = vector.shape_cast %1746 : vector<16x8xf32> to vector<1x16x8xf32>
    %cst_1002 = arith.constant dense<0.000000e+00> : vector<1xf32>
    %1748 = vector.multi_reduction <add>, %1747, %cst_1002 [1, 2] : vector<1x16x8xf32> to vector<1xf32>
    %1749 = vector.shape_cast %1748 : vector<1xf32> to vector<1x1x1xf32>
    %1750 = vector.extract %1749[0, 0, 0] : f32 from vector<1x1x1xf32>
    %cst_1003 = arith.constant 7.812500e-03 : f32
    %1751 = arith.mulf %1750, %cst_1003 : f32
    %1752 = arith.mulf %1746, %1746 : vector<16x8xf32>
    %1753 = vector.shape_cast %1752 : vector<16x8xf32> to vector<1x16x8xf32>
    %cst_1004 = arith.constant dense<0.000000e+00> : vector<1xf32>
    %1754 = vector.multi_reduction <add>, %1753, %cst_1004 [1, 2] : vector<1x16x8xf32> to vector<1xf32>
    %1755 = vector.shape_cast %1754 : vector<1xf32> to vector<1x1x1xf32>
    %1756 = vector.extract %1755[0, 0, 0] : f32 from vector<1x1x1xf32>
    %cst_1005 = arith.constant 7.812500e-03 : f32
    %1757 = arith.mulf %1756, %cst_1005 : f32
    %1758 = arith.mulf %1751, %1751 : f32
    %1759 = arith.subf %1757, %1758 : f32
    %cst_1006 = arith.constant 0.000000e+00 : f32
    %1760 = arith.maximumf %1759, %cst_1006 : f32
    %1761 = vector.broadcast %1751 : f32 to vector<16x8xf32>
    %1762 = arith.subf %1746, %1761 : vector<16x8xf32>
    %cst_1007 = arith.constant 9.99999974E-6 : f32
    %1763 = arith.addf %1760, %cst_1007 : f32
    %1764 = math.rsqrt %1763 : f32
    %1765 = vector.broadcast %1764 : f32 to vector<16x8xf32>
    %1766 = arith.mulf %1762, %1765 : vector<16x8xf32>
    %1767 = tpu.concatenate %1703, %1724, %1745, %1766 in 1 : vector<16x8xf32>, vector<16x8xf32>, vector<16x8xf32>, vector<16x8xf32> -> vector<16x32xf32>
    %1768 = arith.truncf %1767 : vector<16x32xf32> to vector<16x32xbf16>
    %cst_1008 = arith.constant dense<0.000000e+00> : vector<16x128xf32>
    %1769 = tpu.matmul %1768, %1595, %cst_1008 {dimension_numbers = #tpu.dot_dimension_numbers<[1], [0], [0], [1], [0, 0, 1, 1], [], []>} : vector<16x32xbf16>, vector<32x128xbf16>, vector<16x128xf32> -> vector<16x128xf32>
    %1770 = vector.broadcast %1597 : vector<1x128xf32> to vector<16x128xf32>
    %1771 = arith.addf %1769, %1770 : vector<16x128xf32>
    %1772 = math.tanh %1771 : vector<16x128xf32>
    %1773 = vector.extract_strided_slice %1772 {offsets = [0, 0], sizes = [16, 32], strides = [1, 1]} : vector<16x128xf32> to vector<16x32xf32>
    %1774 = vector.extract_strided_slice %1772 {offsets = [0, 32], sizes = [16, 32], strides = [1, 1]} : vector<16x128xf32> to vector<16x32xf32>
    %1775 = vector.extract_strided_slice %1772 {offsets = [0, 64], sizes = [16, 32], strides = [1, 1]} : vector<16x128xf32> to vector<16x32xf32>
    %1776 = vector.extract_strided_slice %1772 {offsets = [0, 96], sizes = [16, 32], strides = [1, 1]} : vector<16x128xf32> to vector<16x32xf32>
    %cst_1009 = arith.constant 1.000000e+00 : f32
    %1777 = vector.broadcast %cst_1009 : f32 to vector<16x32xf32>
    %1778 = arith.addf %1774, %1777 : vector<16x32xf32>
    %1779 = arith.mulf %1778, %1336 : vector<16x32xf32>
    %cst_1010 = arith.constant 1.000000e+00 : f32
    %1780 = vector.broadcast %cst_1010 : f32 to vector<16x32xf32>
    %1781 = arith.addf %1773, %1780 : vector<16x32xf32>
    %1782 = arith.mulf %1781, %1776 : vector<16x32xf32>
    %1783 = arith.addf %1779, %1782 : vector<16x32xf32>
    %cst_1011 = arith.constant 5.000000e-01 : f32
    %1784 = vector.broadcast %cst_1011 : f32 to vector<16x32xf32>
    %1785 = arith.mulf %1784, %1783 : vector<16x32xf32>
    %1786 = vector.shape_cast %1785 : vector<16x32xf32> to vector<1x16x32xf32>
    %cst_1012 = arith.constant dense<0.000000e+00> : vector<1xf32>
    %1787 = vector.multi_reduction <add>, %1786, %cst_1012 [1, 2] : vector<1x16x32xf32> to vector<1xf32>
    %1788 = vector.shape_cast %1787 : vector<1xf32> to vector<1x1x1xf32>
    %1789 = vector.extract %1788[0, 0, 0] : f32 from vector<1x1x1xf32>
    %cst_1013 = arith.constant 0.001953125 : f32
    %1790 = arith.mulf %1789, %cst_1013 : f32
    %1791 = arith.mulf %1785, %1785 : vector<16x32xf32>
    %1792 = vector.shape_cast %1791 : vector<16x32xf32> to vector<1x16x32xf32>
    %cst_1014 = arith.constant dense<0.000000e+00> : vector<1xf32>
    %1793 = vector.multi_reduction <add>, %1792, %cst_1014 [1, 2] : vector<1x16x32xf32> to vector<1xf32>
    %1794 = vector.shape_cast %1793 : vector<1xf32> to vector<1x1x1xf32>
    %1795 = vector.extract %1794[0, 0, 0] : f32 from vector<1x1x1xf32>
    %cst_1015 = arith.constant 0.001953125 : f32
    %1796 = arith.mulf %1795, %cst_1015 : f32
    %1797 = arith.mulf %1790, %1790 : f32
    %1798 = arith.subf %1796, %1797 : f32
    %cst_1016 = arith.constant 0.000000e+00 : f32
    %1799 = arith.maximumf %1798, %cst_1016 : f32
    %cst_1017 = arith.constant 9.99999974E-6 : f32
    %1800 = arith.addf %1799, %cst_1017 : f32
    %1801 = math.rsqrt %1800 : f32
    %1802 = vector.broadcast %1801 : f32 to vector<1x32xf32>
    %1803 = arith.mulf %1599, %1802 : vector<1x32xf32>
    %1804 = vector.broadcast %1790 : f32 to vector<1x32xf32>
    %1805 = arith.mulf %1804, %1803 : vector<1x32xf32>
    %1806 = arith.subf %1601, %1805 : vector<1x32xf32>
    %cst_1018 = arith.constant 1.000000e+00 : f32
    %1807 = vector.broadcast %cst_1018 : f32 to vector<16x32xf32>
    %1808 = arith.addf %1775, %1807 : vector<16x32xf32>
    %cst_1019 = arith.constant 5.000000e-01 : f32
    %1809 = vector.broadcast %cst_1019 : f32 to vector<16x32xf32>
    %1810 = arith.mulf %1809, %1808 : vector<16x32xf32>
    %1811 = vector.broadcast %1803 : vector<1x32xf32> to vector<16x32xf32>
    %1812 = arith.mulf %1785, %1811 : vector<16x32xf32>
    %1813 = vector.broadcast %1806 : vector<1x32xf32> to vector<16x32xf32>
    %1814 = arith.addf %1812, %1813 : vector<16x32xf32>
    %1815 = math.tanh %1814 : vector<16x32xf32>
    %1816 = arith.mulf %1810, %1815 : vector<16x32xf32>
    %1817 = arith.addf %1591, %1816 : vector<16x32xf32>
    %c2_1020 = arith.constant 2 : index
    %c0_1021 = arith.constant 0 : index
    %c0_1022 = arith.constant 0 : index
    %1818 = vector.load %arg5[%c2_1020, %c0_1021, %c0_1022] : memref<4x1x32xf32, #tpu.memory_space<vmem>>, vector<1x1x32xf32>
    %1819 = vector.shape_cast %1818 : vector<1x1x32xf32> to vector<1x32xf32>
    %c2_1023 = arith.constant 2 : index
    %c0_1024 = arith.constant 0 : index
    %c0_1025 = arith.constant 0 : index
    %1820 = vector.load %arg6[%c2_1023, %c0_1024, %c0_1025] : memref<4x32x128xbf16, #tpu.memory_space<vmem>>, vector<1x32x128xbf16>
    %1821 = vector.shape_cast %1820 : vector<1x32x128xbf16> to vector<32x128xbf16>
    %c2_1026 = arith.constant 2 : index
    %c0_1027 = arith.constant 0 : index
    %c0_1028 = arith.constant 0 : index
    %1822 = vector.load %arg7[%c2_1026, %c0_1027, %c0_1028] : memref<4x1x128xf32, #tpu.memory_space<vmem>>, vector<1x1x128xf32>
    %1823 = vector.shape_cast %1822 : vector<1x1x128xf32> to vector<1x128xf32>
    %c2_1029 = arith.constant 2 : index
    %c0_1030 = arith.constant 0 : index
    %c0_1031 = arith.constant 0 : index
    %1824 = vector.load %arg8[%c2_1029, %c0_1030, %c0_1031] : memref<4x1x32xf32, #tpu.memory_space<vmem>>, vector<1x1x32xf32>
    %1825 = vector.shape_cast %1824 : vector<1x1x32xf32> to vector<1x32xf32>
    %c2_1032 = arith.constant 2 : index
    %c0_1033 = arith.constant 0 : index
    %c0_1034 = arith.constant 0 : index
    %1826 = vector.load %arg9[%c2_1032, %c0_1033, %c0_1034] : memref<4x1x32xf32, #tpu.memory_space<vmem>>, vector<1x1x32xf32>
    %1827 = vector.shape_cast %1826 : vector<1x1x32xf32> to vector<1x32xf32>
    %c2_1035 = arith.constant 2 : index
    %c0_1036 = arith.constant 0 : index
    %c0_1037 = arith.constant 0 : index
    %c0_1038 = arith.constant 0 : index
    %1828 = vector.load %arg4[%c2_1035, %c0_1036, %c0_1037, %c0_1038] : memref<4x16x16x32xf32, #tpu.memory_space<vmem>>, vector<1x1x16x32xf32>
    %1829 = vector.shape_cast %1828 : vector<1x1x16x32xf32> to vector<16x32xf32>
    %1830 = arith.mulf %1591, %1829 : vector<16x32xf32>
    %c15_i32_1039 = arith.constant 15 : i32
    %1831 = tpu.dynamic_rotate %1591 by %c15_i32_1039 dim 0 : vector<16x32xf32>, i32 -> vector<16x32xf32>
    %c2_1040 = arith.constant 2 : index
    %c1_1041 = arith.constant 1 : index
    %c0_1042 = arith.constant 0 : index
    %c0_1043 = arith.constant 0 : index
    %1832 = vector.load %arg4[%c2_1040, %c1_1041, %c0_1042, %c0_1043] : memref<4x16x16x32xf32, #tpu.memory_space<vmem>>, vector<1x1x16x32xf32>
    %1833 = vector.shape_cast %1832 : vector<1x1x16x32xf32> to vector<16x32xf32>
    %1834 = arith.mulf %1831, %1833 : vector<16x32xf32>
    %c14_i32_1044 = arith.constant 14 : i32
    %1835 = tpu.dynamic_rotate %1591 by %c14_i32_1044 dim 0 : vector<16x32xf32>, i32 -> vector<16x32xf32>
    %c2_1045 = arith.constant 2 : index
    %c2_1046 = arith.constant 2 : index
    %c0_1047 = arith.constant 0 : index
    %c0_1048 = arith.constant 0 : index
    %1836 = vector.load %arg4[%c2_1045, %c2_1046, %c0_1047, %c0_1048] : memref<4x16x16x32xf32, #tpu.memory_space<vmem>>, vector<1x1x16x32xf32>
    %1837 = vector.shape_cast %1836 : vector<1x1x16x32xf32> to vector<16x32xf32>
    %1838 = arith.mulf %1835, %1837 : vector<16x32xf32>
    %c13_i32_1049 = arith.constant 13 : i32
    %1839 = tpu.dynamic_rotate %1591 by %c13_i32_1049 dim 0 : vector<16x32xf32>, i32 -> vector<16x32xf32>
    %c2_1050 = arith.constant 2 : index
    %c3_1051 = arith.constant 3 : index
    %c0_1052 = arith.constant 0 : index
    %c0_1053 = arith.constant 0 : index
    %1840 = vector.load %arg4[%c2_1050, %c3_1051, %c0_1052, %c0_1053] : memref<4x16x16x32xf32, #tpu.memory_space<vmem>>, vector<1x1x16x32xf32>
    %1841 = vector.shape_cast %1840 : vector<1x1x16x32xf32> to vector<16x32xf32>
    %1842 = arith.mulf %1839, %1841 : vector<16x32xf32>
    %c12_i32_1054 = arith.constant 12 : i32
    %1843 = tpu.dynamic_rotate %1591 by %c12_i32_1054 dim 0 : vector<16x32xf32>, i32 -> vector<16x32xf32>
    %c2_1055 = arith.constant 2 : index
    %c4_1056 = arith.constant 4 : index
    %c0_1057 = arith.constant 0 : index
    %c0_1058 = arith.constant 0 : index
    %1844 = vector.load %arg4[%c2_1055, %c4_1056, %c0_1057, %c0_1058] : memref<4x16x16x32xf32, #tpu.memory_space<vmem>>, vector<1x1x16x32xf32>
    %1845 = vector.shape_cast %1844 : vector<1x1x16x32xf32> to vector<16x32xf32>
    %1846 = arith.mulf %1843, %1845 : vector<16x32xf32>
    %1847 = arith.addf %1830, %1846 : vector<16x32xf32>
    %c11_i32_1059 = arith.constant 11 : i32
    %1848 = tpu.dynamic_rotate %1591 by %c11_i32_1059 dim 0 : vector<16x32xf32>, i32 -> vector<16x32xf32>
    %c2_1060 = arith.constant 2 : index
    %c5_1061 = arith.constant 5 : index
    %c0_1062 = arith.constant 0 : index
    %c0_1063 = arith.constant 0 : index
    %1849 = vector.load %arg4[%c2_1060, %c5_1061, %c0_1062, %c0_1063] : memref<4x16x16x32xf32, #tpu.memory_space<vmem>>, vector<1x1x16x32xf32>
    %1850 = vector.shape_cast %1849 : vector<1x1x16x32xf32> to vector<16x32xf32>
    %1851 = arith.mulf %1848, %1850 : vector<16x32xf32>
    %1852 = arith.addf %1834, %1851 : vector<16x32xf32>
    %c10_i32_1064 = arith.constant 10 : i32
    %1853 = tpu.dynamic_rotate %1591 by %c10_i32_1064 dim 0 : vector<16x32xf32>, i32 -> vector<16x32xf32>
    %c2_1065 = arith.constant 2 : index
    %c6_1066 = arith.constant 6 : index
    %c0_1067 = arith.constant 0 : index
    %c0_1068 = arith.constant 0 : index
    %1854 = vector.load %arg4[%c2_1065, %c6_1066, %c0_1067, %c0_1068] : memref<4x16x16x32xf32, #tpu.memory_space<vmem>>, vector<1x1x16x32xf32>
    %1855 = vector.shape_cast %1854 : vector<1x1x16x32xf32> to vector<16x32xf32>
    %1856 = arith.mulf %1853, %1855 : vector<16x32xf32>
    %1857 = arith.addf %1838, %1856 : vector<16x32xf32>
    %c9_i32_1069 = arith.constant 9 : i32
    %1858 = tpu.dynamic_rotate %1591 by %c9_i32_1069 dim 0 : vector<16x32xf32>, i32 -> vector<16x32xf32>
    %c2_1070 = arith.constant 2 : index
    %c7_1071 = arith.constant 7 : index
    %c0_1072 = arith.constant 0 : index
    %c0_1073 = arith.constant 0 : index
    %1859 = vector.load %arg4[%c2_1070, %c7_1071, %c0_1072, %c0_1073] : memref<4x16x16x32xf32, #tpu.memory_space<vmem>>, vector<1x1x16x32xf32>
    %1860 = vector.shape_cast %1859 : vector<1x1x16x32xf32> to vector<16x32xf32>
    %1861 = arith.mulf %1858, %1860 : vector<16x32xf32>
    %1862 = arith.addf %1842, %1861 : vector<16x32xf32>
    %c8_i32_1074 = arith.constant 8 : i32
    %1863 = tpu.dynamic_rotate %1591 by %c8_i32_1074 dim 0 : vector<16x32xf32>, i32 -> vector<16x32xf32>
    %c2_1075 = arith.constant 2 : index
    %c8_1076 = arith.constant 8 : index
    %c0_1077 = arith.constant 0 : index
    %c0_1078 = arith.constant 0 : index
    %1864 = vector.load %arg4[%c2_1075, %c8_1076, %c0_1077, %c0_1078] : memref<4x16x16x32xf32, #tpu.memory_space<vmem>>, vector<1x1x16x32xf32>
    %1865 = vector.shape_cast %1864 : vector<1x1x16x32xf32> to vector<16x32xf32>
    %1866 = arith.mulf %1863, %1865 : vector<16x32xf32>
    %1867 = arith.addf %1847, %1866 : vector<16x32xf32>
    %c7_i32_1079 = arith.constant 7 : i32
    %1868 = tpu.dynamic_rotate %1591 by %c7_i32_1079 dim 0 : vector<16x32xf32>, i32 -> vector<16x32xf32>
    %c2_1080 = arith.constant 2 : index
    %c9_1081 = arith.constant 9 : index
    %c0_1082 = arith.constant 0 : index
    %c0_1083 = arith.constant 0 : index
    %1869 = vector.load %arg4[%c2_1080, %c9_1081, %c0_1082, %c0_1083] : memref<4x16x16x32xf32, #tpu.memory_space<vmem>>, vector<1x1x16x32xf32>
    %1870 = vector.shape_cast %1869 : vector<1x1x16x32xf32> to vector<16x32xf32>
    %1871 = arith.mulf %1868, %1870 : vector<16x32xf32>
    %1872 = arith.addf %1852, %1871 : vector<16x32xf32>
    %c6_i32_1084 = arith.constant 6 : i32
    %1873 = tpu.dynamic_rotate %1591 by %c6_i32_1084 dim 0 : vector<16x32xf32>, i32 -> vector<16x32xf32>
    %c2_1085 = arith.constant 2 : index
    %c10_1086 = arith.constant 10 : index
    %c0_1087 = arith.constant 0 : index
    %c0_1088 = arith.constant 0 : index
    %1874 = vector.load %arg4[%c2_1085, %c10_1086, %c0_1087, %c0_1088] : memref<4x16x16x32xf32, #tpu.memory_space<vmem>>, vector<1x1x16x32xf32>
    %1875 = vector.shape_cast %1874 : vector<1x1x16x32xf32> to vector<16x32xf32>
    %1876 = arith.mulf %1873, %1875 : vector<16x32xf32>
    %1877 = arith.addf %1857, %1876 : vector<16x32xf32>
    %c5_i32_1089 = arith.constant 5 : i32
    %1878 = tpu.dynamic_rotate %1591 by %c5_i32_1089 dim 0 : vector<16x32xf32>, i32 -> vector<16x32xf32>
    %c2_1090 = arith.constant 2 : index
    %c11_1091 = arith.constant 11 : index
    %c0_1092 = arith.constant 0 : index
    %c0_1093 = arith.constant 0 : index
    %1879 = vector.load %arg4[%c2_1090, %c11_1091, %c0_1092, %c0_1093] : memref<4x16x16x32xf32, #tpu.memory_space<vmem>>, vector<1x1x16x32xf32>
    %1880 = vector.shape_cast %1879 : vector<1x1x16x32xf32> to vector<16x32xf32>
    %1881 = arith.mulf %1878, %1880 : vector<16x32xf32>
    %1882 = arith.addf %1862, %1881 : vector<16x32xf32>
    %c4_i32_1094 = arith.constant 4 : i32
    %1883 = tpu.dynamic_rotate %1591 by %c4_i32_1094 dim 0 : vector<16x32xf32>, i32 -> vector<16x32xf32>
    %c2_1095 = arith.constant 2 : index
    %c12_1096 = arith.constant 12 : index
    %c0_1097 = arith.constant 0 : index
    %c0_1098 = arith.constant 0 : index
    %1884 = vector.load %arg4[%c2_1095, %c12_1096, %c0_1097, %c0_1098] : memref<4x16x16x32xf32, #tpu.memory_space<vmem>>, vector<1x1x16x32xf32>
    %1885 = vector.shape_cast %1884 : vector<1x1x16x32xf32> to vector<16x32xf32>
    %1886 = arith.mulf %1883, %1885 : vector<16x32xf32>
    %1887 = arith.addf %1867, %1886 : vector<16x32xf32>
    %c3_i32_1099 = arith.constant 3 : i32
    %1888 = tpu.dynamic_rotate %1591 by %c3_i32_1099 dim 0 : vector<16x32xf32>, i32 -> vector<16x32xf32>
    %c2_1100 = arith.constant 2 : index
    %c13_1101 = arith.constant 13 : index
    %c0_1102 = arith.constant 0 : index
    %c0_1103 = arith.constant 0 : index
    %1889 = vector.load %arg4[%c2_1100, %c13_1101, %c0_1102, %c0_1103] : memref<4x16x16x32xf32, #tpu.memory_space<vmem>>, vector<1x1x16x32xf32>
    %1890 = vector.shape_cast %1889 : vector<1x1x16x32xf32> to vector<16x32xf32>
    %1891 = arith.mulf %1888, %1890 : vector<16x32xf32>
    %1892 = arith.addf %1872, %1891 : vector<16x32xf32>
    %c2_i32_1104 = arith.constant 2 : i32
    %1893 = tpu.dynamic_rotate %1591 by %c2_i32_1104 dim 0 : vector<16x32xf32>, i32 -> vector<16x32xf32>
    %c2_1105 = arith.constant 2 : index
    %c14_1106 = arith.constant 14 : index
    %c0_1107 = arith.constant 0 : index
    %c0_1108 = arith.constant 0 : index
    %1894 = vector.load %arg4[%c2_1105, %c14_1106, %c0_1107, %c0_1108] : memref<4x16x16x32xf32, #tpu.memory_space<vmem>>, vector<1x1x16x32xf32>
    %1895 = vector.shape_cast %1894 : vector<1x1x16x32xf32> to vector<16x32xf32>
    %1896 = arith.mulf %1893, %1895 : vector<16x32xf32>
    %1897 = arith.addf %1877, %1896 : vector<16x32xf32>
    %c1_i32_1109 = arith.constant 1 : i32
    %1898 = tpu.dynamic_rotate %1591 by %c1_i32_1109 dim 0 : vector<16x32xf32>, i32 -> vector<16x32xf32>
    %c2_1110 = arith.constant 2 : index
    %c15_1111 = arith.constant 15 : index
    %c0_1112 = arith.constant 0 : index
    %c0_1113 = arith.constant 0 : index
    %1899 = vector.load %arg4[%c2_1110, %c15_1111, %c0_1112, %c0_1113] : memref<4x16x16x32xf32, #tpu.memory_space<vmem>>, vector<1x1x16x32xf32>
    %1900 = vector.shape_cast %1899 : vector<1x1x16x32xf32> to vector<16x32xf32>
    %1901 = arith.mulf %1898, %1900 : vector<16x32xf32>
    %1902 = arith.addf %1882, %1901 : vector<16x32xf32>
    %1903 = arith.addf %1887, %1892 : vector<16x32xf32>
    %1904 = arith.addf %1903, %1897 : vector<16x32xf32>
    %1905 = arith.addf %1904, %1902 : vector<16x32xf32>
    %1906 = vector.broadcast %1819 : vector<1x32xf32> to vector<16x32xf32>
    %1907 = arith.addf %1905, %1906 : vector<16x32xf32>
    %1908 = vector.extract_strided_slice %1907 {offsets = [0, 0], sizes = [16, 8], strides = [1, 1]} : vector<16x32xf32> to vector<16x8xf32>
    %1909 = vector.shape_cast %1908 : vector<16x8xf32> to vector<1x16x8xf32>
    %cst_1114 = arith.constant dense<0.000000e+00> : vector<1xf32>
    %1910 = vector.multi_reduction <add>, %1909, %cst_1114 [1, 2] : vector<1x16x8xf32> to vector<1xf32>
    %1911 = vector.shape_cast %1910 : vector<1xf32> to vector<1x1x1xf32>
    %1912 = vector.extract %1911[0, 0, 0] : f32 from vector<1x1x1xf32>
    %cst_1115 = arith.constant 7.812500e-03 : f32
    %1913 = arith.mulf %1912, %cst_1115 : f32
    %1914 = arith.mulf %1908, %1908 : vector<16x8xf32>
    %1915 = vector.shape_cast %1914 : vector<16x8xf32> to vector<1x16x8xf32>
    %cst_1116 = arith.constant dense<0.000000e+00> : vector<1xf32>
    %1916 = vector.multi_reduction <add>, %1915, %cst_1116 [1, 2] : vector<1x16x8xf32> to vector<1xf32>
    %1917 = vector.shape_cast %1916 : vector<1xf32> to vector<1x1x1xf32>
    %1918 = vector.extract %1917[0, 0, 0] : f32 from vector<1x1x1xf32>
    %cst_1117 = arith.constant 7.812500e-03 : f32
    %1919 = arith.mulf %1918, %cst_1117 : f32
    %1920 = arith.mulf %1913, %1913 : f32
    %1921 = arith.subf %1919, %1920 : f32
    %cst_1118 = arith.constant 0.000000e+00 : f32
    %1922 = arith.maximumf %1921, %cst_1118 : f32
    %1923 = vector.broadcast %1913 : f32 to vector<16x8xf32>
    %1924 = arith.subf %1908, %1923 : vector<16x8xf32>
    %cst_1119 = arith.constant 9.99999974E-6 : f32
    %1925 = arith.addf %1922, %cst_1119 : f32
    %1926 = math.rsqrt %1925 : f32
    %1927 = vector.broadcast %1926 : f32 to vector<16x8xf32>
    %1928 = arith.mulf %1924, %1927 : vector<16x8xf32>
    %1929 = vector.extract_strided_slice %1907 {offsets = [0, 8], sizes = [16, 8], strides = [1, 1]} : vector<16x32xf32> to vector<16x8xf32>
    %1930 = vector.shape_cast %1929 : vector<16x8xf32> to vector<1x16x8xf32>
    %cst_1120 = arith.constant dense<0.000000e+00> : vector<1xf32>
    %1931 = vector.multi_reduction <add>, %1930, %cst_1120 [1, 2] : vector<1x16x8xf32> to vector<1xf32>
    %1932 = vector.shape_cast %1931 : vector<1xf32> to vector<1x1x1xf32>
    %1933 = vector.extract %1932[0, 0, 0] : f32 from vector<1x1x1xf32>
    %cst_1121 = arith.constant 7.812500e-03 : f32
    %1934 = arith.mulf %1933, %cst_1121 : f32
    %1935 = arith.mulf %1929, %1929 : vector<16x8xf32>
    %1936 = vector.shape_cast %1935 : vector<16x8xf32> to vector<1x16x8xf32>
    %cst_1122 = arith.constant dense<0.000000e+00> : vector<1xf32>
    %1937 = vector.multi_reduction <add>, %1936, %cst_1122 [1, 2] : vector<1x16x8xf32> to vector<1xf32>
    %1938 = vector.shape_cast %1937 : vector<1xf32> to vector<1x1x1xf32>
    %1939 = vector.extract %1938[0, 0, 0] : f32 from vector<1x1x1xf32>
    %cst_1123 = arith.constant 7.812500e-03 : f32
    %1940 = arith.mulf %1939, %cst_1123 : f32
    %1941 = arith.mulf %1934, %1934 : f32
    %1942 = arith.subf %1940, %1941 : f32
    %cst_1124 = arith.constant 0.000000e+00 : f32
    %1943 = arith.maximumf %1942, %cst_1124 : f32
    %1944 = vector.broadcast %1934 : f32 to vector<16x8xf32>
    %1945 = arith.subf %1929, %1944 : vector<16x8xf32>
    %cst_1125 = arith.constant 9.99999974E-6 : f32
    %1946 = arith.addf %1943, %cst_1125 : f32
    %1947 = math.rsqrt %1946 : f32
    %1948 = vector.broadcast %1947 : f32 to vector<16x8xf32>
    %1949 = arith.mulf %1945, %1948 : vector<16x8xf32>
    %1950 = vector.extract_strided_slice %1907 {offsets = [0, 16], sizes = [16, 8], strides = [1, 1]} : vector<16x32xf32> to vector<16x8xf32>
    %1951 = vector.shape_cast %1950 : vector<16x8xf32> to vector<1x16x8xf32>
    %cst_1126 = arith.constant dense<0.000000e+00> : vector<1xf32>
    %1952 = vector.multi_reduction <add>, %1951, %cst_1126 [1, 2] : vector<1x16x8xf32> to vector<1xf32>
    %1953 = vector.shape_cast %1952 : vector<1xf32> to vector<1x1x1xf32>
    %1954 = vector.extract %1953[0, 0, 0] : f32 from vector<1x1x1xf32>
    %cst_1127 = arith.constant 7.812500e-03 : f32
    %1955 = arith.mulf %1954, %cst_1127 : f32
    %1956 = arith.mulf %1950, %1950 : vector<16x8xf32>
    %1957 = vector.shape_cast %1956 : vector<16x8xf32> to vector<1x16x8xf32>
    %cst_1128 = arith.constant dense<0.000000e+00> : vector<1xf32>
    %1958 = vector.multi_reduction <add>, %1957, %cst_1128 [1, 2] : vector<1x16x8xf32> to vector<1xf32>
    %1959 = vector.shape_cast %1958 : vector<1xf32> to vector<1x1x1xf32>
    %1960 = vector.extract %1959[0, 0, 0] : f32 from vector<1x1x1xf32>
    %cst_1129 = arith.constant 7.812500e-03 : f32
    %1961 = arith.mulf %1960, %cst_1129 : f32
    %1962 = arith.mulf %1955, %1955 : f32
    %1963 = arith.subf %1961, %1962 : f32
    %cst_1130 = arith.constant 0.000000e+00 : f32
    %1964 = arith.maximumf %1963, %cst_1130 : f32
    %1965 = vector.broadcast %1955 : f32 to vector<16x8xf32>
    %1966 = arith.subf %1950, %1965 : vector<16x8xf32>
    %cst_1131 = arith.constant 9.99999974E-6 : f32
    %1967 = arith.addf %1964, %cst_1131 : f32
    %1968 = math.rsqrt %1967 : f32
    %1969 = vector.broadcast %1968 : f32 to vector<16x8xf32>
    %1970 = arith.mulf %1966, %1969 : vector<16x8xf32>
    %1971 = vector.extract_strided_slice %1907 {offsets = [0, 24], sizes = [16, 8], strides = [1, 1]} : vector<16x32xf32> to vector<16x8xf32>
    %1972 = vector.shape_cast %1971 : vector<16x8xf32> to vector<1x16x8xf32>
    %cst_1132 = arith.constant dense<0.000000e+00> : vector<1xf32>
    %1973 = vector.multi_reduction <add>, %1972, %cst_1132 [1, 2] : vector<1x16x8xf32> to vector<1xf32>
    %1974 = vector.shape_cast %1973 : vector<1xf32> to vector<1x1x1xf32>
    %1975 = vector.extract %1974[0, 0, 0] : f32 from vector<1x1x1xf32>
    %cst_1133 = arith.constant 7.812500e-03 : f32
    %1976 = arith.mulf %1975, %cst_1133 : f32
    %1977 = arith.mulf %1971, %1971 : vector<16x8xf32>
    %1978 = vector.shape_cast %1977 : vector<16x8xf32> to vector<1x16x8xf32>
    %cst_1134 = arith.constant dense<0.000000e+00> : vector<1xf32>
    %1979 = vector.multi_reduction <add>, %1978, %cst_1134 [1, 2] : vector<1x16x8xf32> to vector<1xf32>
    %1980 = vector.shape_cast %1979 : vector<1xf32> to vector<1x1x1xf32>
    %1981 = vector.extract %1980[0, 0, 0] : f32 from vector<1x1x1xf32>
    %cst_1135 = arith.constant 7.812500e-03 : f32
    %1982 = arith.mulf %1981, %cst_1135 : f32
    %1983 = arith.mulf %1976, %1976 : f32
    %1984 = arith.subf %1982, %1983 : f32
    %cst_1136 = arith.constant 0.000000e+00 : f32
    %1985 = arith.maximumf %1984, %cst_1136 : f32
    %1986 = vector.broadcast %1976 : f32 to vector<16x8xf32>
    %1987 = arith.subf %1971, %1986 : vector<16x8xf32>
    %cst_1137 = arith.constant 9.99999974E-6 : f32
    %1988 = arith.addf %1985, %cst_1137 : f32
    %1989 = math.rsqrt %1988 : f32
    %1990 = vector.broadcast %1989 : f32 to vector<16x8xf32>
    %1991 = arith.mulf %1987, %1990 : vector<16x8xf32>
    %1992 = tpu.concatenate %1928, %1949, %1970, %1991 in 1 : vector<16x8xf32>, vector<16x8xf32>, vector<16x8xf32>, vector<16x8xf32> -> vector<16x32xf32>
    %1993 = arith.truncf %1992 : vector<16x32xf32> to vector<16x32xbf16>
    %cst_1138 = arith.constant dense<0.000000e+00> : vector<16x128xf32>
    %1994 = tpu.matmul %1993, %1821, %cst_1138 {dimension_numbers = #tpu.dot_dimension_numbers<[1], [0], [0], [1], [0, 0, 1, 1], [], []>} : vector<16x32xbf16>, vector<32x128xbf16>, vector<16x128xf32> -> vector<16x128xf32>
    %1995 = vector.broadcast %1823 : vector<1x128xf32> to vector<16x128xf32>
    %1996 = arith.addf %1994, %1995 : vector<16x128xf32>
    %1997 = math.tanh %1996 : vector<16x128xf32>
    %1998 = vector.extract_strided_slice %1997 {offsets = [0, 0], sizes = [16, 32], strides = [1, 1]} : vector<16x128xf32> to vector<16x32xf32>
    %1999 = vector.extract_strided_slice %1997 {offsets = [0, 32], sizes = [16, 32], strides = [1, 1]} : vector<16x128xf32> to vector<16x32xf32>
    %2000 = vector.extract_strided_slice %1997 {offsets = [0, 64], sizes = [16, 32], strides = [1, 1]} : vector<16x128xf32> to vector<16x32xf32>
    %2001 = vector.extract_strided_slice %1997 {offsets = [0, 96], sizes = [16, 32], strides = [1, 1]} : vector<16x128xf32> to vector<16x32xf32>
    %cst_1139 = arith.constant 1.000000e+00 : f32
    %2002 = vector.broadcast %cst_1139 : f32 to vector<16x32xf32>
    %2003 = arith.addf %1999, %2002 : vector<16x32xf32>
    %2004 = arith.mulf %2003, %1560 : vector<16x32xf32>
    %cst_1140 = arith.constant 1.000000e+00 : f32
    %2005 = vector.broadcast %cst_1140 : f32 to vector<16x32xf32>
    %2006 = arith.addf %1998, %2005 : vector<16x32xf32>
    %2007 = arith.mulf %2006, %2001 : vector<16x32xf32>
    %2008 = arith.addf %2004, %2007 : vector<16x32xf32>
    %cst_1141 = arith.constant 5.000000e-01 : f32
    %2009 = vector.broadcast %cst_1141 : f32 to vector<16x32xf32>
    %2010 = arith.mulf %2009, %2008 : vector<16x32xf32>
    %2011 = vector.shape_cast %2010 : vector<16x32xf32> to vector<1x16x32xf32>
    %cst_1142 = arith.constant dense<0.000000e+00> : vector<1xf32>
    %2012 = vector.multi_reduction <add>, %2011, %cst_1142 [1, 2] : vector<1x16x32xf32> to vector<1xf32>
    %2013 = vector.shape_cast %2012 : vector<1xf32> to vector<1x1x1xf32>
    %2014 = vector.extract %2013[0, 0, 0] : f32 from vector<1x1x1xf32>
    %cst_1143 = arith.constant 0.001953125 : f32
    %2015 = arith.mulf %2014, %cst_1143 : f32
    %2016 = arith.mulf %2010, %2010 : vector<16x32xf32>
    %2017 = vector.shape_cast %2016 : vector<16x32xf32> to vector<1x16x32xf32>
    %cst_1144 = arith.constant dense<0.000000e+00> : vector<1xf32>
    %2018 = vector.multi_reduction <add>, %2017, %cst_1144 [1, 2] : vector<1x16x32xf32> to vector<1xf32>
    %2019 = vector.shape_cast %2018 : vector<1xf32> to vector<1x1x1xf32>
    %2020 = vector.extract %2019[0, 0, 0] : f32 from vector<1x1x1xf32>
    %cst_1145 = arith.constant 0.001953125 : f32
    %2021 = arith.mulf %2020, %cst_1145 : f32
    %2022 = arith.mulf %2015, %2015 : f32
    %2023 = arith.subf %2021, %2022 : f32
    %cst_1146 = arith.constant 0.000000e+00 : f32
    %2024 = arith.maximumf %2023, %cst_1146 : f32
    %cst_1147 = arith.constant 9.99999974E-6 : f32
    %2025 = arith.addf %2024, %cst_1147 : f32
    %2026 = math.rsqrt %2025 : f32
    %2027 = vector.broadcast %2026 : f32 to vector<1x32xf32>
    %2028 = arith.mulf %1825, %2027 : vector<1x32xf32>
    %2029 = vector.broadcast %2015 : f32 to vector<1x32xf32>
    %2030 = arith.mulf %2029, %2028 : vector<1x32xf32>
    %2031 = arith.subf %1827, %2030 : vector<1x32xf32>
    %cst_1148 = arith.constant 1.000000e+00 : f32
    %2032 = vector.broadcast %cst_1148 : f32 to vector<16x32xf32>
    %2033 = arith.addf %2000, %2032 : vector<16x32xf32>
    %cst_1149 = arith.constant 5.000000e-01 : f32
    %2034 = vector.broadcast %cst_1149 : f32 to vector<16x32xf32>
    %2035 = arith.mulf %2034, %2033 : vector<16x32xf32>
    %2036 = vector.broadcast %2028 : vector<1x32xf32> to vector<16x32xf32>
    %2037 = arith.mulf %2010, %2036 : vector<16x32xf32>
    %2038 = vector.broadcast %2031 : vector<1x32xf32> to vector<16x32xf32>
    %2039 = arith.addf %2037, %2038 : vector<16x32xf32>
    %2040 = math.tanh %2039 : vector<16x32xf32>
    %2041 = arith.mulf %2035, %2040 : vector<16x32xf32>
    %c3_1150 = arith.constant 3 : index
    %c0_1151 = arith.constant 0 : index
    %c0_1152 = arith.constant 0 : index
    %2042 = vector.load %arg5[%c3_1150, %c0_1151, %c0_1152] : memref<4x1x32xf32, #tpu.memory_space<vmem>>, vector<1x1x32xf32>
    %2043 = vector.shape_cast %2042 : vector<1x1x32xf32> to vector<1x32xf32>
    %c3_1153 = arith.constant 3 : index
    %c0_1154 = arith.constant 0 : index
    %c0_1155 = arith.constant 0 : index
    %2044 = vector.load %arg6[%c3_1153, %c0_1154, %c0_1155] : memref<4x32x128xbf16, #tpu.memory_space<vmem>>, vector<1x32x128xbf16>
    %2045 = vector.shape_cast %2044 : vector<1x32x128xbf16> to vector<32x128xbf16>
    %c3_1156 = arith.constant 3 : index
    %c0_1157 = arith.constant 0 : index
    %c0_1158 = arith.constant 0 : index
    %2046 = vector.load %arg7[%c3_1156, %c0_1157, %c0_1158] : memref<4x1x128xf32, #tpu.memory_space<vmem>>, vector<1x1x128xf32>
    %2047 = vector.shape_cast %2046 : vector<1x1x128xf32> to vector<1x128xf32>
    %c3_1159 = arith.constant 3 : index
    %c0_1160 = arith.constant 0 : index
    %c0_1161 = arith.constant 0 : index
    %2048 = vector.load %arg8[%c3_1159, %c0_1160, %c0_1161] : memref<4x1x32xf32, #tpu.memory_space<vmem>>, vector<1x1x32xf32>
    %2049 = vector.shape_cast %2048 : vector<1x1x32xf32> to vector<1x32xf32>
    %c3_1162 = arith.constant 3 : index
    %c0_1163 = arith.constant 0 : index
    %c0_1164 = arith.constant 0 : index
    %2050 = vector.load %arg9[%c3_1162, %c0_1163, %c0_1164] : memref<4x1x32xf32, #tpu.memory_space<vmem>>, vector<1x1x32xf32>
    %2051 = vector.shape_cast %2050 : vector<1x1x32xf32> to vector<1x32xf32>
    %2052 = arith.addf %2041, %1816 : vector<16x32xf32>
    %c3_1165 = arith.constant 3 : index
    %c0_1166 = arith.constant 0 : index
    %c0_1167 = arith.constant 0 : index
    %c0_1168 = arith.constant 0 : index
    %2053 = vector.load %arg4[%c3_1165, %c0_1166, %c0_1167, %c0_1168] : memref<4x16x16x32xf32, #tpu.memory_space<vmem>>, vector<1x1x16x32xf32>
    %2054 = vector.shape_cast %2053 : vector<1x1x16x32xf32> to vector<16x32xf32>
    %2055 = arith.mulf %2052, %2054 : vector<16x32xf32>
    %c15_i32_1169 = arith.constant 15 : i32
    %2056 = tpu.dynamic_rotate %2052 by %c15_i32_1169 dim 0 : vector<16x32xf32>, i32 -> vector<16x32xf32>
    %c3_1170 = arith.constant 3 : index
    %c1_1171 = arith.constant 1 : index
    %c0_1172 = arith.constant 0 : index
    %c0_1173 = arith.constant 0 : index
    %2057 = vector.load %arg4[%c3_1170, %c1_1171, %c0_1172, %c0_1173] : memref<4x16x16x32xf32, #tpu.memory_space<vmem>>, vector<1x1x16x32xf32>
    %2058 = vector.shape_cast %2057 : vector<1x1x16x32xf32> to vector<16x32xf32>
    %2059 = arith.mulf %2056, %2058 : vector<16x32xf32>
    %c14_i32_1174 = arith.constant 14 : i32
    %2060 = tpu.dynamic_rotate %2052 by %c14_i32_1174 dim 0 : vector<16x32xf32>, i32 -> vector<16x32xf32>
    %c3_1175 = arith.constant 3 : index
    %c2_1176 = arith.constant 2 : index
    %c0_1177 = arith.constant 0 : index
    %c0_1178 = arith.constant 0 : index
    %2061 = vector.load %arg4[%c3_1175, %c2_1176, %c0_1177, %c0_1178] : memref<4x16x16x32xf32, #tpu.memory_space<vmem>>, vector<1x1x16x32xf32>
    %2062 = vector.shape_cast %2061 : vector<1x1x16x32xf32> to vector<16x32xf32>
    %2063 = arith.mulf %2060, %2062 : vector<16x32xf32>
    %c13_i32_1179 = arith.constant 13 : i32
    %2064 = tpu.dynamic_rotate %2052 by %c13_i32_1179 dim 0 : vector<16x32xf32>, i32 -> vector<16x32xf32>
    %c3_1180 = arith.constant 3 : index
    %c3_1181 = arith.constant 3 : index
    %c0_1182 = arith.constant 0 : index
    %c0_1183 = arith.constant 0 : index
    %2065 = vector.load %arg4[%c3_1180, %c3_1181, %c0_1182, %c0_1183] : memref<4x16x16x32xf32, #tpu.memory_space<vmem>>, vector<1x1x16x32xf32>
    %2066 = vector.shape_cast %2065 : vector<1x1x16x32xf32> to vector<16x32xf32>
    %2067 = arith.mulf %2064, %2066 : vector<16x32xf32>
    %c12_i32_1184 = arith.constant 12 : i32
    %2068 = tpu.dynamic_rotate %2052 by %c12_i32_1184 dim 0 : vector<16x32xf32>, i32 -> vector<16x32xf32>
    %c3_1185 = arith.constant 3 : index
    %c4_1186 = arith.constant 4 : index
    %c0_1187 = arith.constant 0 : index
    %c0_1188 = arith.constant 0 : index
    %2069 = vector.load %arg4[%c3_1185, %c4_1186, %c0_1187, %c0_1188] : memref<4x16x16x32xf32, #tpu.memory_space<vmem>>, vector<1x1x16x32xf32>
    %2070 = vector.shape_cast %2069 : vector<1x1x16x32xf32> to vector<16x32xf32>
    %2071 = arith.mulf %2068, %2070 : vector<16x32xf32>
    %2072 = arith.addf %2055, %2071 : vector<16x32xf32>
    %c11_i32_1189 = arith.constant 11 : i32
    %2073 = tpu.dynamic_rotate %2052 by %c11_i32_1189 dim 0 : vector<16x32xf32>, i32 -> vector<16x32xf32>
    %c3_1190 = arith.constant 3 : index
    %c5_1191 = arith.constant 5 : index
    %c0_1192 = arith.constant 0 : index
    %c0_1193 = arith.constant 0 : index
    %2074 = vector.load %arg4[%c3_1190, %c5_1191, %c0_1192, %c0_1193] : memref<4x16x16x32xf32, #tpu.memory_space<vmem>>, vector<1x1x16x32xf32>
    %2075 = vector.shape_cast %2074 : vector<1x1x16x32xf32> to vector<16x32xf32>
    %2076 = arith.mulf %2073, %2075 : vector<16x32xf32>
    %2077 = arith.addf %2059, %2076 : vector<16x32xf32>
    %c10_i32_1194 = arith.constant 10 : i32
    %2078 = tpu.dynamic_rotate %2052 by %c10_i32_1194 dim 0 : vector<16x32xf32>, i32 -> vector<16x32xf32>
    %c3_1195 = arith.constant 3 : index
    %c6_1196 = arith.constant 6 : index
    %c0_1197 = arith.constant 0 : index
    %c0_1198 = arith.constant 0 : index
    %2079 = vector.load %arg4[%c3_1195, %c6_1196, %c0_1197, %c0_1198] : memref<4x16x16x32xf32, #tpu.memory_space<vmem>>, vector<1x1x16x32xf32>
    %2080 = vector.shape_cast %2079 : vector<1x1x16x32xf32> to vector<16x32xf32>
    %2081 = arith.mulf %2078, %2080 : vector<16x32xf32>
    %2082 = arith.addf %2063, %2081 : vector<16x32xf32>
    %c9_i32_1199 = arith.constant 9 : i32
    %2083 = tpu.dynamic_rotate %2052 by %c9_i32_1199 dim 0 : vector<16x32xf32>, i32 -> vector<16x32xf32>
    %c3_1200 = arith.constant 3 : index
    %c7_1201 = arith.constant 7 : index
    %c0_1202 = arith.constant 0 : index
    %c0_1203 = arith.constant 0 : index
    %2084 = vector.load %arg4[%c3_1200, %c7_1201, %c0_1202, %c0_1203] : memref<4x16x16x32xf32, #tpu.memory_space<vmem>>, vector<1x1x16x32xf32>
    %2085 = vector.shape_cast %2084 : vector<1x1x16x32xf32> to vector<16x32xf32>
    %2086 = arith.mulf %2083, %2085 : vector<16x32xf32>
    %2087 = arith.addf %2067, %2086 : vector<16x32xf32>
    %c8_i32_1204 = arith.constant 8 : i32
    %2088 = tpu.dynamic_rotate %2052 by %c8_i32_1204 dim 0 : vector<16x32xf32>, i32 -> vector<16x32xf32>
    %c3_1205 = arith.constant 3 : index
    %c8_1206 = arith.constant 8 : index
    %c0_1207 = arith.constant 0 : index
    %c0_1208 = arith.constant 0 : index
    %2089 = vector.load %arg4[%c3_1205, %c8_1206, %c0_1207, %c0_1208] : memref<4x16x16x32xf32, #tpu.memory_space<vmem>>, vector<1x1x16x32xf32>
    %2090 = vector.shape_cast %2089 : vector<1x1x16x32xf32> to vector<16x32xf32>
    %2091 = arith.mulf %2088, %2090 : vector<16x32xf32>
    %2092 = arith.addf %2072, %2091 : vector<16x32xf32>
    %c7_i32_1209 = arith.constant 7 : i32
    %2093 = tpu.dynamic_rotate %2052 by %c7_i32_1209 dim 0 : vector<16x32xf32>, i32 -> vector<16x32xf32>
    %c3_1210 = arith.constant 3 : index
    %c9_1211 = arith.constant 9 : index
    %c0_1212 = arith.constant 0 : index
    %c0_1213 = arith.constant 0 : index
    %2094 = vector.load %arg4[%c3_1210, %c9_1211, %c0_1212, %c0_1213] : memref<4x16x16x32xf32, #tpu.memory_space<vmem>>, vector<1x1x16x32xf32>
    %2095 = vector.shape_cast %2094 : vector<1x1x16x32xf32> to vector<16x32xf32>
    %2096 = arith.mulf %2093, %2095 : vector<16x32xf32>
    %2097 = arith.addf %2077, %2096 : vector<16x32xf32>
    %c6_i32_1214 = arith.constant 6 : i32
    %2098 = tpu.dynamic_rotate %2052 by %c6_i32_1214 dim 0 : vector<16x32xf32>, i32 -> vector<16x32xf32>
    %c3_1215 = arith.constant 3 : index
    %c10_1216 = arith.constant 10 : index
    %c0_1217 = arith.constant 0 : index
    %c0_1218 = arith.constant 0 : index
    %2099 = vector.load %arg4[%c3_1215, %c10_1216, %c0_1217, %c0_1218] : memref<4x16x16x32xf32, #tpu.memory_space<vmem>>, vector<1x1x16x32xf32>
    %2100 = vector.shape_cast %2099 : vector<1x1x16x32xf32> to vector<16x32xf32>
    %2101 = arith.mulf %2098, %2100 : vector<16x32xf32>
    %2102 = arith.addf %2082, %2101 : vector<16x32xf32>
    %c5_i32_1219 = arith.constant 5 : i32
    %2103 = tpu.dynamic_rotate %2052 by %c5_i32_1219 dim 0 : vector<16x32xf32>, i32 -> vector<16x32xf32>
    %c3_1220 = arith.constant 3 : index
    %c11_1221 = arith.constant 11 : index
    %c0_1222 = arith.constant 0 : index
    %c0_1223 = arith.constant 0 : index
    %2104 = vector.load %arg4[%c3_1220, %c11_1221, %c0_1222, %c0_1223] : memref<4x16x16x32xf32, #tpu.memory_space<vmem>>, vector<1x1x16x32xf32>
    %2105 = vector.shape_cast %2104 : vector<1x1x16x32xf32> to vector<16x32xf32>
    %2106 = arith.mulf %2103, %2105 : vector<16x32xf32>
    %2107 = arith.addf %2087, %2106 : vector<16x32xf32>
    %c4_i32_1224 = arith.constant 4 : i32
    %2108 = tpu.dynamic_rotate %2052 by %c4_i32_1224 dim 0 : vector<16x32xf32>, i32 -> vector<16x32xf32>
    %c3_1225 = arith.constant 3 : index
    %c12_1226 = arith.constant 12 : index
    %c0_1227 = arith.constant 0 : index
    %c0_1228 = arith.constant 0 : index
    %2109 = vector.load %arg4[%c3_1225, %c12_1226, %c0_1227, %c0_1228] : memref<4x16x16x32xf32, #tpu.memory_space<vmem>>, vector<1x1x16x32xf32>
    %2110 = vector.shape_cast %2109 : vector<1x1x16x32xf32> to vector<16x32xf32>
    %2111 = arith.mulf %2108, %2110 : vector<16x32xf32>
    %2112 = arith.addf %2092, %2111 : vector<16x32xf32>
    %c3_i32_1229 = arith.constant 3 : i32
    %2113 = tpu.dynamic_rotate %2052 by %c3_i32_1229 dim 0 : vector<16x32xf32>, i32 -> vector<16x32xf32>
    %c3_1230 = arith.constant 3 : index
    %c13_1231 = arith.constant 13 : index
    %c0_1232 = arith.constant 0 : index
    %c0_1233 = arith.constant 0 : index
    %2114 = vector.load %arg4[%c3_1230, %c13_1231, %c0_1232, %c0_1233] : memref<4x16x16x32xf32, #tpu.memory_space<vmem>>, vector<1x1x16x32xf32>
    %2115 = vector.shape_cast %2114 : vector<1x1x16x32xf32> to vector<16x32xf32>
    %2116 = arith.mulf %2113, %2115 : vector<16x32xf32>
    %2117 = arith.addf %2097, %2116 : vector<16x32xf32>
    %c2_i32_1234 = arith.constant 2 : i32
    %2118 = tpu.dynamic_rotate %2052 by %c2_i32_1234 dim 0 : vector<16x32xf32>, i32 -> vector<16x32xf32>
    %c3_1235 = arith.constant 3 : index
    %c14_1236 = arith.constant 14 : index
    %c0_1237 = arith.constant 0 : index
    %c0_1238 = arith.constant 0 : index
    %2119 = vector.load %arg4[%c3_1235, %c14_1236, %c0_1237, %c0_1238] : memref<4x16x16x32xf32, #tpu.memory_space<vmem>>, vector<1x1x16x32xf32>
    %2120 = vector.shape_cast %2119 : vector<1x1x16x32xf32> to vector<16x32xf32>
    %2121 = arith.mulf %2118, %2120 : vector<16x32xf32>
    %2122 = arith.addf %2102, %2121 : vector<16x32xf32>
    %c1_i32_1239 = arith.constant 1 : i32
    %2123 = tpu.dynamic_rotate %2052 by %c1_i32_1239 dim 0 : vector<16x32xf32>, i32 -> vector<16x32xf32>
    %c3_1240 = arith.constant 3 : index
    %c15_1241 = arith.constant 15 : index
    %c0_1242 = arith.constant 0 : index
    %c0_1243 = arith.constant 0 : index
    %2124 = vector.load %arg4[%c3_1240, %c15_1241, %c0_1242, %c0_1243] : memref<4x16x16x32xf32, #tpu.memory_space<vmem>>, vector<1x1x16x32xf32>
    %2125 = vector.shape_cast %2124 : vector<1x1x16x32xf32> to vector<16x32xf32>
    %2126 = arith.mulf %2123, %2125 : vector<16x32xf32>
    %2127 = arith.addf %2107, %2126 : vector<16x32xf32>
    %2128 = arith.addf %2112, %2117 : vector<16x32xf32>
    %2129 = arith.addf %2128, %2122 : vector<16x32xf32>
    %2130 = arith.addf %2129, %2127 : vector<16x32xf32>
    %2131 = vector.broadcast %2043 : vector<1x32xf32> to vector<16x32xf32>
    %2132 = arith.addf %2130, %2131 : vector<16x32xf32>
    %2133 = vector.extract_strided_slice %2132 {offsets = [0, 0], sizes = [16, 8], strides = [1, 1]} : vector<16x32xf32> to vector<16x8xf32>
    %2134 = vector.shape_cast %2133 : vector<16x8xf32> to vector<1x16x8xf32>
    %cst_1244 = arith.constant dense<0.000000e+00> : vector<1xf32>
    %2135 = vector.multi_reduction <add>, %2134, %cst_1244 [1, 2] : vector<1x16x8xf32> to vector<1xf32>
    %2136 = vector.shape_cast %2135 : vector<1xf32> to vector<1x1x1xf32>
    %2137 = vector.extract %2136[0, 0, 0] : f32 from vector<1x1x1xf32>
    %cst_1245 = arith.constant 7.812500e-03 : f32
    %2138 = arith.mulf %2137, %cst_1245 : f32
    %2139 = arith.mulf %2133, %2133 : vector<16x8xf32>
    %2140 = vector.shape_cast %2139 : vector<16x8xf32> to vector<1x16x8xf32>
    %cst_1246 = arith.constant dense<0.000000e+00> : vector<1xf32>
    %2141 = vector.multi_reduction <add>, %2140, %cst_1246 [1, 2] : vector<1x16x8xf32> to vector<1xf32>
    %2142 = vector.shape_cast %2141 : vector<1xf32> to vector<1x1x1xf32>
    %2143 = vector.extract %2142[0, 0, 0] : f32 from vector<1x1x1xf32>
    %cst_1247 = arith.constant 7.812500e-03 : f32
    %2144 = arith.mulf %2143, %cst_1247 : f32
    %2145 = arith.mulf %2138, %2138 : f32
    %2146 = arith.subf %2144, %2145 : f32
    %cst_1248 = arith.constant 0.000000e+00 : f32
    %2147 = arith.maximumf %2146, %cst_1248 : f32
    %2148 = vector.broadcast %2138 : f32 to vector<16x8xf32>
    %2149 = arith.subf %2133, %2148 : vector<16x8xf32>
    %cst_1249 = arith.constant 9.99999974E-6 : f32
    %2150 = arith.addf %2147, %cst_1249 : f32
    %2151 = math.rsqrt %2150 : f32
    %2152 = vector.broadcast %2151 : f32 to vector<16x8xf32>
    %2153 = arith.mulf %2149, %2152 : vector<16x8xf32>
    %2154 = vector.extract_strided_slice %2132 {offsets = [0, 8], sizes = [16, 8], strides = [1, 1]} : vector<16x32xf32> to vector<16x8xf32>
    %2155 = vector.shape_cast %2154 : vector<16x8xf32> to vector<1x16x8xf32>
    %cst_1250 = arith.constant dense<0.000000e+00> : vector<1xf32>
    %2156 = vector.multi_reduction <add>, %2155, %cst_1250 [1, 2] : vector<1x16x8xf32> to vector<1xf32>
    %2157 = vector.shape_cast %2156 : vector<1xf32> to vector<1x1x1xf32>
    %2158 = vector.extract %2157[0, 0, 0] : f32 from vector<1x1x1xf32>
    %cst_1251 = arith.constant 7.812500e-03 : f32
    %2159 = arith.mulf %2158, %cst_1251 : f32
    %2160 = arith.mulf %2154, %2154 : vector<16x8xf32>
    %2161 = vector.shape_cast %2160 : vector<16x8xf32> to vector<1x16x8xf32>
    %cst_1252 = arith.constant dense<0.000000e+00> : vector<1xf32>
    %2162 = vector.multi_reduction <add>, %2161, %cst_1252 [1, 2] : vector<1x16x8xf32> to vector<1xf32>
    %2163 = vector.shape_cast %2162 : vector<1xf32> to vector<1x1x1xf32>
    %2164 = vector.extract %2163[0, 0, 0] : f32 from vector<1x1x1xf32>
    %cst_1253 = arith.constant 7.812500e-03 : f32
    %2165 = arith.mulf %2164, %cst_1253 : f32
    %2166 = arith.mulf %2159, %2159 : f32
    %2167 = arith.subf %2165, %2166 : f32
    %cst_1254 = arith.constant 0.000000e+00 : f32
    %2168 = arith.maximumf %2167, %cst_1254 : f32
    %2169 = vector.broadcast %2159 : f32 to vector<16x8xf32>
    %2170 = arith.subf %2154, %2169 : vector<16x8xf32>
    %cst_1255 = arith.constant 9.99999974E-6 : f32
    %2171 = arith.addf %2168, %cst_1255 : f32
    %2172 = math.rsqrt %2171 : f32
    %2173 = vector.broadcast %2172 : f32 to vector<16x8xf32>
    %2174 = arith.mulf %2170, %2173 : vector<16x8xf32>
    %2175 = vector.extract_strided_slice %2132 {offsets = [0, 16], sizes = [16, 8], strides = [1, 1]} : vector<16x32xf32> to vector<16x8xf32>
    %2176 = vector.shape_cast %2175 : vector<16x8xf32> to vector<1x16x8xf32>
    %cst_1256 = arith.constant dense<0.000000e+00> : vector<1xf32>
    %2177 = vector.multi_reduction <add>, %2176, %cst_1256 [1, 2] : vector<1x16x8xf32> to vector<1xf32>
    %2178 = vector.shape_cast %2177 : vector<1xf32> to vector<1x1x1xf32>
    %2179 = vector.extract %2178[0, 0, 0] : f32 from vector<1x1x1xf32>
    %cst_1257 = arith.constant 7.812500e-03 : f32
    %2180 = arith.mulf %2179, %cst_1257 : f32
    %2181 = arith.mulf %2175, %2175 : vector<16x8xf32>
    %2182 = vector.shape_cast %2181 : vector<16x8xf32> to vector<1x16x8xf32>
    %cst_1258 = arith.constant dense<0.000000e+00> : vector<1xf32>
    %2183 = vector.multi_reduction <add>, %2182, %cst_1258 [1, 2] : vector<1x16x8xf32> to vector<1xf32>
    %2184 = vector.shape_cast %2183 : vector<1xf32> to vector<1x1x1xf32>
    %2185 = vector.extract %2184[0, 0, 0] : f32 from vector<1x1x1xf32>
    %cst_1259 = arith.constant 7.812500e-03 : f32
    %2186 = arith.mulf %2185, %cst_1259 : f32
    %2187 = arith.mulf %2180, %2180 : f32
    %2188 = arith.subf %2186, %2187 : f32
    %cst_1260 = arith.constant 0.000000e+00 : f32
    %2189 = arith.maximumf %2188, %cst_1260 : f32
    %2190 = vector.broadcast %2180 : f32 to vector<16x8xf32>
    %2191 = arith.subf %2175, %2190 : vector<16x8xf32>
    %cst_1261 = arith.constant 9.99999974E-6 : f32
    %2192 = arith.addf %2189, %cst_1261 : f32
    %2193 = math.rsqrt %2192 : f32
    %2194 = vector.broadcast %2193 : f32 to vector<16x8xf32>
    %2195 = arith.mulf %2191, %2194 : vector<16x8xf32>
    %2196 = vector.extract_strided_slice %2132 {offsets = [0, 24], sizes = [16, 8], strides = [1, 1]} : vector<16x32xf32> to vector<16x8xf32>
    %2197 = vector.shape_cast %2196 : vector<16x8xf32> to vector<1x16x8xf32>
    %cst_1262 = arith.constant dense<0.000000e+00> : vector<1xf32>
    %2198 = vector.multi_reduction <add>, %2197, %cst_1262 [1, 2] : vector<1x16x8xf32> to vector<1xf32>
    %2199 = vector.shape_cast %2198 : vector<1xf32> to vector<1x1x1xf32>
    %2200 = vector.extract %2199[0, 0, 0] : f32 from vector<1x1x1xf32>
    %cst_1263 = arith.constant 7.812500e-03 : f32
    %2201 = arith.mulf %2200, %cst_1263 : f32
    %2202 = arith.mulf %2196, %2196 : vector<16x8xf32>
    %2203 = vector.shape_cast %2202 : vector<16x8xf32> to vector<1x16x8xf32>
    %cst_1264 = arith.constant dense<0.000000e+00> : vector<1xf32>
    %2204 = vector.multi_reduction <add>, %2203, %cst_1264 [1, 2] : vector<1x16x8xf32> to vector<1xf32>
    %2205 = vector.shape_cast %2204 : vector<1xf32> to vector<1x1x1xf32>
    %2206 = vector.extract %2205[0, 0, 0] : f32 from vector<1x1x1xf32>
    %cst_1265 = arith.constant 7.812500e-03 : f32
    %2207 = arith.mulf %2206, %cst_1265 : f32
    %2208 = arith.mulf %2201, %2201 : f32
    %2209 = arith.subf %2207, %2208 : f32
    %cst_1266 = arith.constant 0.000000e+00 : f32
    %2210 = arith.maximumf %2209, %cst_1266 : f32
    %2211 = vector.broadcast %2201 : f32 to vector<16x8xf32>
    %2212 = arith.subf %2196, %2211 : vector<16x8xf32>
    %cst_1267 = arith.constant 9.99999974E-6 : f32
    %2213 = arith.addf %2210, %cst_1267 : f32
    %2214 = math.rsqrt %2213 : f32
    %2215 = vector.broadcast %2214 : f32 to vector<16x8xf32>
    %2216 = arith.mulf %2212, %2215 : vector<16x8xf32>
    %2217 = tpu.concatenate %2153, %2174, %2195, %2216 in 1 : vector<16x8xf32>, vector<16x8xf32>, vector<16x8xf32>, vector<16x8xf32> -> vector<16x32xf32>
    %2218 = arith.truncf %2217 : vector<16x32xf32> to vector<16x32xbf16>
    %cst_1268 = arith.constant dense<0.000000e+00> : vector<16x128xf32>
    %2219 = tpu.matmul %2218, %2045, %cst_1268 {dimension_numbers = #tpu.dot_dimension_numbers<[1], [0], [0], [1], [0, 0, 1, 1], [], []>} : vector<16x32xbf16>, vector<32x128xbf16>, vector<16x128xf32> -> vector<16x128xf32>
    %2220 = vector.broadcast %2047 : vector<1x128xf32> to vector<16x128xf32>
    %2221 = arith.addf %2219, %2220 : vector<16x128xf32>
    %2222 = math.tanh %2221 : vector<16x128xf32>
    %2223 = vector.extract_strided_slice %2222 {offsets = [0, 0], sizes = [16, 32], strides = [1, 1]} : vector<16x128xf32> to vector<16x32xf32>
    %2224 = vector.extract_strided_slice %2222 {offsets = [0, 32], sizes = [16, 32], strides = [1, 1]} : vector<16x128xf32> to vector<16x32xf32>
    %2225 = vector.extract_strided_slice %2222 {offsets = [0, 64], sizes = [16, 32], strides = [1, 1]} : vector<16x128xf32> to vector<16x32xf32>
    %2226 = vector.extract_strided_slice %2222 {offsets = [0, 96], sizes = [16, 32], strides = [1, 1]} : vector<16x128xf32> to vector<16x32xf32>
    %cst_1269 = arith.constant 1.000000e+00 : f32
    %2227 = vector.broadcast %cst_1269 : f32 to vector<16x32xf32>
    %2228 = arith.addf %2224, %2227 : vector<16x32xf32>
    %2229 = arith.mulf %2228, %1785 : vector<16x32xf32>
    %cst_1270 = arith.constant 1.000000e+00 : f32
    %2230 = vector.broadcast %cst_1270 : f32 to vector<16x32xf32>
    %2231 = arith.addf %2223, %2230 : vector<16x32xf32>
    %2232 = arith.mulf %2231, %2226 : vector<16x32xf32>
    %2233 = arith.addf %2229, %2232 : vector<16x32xf32>
    %cst_1271 = arith.constant 5.000000e-01 : f32
    %2234 = vector.broadcast %cst_1271 : f32 to vector<16x32xf32>
    %2235 = arith.mulf %2234, %2233 : vector<16x32xf32>
    %2236 = vector.shape_cast %2235 : vector<16x32xf32> to vector<1x16x32xf32>
    %cst_1272 = arith.constant dense<0.000000e+00> : vector<1xf32>
    %2237 = vector.multi_reduction <add>, %2236, %cst_1272 [1, 2] : vector<1x16x32xf32> to vector<1xf32>
    %2238 = vector.shape_cast %2237 : vector<1xf32> to vector<1x1x1xf32>
    %2239 = vector.extract %2238[0, 0, 0] : f32 from vector<1x1x1xf32>
    %cst_1273 = arith.constant 0.001953125 : f32
    %2240 = arith.mulf %2239, %cst_1273 : f32
    %2241 = arith.mulf %2235, %2235 : vector<16x32xf32>
    %2242 = vector.shape_cast %2241 : vector<16x32xf32> to vector<1x16x32xf32>
    %cst_1274 = arith.constant dense<0.000000e+00> : vector<1xf32>
    %2243 = vector.multi_reduction <add>, %2242, %cst_1274 [1, 2] : vector<1x16x32xf32> to vector<1xf32>
    %2244 = vector.shape_cast %2243 : vector<1xf32> to vector<1x1x1xf32>
    %2245 = vector.extract %2244[0, 0, 0] : f32 from vector<1x1x1xf32>
    %cst_1275 = arith.constant 0.001953125 : f32
    %2246 = arith.mulf %2245, %cst_1275 : f32
    %2247 = arith.mulf %2240, %2240 : f32
    %2248 = arith.subf %2246, %2247 : f32
    %cst_1276 = arith.constant 0.000000e+00 : f32
    %2249 = arith.maximumf %2248, %cst_1276 : f32
    %cst_1277 = arith.constant 9.99999974E-6 : f32
    %2250 = arith.addf %2249, %cst_1277 : f32
    %2251 = math.rsqrt %2250 : f32
    %2252 = vector.broadcast %2251 : f32 to vector<1x32xf32>
    %2253 = arith.mulf %2049, %2252 : vector<1x32xf32>
    %2254 = vector.broadcast %2240 : f32 to vector<1x32xf32>
    %2255 = arith.mulf %2254, %2253 : vector<1x32xf32>
    %2256 = arith.subf %2051, %2255 : vector<1x32xf32>
    %cst_1278 = arith.constant 1.000000e+00 : f32
    %2257 = vector.broadcast %cst_1278 : f32 to vector<16x32xf32>
    %2258 = arith.addf %2225, %2257 : vector<16x32xf32>
    %cst_1279 = arith.constant 5.000000e-01 : f32
    %2259 = vector.broadcast %cst_1279 : f32 to vector<16x32xf32>
    %2260 = arith.mulf %2259, %2258 : vector<16x32xf32>
    %2261 = vector.broadcast %2253 : vector<1x32xf32> to vector<16x32xf32>
    %2262 = arith.mulf %2235, %2261 : vector<16x32xf32>
    %2263 = vector.broadcast %2256 : vector<1x32xf32> to vector<16x32xf32>
    %2264 = arith.addf %2262, %2263 : vector<16x32xf32>
    %2265 = math.tanh %2264 : vector<16x32xf32>
    %2266 = arith.mulf %2260, %2265 : vector<16x32xf32>
    %2267 = arith.addf %2041, %2266 : vector<16x32xf32>
    %2268 = tpu.concatenate %1817, %2267 in 0 : vector<16x32xf32>, vector<16x32xf32> -> vector<32x32xf32>
    %2269 = arith.truncf %2268 : vector<32x32xf32> to vector<32x32xbf16>
    %c0_1280 = arith.constant 0 : index
    %c0_1281 = arith.constant 0 : index
    %2270 = vector.load %arg10[%c0_1280, %c0_1281] : memref<32x128xbf16, #tpu.memory_space<vmem>>, vector<32x128xbf16>
    %cst_1282 = arith.constant dense<0.000000e+00> : vector<32x128xf32>
    %2271 = tpu.matmul %2269, %2270, %cst_1282 {dimension_numbers = #tpu.dot_dimension_numbers<[1], [0], [0], [1], [0, 0, 1, 1], [], []>} : vector<32x32xbf16>, vector<32x128xbf16>, vector<32x128xf32> -> vector<32x128xf32>
    %c0_1283 = arith.constant 0 : index
    %c0_1284 = arith.constant 0 : index
    %2272 = vector.load %arg11[%c0_1283, %c0_1284] : memref<1x128xf32, #tpu.memory_space<vmem>>, vector<1x128xf32>
    %2273 = vector.broadcast %2272 : vector<1x128xf32> to vector<32x128xf32>
    %2274 = arith.addf %2271, %2273 : vector<32x128xf32>
    %cst_1285 = arith.constant 5.000000e-01 : f32
    %2275 = vector.broadcast %cst_1285 : f32 to vector<32x128xf32>
    %2276 = arith.mulf %2275, %2274 : vector<32x128xf32>
    %cst_1286 = arith.constant 4.471500e-02 : f32
    %2277 = vector.broadcast %cst_1286 : f32 to vector<32x128xf32>
    %2278 = arith.mulf %2277, %2274 : vector<32x128xf32>
    %2279 = arith.mulf %2278, %2274 : vector<32x128xf32>
    %2280 = arith.mulf %2279, %2274 : vector<32x128xf32>
    %2281 = arith.addf %2274, %2280 : vector<32x128xf32>
    %cst_1287 = arith.constant 0.797884583 : f32
    %2282 = vector.broadcast %cst_1287 : f32 to vector<32x128xf32>
    %2283 = arith.mulf %2282, %2281 : vector<32x128xf32>
    %2284 = math.tanh %2283 : vector<32x128xf32>
    %cst_1288 = arith.constant 1.000000e+00 : f32
    %2285 = vector.broadcast %cst_1288 : f32 to vector<32x128xf32>
    %2286 = arith.addf %2285, %2284 : vector<32x128xf32>
    %2287 = arith.mulf %2276, %2286 : vector<32x128xf32>
    %2288 = arith.truncf %2287 : vector<32x128xf32> to vector<32x128xbf16>
    %c0_1289 = arith.constant 0 : index
    %c0_1290 = arith.constant 0 : index
    %2289 = vector.load %arg12[%c0_1289, %c0_1290] : memref<128x256xbf16, #tpu.memory_space<vmem>>, vector<128x256xbf16>
    %cst_1291 = arith.constant dense<0.000000e+00> : vector<32x256xf32>
    %2290 = tpu.matmul %2288, %2289, %cst_1291 {dimension_numbers = #tpu.dot_dimension_numbers<[1], [0], [0], [1], [0, 0, 1, 1], [], []>} : vector<32x128xbf16>, vector<128x256xbf16>, vector<32x256xf32> -> vector<32x256xf32>
    %c0_1292 = arith.constant 0 : index
    %c0_1293 = arith.constant 0 : index
    %2291 = vector.load %arg13[%c0_1292, %c0_1293] : memref<1x256xf32, #tpu.memory_space<vmem>>, vector<1x256xf32>
    %2292 = vector.broadcast %2291 : vector<1x256xf32> to vector<32x256xf32>
    %2293 = arith.addf %2290, %2292 : vector<32x256xf32>
    %c0_1294 = arith.constant 0 : index
    %c0_1295 = arith.constant 0 : index
    %c0_1296 = arith.constant 0 : index
    %2294 = vector.load %arg14[%c0_1294, %c0_1295, %c0_1296] : memref<1x32x256xf32, #tpu.memory_space<vmem>>, vector<1x32x256xf32>
    %2295 = vector.shape_cast %2294 : vector<1x32x256xf32> to vector<32x256xf32>
    %2296 = vector.shape_cast %2293 : vector<32x256xf32> to vector<1x32x256xf32>
    tpu.vector_store %arg14[%c0_1294, %c0_1295, %c0_1296], %2296 {strides = array<i32>} : memref<1x32x256xf32, #tpu.memory_space<vmem>>, vector<1x32x256xf32>,
    return
  }
  func.func @transform_0(%arg0: i32) -> (i32, i32, i32) {
    %c0_i32 = arith.constant 0 : i32
    %c0_i32_0 = arith.constant 0 : i32
    %c0_i32_1 = arith.constant 0 : i32
    return %arg0, %c0_i32, %c0_i32_0 : i32, i32, i32
  }
  func.func @transform_1(%arg0: i32) -> (i32, i32) {
    %c0_i32 = arith.constant 0 : i32
    %c0_i32_0 = arith.constant 0 : i32
    %c0_i32_1 = arith.constant 0 : i32
    return %c0_i32, %c0_i32_0 : i32, i32
  }
  func.func @transform_2(%arg0: i32) -> (i32, i32) {
    %c0_i32 = arith.constant 0 : i32
    %c0_i32_0 = arith.constant 0 : i32
    %c0_i32_1 = arith.constant 0 : i32
    return %c0_i32, %c0_i32_0 : i32, i32
  }
  func.func @transform_3(%arg0: i32) -> (i32, i32, i32, i32) {
    %c0_i32 = arith.constant 0 : i32
    %c0_i32_0 = arith.constant 0 : i32
    %c0_i32_1 = arith.constant 0 : i32
    %c0_i32_2 = arith.constant 0 : i32
    %c0_i32_3 = arith.constant 0 : i32
    return %c0_i32, %c0_i32_0, %c0_i32_1, %c0_i32_2 : i32, i32, i32, i32
  }
  func.func @transform_4(%arg0: i32) -> (i32, i32, i32) {
    %c0_i32 = arith.constant 0 : i32
    %c0_i32_0 = arith.constant 0 : i32
    %c0_i32_1 = arith.constant 0 : i32
    %c0_i32_2 = arith.constant 0 : i32
    return %c0_i32, %c0_i32_0, %c0_i32_1 : i32, i32, i32
  }
  func.func @transform_5(%arg0: i32) -> (i32, i32, i32) {
    %c0_i32 = arith.constant 0 : i32
    %c0_i32_0 = arith.constant 0 : i32
    %c0_i32_1 = arith.constant 0 : i32
    %c0_i32_2 = arith.constant 0 : i32
    return %c0_i32, %c0_i32_0, %c0_i32_1 : i32, i32, i32
  }
  func.func @transform_6(%arg0: i32) -> (i32, i32, i32) {
    %c0_i32 = arith.constant 0 : i32
    %c0_i32_0 = arith.constant 0 : i32
    %c0_i32_1 = arith.constant 0 : i32
    %c0_i32_2 = arith.constant 0 : i32
    return %c0_i32, %c0_i32_0, %c0_i32_1 : i32, i32, i32
  }
  func.func @transform_7(%arg0: i32) -> (i32, i32, i32) {
    %c0_i32 = arith.constant 0 : i32
    %c0_i32_0 = arith.constant 0 : i32
    %c0_i32_1 = arith.constant 0 : i32
    %c0_i32_2 = arith.constant 0 : i32
    return %c0_i32, %c0_i32_0, %c0_i32_1 : i32, i32, i32
  }
  func.func @transform_8(%arg0: i32) -> (i32, i32, i32) {
    %c0_i32 = arith.constant 0 : i32
    %c0_i32_0 = arith.constant 0 : i32
    %c0_i32_1 = arith.constant 0 : i32
    %c0_i32_2 = arith.constant 0 : i32
    return %c0_i32, %c0_i32_0, %c0_i32_1 : i32, i32, i32
  }
  func.func @transform_9(%arg0: i32) -> (i32, i32) {
    %c0_i32 = arith.constant 0 : i32
    %c0_i32_0 = arith.constant 0 : i32
    %c0_i32_1 = arith.constant 0 : i32
    return %c0_i32, %c0_i32_0 : i32, i32
  }
  func.func @transform_10(%arg0: i32) -> (i32, i32) {
    %c0_i32 = arith.constant 0 : i32
    %c0_i32_0 = arith.constant 0 : i32
    %c0_i32_1 = arith.constant 0 : i32
    return %c0_i32, %c0_i32_0 : i32, i32
  }
  func.func @transform_11(%arg0: i32) -> (i32, i32) {
    %c0_i32 = arith.constant 0 : i32
    %c0_i32_0 = arith.constant 0 : i32
    %c0_i32_1 = arith.constant 0 : i32
    return %c0_i32, %c0_i32_0 : i32, i32
  }
  func.func @transform_12(%arg0: i32) -> (i32, i32) {
    %c0_i32 = arith.constant 0 : i32
    %c0_i32_0 = arith.constant 0 : i32
    %c0_i32_1 = arith.constant 0 : i32
    return %c0_i32, %c0_i32_0 : i32, i32
  }
  func.func @transform_13(%arg0: i32) -> (i32, i32, i32) {
    %c0_i32 = arith.constant 0 : i32
    %c0_i32_0 = arith.constant 0 : i32
    %c0_i32_1 = arith.constant 0 : i32
    return %arg0, %c0_i32, %c0_i32_0 : i32, i32, i32
  }
}

</mosaic_0001>

<llo_original>
// kernel: encdec_swinlstm_forward.1
$region0: #{encdec_swinlstm_forward.1}
  #allocation0 [shape = 'u32[]', space=smem, size = 0x4, offset = 0x4, fixed_abs, tag = 'smem constant byte address 0x4 - core index']
  #allocation1 [shape = 'u32[144,128]{1,0:T(1,128)}', space=vmem, size = 0x12000, scoped, tag = 'internal scratch']
  %s0 = inlined_call_operand.vmem [shape: f32[2,48,64], index: 0, kind: input, shape index: {}]
  %s1 = inlined_call_operand.vmem [shape: bf16[64,32], index: 1, kind: input, shape index: {}]
  %s2 = inlined_call_operand.vmem [shape: f32[1,32], index: 2, kind: input, shape index: {}]
  %s3 = inlined_call_operand.vmem [shape: f32[4,16,16,32], index: 3, kind: input, shape index: {}]
  %s4 = inlined_call_operand.vmem [shape: f32[4,1,32], index: 4, kind: input, shape index: {}]
  %s5 = inlined_call_operand.vmem [shape: bf16[4,32,128], index: 5, kind: input, shape index: {}]
  %s6 = inlined_call_operand.vmem [shape: f32[4,1,128], index: 6, kind: input, shape index: {}]
  %s7 = inlined_call_operand.vmem [shape: f32[4,1,32], index: 7, kind: input, shape index: {}]
  %s8 = inlined_call_operand.vmem [shape: f32[4,1,32], index: 8, kind: input, shape index: {}]
  %s9 = inlined_call_operand.vmem [shape: bf16[32,128], index: 9, kind: input, shape index: {}]
  %s10 = inlined_call_operand.vmem [shape: f32[1,128], index: 10, kind: input, shape index: {}]
  %s11 = inlined_call_operand.vmem [shape: bf16[128,256], index: 11, kind: input, shape index: {}]
  %s12 = inlined_call_operand.vmem [shape: f32[1,256], index: 12, kind: input, shape index: {}]
  %s13 = inlined_call_operand.vmem [shape: f32[2,32,256], index: 13, kind: output, shape index: {}]
  %s14 = sld [smem:[#allocation0]]
  $region85: #{encdec_swinlstm_forward.1} parent=0
    _
  %s16 = ssub.s32 1, %s14
  %s17 = scalar_select 0, %s16, %s14
  loop: start=0, step=1, limit=4
  $region2: #{encdec_swinlstm_forward.1} parent=0 // loop_pre_header
    _
  $region3: #{encdec_swinlstm_forward.1} parent=0 // loop_header
    %s19 = sphi 0, %s23
    %p20 = scmp.ge.s32.totalorder %s19, 4
    %s29 = sphi 0, %s31
    %s32 = sphi 0, %s29
    %s33 = sphi 0, %s32
    %s49 = sphi 0, %s33
    %s53 = sphi 0, %s53
    %s55 = sphi 0, %s53
    %s56 = sphi 0, %s55
    %s70 = sphi 0, %s56
    %s74 = sphi 0, %s74
    %s76 = sphi 0, %s74
    %s77 = sphi 0, %s76
    %s91 = sphi 0, %s77
    %s95 = sphi 0, %s95
    %s97 = sphi 0, %s95
    %s98 = sphi 0, %s97
    %s112 = sphi 0, %s98
    %s116 = sphi 0, %s116
    %s118 = sphi 0, %s116
    %s119 = sphi 0, %s118
    %s133 = sphi 0, %s119
    %s137 = sphi 0, %s137
    %s139 = sphi 0, %s137
    %s140 = sphi 0, %s139
    %s154 = sphi 0, %s140
    %s158 = sphi 0, %s158
    %s160 = sphi 0, %s158
    %s161 = sphi 0, %s160
    %s175 = sphi 0, %s161
    %s179 = sphi 0, %s179
    %s181 = sphi 0, %s179
    %s182 = sphi 0, %s181
    %s196 = sphi 0, %s182
    %s200 = sphi 0, %s200
    %s202 = sphi 0, %s200
    %s203 = sphi 0, %s202
    %s217 = sphi 0, %s203
    %s221 = sphi 0, %s221
    %s223 = sphi 0, %s221
    %s224 = sphi 0, %s223
    %s238 = sphi 0, %s224
    %s242 = sphi 0, %s242
    %s244 = sphi 0, %s242
    %s245 = sphi 0, %s244
    %s259 = sphi 0, %s245
    %s263 = sphi 0, %s263
    %s265 = sphi 0, %s263
    %s266 = sphi 0, %s265
    %s280 = sphi 0, %s266
    %s284 = sphi 0, %s284
    %s286 = sphi 0, %s284
    %s287 = sphi 0, %s286
    %s301 = sphi 0, %s287
    %s307 = sphi 0, %s309
    %s310 = sphi 0, %s307
    %s311 = sphi 0, %s310
    %s327 = sphi 0, %s311
  $region4: #{encdec_swinlstm_forward.1} parent=0 // loop_header_branch
    %22 = sbr.rel (%p20) target = $region8
  $region5: #{encdec_swinlstm_forward.1} parent=0 // loop_body
    %s24 = ssub.s32 %s19, 1
    %s25 = ssub.s32 %s19, 2
    %s26 = sadd.s32 %s19, 1
    %s27 = ssub.s32 %s19, %s26
    %p28 = scmp.eq.s32.totalorder %s27, 0
    %s30 = sadd.s32 %s29, 1
    %s31 = scalar_select %p28, %s29, %s30
    %p34 = pneg %p28
    %p35 = scmp.eq.s32.totalorder %s19, 1
    %p36 = por %p34, %p35
    %p37 = scmp.ne.s32.totalorder %s29, %s32
    %p38 = scmp.eq.s32.totalorder %s19, 0
    %p39 = por %p37, %p38
    %p40 = scmp.ne.s32.totalorder %s29, %s32
    %p41 = scmp.eq.s32.totalorder %s24, 1
    %p42 = por %p40, %p41
    %p43 = scmp.ne.s32.totalorder %s32, %s33
    %p44 = scmp.eq.s32.totalorder %s24, 0
    %p45 = por %p43, %p44
    %p46 = scmp.ne.s32.totalorder %s32, %s33
    %p47 = scmp.eq.s32.totalorder %s25, 1
    %p48 = por %p46, %p47
    %p50 = scmp.ne.s32.totalorder %s33, %s49
    %p51 = scmp.eq.s32.totalorder %s25, 0
    %p52 = por %p50, %p51
    %s54 = sadd.s32 %s53, 1
    %p57 = scmp.eq.s32.totalorder %s19, 1
    %p58 = scmp.ne.s32.totalorder %s53, %s55
    %p59 = scmp.eq.s32.totalorder %s19, 0
    %p60 = por %p58, %p59
    %p61 = scmp.ne.s32.totalorder %s53, %s55
    %p62 = scmp.eq.s32.totalorder %s24, 1
    %p63 = por %p61, %p62
    %p64 = scmp.ne.s32.totalorder %s55, %s56
    %p65 = scmp.eq.s32.totalorder %s24, 0
    %p66 = por %p64, %p65
    %p67 = scmp.ne.s32.totalorder %s55, %s56
    %p68 = scmp.eq.s32.totalorder %s25, 1
    %p69 = por %p67, %p68
    %p71 = scmp.ne.s32.totalorder %s56, %s70
    %p72 = scmp.eq.s32.totalorder %s25, 0
    %p73 = por %p71, %p72
    %s75 = sadd.s32 %s74, 1
    %p78 = scmp.eq.s32.totalorder %s19, 1
    %p79 = scmp.ne.s32.totalorder %s74, %s76
    %p80 = scmp.eq.s32.totalorder %s19, 0
    %p81 = por %p79, %p80
    %p82 = scmp.ne.s32.totalorder %s74, %s76
    %p83 = scmp.eq.s32.totalorder %s24, 1
    %p84 = por %p82, %p83
    %p85 = scmp.ne.s32.totalorder %s76, %s77
    %p86 = scmp.eq.s32.totalorder %s24, 0
    %p87 = por %p85, %p86
    %p88 = scmp.ne.s32.totalorder %s76, %s77
    %p89 = scmp.eq.s32.totalorder %s25, 1
    %p90 = por %p88, %p89
    %p92 = scmp.ne.s32.totalorder %s77, %s91
    %p93 = scmp.eq.s32.totalorder %s25, 0
    %p94 = por %p92, %p93
    %s96 = sadd.s32 %s95, 1
    %p99 = scmp.eq.s32.totalorder %s19, 1
    %p100 = scmp.ne.s32.totalorder %s95, %s97
    %p101 = scmp.eq.s32.totalorder %s19, 0
    %p102 = por %p100, %p101
    %p103 = scmp.ne.s32.totalorder %s95, %s97
    %p104 = scmp.eq.s32.totalorder %s24, 1
    %p105 = por %p103, %p104
    %p106 = scmp.ne.s32.totalorder %s97, %s98
    %p107 = scmp.eq.s32.totalorder %s24, 0
    %p108 = por %p106, %p107
    %p109 = scmp.ne.s32.totalorder %s97, %s98
    %p110 = scmp.eq.s32.totalorder %s25, 1
    %p111 = por %p109, %p110
    %p113 = scmp.ne.s32.totalorder %s98, %s112
    %p114 = scmp.eq.s32.totalorder %s25, 0
    %p115 = por %p113, %p114
    %s117 = sadd.s32 %s116, 1
    %p120 = scmp.eq.s32.totalorder %s19, 1
    %p121 = scmp.ne.s32.totalorder %s116, %s118
    %p122 = scmp.eq.s32.totalorder %s19, 0
    %p123 = por %p121, %p122
    %p124 = scmp.ne.s32.totalorder %s116, %s118
    %p125 = scmp.eq.s32.totalorder %s24, 1
    %p126 = por %p124, %p125
    %p127 = scmp.ne.s32.totalorder %s118, %s119
    %p128 = scmp.eq.s32.totalorder %s24, 0
    %p129 = por %p127, %p128
    %p130 = scmp.ne.s32.totalorder %s118, %s119
    %p131 = scmp.eq.s32.totalorder %s25, 1
    %p132 = por %p130, %p131
    %p134 = scmp.ne.s32.totalorder %s119, %s133
    %p135 = scmp.eq.s32.totalorder %s25, 0
    %p136 = por %p134, %p135
    %s138 = sadd.s32 %s137, 1
    %p141 = scmp.eq.s32.totalorder %s19, 1
    %p142 = scmp.ne.s32.totalorder %s137, %s139
    %p143 = scmp.eq.s32.totalorder %s19, 0
    %p144 = por %p142, %p143
    %p145 = scmp.ne.s32.totalorder %s137, %s139
    %p146 = scmp.eq.s32.totalorder %s24, 1
    %p147 = por %p145, %p146
    %p148 = scmp.ne.s32.totalorder %s139, %s140
    %p149 = scmp.eq.s32.totalorder %s24, 0
    %p150 = por %p148, %p149
    %p151 = scmp.ne.s32.totalorder %s139, %s140
    %p152 = scmp.eq.s32.totalorder %s25, 1
    %p153 = por %p151, %p152
    %p155 = scmp.ne.s32.totalorder %s140, %s154
    %p156 = scmp.eq.s32.totalorder %s25, 0
    %p157 = por %p155, %p156
    %s159 = sadd.s32 %s158, 1
    %p162 = scmp.eq.s32.totalorder %s19, 1
    %p163 = scmp.ne.s32.totalorder %s158, %s160
    %p164 = scmp.eq.s32.totalorder %s19, 0
    %p165 = por %p163, %p164
    %p166 = scmp.ne.s32.totalorder %s158, %s160
    %p167 = scmp.eq.s32.totalorder %s24, 1
    %p168 = por %p166, %p167
    %p169 = scmp.ne.s32.totalorder %s160, %s161
    %p170 = scmp.eq.s32.totalorder %s24, 0
    %p171 = por %p169, %p170
    %p172 = scmp.ne.s32.totalorder %s160, %s161
    %p173 = scmp.eq.s32.totalorder %s25, 1
    %p174 = por %p172, %p173
    %p176 = scmp.ne.s32.totalorder %s161, %s175
    %p177 = scmp.eq.s32.totalorder %s25, 0
    %p178 = por %p176, %p177
    %s180 = sadd.s32 %s179, 1
    %p183 = scmp.eq.s32.totalorder %s19, 1
    %p184 = scmp.ne.s32.totalorder %s179, %s181
    %p185 = scmp.eq.s32.totalorder %s19, 0
    %p186 = por %p184, %p185
    %p187 = scmp.ne.s32.totalorder %s179, %s181
    %p188 = scmp.eq.s32.totalorder %s24, 1
    %p189 = por %p187, %p188
    %p190 = scmp.ne.s32.totalorder %s181, %s182
    %p191 = scmp.eq.s32.totalorder %s24, 0
    %p192 = por %p190, %p191
    %p193 = scmp.ne.s32.totalorder %s181, %s182
    %p194 = scmp.eq.s32.totalorder %s25, 1
    %p195 = por %p193, %p194
    %p197 = scmp.ne.s32.totalorder %s182, %s196
    %p198 = scmp.eq.s32.totalorder %s25, 0
    %p199 = por %p197, %p198
    %s201 = sadd.s32 %s200, 1
    %p204 = scmp.eq.s32.totalorder %s19, 1
    %p205 = scmp.ne.s32.totalorder %s200, %s202
    %p206 = scmp.eq.s32.totalorder %s19, 0
    %p207 = por %p205, %p206
    %p208 = scmp.ne.s32.totalorder %s200, %s202
    %p209 = scmp.eq.s32.totalorder %s24, 1
    %p210 = por %p208, %p209
    %p211 = scmp.ne.s32.totalorder %s202, %s203
    %p212 = scmp.eq.s32.totalorder %s24, 0
    %p213 = por %p211, %p212
    %p214 = scmp.ne.s32.totalorder %s202, %s203
    %p215 = scmp.eq.s32.totalorder %s25, 1
    %p216 = por %p214, %p215
    %p218 = scmp.ne.s32.totalorder %s203, %s217
    %p219 = scmp.eq.s32.totalorder %s25, 0
    %p220 = por %p218, %p219
    %s222 = sadd.s32 %s221, 1
    %p225 = scmp.eq.s32.totalorder %s19, 1
    %p226 = scmp.ne.s32.totalorder %s221, %s223
    %p227 = scmp.eq.s32.totalorder %s19, 0
    %p228 = por %p226, %p227
    %p229 = scmp.ne.s32.totalorder %s221, %s223
    %p230 = scmp.eq.s32.totalorder %s24, 1
    %p231 = por %p229, %p230
    %p232 = scmp.ne.s32.totalorder %s223, %s224
    %p233 = scmp.eq.s32.totalorder %s24, 0
    %p234 = por %p232, %p233
    %p235 = scmp.ne.s32.totalorder %s223, %s224
    %p236 = scmp.eq.s32.totalorder %s25, 1
    %p237 = por %p235, %p236
    %p239 = scmp.ne.s32.totalorder %s224, %s238
    %p240 = scmp.eq.s32.totalorder %s25, 0
    %p241 = por %p239, %p240
    %s243 = sadd.s32 %s242, 1
    %p246 = scmp.eq.s32.totalorder %s19, 1
    %p247 = scmp.ne.s32.totalorder %s242, %s244
    %p248 = scmp.eq.s32.totalorder %s19, 0
    %p249 = por %p247, %p248
    %p250 = scmp.ne.s32.totalorder %s242, %s244
    %p251 = scmp.eq.s32.totalorder %s24, 1
    %p252 = por %p250, %p251
    %p253 = scmp.ne.s32.totalorder %s244, %s245
    %p254 = scmp.eq.s32.totalorder %s24, 0
    %p255 = por %p253, %p254
    %p256 = scmp.ne.s32.totalorder %s244, %s245
    %p257 = scmp.eq.s32.totalorder %s25, 1
    %p258 = por %p256, %p257
    %p260 = scmp.ne.s32.totalorder %s245, %s259
    %p261 = scmp.eq.s32.totalorder %s25, 0
    %p262 = por %p260, %p261
    %s264 = sadd.s32 %s263, 1
    %p267 = scmp.eq.s32.totalorder %s19, 1
    %p268 = scmp.ne.s32.totalorder %s263, %s265
    %p269 = scmp.eq.s32.totalorder %s19, 0
    %p270 = por %p268, %p269
    %p271 = scmp.ne.s32.totalorder %s263, %s265
    %p272 = scmp.eq.s32.totalorder %s24, 1
    %p273 = por %p271, %p272
    %p274 = scmp.ne.s32.totalorder %s265, %s266
    %p275 = scmp.eq.s32.totalorder %s24, 0
    %p276 = por %p274, %p275
    %p277 = scmp.ne.s32.totalorder %s265, %s266
    %p278 = scmp.eq.s32.totalorder %s25, 1
    %p279 = por %p277, %p278
    %p281 = scmp.ne.s32.totalorder %s266, %s280
    %p282 = scmp.eq.s32.totalorder %s25, 0
    %p283 = por %p281, %p282
    %s285 = sadd.s32 %s284, 1
    %p288 = scmp.eq.s32.totalorder %s19, 1
    %p289 = scmp.ne.s32.totalorder %s284, %s286
    %p290 = scmp.eq.s32.totalorder %s19, 0
    %p291 = por %p289, %p290
    %p292 = scmp.ne.s32.totalorder %s284, %s286
    %p293 = scmp.eq.s32.totalorder %s24, 1
    %p294 = por %p292, %p293
    %p295 = scmp.ne.s32.totalorder %s286, %s287
    %p296 = scmp.eq.s32.totalorder %s24, 0
    %p297 = por %p295, %p296
    %p298 = scmp.ne.s32.totalorder %s286, %s287
    %p299 = scmp.eq.s32.totalorder %s25, 1
    %p300 = por %p298, %p299
    %p302 = scmp.ne.s32.totalorder %s287, %s301
    %p303 = scmp.eq.s32.totalorder %s25, 0
    %p304 = por %p302, %p303
    %s305 = ssub.s32 %s19, %s26
    %p306 = scmp.eq.s32.totalorder %s305, 0
    %s308 = sadd.s32 %s307, 1
    %s309 = scalar_select %p306, %s307, %s308
    %p312 = pneg %p306
    %p313 = scmp.eq.s32.totalorder %s19, 1
    %p314 = por %p312, %p313
    %p315 = scmp.ne.s32.totalorder %s307, %s310
    %p316 = scmp.eq.s32.totalorder %s19, 0
    %p317 = por %p315, %p316
    %p318 = scmp.ne.s32.totalorder %s307, %s310
    %p319 = scmp.eq.s32.totalorder %s24, 1
    %p320 = por %p318, %p319
    %p321 = scmp.ne.s32.totalorder %s310, %s311
    %p322 = scmp.eq.s32.totalorder %s24, 0
    %p323 = por %p321, %p322
    %p324 = scmp.ne.s32.totalorder %s310, %s311
    %p325 = scmp.eq.s32.totalorder %s25, 1
    %p326 = por %p324, %p325
    %p328 = scmp.ne.s32.totalorder %s311, %s327
    %p329 = scmp.eq.s32.totalorder %s25, 0
    %p330 = por %p328, %p329
    %p331 = scmp.le.s32.totalorder 1, %s19
    %p332 = scmp.lt.s32.totalorder %s19, 3
    %p333 = pnand %p331, %p332
    %p334 = pneg %p333
    // Predicated region
    $region9: #{encdec_swinlstm_forward.1} parent=5 // pred_check
      _
    $region10: #{encdec_swinlstm_forward.1} parent=5 // pred_check_branch
      %336 = sbr.rel (%p333) target = $region12
    $region11: #{encdec_swinlstm_forward.1} parent=5 // pred_region
      %s337 = ssub.s32 %s19, 1
      // Predicated region
      $region13: #{encdec_swinlstm_forward.1} parent=11 // pred_check
        %p338 = pneg %p66
      $region14: #{encdec_swinlstm_forward.1} parent=11 // pred_check_branch
        %340 = sbr.rel (%p338) target = $region16
      $region15: #{encdec_swinlstm_forward.1} parent=11 // pred_region
        _
      $region16: #{encdec_swinlstm_forward.1} parent=11 // pred_fallthru
        _
      // Predicated region
      $region17: #{encdec_swinlstm_forward.1} parent=11 // pred_check
        %p341 = pneg %p87
      $region18: #{encdec_swinlstm_forward.1} parent=11 // pred_check_branch
        %343 = sbr.rel (%p341) target = $region20
      $region19: #{encdec_swinlstm_forward.1} parent=11 // pred_region
        _
      $region20: #{encdec_swinlstm_forward.1} parent=11 // pred_fallthru
        _
      // Predicated region
      $region21: #{encdec_swinlstm_forward.1} parent=11 // pred_check
        %p344 = pneg %p108
      $region22: #{encdec_swinlstm_forward.1} parent=11 // pred_check_branch
        %346 = sbr.rel (%p344) target = $region24
      $region23: #{encdec_swinlstm_forward.1} parent=11 // pred_region
        _
      $region24: #{encdec_swinlstm_forward.1} parent=11 // pred_fallthru
        _
      // Predicated region
      $region25: #{encdec_swinlstm_forward.1} parent=11 // pred_check
        %p347 = pneg %p129
      $region26: #{encdec_swinlstm_forward.1} parent=11 // pred_check_branch
        %349 = sbr.rel (%p347) target = $region28
      $region27: #{encdec_swinlstm_forward.1} parent=11 // pred_region
        _
      $region28: #{encdec_swinlstm_forward.1} parent=11 // pred_fallthru
        _
      // Predicated region
      $region29: #{encdec_swinlstm_forward.1} parent=11 // pred_check
        %p350 = pneg %p150
      $region30: #{encdec_swinlstm_forward.1} parent=11 // pred_check_branch
        %352 = sbr.rel (%p350) target = $region32
      $region31: #{encdec_swinlstm_forward.1} parent=11 // pred_region
        _
      $region32: #{encdec_swinlstm_forward.1} parent=11 // pred_fallthru
        _
      // Predicated region
      $region33: #{encdec_swinlstm_forward.1} parent=11 // pred_check
        %p353 = pneg %p171
      $region34: #{encdec_swinlstm_forward.1} parent=11 // pred_check_branch
        %355 = sbr.rel (%p353) target = $region36
      $region35: #{encdec_swinlstm_forward.1} parent=11 // pred_region
        _
      $region36: #{encdec_swinlstm_forward.1} parent=11 // pred_fallthru
        _
      // Predicated region
      $region37: #{encdec_swinlstm_forward.1} parent=11 // pred_check
        %p356 = pneg %p192
      $region38: #{encdec_swinlstm_forward.1} parent=11 // pred_check_branch
        %358 = sbr.rel (%p356) target = $region40
      $region39: #{encdec_swinlstm_forward.1} parent=11 // pred_region
        _
      $region40: #{encdec_swinlstm_forward.1} parent=11 // pred_fallthru
        _
      // Predicated region
      $region41: #{encdec_swinlstm_forward.1} parent=11 // pred_check
        %p359 = pneg %p213
      $region42: #{encdec_swinlstm_forward.1} parent=11 // pred_check_branch
        %361 = sbr.rel (%p359) target = $region44
      $region43: #{encdec_swinlstm_forward.1} parent=11 // pred_region
        _
      $region44: #{encdec_swinlstm_forward.1} parent=11 // pred_fallthru
        _
      // Predicated region
      $region45: #{encdec_swinlstm_forward.1} parent=11 // pred_check
        %p362 = pneg %p234
      $region46: #{encdec_swinlstm_forward.1} parent=11 // pred_check_branch
        %364 = sbr.rel (%p362) target = $region48
      $region47: #{encdec_swinlstm_forward.1} parent=11 // pred_region
        _
      $region48: #{encdec_swinlstm_forward.1} parent=11 // pred_fallthru
        _
      // Predicated region
      $region49: #{encdec_swinlstm_forward.1} parent=11 // pred_check
        %p365 = pneg %p255
      $region50: #{encdec_swinlstm_forward.1} parent=11 // pred_check_branch
        %367 = sbr.rel (%p365) target = $region52
      $region51: #{encdec_swinlstm_forward.1} parent=11 // pred_region
        _
      $region52: #{encdec_swinlstm_forward.1} parent=11 // pred_fallthru
        _
      // Predicated region
      $region53: #{encdec_swinlstm_forward.1} parent=11 // pred_check
        %p368 = pneg %p276
      $region54: #{encdec_swinlstm_forward.1} parent=11 // pred_check_branch
        %370 = sbr.rel (%p368) target = $region56
      $region55: #{encdec_swinlstm_forward.1} parent=11 // pred_region
        _
      $region56: #{encdec_swinlstm_forward.1} parent=11 // pred_fallthru
        _
      // Predicated region
      $region57: #{encdec_swinlstm_forward.1} parent=11 // pred_check
        %p371 = pneg %p297
      $region58: #{encdec_swinlstm_forward.1} parent=11 // pred_check_branch
        %373 = sbr.rel (%p371) target = $region60
      $region59: #{encdec_swinlstm_forward.1} parent=11 // pred_region
        _
      $region60: #{encdec_swinlstm_forward.1} parent=11 // pred_fallthru
        _
    $region12: #{encdec_swinlstm_forward.1} parent=5 // pred_fallthru
      _
    %p374 = scmp.lt.s32.totalorder %s19, 2
    // Predicated region
    $region61: #{encdec_swinlstm_forward.1} parent=5 // pred_check
      %p375 = pneg %p374
    $region62: #{encdec_swinlstm_forward.1} parent=5 // pred_check_branch
      %377 = sbr.rel (%p375) target = $region64
    $region63: #{encdec_swinlstm_forward.1} parent=5 // pred_region
      // Predicated region
      $region65: #{encdec_swinlstm_forward.1} parent=63 // pred_check
        %p378 = pneg %p39
      $region66: #{encdec_swinlstm_forward.1} parent=63 // pred_check_branch
        %380 = sbr.rel (%p378) target = $region68
      $region67: #{encdec_swinlstm_forward.1} parent=63 // pred_region
        %p381 = scmp.lt.s32.totalorder %s19, 1
        %s382 = scalar_select %p381, %s19, 1
        %s383 = smul.addr %s382, 6
        %s384 = smul.addr %s383, 8
        %s385 = scalar_lea.vmem %s0, %s384
      $region68: #{encdec_swinlstm_forward.1} parent=63 // pred_fallthru
        _
    $region64: #{encdec_swinlstm_forward.1} parent=5 // pred_fallthru
      _
    %p386 = scmp.le.s32.totalorder 1, %s19
    %p387 = scmp.lt.s32.totalorder %s19, 3
    %p388 = pnand %p386, %p387
    %p389 = pneg %p388
    // Predicated region
    $region69: #{encdec_swinlstm_forward.1} parent=5 // pred_check
      _
    $region70: #{encdec_swinlstm_forward.1} parent=5 // pred_check_branch
      %391 = sbr.rel (%p388) target = $region72
    $region71: #{encdec_swinlstm_forward.1} parent=5 // pred_region
      %s392 = ssub.s32 %s19, 1
      %p393 = scmp.lt.s32.totalorder %s24, 1
      %s394 = scalar_select %p393, %s24, 1
      %s395 = smul.addr %s394, 6
      %s396 = smul.addr %s395, 8
      %s397 = scalar_lea.vmem %s0, %s396
      %p398 = pneg %p45
      %p399 = pneg %p42
      %p400 = pneg %p66
      %p401 = pneg %p63
      %p402 = pneg %p87
      %p403 = pneg %p84
      %p404 = pneg %p108
      %p405 = pneg %p105
      %p406 = pneg %p129
      %p407 = pneg %p126
      %p408 = pneg %p150
      %p409 = pneg %p147
      %p410 = pneg %p171
      %p411 = pneg %p168
      %p412 = pneg %p192
      %p413 = pneg %p189
      %p414 = pneg %p213
      %p415 = pneg %p210
      %p416 = pneg %p234
      %p417 = pneg %p231
      %p418 = pneg %p255
      %p419 = pneg %p252
      %p420 = pneg %p276
      %p421 = pneg %p273
      %p422 = pneg %p297
      %p423 = pneg %p294
      %p424 = pneg %p323
      %p425 = pneg %p320
      %p426 = scmp.lt.s32.totalorder %s24, 1
      %s427 = scalar_select %p426, %s24, 1
      %s428 = smul.addr %s427, 8
      %s429 = smul.addr %s428, 8
      %s430 = scalar_lea.vmem %s13, %s429
      %p431 = scmp.lt.s32.totalorder %s24, 1
      %s432 = scalar_select %p431, %s24, 1
      %s433 = smul.addr %s432, 6
      %s434 = smul.addr %s433, 8
      %s435 = scalar_lea.vmem %s0, %s434
      %p436 = scmp.lt.s32.totalorder %s24, 1
      %s437 = scalar_select %p436, %s24, 1
      %s438 = smul.addr %s437, 8
      %s439 = smul.addr %s438, 8
      %s440 = scalar_lea.vmem %s13, %s439
      %v442 = vld [vmem:[%s435] sm:$0xff]
      %v443 = vld [vmem:[%s435 + $0x8] sm:$0xff]
      %v444 = vld [vmem:[%s435 + $0x10] sm:$0xff]
      %v445 = vld [vmem:[%s435 + $0x18] sm:$0xff]
      %v446 = vld [vmem:[%s435 + $0x20] sm:$0xff]
      %v447 = vld [vmem:[%s435 + $0x28] sm:$0xff]
      %v448 = vpack.c.bf16 %v443, %v442
      %v449 = vpack.c.bf16 %v445, %v444
      %v450 = vpack.c.bf16 %v447, %v446
      %v451 = vld [vmem:[%s1] sm:$0xf]
      %v452 = vld [vmem:[%s1 + $0x4] sm:$0xf]
      %v453 = vld [vmem:[%s1 + $0x8] sm:$0xf]
      %v454 = vld [vmem:[%s1 + $0xc] sm:$0xf]
      %v455 = vld [vmem:[%s1 + $0x10] sm:$0xf]
      %v456 = vld [vmem:[%s1 + $0x14] sm:$0xf]
      %v457 = vld [vmem:[%s1 + $0x18] sm:$0xf]
      %v458 = vld [vmem:[%s1 + $0x1c] sm:$0xf]
      %v459 = vld [vmem:[%s2] sm:$0x1]
      %v461 = vlaneseq
      %v462 = vshrl.u32 %v461, 7
      %v463 = vsub.s32 0, %v462
      %v464 = vrot.slane %v459, %v463
      %v474 = vunpack.c.l.b16 %v451
      %v475 = vunpack.c.l.b16 %v452
      %v476 = vunpack.c.l.b16 %v453
      %v477 = vunpack.c.l.b16 %v454
      %v478 = vunpack.c.l.b16 %v455
      %v479 = vunpack.c.l.b16 %v456
      %v480 = vunpack.c.l.b16 %v457
      %v481 = vunpack.c.l.b16 %v458
      %v482 = vpack.c.b16 %v475, %v474
      %v483 = vpack.c.b16 %v477, %v476
      %v484 = vpack.c.b16 %v479, %v478
      %v485 = vpack.c.b16 %v481, %v480
      %vm490 = vcmask 523264
      %v492 = vsel %vm490, %v448, 0
      %v495 = vsel %vm490, %v449, 0
      %v498 = vsel %vm490, %v450, 0
      %500 = vmatprep.subr.bf16.mxu0 0
      %501 = vmatpush1.bf16.msra.mxu0 %v482
      %502 = vmatprep.subr.bf16.mxu0 0
      %503 = vmatpush1.bf16.msra.mxu0 %v483
      %504 = vmatprep.subr.bf16.mxu0 0
      %505 = vmatpush1.bf16.msra.mxu0 %v484
      %506 = vmatprep.subr.bf16.mxu0 0
      %507 = vmatpush1.bf16.msra.mxu0 %v485
      %508 = vmatprep.subr.bf16.mxu0 0
      %509 = vmatpush1.bf16.msra.mxu0 0
      %510 = vmatprep.subr.bf16.mxu0 0
      %511 = vmatpush1.bf16.msra.mxu0 0
      %512 = vmatprep.subr.bf16.mxu0 0
      %513 = vmatpush1.bf16.msra.mxu0 0
      %514 = vmatprep.subr.bf16.mxu0 0
      %515 = vmatpush1.bf16.msra.mxu0 0
      %516 = vmatprep.subr.bf16.mxu0 0
      %517 = vmatpush1.bf16.msra.mxu0 0
      %518 = vmatprep.subr.bf16.mxu0 0
      %519 = vmatpush1.bf16.msra.mxu0 0
      %520 = vmatprep.subr.bf16.mxu0 0
      %521 = vmatpush1.bf16.msra.mxu0 0
      %522 = vmatprep.subr.bf16.mxu0 0
      %523 = vmatpush1.bf16.msra.mxu0 0
      %524 = vmatprep.subr.bf16.mxu0 0
      %525 = vmatpush1.bf16.msra.mxu0 0
      %526 = vmatprep.subr.bf16.mxu0 0
      %527 = vmatpush1.bf16.msra.mxu0 0
      %528 = vmatprep.subr.bf16.mxu0 0
      %529 = vmatpush1.bf16.msra.mxu0 0
      %530 = vmatprep.subr.bf16.mxu0 0
      %531 = vmatpush1.bf16.msra.mxu0 0
      %532 = vmatprep.mubr.bf16.mxu0 0
      %533 = vmatmul.mubr.bf16.gmra.mrb[0].mxu0 %v492
      %v534 = vpop.f32.mrb[0].mxu0
      %v535 = vadd.f32 %v464, %v534
      %v536 = vpop.f32.mrb[0].mxu0
      %v537 = vpop.f32.mrb[0].mxu0
      %v538 = vadd.f32 %v464, %v537
      %v539 = vpop.f32.mrb[0].mxu0
      %540 = vmatprep.mubr.bf16.mxu0 0
      %541 = vmatmul.mubr.bf16.gmra.mrb[0].mxu0 %v495
      %v542 = vpop.f32.mrb[0].mxu0
      %v543 = vadd.f32 %v464, %v542
      %v544 = vpop.f32.mrb[0].mxu0
      %v545 = vpop.f32.mrb[0].mxu0
      %v546 = vadd.f32 %v464, %v545
      %v547 = vpop.f32.mrb[0].mxu0
      %548 = vmatprep.mubr.bf16.mxu0 0
      %549 = vmatmul.mubr.bf16.gmra.mrb[0].mxu0 %v498
      %v550 = vpop.f32.mrb[0].mxu0
      %v551 = vadd.f32 %v464, %v550
      %v552 = vpop.f32.mrb[0].mxu0
      %v553 = vpop.f32.mrb[0].mxu0
      %v554 = vadd.f32 %v464, %v553
      %v555 = vpop.f32.mrb[0].mxu0
      %556 = vdwg.mxu0
      %v557 = vld [vmem:[%s4] sm:$0x1]
      %v558 = vld [vmem:[%s5] sm:$0xf]
      %v559 = vld [vmem:[%s5 + $0x4] sm:$0xf]
      %v560 = vld [vmem:[%s5 + $0x8] sm:$0xf]
      %v561 = vld [vmem:[%s5 + $0xc] sm:$0xf]
      %v562 = vld [vmem:[%s6] sm:$0x1]
      %v563 = vld [vmem:[%s7] sm:$0x1]
      %v564 = vld [vmem:[%s8] sm:$0x1]
      %v565 = vadd.f32 %v535, 0.0
      %v566 = vadd.f32 %v538, 0.0
      %v567 = vld [vmem:[%s3] sm:$0xff]
      %v568 = vld [vmem:[%s3 + $0x8] sm:$0xff]
      %v569 = vmul.f32 %v565, %v567
      %v570 = vmul.f32 %v566, %v568
      %v571 = vrot.slane %v565, 1
      %v572 = vrot.slane %v566, 1
      %v573 = vlaneseq
      %v574 = vshrl.u32 %v573, 7
      %vm575 = vcmp.lt.s32.totalorder %v574, 7
      %v576 = vsel %vm575, %v571, %v572
      %v577 = vsel %vm575, %v572, %v571
      %s578 = scalar_lea.vmem %s3, 16
      %v579 = vld [vmem:[%s578] sm:$0xff]
      %v580 = vld [vmem:[%s578 + $0x8] sm:$0xff]
      %v581 = vmul.f32 %v576, %v579
      %v582 = vmul.f32 %v577, %v580
      %v583 = vrot.slane %v565, 2
      %v584 = vrot.slane %v566, 2
      %vm585 = vcmp.lt.s32.totalorder %v574, 6
      %v586 = vsel %vm585, %v583, %v584
      %v587 = vsel %vm585, %v584, %v583
      %s588 = scalar_lea.vmem %s3, 32
      %v589 = vld [vmem:[%s588] sm:$0xff]
      %v590 = vld [vmem:[%s588 + $0x8] sm:$0xff]
      %v591 = vmul.f32 %v586, %v589
      %v592 = vmul.f32 %v587, %v590
      %v593 = vrot.slane %v565, 3
      %v594 = vrot.slane %v566, 3
      %vm595 = vcmp.lt.s32.totalorder %v574, 5
      %v596 = vsel %vm595, %v593, %v594
      %v597 = vsel %vm595, %v594, %v593
      %s598 = scalar_lea.vmem %s3, 48
      %v599 = vld [vmem:[%s598] sm:$0xff]
      %v600 = vld [vmem:[%s598 + $0x8] sm:$0xff]
      %v601 = vmul.f32 %v596, %v599
      %v602 = vmul.f32 %v597, %v600
      %v603 = vrot.slane %v565, 4
      %v604 = vrot.slane %v566, 4
      %vm605 = vcmp.lt.s32.totalorder %v574, 4
      %v606 = vsel %vm605, %v603, %v604
      %v607 = vsel %vm605, %v604, %v603
      %s608 = scalar_lea.vmem %s3, 64
      %v609 = vld [vmem:[%s608] sm:$0xff]
      %v610 = vld [vmem:[%s608 + $0x8] sm:$0xff]
      %v611 = vmul.f32 %v606, %v609
      %v612 = vmul.f32 %v607, %v610
      %v613 = vadd.f32 %v569, %v611
      %v614 = vadd.f32 %v570, %v612
      %v615 = vrot.slane %v565, 5
      %v616 = vrot.slane %v566, 5
      %vm617 = vcmp.lt.s32.totalorder %v574, 3
      %v618 = vsel %vm617, %v615, %v616
      %v619 = vsel %vm617, %v616, %v615
      %s620 = scalar_lea.vmem %s3, 80
      %v621 = vld [vmem:[%s620] sm:$0xff]
      %v622 = vld [vmem:[%s620 + $0x8] sm:$0xff]
      %v623 = vmul.f32 %v618, %v621
      %v624 = vmul.f32 %v619, %v622
      %v625 = vadd.f32 %v581, %v623
      %v626 = vadd.f32 %v582, %v624
      %v627 = vrot.slane %v565, 6
      %v628 = vrot.slane %v566, 6
      %vm629 = vcmp.lt.s32.totalorder %v574, 2
      %v630 = vsel %vm629, %v627, %v628
      %v631 = vsel %vm629, %v628, %v627
      %s632 = scalar_lea.vmem %s3, 96
      %v633 = vld [vmem:[%s632] sm:$0xff]
      %v634 = vld [vmem:[%s632 + $0x8] sm:$0xff]
      %v635 = vmul.f32 %v630, %v633
      %v636 = vmul.f32 %v631, %v634
      %v637 = vadd.f32 %v591, %v635
      %v638 = vadd.f32 %v592, %v636
      %v639 = vrot.slane %v565, 7
      %v640 = vrot.slane %v566, 7
      %vm641 = vcmp.lt.s32.totalorder %v574, 1
      %v642 = vsel %vm641, %v639, %v640
      %v643 = vsel %vm641, %v640, %v639
      %s644 = scalar_lea.vmem %s3, 112
      %v645 = vld [vmem:[%s644] sm:$0xff]
      %v646 = vld [vmem:[%s644 + $0x8] sm:$0xff]
      %v647 = vmul.f32 %v642, %v645
      %v648 = vmul.f32 %v643, %v646
      %v649 = vadd.f32 %v601, %v647
      %v650 = vadd.f32 %v602, %v648
      %s651 = scalar_lea.vmem %s3, 128
      %v652 = vld [vmem:[%s651] sm:$0xff]
      %v653 = vld [vmem:[%s651 + $0x8] sm:$0xff]
      %v654 = vmul.f32 %v566, %v652
      %v655 = vmul.f32 %v565, %v653
      %v656 = vadd.f32 %v613, %v654
      %v657 = vadd.f32 %v614, %v655
      %s658 = scalar_lea.vmem %s3, 144
      %v659 = vld [vmem:[%s658] sm:$0xff]
      %v660 = vld [vmem:[%s658 + $0x8] sm:$0xff]
      %v661 = vmul.f32 %v577, %v659
      %v662 = vmul.f32 %v576, %v660
      %v663 = vadd.f32 %v625, %v661
      %v664 = vadd.f32 %v626, %v662
      %s665 = scalar_lea.vmem %s3, 160
      %v666 = vld [vmem:[%s665] sm:$0xff]
      %v667 = vld [vmem:[%s665 + $0x8] sm:$0xff]
      %v668 = vmul.f32 %v587, %v666
      %v669 = vmul.f32 %v586, %v667
      %v670 = vadd.f32 %v637, %v668
      %v671 = vadd.f32 %v638, %v669
      %s672 = scalar_lea.vmem %s3, 176
      %v673 = vld [vmem:[%s672] sm:$0xff]
      %v674 = vld [vmem:[%s672 + $0x8] sm:$0xff]
      %v675 = vmul.f32 %v597, %v673
      %v676 = vmul.f32 %v596, %v674
      %v677 = vadd.f32 %v649, %v675
      %v678 = vadd.f32 %v650, %v676
      %s679 = scalar_lea.vmem %s3, 192
      %v680 = vld [vmem:[%s679] sm:$0xff]
      %v681 = vld [vmem:[%s679 + $0x8] sm:$0xff]
      %v682 = vmul.f32 %v607, %v680
      %v683 = vmul.f32 %v606, %v681
      %v684 = vadd.f32 %v656, %v682
      %v685 = vadd.f32 %v657, %v683
      %s686 = scalar_lea.vmem %s3, 208
      %v687 = vld [vmem:[%s686] sm:$0xff]
      %v688 = vld [vmem:[%s686 + $0x8] sm:$0xff]
      %v689 = vmul.f32 %v619, %v687
      %v690 = vmul.f32 %v618, %v688
      %v691 = vadd.f32 %v663, %v689
      %v692 = vadd.f32 %v664, %v690
      %s693 = scalar_lea.vmem %s3, 224
      %v694 = vld [vmem:[%s693] sm:$0xff]
      %v695 = vld [vmem:[%s693 + $0x8] sm:$0xff]
      %v696 = vmul.f32 %v631, %v694
      %v697 = vmul.f32 %v630, %v695
      %v698 = vadd.f32 %v670, %v696
      %v699 = vadd.f32 %v671, %v697
      %s700 = scalar_lea.vmem %s3, 240
      %v701 = vld [vmem:[%s700] sm:$0xff]
      %v702 = vld [vmem:[%s700 + $0x8] sm:$0xff]
      %v703 = vmul.f32 %v643, %v701
      %v704 = vmul.f32 %v642, %v702
      %v705 = vadd.f32 %v677, %v703
      %v706 = vadd.f32 %v678, %v704
      %v707 = vadd.f32 %v684, %v691
      %v708 = vadd.f32 %v685, %v692
      %v709 = vadd.f32 %v707, %v698
      %v710 = vadd.f32 %v708, %v699
      %v711 = vadd.f32 %v709, %v705
      %v712 = vadd.f32 %v710, %v706
      %v714 = vlaneseq
      %v715 = vshrl.u32 %v714, 7
      %v716 = vsub.s32 0, %v715
      %v717 = vrot.slane %v557, %v716
      %v719 = vadd.f32 %v711, %v717
      %v720 = vadd.f32 %v712, %v717
      %vm721 = vcmask 64512
      %v722 = vsel %vm721, %v719, 0.0
      %v723 = vsel %vm721, %v720, 0.0
      %v724 = vadd.f32 %v722, %v723
      %725 = vadd.xlane.f32.xlu0 %v724
      %v726 = vpop.xlane.xlu0 %725
      %v727 = vrot.slane %v726, 4
      %v728 = vadd.f32 %v726, %v727
      %v729 = vrot.slane %v728, 2
      %v730 = vadd.f32 %v728, %v729
      %v731 = vrot.slane %v730, 1
      %v732 = vadd.f32 %v730, %v731
      %s733 = vtos %v732
      %s734 = smul.f32 %s733, 0.0078125
      %v735 = vmul.f32 %v719, %v719
      %v736 = vmul.f32 %v720, %v720
      %v737 = vsel %vm721, %v735, 0.0
      %v738 = vsel %vm721, %v736, 0.0
      %v739 = vadd.f32 %v737, %v738
      %740 = vadd.xlane.f32.xlu0 %v739
      %v741 = vpop.xlane.xlu0 %740
      %v742 = vrot.slane %v741, 4
      %v743 = vadd.f32 %v741, %v742
      %v744 = vrot.slane %v743, 2
      %v745 = vadd.f32 %v743, %v744
      %v746 = vrot.slane %v745, 1
      %v747 = vadd.f32 %v745, %v746
      %s748 = vtos %v747
      %s749 = smul.f32 %s748, 0.0078125
      %s750 = smul.f32 %s734, %s734
      %s751 = ssub.f32 %s749, %s750
      %s752 = smax.f32 %s751, 0.0
      %v753 = vstv %s734
      %v754 = vsub.f32 %v719, %v753
      %v755 = vsub.f32 %v720, %v753
      %s756 = sadd.f32 %s752, 1e-05
      %v757 = vstv %s756
      %v758 = vrsqrt.pop %v757
      %s759 = vtos %v758
      %v760 = vstv %s759
      %v761 = vmul.f32 %v754, %v760
      %v762 = vmul.f32 %v755, %v760
      %765 = vrot.lane.b32.xlu0 %v719, 120
      %v766 = vpop.permute.xlu0 %765
      %767 = vrot.lane.b32.xlu0 %v720, 120
      %v768 = vpop.permute.xlu0 %767
      %v771 = vsel %vm721, %v766, 0.0
      %v772 = vsel %vm721, %v768, 0.0
      %v773 = vadd.f32 %v771, %v772
      %774 = vadd.xlane.f32.xlu0 %v773
      %v775 = vpop.xlane.xlu0 %774
      %v776 = vrot.slane %v775, 4
      %v777 = vadd.f32 %v775, %v776
      %v778 = vrot.slane %v777, 2
      %v779 = vadd.f32 %v777, %v778
      %v780 = vrot.slane %v779, 1
      %v781 = vadd.f32 %v779, %v780
      %s782 = vtos %v781
      %s783 = smul.f32 %s782, 0.0078125
      %786 = vrot.lane.b32.xlu0 %v735, 120
      %v787 = vpop.permute.xlu0 %786
      %788 = vrot.lane.b32.xlu0 %v736, 120
      %v789 = vpop.permute.xlu0 %788
      %v792 = vsel %vm721, %v787, 0.0
      %v793 = vsel %vm721, %v789, 0.0
      %v794 = vadd.f32 %v792, %v793
      %795 = vadd.xlane.f32.xlu0 %v794
      %v796 = vpop.xlane.xlu0 %795
      %v797 = vrot.slane %v796, 4
      %v798 = vadd.f32 %v796, %v797
      %v799 = vrot.slane %v798, 2
      %v800 = vadd.f32 %v798, %v799
      %v801 = vrot.slane %v800, 1
      %v802 = vadd.f32 %v800, %v801
      %s803 = vtos %v802
      %s804 = smul.f32 %s803, 0.0078125
      %s805 = smul.f32 %s783, %s783
      %s806 = ssub.f32 %s804, %s805
      %s807 = smax.f32 %s806, 0.0
      %v808 = vstv %s783
      %v809 = vsub.f32 %v719, %v808
      %v810 = vsub.f32 %v720, %v808
      %s811 = sadd.f32 %s807, 1e-05
      %v812 = vstv %s811
      %v813 = vrsqrt.pop %v812
      %s814 = vtos %v813
      %v815 = vstv %s814
      %v816 = vmul.f32 %v809, %v815
      %v817 = vmul.f32 %v810, %v815
      %818 = vrot.lane.b32.xlu0 %v719, 112
      %v819 = vpop.permute.xlu0 %818
      %820 = vrot.lane.b32.xlu0 %v720, 112
      %v821 = vpop.permute.xlu0 %820
      %v824 = vsel %vm721, %v819, 0.0
      %v825 = vsel %vm721, %v821, 0.0
      %v826 = vadd.f32 %v824, %v825
      %827 = vadd.xlane.f32.xlu0 %v826
      %v828 = vpop.xlane.xlu0 %827
      %v829 = vrot.slane %v828, 4
      %v830 = vadd.f32 %v828, %v829
      %v831 = vrot.slane %v830, 2
      %v832 = vadd.f32 %v830, %v831
      %v833 = vrot.slane %v832, 1
      %v834 = vadd.f32 %v832, %v833
      %s835 = vtos %v834
      %s836 = smul.f32 %s835, 0.0078125
      %837 = vrot.lane.b32.xlu0 %v735, 112
      %v838 = vpop.permute.xlu0 %837
      %839 = vrot.lane.b32.xlu0 %v736, 112
      %v840 = vpop.permute.xlu0 %839
      %v843 = vsel %vm721, %v838, 0.0
      %v844 = vsel %vm721, %v840, 0.0
      %v845 = vadd.f32 %v843, %v844
      %846 = vadd.xlane.f32.xlu0 %v845
      %v847 = vpop.xlane.xlu0 %846
      %v848 = vrot.slane %v847, 4
      %v849 = vadd.f32 %v847, %v848
      %v850 = vrot.slane %v849, 2
      %v851 = vadd.f32 %v849, %v850
      %v852 = vrot.slane %v851, 1
      %v853 = vadd.f32 %v851, %v852
      %s854 = vtos %v853
      %s855 = smul.f32 %s854, 0.0078125
      %s856 = smul.f32 %s836, %s836
      %s857 = ssub.f32 %s855, %s856
      %s858 = smax.f32 %s857, 0.0
      %v859 = vstv %s836
      %v860 = vsub.f32 %v719, %v859
      %v861 = vsub.f32 %v720, %v859
      %s862 = sadd.f32 %s858, 1e-05
      %v863 = vstv %s862
      %v864 = vrsqrt.pop %v863
      %s865 = vtos %v864
      %v866 = vstv %s865
      %v867 = vmul.f32 %v860, %v866
      %v868 = vmul.f32 %v861, %v866
      %869 = vrot.lane.b32.xlu0 %v719, 104
      %v870 = vpop.permute.xlu0 %869
      %871 = vrot.lane.b32.xlu0 %v720, 104
      %v872 = vpop.permute.xlu0 %871
      %v875 = vsel %vm721, %v870, 0.0
      %v876 = vsel %vm721, %v872, 0.0
      %v877 = vadd.f32 %v875, %v876
      %878 = vadd.xlane.f32.xlu0 %v877
      %v879 = vpop.xlane.xlu0 %878
      %v880 = vrot.slane %v879, 4
      %v881 = vadd.f32 %v879, %v880
      %v882 = vrot.slane %v881, 2
      %v883 = vadd.f32 %v881, %v882
      %v884 = vrot.slane %v883, 1
      %v885 = vadd.f32 %v883, %v884
      %s886 = vtos %v885
      %s887 = smul.f32 %s886, 0.0078125
      %888 = vrot.lane.b32.xlu0 %v735, 104
      %v889 = vpop.permute.xlu0 %888
      %890 = vrot.lane.b32.xlu0 %v736, 104
      %v891 = vpop.permute.xlu0 %890
      %v894 = vsel %vm721, %v889, 0.0
      %v895 = vsel %vm721, %v891, 0.0
      %v896 = vadd.f32 %v894, %v895
      %897 = vadd.xlane.f32.xlu0 %v896
      %v898 = vpop.xlane.xlu0 %897
      %v899 = vrot.slane %v898, 4
      %v900 = vadd.f32 %v898, %v899
      %v901 = vrot.slane %v900, 2
      %v902 = vadd.f32 %v900, %v901
      %v903 = vrot.slane %v902, 1
      %v904 = vadd.f32 %v902, %v903
      %s905 = vtos %v904
      %s906 = smul.f32 %s905, 0.0078125
      %s907 = smul.f32 %s887, %s887
      %s908 = ssub.f32 %s906, %s907
      %s909 = smax.f32 %s908, 0.0
      %v910 = vstv %s887
      %v911 = vsub.f32 %v719, %v910
      %v912 = vsub.f32 %v720, %v910
      %s913 = sadd.f32 %s909, 1e-05
      %v914 = vstv %s913
      %v915 = vrsqrt.pop %v914
      %s916 = vtos %v915
      %v917 = vstv %s916
      %v918 = vmul.f32 %v911, %v917
      %v919 = vmul.f32 %v912, %v917
      %v920 = vsel %vm721, %v761, %v816
      %v921 = vsel %vm721, %v762, %v817
      %vm922 = vcmask 130048
      %v923 = vsel %vm922, %v920, %v867
      %v924 = vsel %vm922, %v921, %v868
      %vm925 = vcmask 195584
      %v926 = vsel %vm925, %v923, %v918
      %v927 = vsel %vm925, %v924, %v919
      %v928 = vpack.c.bf16 %v927, %v926
      %v930 = vlaneseq
      %v931 = vshrl.u32 %v930, 7
      %v932 = vsub.s32 0, %v931
      %v933 = vrot.slane %v562, %v932
      %v939 = vunpack.c.l.b16 %v558
      %v940 = vunpack.c.l.b16 %v559
      %v941 = vunpack.c.l.b16 %v560
      %v942 = vunpack.c.l.b16 %v561
      %v943 = vpack.c.b16 %v940, %v939
      %v944 = vpack.c.b16 %v942, %v941
      %vm947 = vcmask 261120
      %v949 = vsel %vm947, %v928, 0
      %951 = vmatprep.subr.bf16.mxu0 0
      %952 = vmatpush1.bf16.msra.mxu0 %v943
      %953 = vmatprep.subr.bf16.mxu0 0
      %954 = vmatpush1.bf16.msra.mxu0 %v944
      %955 = vmatprep.subr.bf16.mxu0 0
      %956 = vmatpush1.bf16.msra.mxu0 0
      %957 = vmatprep.subr.bf16.mxu0 0
      %958 = vmatpush1.bf16.msra.mxu0 0
      %959 = vmatprep.subr.bf16.mxu0 0
      %960 = vmatpush1.bf16.msra.mxu0 0
      %961 = vmatprep.subr.bf16.mxu0 0
      %962 = vmatpush1.bf16.msra.mxu0 0
      %963 = vmatprep.subr.bf16.mxu0 0
      %964 = vmatpush1.bf16.msra.mxu0 0
      %965 = vmatprep.subr.bf16.mxu0 0
      %966 = vmatpush1.bf16.msra.mxu0 0
      %967 = vmatprep.subr.bf16.mxu0 0
      %968 = vmatpush1.bf16.msra.mxu0 0
      %969 = vmatprep.subr.bf16.mxu0 0
      %970 = vmatpush1.bf16.msra.mxu0 0
      %971 = vmatprep.subr.bf16.mxu0 0
      %972 = vmatpush1.bf16.msra.mxu0 0
      %973 = vmatprep.subr.bf16.mxu0 0
      %974 = vmatpush1.bf16.msra.mxu0 0
      %975 = vmatprep.subr.bf16.mxu0 0
      %976 = vmatpush1.bf16.msra.mxu0 0
      %977 = vmatprep.subr.bf16.mxu0 0
      %978 = vmatpush1.bf16.msra.mxu0 0
      %979 = vmatprep.subr.bf16.mxu0 0
      %980 = vmatpush1.bf16.msra.mxu0 0
      %981 = vmatprep.subr.bf16.mxu0 0
      %982 = vmatpush1.bf16.msra.mxu0 0
      %983 = vmatprep.mubr.bf16.mxu0 0
      %984 = vmatmul.mubr.bf16.gmra.mrb[0].mxu0 %v949
      %v985 = vpop.f32.mrb[0].mxu0
      %v986 = vadd.f32 %v933, %v985
      %v987 = vpop.f32.mrb[0].mxu0
      %v988 = vpop.f32.mrb[0].mxu0
      %v989 = vadd.f32 %v933, %v988
      %v990 = vpop.f32.mrb[0].mxu0
      %991 = vdwg.mxu0
      %v992 = vtanh.pop %v986
      %v993 = vtanh.pop %v989
      %v994 = vadd.f32 %v992, 1.0
      %v995 = vadd.f32 %v993, 1.0
      %v996 = vmul.f32 %v994, 0.0
      %v997 = vmul.f32 %v995, 0.0
      %1000 = vrot.lane.b32.xlu0 %v992, 32
      %v1001 = vpop.permute.xlu0 %1000
      %1002 = vrot.lane.b32.xlu0 %v993, 32
      %v1003 = vpop.permute.xlu0 %1002
      %v1006 = vmul.f32 %v994, %v1001
      %v1007 = vmul.f32 %v995, %v1003
      %1010 = vrot.lane.b32.xlu0 %v1006, 32
      %v1011 = vpop.permute.xlu0 %1010
      %1012 = vrot.lane.b32.xlu0 %v1007, 32
      %v1013 = vpop.permute.xlu0 %1012
      %v1016 = vadd.f32 %v996, %v1011
      %v1017 = vadd.f32 %v997, %v1013
      %v1018 = vmul.f32 %v1016, 0.5
      %v1019 = vmul.f32 %v1017, 0.5
      %1022 = vrot.lane.b32.xlu0 %v1018, 96
      %v1023 = vpop.permute.xlu0 %1022
      %1024 = vrot.lane.b32.xlu0 %v1019, 96
      %v1025 = vpop.permute.xlu0 %1024
      %v1028 = vsel %vm947, %v1023, 0.0
      %v1029 = vsel %vm947, %v1025, 0.0
      %v1030 = vadd.f32 %v1028, %v1029
      %1031 = vadd.xlane.f32.xlu0 %v1030
      %v1032 = vpop.xlane.xlu0 %1031
      %v1033 = vrot.slane %v1032, 4
      %v1034 = vadd.f32 %v1032, %v1033
      %v1035 = vrot.slane %v1034, 2
      %v1036 = vadd.f32 %v1034, %v1035
      %v1037 = vrot.slane %v1036, 1
      %v1038 = vadd.f32 %v1036, %v1037
      %s1039 = vtos %v1038
      %s1040 = smul.f32 %s1039, 0.001953125
      %v1041 = vmul.f32 %v1018, %v1018
      %v1042 = vmul.f32 %v1019, %v1019
      %1045 = vrot.lane.b32.xlu0 %v1041, 96
      %v1046 = vpop.permute.xlu0 %1045
      %1047 = vrot.lane.b32.xlu0 %v1042, 96
      %v1048 = vpop.permute.xlu0 %1047
      %v1051 = vsel %vm947, %v1046, 0.0
      %v1052 = vsel %vm947, %v1048, 0.0
      %v1053 = vadd.f32 %v1051, %v1052
      %1054 = vadd.xlane.f32.xlu0 %v1053
      %v1055 = vpop.xlane.xlu0 %1054
      %v1056 = vrot.slane %v1055, 4
      %v1057 = vadd.f32 %v1055, %v1056
      %v1058 = vrot.slane %v1057, 2
      %v1059 = vadd.f32 %v1057, %v1058
      %v1060 = vrot.slane %v1059, 1
      %v1061 = vadd.f32 %v1059, %v1060
      %s1062 = vtos %v1061
      %s1063 = smul.f32 %s1062, 0.001953125
      %s1064 = smul.f32 %s1040, %s1040
      %s1065 = ssub.f32 %s1063, %s1064
      %s1066 = smax.f32 %s1065, 0.0
      %s1067 = sadd.f32 %s1066, 1e-05
      %v1068 = vstv %s1067
      %v1069 = vrsqrt.pop %v1068
      %s1070 = vtos %v1069
      %v1071 = vstv %s1070
      %v1072 = vmul.f32 %v563, %v1071
      %v1073 = vstv %s1040
      %v1074 = vmul.f32 %v1073, %v1072
      %v1075 = vsub.f32 %v564, %v1074
      %v1076 = vmul.f32 %v994, 0.5
      %v1077 = vmul.f32 %v995, 0.5
      %v1079 = vlaneseq
      %v1080 = vshrl.u32 %v1079, 7
      %v1081 = vsub.s32 0, %v1080
      %v1082 = vrot.slane %v1072, %v1081
      %1083 = vrot.lane.b32.xlu0 %v1082, 32
      %v1084 = vpop.permute.xlu0 %1083
      %v1086 = vmul.f32 %v1018, %v1084
      %v1087 = vmul.f32 %v1019, %v1084
      %v1089 = vlaneseq
      %v1090 = vshrl.u32 %v1089, 7
      %v1091 = vsub.s32 0, %v1090
      %v1092 = vrot.slane %v1075, %v1091
      %1093 = vrot.lane.b32.xlu0 %v1092, 32
      %v1094 = vpop.permute.xlu0 %1093
      %v1096 = vadd.f32 %v1086, %v1094
      %v1097 = vadd.f32 %v1087, %v1094
      %v1098 = vtanh.pop %v1096
      %v1099 = vtanh.pop %v1097
      %1102 = vrot.lane.b32.xlu0 %v1098, 32
      %v1103 = vpop.permute.xlu0 %1102
      %1104 = vrot.lane.b32.xlu0 %v1099, 32
      %v1105 = vpop.permute.xlu0 %1104
      %v1108 = vmul.f32 %v1076, %v1103
      %v1109 = vmul.f32 %v1077, %v1105
      %1112 = vrot.lane.b32.xlu0 %v1108, 64
      %v1113 = vpop.permute.xlu0 %1112
      %1114 = vrot.lane.b32.xlu0 %v1109, 64
      %v1115 = vpop.permute.xlu0 %1114
      %v1118 = vadd.f32 %v535, %v1113
      %v1119 = vadd.f32 %v538, %v1115
      %s1120 = scalar_lea.vmem %s4, 1
      %v1121 = vld [vmem:[%s1120] sm:$0x1]
      %s1122 = scalar_lea.vmem %s5, 16
      %v1123 = vld [vmem:[%s1122] sm:$0xf]
      %v1124 = vld [vmem:[%s1122 + $0x4] sm:$0xf]
      %v1125 = vld [vmem:[%s1122 + $0x8] sm:$0xf]
      %v1126 = vld [vmem:[%s1122 + $0xc] sm:$0xf]
      %s1127 = scalar_lea.vmem %s6, 1
      %v1128 = vld [vmem:[%s1127] sm:$0x1]
      %s1129 = scalar_lea.vmem %s7, 1
      %v1130 = vld [vmem:[%s1129] sm:$0x1]
      %s1131 = scalar_lea.vmem %s8, 1
      %v1132 = vld [vmem:[%s1131] sm:$0x1]
      %v1133 = vadd.f32 %v1118, 0.0
      %v1134 = vadd.f32 %v1119, 0.0
      %s1135 = scalar_lea.vmem %s3, 256
      %v1136 = vld [vmem:[%s1135] sm:$0xff]
      %v1137 = vld [vmem:[%s1135 + $0x8] sm:$0xff]
      %v1138 = vmul.f32 %v1133, %v1136
      %v1139 = vmul.f32 %v1134, %v1137
      %v1140 = vrot.slane %v1133, 1
      %v1141 = vrot.slane %v1134, 1
      %v1142 = vsel %vm575, %v1140, %v1141
      %v1143 = vsel %vm575, %v1141, %v1140
      %s1144 = scalar_lea.vmem %s3, 272
      %v1145 = vld [vmem:[%s1144] sm:$0xff]
      %v1146 = vld [vmem:[%s1144 + $0x8] sm:$0xff]
      %v1147 = vmul.f32 %v1142, %v1145
      %v1148 = vmul.f32 %v1143, %v1146
      %v1149 = vrot.slane %v1133, 2
      %v1150 = vrot.slane %v1134, 2
      %v1151 = vsel %vm585, %v1149, %v1150
      %v1152 = vsel %vm585, %v1150, %v1149
      %s1153 = scalar_lea.vmem %s3, 288
      %v1154 = vld [vmem:[%s1153] sm:$0xff]
      %v1155 = vld [vmem:[%s1153 + $0x8] sm:$0xff]
      %v1156 = vmul.f32 %v1151, %v1154
      %v1157 = vmul.f32 %v1152, %v1155
      %v1158 = vrot.slane %v1133, 3
      %v1159 = vrot.slane %v1134, 3
      %v1160 = vsel %vm595, %v1158, %v1159
      %v1161 = vsel %vm595, %v1159, %v1158
      %s1162 = scalar_lea.vmem %s3, 304
      %v1163 = vld [vmem:[%s1162] sm:$0xff]
      %v1164 = vld [vmem:[%s1162 + $0x8] sm:$0xff]
      %v1165 = vmul.f32 %v1160, %v1163
      %v1166 = vmul.f32 %v1161, %v1164
      %v1167 = vrot.slane %v1133, 4
      %v1168 = vrot.slane %v1134, 4
      %v1169 = vsel %vm605, %v1167, %v1168
      %v1170 = vsel %vm605, %v1168, %v1167
      %s1171 = scalar_lea.vmem %s3, 320
      %v1172 = vld [vmem:[%s1171] sm:$0xff]
      %v1173 = vld [vmem:[%s1171 + $0x8] sm:$0xff]
      %v1174 = vmul.f32 %v1169, %v1172
      %v1175 = vmul.f32 %v1170, %v1173
      %v1176 = vadd.f32 %v1138, %v1174
      %v1177 = vadd.f32 %v1139, %v1175
      %v1178 = vrot.slane %v1133, 5
      %v1179 = vrot.slane %v1134, 5
      %v1180 = vsel %vm617, %v1178, %v1179
      %v1181 = vsel %vm617, %v1179, %v1178
      %s1182 = scalar_lea.vmem %s3, 336
      %v1183 = vld [vmem:[%s1182] sm:$0xff]
      %v1184 = vld [vmem:[%s1182 + $0x8] sm:$0xff]
      %v1185 = vmul.f32 %v1180, %v1183
      %v1186 = vmul.f32 %v1181, %v1184
      %v1187 = vadd.f32 %v1147, %v1185
      %v1188 = vadd.f32 %v1148, %v1186
      %v1189 = vrot.slane %v1133, 6
      %v1190 = vrot.slane %v1134, 6
      %v1191 = vsel %vm629, %v1189, %v1190
      %v1192 = vsel %vm629, %v1190, %v1189
      %s1193 = scalar_lea.vmem %s3, 352
      %v1194 = vld [vmem:[%s1193] sm:$0xff]
      %v1195 = vld [vmem:[%s1193 + $0x8] sm:$0xff]
      %v1196 = vmul.f32 %v1191, %v1194
      %v1197 = vmul.f32 %v1192, %v1195
      %v1198 = vadd.f32 %v1156, %v1196
      %v1199 = vadd.f32 %v1157, %v1197
      %v1200 = vrot.slane %v1133, 7
      %v1201 = vrot.slane %v1134, 7
      %v1202 = vsel %vm641, %v1200, %v1201
      %v1203 = vsel %vm641, %v1201, %v1200
      %s1204 = scalar_lea.vmem %s3, 368
      %v1205 = vld [vmem:[%s1204] sm:$0xff]
      %v1206 = vld [vmem:[%s1204 + $0x8] sm:$0xff]
      %v1207 = vmul.f32 %v1202, %v1205
      %v1208 = vmul.f32 %v1203, %v1206
      %v1209 = vadd.f32 %v1165, %v1207
      %v1210 = vadd.f32 %v1166, %v1208
      %s1211 = scalar_lea.vmem %s3, 384
      %v1212 = vld [vmem:[%s1211] sm:$0xff]
      %v1213 = vld [vmem:[%s1211 + $0x8] sm:$0xff]
      %v1214 = vmul.f32 %v1134, %v1212
      %v1215 = vmul.f32 %v1133, %v1213
      %v1216 = vadd.f32 %v1176, %v1214
      %v1217 = vadd.f32 %v1177, %v1215
      %s1218 = scalar_lea.vmem %s3, 400
      %v1219 = vld [vmem:[%s1218] sm:$0xff]
      %v1220 = vld [vmem:[%s1218 + $0x8] sm:$0xff]
      %v1221 = vmul.f32 %v1143, %v1219
      %v1222 = vmul.f32 %v1142, %v1220
      %v1223 = vadd.f32 %v1187, %v1221
      %v1224 = vadd.f32 %v1188, %v1222
      %s1225 = scalar_lea.vmem %s3, 416
      %v1226 = vld [vmem:[%s1225] sm:$0xff]
      %v1227 = vld [vmem:[%s1225 + $0x8] sm:$0xff]
      %v1228 = vmul.f32 %v1152, %v1226
      %v1229 = vmul.f32 %v1151, %v1227
      %v1230 = vadd.f32 %v1198, %v1228
      %v1231 = vadd.f32 %v1199, %v1229
      %s1232 = scalar_lea.vmem %s3, 432
      %v1233 = vld [vmem:[%s1232] sm:$0xff]
      %v1234 = vld [vmem:[%s1232 + $0x8] sm:$0xff]
      %v1235 = vmul.f32 %v1161, %v1233
      %v1236 = vmul.f32 %v1160, %v1234
      %v1237 = vadd.f32 %v1209, %v1235
      %v1238 = vadd.f32 %v1210, %v1236
      %s1239 = scalar_lea.vmem %s3, 448
      %v1240 = vld [vmem:[%s1239] sm:$0xff]
      %v1241 = vld [vmem:[%s1239 + $0x8] sm:$0xff]
      %v1242 = vmul.f32 %v1170, %v1240
      %v1243 = vmul.f32 %v1169, %v1241
      %v1244 = vadd.f32 %v1216, %v1242
      %v1245 = vadd.f32 %v1217, %v1243
      %s1246 = scalar_lea.vmem %s3, 464
      %v1247 = vld [vmem:[%s1246] sm:$0xff]
      %v1248 = vld [vmem:[%s1246 + $0x8] sm:$0xff]
      %v1249 = vmul.f32 %v1181, %v1247
      %v1250 = vmul.f32 %v1180, %v1248
      %v1251 = vadd.f32 %v1223, %v1249
      %v1252 = vadd.f32 %v1224, %v1250
      %s1253 = scalar_lea.vmem %s3, 480
      %v1254 = vld [vmem:[%s1253] sm:$0xff]
      %v1255 = vld [vmem:[%s1253 + $0x8] sm:$0xff]
      %v1256 = vmul.f32 %v1192, %v1254
      %v1257 = vmul.f32 %v1191, %v1255
      %v1258 = vadd.f32 %v1230, %v1256
      %v1259 = vadd.f32 %v1231, %v1257
      %s1260 = scalar_lea.vmem %s3, 496
      %v1261 = vld [vmem:[%s1260] sm:$0xff]
      %v1262 = vld [vmem:[%s1260 + $0x8] sm:$0xff]
      %v1263 = vmul.f32 %v1203, %v1261
      %v1264 = vmul.f32 %v1202, %v1262
      %v1265 = vadd.f32 %v1237, %v1263
      %v1266 = vadd.f32 %v1238, %v1264
      %v1267 = vadd.f32 %v1244, %v1251
      %v1268 = vadd.f32 %v1245, %v1252
      %v1269 = vadd.f32 %v1267, %v1258
      %v1270 = vadd.f32 %v1268, %v1259
      %v1271 = vadd.f32 %v1269, %v1265
      %v1272 = vadd.f32 %v1270, %v1266
      %v1274 = vlaneseq
      %v1275 = vshrl.u32 %v1274, 7
      %v1276 = vsub.s32 0, %v1275
      %v1277 = vrot.slane %v1121, %v1276
      %v1279 = vadd.f32 %v1271, %v1277
      %v1280 = vadd.f32 %v1272, %v1277
      %v1281 = vsel %vm721, %v1279, 0.0
      %v1282 = vsel %vm721, %v1280, 0.0
      %v1283 = vadd.f32 %v1281, %v1282
      %1284 = vadd.xlane.f32.xlu0 %v1283
      %v1285 = vpop.xlane.xlu0 %1284
      %v1286 = vrot.slane %v1285, 4
      %v1287 = vadd.f32 %v1285, %v1286
      %v1288 = vrot.slane %v1287, 2
      %v1289 = vadd.f32 %v1287, %v1288
      %v1290 = vrot.slane %v1289, 1
      %v1291 = vadd.f32 %v1289, %v1290
      %s1292 = vtos %v1291
      %s1293 = smul.f32 %s1292, 0.0078125
      %v1294 = vmul.f32 %v1279, %v1279
      %v1295 = vmul.f32 %v1280, %v1280
      %v1296 = vsel %vm721, %v1294, 0.0
      %v1297 = vsel %vm721, %v1295, 0.0
      %v1298 = vadd.f32 %v1296, %v1297
      %1299 = vadd.xlane.f32.xlu0 %v1298
      %v1300 = vpop.xlane.xlu0 %1299
      %v1301 = vrot.slane %v1300, 4
      %v1302 = vadd.f32 %v1300, %v1301
      %v1303 = vrot.slane %v1302, 2
      %v1304 = vadd.f32 %v1302, %v1303
      %v1305 = vrot.slane %v1304, 1
      %v1306 = vadd.f32 %v1304, %v1305
      %s1307 = vtos %v1306
      %s1308 = smul.f32 %s1307, 0.0078125
      %s1309 = smul.f32 %s1293, %s1293
      %s1310 = ssub.f32 %s1308, %s1309
      %s1311 = smax.f32 %s1310, 0.0
      %v1312 = vstv %s1293
      %v1313 = vsub.f32 %v1279, %v1312
      %v1314 = vsub.f32 %v1280, %v1312
      %s1315 = sadd.f32 %s1311, 1e-05
      %v1316 = vstv %s1315
      %v1317 = vrsqrt.pop %v1316
      %s1318 = vtos %v1317
      %v1319 = vstv %s1318
      %v1320 = vmul.f32 %v1313, %v1319
      %v1321 = vmul.f32 %v1314, %v1319
      %1324 = vrot.lane.b32.xlu0 %v1279, 120
      %v1325 = vpop.permute.xlu0 %1324
      %1326 = vrot.lane.b32.xlu0 %v1280, 120
      %v1327 = vpop.permute.xlu0 %1326
      %v1330 = vsel %vm721, %v1325, 0.0
      %v1331 = vsel %vm721, %v1327, 0.0
      %v1332 = vadd.f32 %v1330, %v1331
      %1333 = vadd.xlane.f32.xlu0 %v1332
      %v1334 = vpop.xlane.xlu0 %1333
      %v1335 = vrot.slane %v1334, 4
      %v1336 = vadd.f32 %v1334, %v1335
      %v1337 = vrot.slane %v1336, 2
      %v1338 = vadd.f32 %v1336, %v1337
      %v1339 = vrot.slane %v1338, 1
      %v1340 = vadd.f32 %v1338, %v1339
      %s1341 = vtos %v1340
      %s1342 = smul.f32 %s1341, 0.0078125
      %1345 = vrot.lane.b32.xlu0 %v1294, 120
      %v1346 = vpop.permute.xlu0 %1345
      %1347 = vrot.lane.b32.xlu0 %v1295, 120
      %v1348 = vpop.permute.xlu0 %1347
      %v1351 = vsel %vm721, %v1346, 0.0
      %v1352 = vsel %vm721, %v1348, 0.0
      %v1353 = vadd.f32 %v1351, %v1352
      %1354 = vadd.xlane.f32.xlu0 %v1353
      %v1355 = vpop.xlane.xlu0 %1354
      %v1356 = vrot.slane %v1355, 4
      %v1357 = vadd.f32 %v1355, %v1356
      %v1358 = vrot.slane %v1357, 2
      %v1359 = vadd.f32 %v1357, %v1358
      %v1360 = vrot.slane %v1359, 1
      %v1361 = vadd.f32 %v1359, %v1360
      %s1362 = vtos %v1361
      %s1363 = smul.f32 %s1362, 0.0078125
      %s1364 = smul.f32 %s1342, %s1342
      %s1365 = ssub.f32 %s1363, %s1364
      %s1366 = smax.f32 %s1365, 0.0
      %v1367 = vstv %s1342
      %v1368 = vsub.f32 %v1279, %v1367
      %v1369 = vsub.f32 %v1280, %v1367
      %s1370 = sadd.f32 %s1366, 1e-05
      %v1371 = vstv %s1370
      %v1372 = vrsqrt.pop %v1371
      %s1373 = vtos %v1372
      %v1374 = vstv %s1373
      %v1375 = vmul.f32 %v1368, %v1374
      %v1376 = vmul.f32 %v1369, %v1374
      %1377 = vrot.lane.b32.xlu0 %v1279, 112
      %v1378 = vpop.permute.xlu0 %1377
      %1379 = vrot.lane.b32.xlu0 %v1280, 112
      %v1380 = vpop.permute.xlu0 %1379
      %v1383 = vsel %vm721, %v1378, 0.0
      %v1384 = vsel %vm721, %v1380, 0.0
      %v1385 = vadd.f32 %v1383, %v1384
      %1386 = vadd.xlane.f32.xlu0 %v1385
      %v1387 = vpop.xlane.xlu0 %1386
      %v1388 = vrot.slane %v1387, 4
      %v1389 = vadd.f32 %v1387, %v1388
      %v1390 = vrot.slane %v1389, 2
      %v1391 = vadd.f32 %v1389, %v1390
      %v1392 = vrot.slane %v1391, 1
      %v1393 = vadd.f32 %v1391, %v1392
      %s1394 = vtos %v1393
      %s1395 = smul.f32 %s1394, 0.0078125
      %1396 = vrot.lane.b32.xlu0 %v1294, 112
      %v1397 = vpop.permute.xlu0 %1396
      %1398 = vrot.lane.b32.xlu0 %v1295, 112
      %v1399 = vpop.permute.xlu0 %1398
      %v1402 = vsel %vm721, %v1397, 0.0
      %v1403 = vsel %vm721, %v1399, 0.0
      %v1404 = vadd.f32 %v1402, %v1403
      %1405 = vadd.xlane.f32.xlu0 %v1404
      %v1406 = vpop.xlane.xlu0 %1405
      %v1407 = vrot.slane %v1406, 4
      %v1408 = vadd.f32 %v1406, %v1407
      %v1409 = vrot.slane %v1408, 2
      %v1410 = vadd.f32 %v1408, %v1409
      %v1411 = vrot.slane %v1410, 1
      %v1412 = vadd.f32 %v1410, %v1411
      %s1413 = vtos %v1412
      %s1414 = smul.f32 %s1413, 0.0078125
      %s1415 = smul.f32 %s1395, %s1395
      %s1416 = ssub.f32 %s1414, %s1415
      %s1417 = smax.f32 %s1416, 0.0
      %v1418 = vstv %s1395
      %v1419 = vsub.f32 %v1279, %v1418
      %v1420 = vsub.f32 %v1280, %v1418
      %s1421 = sadd.f32 %s1417, 1e-05
      %v1422 = vstv %s1421
      %v1423 = vrsqrt.pop %v1422
      %s1424 = vtos %v1423
      %v1425 = vstv %s1424
      %v1426 = vmul.f32 %v1419, %v1425
      %v1427 = vmul.f32 %v1420, %v1425
      %1428 = vrot.lane.b32.xlu0 %v1279, 104
      %v1429 = vpop.permute.xlu0 %1428
      %1430 = vrot.lane.b32.xlu0 %v1280, 104
      %v1431 = vpop.permute.xlu0 %1430
      %v1434 = vsel %vm721, %v1429, 0.0
      %v1435 = vsel %vm721, %v1431, 0.0
      %v1436 = vadd.f32 %v1434, %v1435
      %1437 = vadd.xlane.f32.xlu0 %v1436
      %v1438 = vpop.xlane.xlu0 %1437
      %v1439 = vrot.slane %v1438, 4
      %v1440 = vadd.f32 %v1438, %v1439
      %v1441 = vrot.slane %v1440, 2
      %v1442 = vadd.f32 %v1440, %v1441
      %v1443 = vrot.slane %v1442, 1
      %v1444 = vadd.f32 %v1442, %v1443
      %s1445 = vtos %v1444
      %s1446 = smul.f32 %s1445, 0.0078125
      %1447 = vrot.lane.b32.xlu0 %v1294, 104
      %v1448 = vpop.permute.xlu0 %1447
      %1449 = vrot.lane.b32.xlu0 %v1295, 104
      %v1450 = vpop.permute.xlu0 %1449
      %v1453 = vsel %vm721, %v1448, 0.0
      %v1454 = vsel %vm721, %v1450, 0.0
      %v1455 = vadd.f32 %v1453, %v1454
      %1456 = vadd.xlane.f32.xlu0 %v1455
      %v1457 = vpop.xlane.xlu0 %1456
      %v1458 = vrot.slane %v1457, 4
      %v1459 = vadd.f32 %v1457, %v1458
      %v1460 = vrot.slane %v1459, 2
      %v1461 = vadd.f32 %v1459, %v1460
      %v1462 = vrot.slane %v1461, 1
      %v1463 = vadd.f32 %v1461, %v1462
      %s1464 = vtos %v1463
      %s1465 = smul.f32 %s1464, 0.0078125
      %s1466 = smul.f32 %s1446, %s1446
      %s1467 = ssub.f32 %s1465, %s1466
      %s1468 = smax.f32 %s1467, 0.0
      %v1469 = vstv %s1446
      %v1470 = vsub.f32 %v1279, %v1469
      %v1471 = vsub.f32 %v1280, %v1469
      %s1472 = sadd.f32 %s1468, 1e-05
      %v1473 = vstv %s1472
      %v1474 = vrsqrt.pop %v1473
      %s1475 = vtos %v1474
      %v1476 = vstv %s1475
      %v1477 = vmul.f32 %v1470, %v1476
      %v1478 = vmul.f32 %v1471, %v1476
      %v1479 = vsel %vm721, %v1320, %v1375
      %v1480 = vsel %vm721, %v1321, %v1376
      %v1481 = vsel %vm922, %v1479, %v1426
      %v1482 = vsel %vm922, %v1480, %v1427
      %v1483 = vsel %vm925, %v1481, %v1477
      %v1484 = vsel %vm925, %v1482, %v1478
      %v1485 = vpack.c.bf16 %v1484, %v1483
      %v1487 = vlaneseq
      %v1488 = vshrl.u32 %v1487, 7
      %v1489 = vsub.s32 0, %v1488
      %v1490 = vrot.slane %v1128, %v1489
      %v1496 = vunpack.c.l.b16 %v1123
      %v1497 = vunpack.c.l.b16 %v1124
      %v1498 = vunpack.c.l.b16 %v1125
      %v1499 = vunpack.c.l.b16 %v1126
      %v1500 = vpack.c.b16 %v1497, %v1496
      %v1501 = vpack.c.b16 %v1499, %v1498
      %v1505 = vsel %vm947, %v1485, 0
      %1507 = vmatprep.subr.bf16.mxu0 0
      %1508 = vmatpush1.bf16.msra.mxu0 %v1500
      %1509 = vmatprep.subr.bf16.mxu0 0
      %1510 = vmatpush1.bf16.msra.mxu0 %v1501
      %1511 = vmatprep.subr.bf16.mxu0 0
      %1512 = vmatpush1.bf16.msra.mxu0 0
      %1513 = vmatprep.subr.bf16.mxu0 0
      %1514 = vmatpush1.bf16.msra.mxu0 0
      %1515 = vmatprep.subr.bf16.mxu0 0
      %1516 = vmatpush1.bf16.msra.mxu0 0
      %1517 = vmatprep.subr.bf16.mxu0 0
      %1518 = vmatpush1.bf16.msra.mxu0 0
      %1519 = vmatprep.subr.bf16.mxu0 0
      %1520 = vmatpush1.bf16.msra.mxu0 0
      %1521 = vmatprep.subr.bf16.mxu0 0
      %1522 = vmatpush1.bf16.msra.mxu0 0
      %1523 = vmatprep.subr.bf16.mxu0 0
      %1524 = vmatpush1.bf16.msra.mxu0 0
      %1525 = vmatprep.subr.bf16.mxu0 0
      %1526 = vmatpush1.bf16.msra.mxu0 0
      %1527 = vmatprep.subr.bf16.mxu0 0
      %1528 = vmatpush1.bf16.msra.mxu0 0
      %1529 = vmatprep.subr.bf16.mxu0 0
      %1530 = vmatpush1.bf16.msra.mxu0 0
      %1531 = vmatprep.subr.bf16.mxu0 0
      %1532 = vmatpush1.bf16.msra.mxu0 0
      %1533 = vmatprep.subr.bf16.mxu0 0
      %1534 = vmatpush1.bf16.msra.mxu0 0
      %1535 = vmatprep.subr.bf16.mxu0 0
      %1536 = vmatpush1.bf16.msra.mxu0 0
      %1537 = vmatprep.subr.bf16.mxu0 0
      %1538 = vmatpush1.bf16.msra.mxu0 0
      %1539 = vmatprep.mubr.bf16.mxu0 0
      %1540 = vmatmul.mubr.bf16.gmra.mrb[0].mxu0 %v1505
      %v1541 = vpop.f32.mrb[0].mxu0
      %v1542 = vadd.f32 %v1490, %v1541
      %v1543 = vpop.f32.mrb[0].mxu0
      %v1544 = vpop.f32.mrb[0].mxu0
      %v1545 = vadd.f32 %v1490, %v1544
      %v1546 = vpop.f32.mrb[0].mxu0
      %1547 = vdwg.mxu0
      %v1548 = vtanh.pop %v1542
      %v1549 = vtanh.pop %v1545
      %v1550 = vadd.f32 %v1548, 1.0
      %v1551 = vadd.f32 %v1549, 1.0
      %v1552 = vmul.f32 %v1550, 0.0
      %v1553 = vmul.f32 %v1551, 0.0
      %1556 = vrot.lane.b32.xlu0 %v1548, 32
      %v1557 = vpop.permute.xlu0 %1556
      %1558 = vrot.lane.b32.xlu0 %v1549, 32
      %v1559 = vpop.permute.xlu0 %1558
      %v1562 = vmul.f32 %v1550, %v1557
      %v1563 = vmul.f32 %v1551, %v1559
      %1566 = vrot.lane.b32.xlu0 %v1562, 32
      %v1567 = vpop.permute.xlu0 %1566
      %1568 = vrot.lane.b32.xlu0 %v1563, 32
      %v1569 = vpop.permute.xlu0 %1568
      %v1572 = vadd.f32 %v1552, %v1567
      %v1573 = vadd.f32 %v1553, %v1569
      %v1574 = vmul.f32 %v1572, 0.5
      %v1575 = vmul.f32 %v1573, 0.5
      %1578 = vrot.lane.b32.xlu0 %v1574, 96
      %v1579 = vpop.permute.xlu0 %1578
      %1580 = vrot.lane.b32.xlu0 %v1575, 96
      %v1581 = vpop.permute.xlu0 %1580
      %v1584 = vsel %vm947, %v1579, 0.0
      %v1585 = vsel %vm947, %v1581, 0.0
      %v1586 = vadd.f32 %v1584, %v1585
      %1587 = vadd.xlane.f32.xlu0 %v1586
      %v1588 = vpop.xlane.xlu0 %1587
      %v1589 = vrot.slane %v1588, 4
      %v1590 = vadd.f32 %v1588, %v1589
      %v1591 = vrot.slane %v1590, 2
      %v1592 = vadd.f32 %v1590, %v1591
      %v1593 = vrot.slane %v1592, 1
      %v1594 = vadd.f32 %v1592, %v1593
      %s1595 = vtos %v1594
      %s1596 = smul.f32 %s1595, 0.001953125
      %v1597 = vmul.f32 %v1574, %v1574
      %v1598 = vmul.f32 %v1575, %v1575
      %1601 = vrot.lane.b32.xlu0 %v1597, 96
      %v1602 = vpop.permute.xlu0 %1601
      %1603 = vrot.lane.b32.xlu0 %v1598, 96
      %v1604 = vpop.permute.xlu0 %1603
      %v1607 = vsel %vm947, %v1602, 0.0
      %v1608 = vsel %vm947, %v1604, 0.0
      %v1609 = vadd.f32 %v1607, %v1608
      %1610 = vadd.xlane.f32.xlu0 %v1609
      %v1611 = vpop.xlane.xlu0 %1610
      %v1612 = vrot.slane %v1611, 4
      %v1613 = vadd.f32 %v1611, %v1612
      %v1614 = vrot.slane %v1613, 2
      %v1615 = vadd.f32 %v1613, %v1614
      %v1616 = vrot.slane %v1615, 1
      %v1617 = vadd.f32 %v1615, %v1616
      %s1618 = vtos %v1617
      %s1619 = smul.f32 %s1618, 0.001953125
      %s1620 = smul.f32 %s1596, %s1596
      %s1621 = ssub.f32 %s1619, %s1620
      %s1622 = smax.f32 %s1621, 0.0
      %s1623 = sadd.f32 %s1622, 1e-05
      %v1624 = vstv %s1623
      %v1625 = vrsqrt.pop %v1624
      %s1626 = vtos %v1625
      %v1627 = vstv %s1626
      %v1628 = vmul.f32 %v1130, %v1627
      %v1629 = vstv %s1596
      %v1630 = vmul.f32 %v1629, %v1628
      %v1631 = vsub.f32 %v1132, %v1630
      %v1632 = vmul.f32 %v1550, 0.5
      %v1633 = vmul.f32 %v1551, 0.5
      %v1635 = vlaneseq
      %v1636 = vshrl.u32 %v1635, 7
      %v1637 = vsub.s32 0, %v1636
      %v1638 = vrot.slane %v1628, %v1637
      %1639 = vrot.lane.b32.xlu0 %v1638, 32
      %v1640 = vpop.permute.xlu0 %1639
      %v1642 = vmul.f32 %v1574, %v1640
      %v1643 = vmul.f32 %v1575, %v1640
      %v1645 = vlaneseq
      %v1646 = vshrl.u32 %v1645, 7
      %v1647 = vsub.s32 0, %v1646
      %v1648 = vrot.slane %v1631, %v1647
      %1649 = vrot.lane.b32.xlu0 %v1648, 32
      %v1650 = vpop.permute.xlu0 %1649
      %v1652 = vadd.f32 %v1642, %v1650
      %v1653 = vadd.f32 %v1643, %v1650
      %v1654 = vtanh.pop %v1652
      %v1655 = vtanh.pop %v1653
      %1658 = vrot.lane.b32.xlu0 %v1654, 32
      %v1659 = vpop.permute.xlu0 %1658
      %1660 = vrot.lane.b32.xlu0 %v1655, 32
      %v1661 = vpop.permute.xlu0 %1660
      %v1664 = vmul.f32 %v1632, %v1659
      %v1665 = vmul.f32 %v1633, %v1661
      %v1666 = vadd.f32 %v543, %v1113
      %v1667 = vadd.f32 %v546, %v1115
      %v1668 = vmul.f32 %v1666, %v567
      %v1669 = vmul.f32 %v1667, %v568
      %v1670 = vrot.slane %v1666, 1
      %v1671 = vrot.slane %v1667, 1
      %v1672 = vsel %vm575, %v1670, %v1671
      %v1673 = vsel %vm575, %v1671, %v1670
      %v1674 = vmul.f32 %v1672, %v579
      %v1675 = vmul.f32 %v1673, %v580
      %v1676 = vrot.slane %v1666, 2
      %v1677 = vrot.slane %v1667, 2
      %v1678 = vsel %vm585, %v1676, %v1677
      %v1679 = vsel %vm585, %v1677, %v1676
      %v1680 = vmul.f32 %v1678, %v589
      %v1681 = vmul.f32 %v1679, %v590
      %v1682 = vrot.slane %v1666, 3
      %v1683 = vrot.slane %v1667, 3
      %v1684 = vsel %vm595, %v1682, %v1683
      %v1685 = vsel %vm595, %v1683, %v1682
      %v1686 = vmul.f32 %v1684, %v599
      %v1687 = vmul.f32 %v1685, %v600
      %v1688 = vrot.slane %v1666, 4
      %v1689 = vrot.slane %v1667, 4
      %v1690 = vsel %vm605, %v1688, %v1689
      %v1691 = vsel %vm605, %v1689, %v1688
      %v1692 = vmul.f32 %v1690, %v609
      %v1693 = vmul.f32 %v1691, %v610
      %v1694 = vadd.f32 %v1668, %v1692
      %v1695 = vadd.f32 %v1669, %v1693
      %v1696 = vrot.slane %v1666, 5
      %v1697 = vrot.slane %v1667, 5
      %v1698 = vsel %vm617, %v1696, %v1697
      %v1699 = vsel %vm617, %v1697, %v1696
      %v1700 = vmul.f32 %v1698, %v621
      %v1701 = vmul.f32 %v1699, %v622
      %v1702 = vadd.f32 %v1674, %v1700
      %v1703 = vadd.f32 %v1675, %v1701
      %v1704 = vrot.slane %v1666, 6
      %v1705 = vrot.slane %v1667, 6
      %v1706 = vsel %vm629, %v1704, %v1705
      %v1707 = vsel %vm629, %v1705, %v1704
      %v1708 = vmul.f32 %v1706, %v633
      %v1709 = vmul.f32 %v1707, %v634
      %v1710 = vadd.f32 %v1680, %v1708
      %v1711 = vadd.f32 %v1681, %v1709
      %v1712 = vrot.slane %v1666, 7
      %v1713 = vrot.slane %v1667, 7
      %v1714 = vsel %vm641, %v1712, %v1713
      %v1715 = vsel %vm641, %v1713, %v1712
      %v1716 = vmul.f32 %v1714, %v645
      %v1717 = vmul.f32 %v1715, %v646
      %v1718 = vadd.f32 %v1686, %v1716
      %v1719 = vadd.f32 %v1687, %v1717
      %v1720 = vmul.f32 %v1667, %v652
      %v1721 = vmul.f32 %v1666, %v653
      %v1722 = vadd.f32 %v1694, %v1720
      %v1723 = vadd.f32 %v1695, %v1721
      %v1724 = vmul.f32 %v1673, %v659
      %v1725 = vmul.f32 %v1672, %v660
      %v1726 = vadd.f32 %v1702, %v1724
      %v1727 = vadd.f32 %v1703, %v1725
      %v1728 = vmul.f32 %v1679, %v666
      %v1729 = vmul.f32 %v1678, %v667
      %v1730 = vadd.f32 %v1710, %v1728
      %v1731 = vadd.f32 %v1711, %v1729
      %v1732 = vmul.f32 %v1685, %v673
      %v1733 = vmul.f32 %v1684, %v674
      %v1734 = vadd.f32 %v1718, %v1732
      %v1735 = vadd.f32 %v1719, %v1733
      %v1736 = vmul.f32 %v1691, %v680
      %v1737 = vmul.f32 %v1690, %v681
      %v1738 = vadd.f32 %v1722, %v1736
      %v1739 = vadd.f32 %v1723, %v1737
      %v1740 = vmul.f32 %v1699, %v687
      %v1741 = vmul.f32 %v1698, %v688
      %v1742 = vadd.f32 %v1726, %v1740
      %v1743 = vadd.f32 %v1727, %v1741
      %v1744 = vmul.f32 %v1707, %v694
      %v1745 = vmul.f32 %v1706, %v695
      %v1746 = vadd.f32 %v1730, %v1744
      %v1747 = vadd.f32 %v1731, %v1745
      %v1748 = vmul.f32 %v1715, %v701
      %v1749 = vmul.f32 %v1714, %v702
      %v1750 = vadd.f32 %v1734, %v1748
      %v1751 = vadd.f32 %v1735, %v1749
      %v1752 = vadd.f32 %v1738, %v1742
      %v1753 = vadd.f32 %v1739, %v1743
      %v1754 = vadd.f32 %v1752, %v1746
      %v1755 = vadd.f32 %v1753, %v1747
      %v1756 = vadd.f32 %v1754, %v1750
      %v1757 = vadd.f32 %v1755, %v1751
      %v1758 = vadd.f32 %v1756, %v717
      %v1759 = vadd.f32 %v1757, %v717
      %v1760 = vsel %vm721, %v1758, 0.0
      %v1761 = vsel %vm721, %v1759, 0.0
      %v1762 = vadd.f32 %v1760, %v1761
      %1763 = vadd.xlane.f32.xlu0 %v1762
      %v1764 = vpop.xlane.xlu0 %1763
      %v1765 = vrot.slane %v1764, 4
      %v1766 = vadd.f32 %v1764, %v1765
      %v1767 = vrot.slane %v1766, 2
      %v1768 = vadd.f32 %v1766, %v1767
      %v1769 = vrot.slane %v1768, 1
      %v1770 = vadd.f32 %v1768, %v1769
      %s1771 = vtos %v1770
      %s1772 = smul.f32 %s1771, 0.0078125
      %v1773 = vmul.f32 %v1758, %v1758
      %v1774 = vmul.f32 %v1759, %v1759
      %v1775 = vsel %vm721, %v1773, 0.0
      %v1776 = vsel %vm721, %v1774, 0.0
      %v1777 = vadd.f32 %v1775, %v1776
      %1778 = vadd.xlane.f32.xlu0 %v1777
      %v1779 = vpop.xlane.xlu0 %1778
      %v1780 = vrot.slane %v1779, 4
      %v1781 = vadd.f32 %v1779, %v1780
      %v1782 = vrot.slane %v1781, 2
      %v1783 = vadd.f32 %v1781, %v1782
      %v1784 = vrot.slane %v1783, 1
      %v1785 = vadd.f32 %v1783, %v1784
      %s1786 = vtos %v1785
      %s1787 = smul.f32 %s1786, 0.0078125
      %s1788 = smul.f32 %s1772, %s1772
      %s1789 = ssub.f32 %s1787, %s1788
      %s1790 = smax.f32 %s1789, 0.0
      %v1791 = vstv %s1772
      %v1792 = vsub.f32 %v1758, %v1791
      %v1793 = vsub.f32 %v1759, %v1791
      %s1794 = sadd.f32 %s1790, 1e-05
      %v1795 = vstv %s1794
      %v1796 = vrsqrt.pop %v1795
      %s1797 = vtos %v1796
      %v1798 = vstv %s1797
      %v1799 = vmul.f32 %v1792, %v1798
      %v1800 = vmul.f32 %v1793, %v1798
      %1803 = vrot.lane.b32.xlu0 %v1758, 120
      %v1804 = vpop.permute.xlu0 %1803
      %1805 = vrot.lane.b32.xlu0 %v1759, 120
      %v1806 = vpop.permute.xlu0 %1805
      %v1809 = vsel %vm721, %v1804, 0.0
      %v1810 = vsel %vm721, %v1806, 0.0
      %v1811 = vadd.f32 %v1809, %v1810
      %1812 = vadd.xlane.f32.xlu0 %v1811
      %v1813 = vpop.xlane.xlu0 %1812
      %v1814 = vrot.slane %v1813, 4
      %v1815 = vadd.f32 %v1813, %v1814
      %v1816 = vrot.slane %v1815, 2
      %v1817 = vadd.f32 %v1815, %v1816
      %v1818 = vrot.slane %v1817, 1
      %v1819 = vadd.f32 %v1817, %v1818
      %s1820 = vtos %v1819
      %s1821 = smul.f32 %s1820, 0.0078125
      %1824 = vrot.lane.b32.xlu0 %v1773, 120
      %v1825 = vpop.permute.xlu0 %1824
      %1826 = vrot.lane.b32.xlu0 %v1774, 120
      %v1827 = vpop.permute.xlu0 %1826
      %v1830 = vsel %vm721, %v1825, 0.0
      %v1831 = vsel %vm721, %v1827, 0.0
      %v1832 = vadd.f32 %v1830, %v1831
      %1833 = vadd.xlane.f32.xlu0 %v1832
      %v1834 = vpop.xlane.xlu0 %1833
      %v1835 = vrot.slane %v1834, 4
      %v1836 = vadd.f32 %v1834, %v1835
      %v1837 = vrot.slane %v1836, 2
      %v1838 = vadd.f32 %v1836, %v1837
      %v1839 = vrot.slane %v1838, 1
      %v1840 = vadd.f32 %v1838, %v1839
      %s1841 = vtos %v1840
      %s1842 = smul.f32 %s1841, 0.0078125
      %s1843 = smul.f32 %s1821, %s1821
      %s1844 = ssub.f32 %s1842, %s1843
      %s1845 = smax.f32 %s1844, 0.0
      %v1846 = vstv %s1821
      %v1847 = vsub.f32 %v1758, %v1846
      %v1848 = vsub.f32 %v1759, %v1846
      %s1849 = sadd.f32 %s1845, 1e-05
      %v1850 = vstv %s1849
      %v1851 = vrsqrt.pop %v1850
      %s1852 = vtos %v1851
      %v1853 = vstv %s1852
      %v1854 = vmul.f32 %v1847, %v1853
      %v1855 = vmul.f32 %v1848, %v1853
      %1856 = vrot.lane.b32.xlu0 %v1758, 112
      %v1857 = vpop.permute.xlu0 %1856
      %1858 = vrot.lane.b32.xlu0 %v1759, 112
      %v1859 = vpop.permute.xlu0 %1858
      %v1862 = vsel %vm721, %v1857, 0.0
      %v1863 = vsel %vm721, %v1859, 0.0
      %v1864 = vadd.f32 %v1862, %v1863
      %1865 = vadd.xlane.f32.xlu0 %v1864
      %v1866 = vpop.xlane.xlu0 %1865
      %v1867 = vrot.slane %v1866, 4
      %v1868 = vadd.f32 %v1866, %v1867
      %v1869 = vrot.slane %v1868, 2
      %v1870 = vadd.f32 %v1868, %v1869
      %v1871 = vrot.slane %v1870, 1
      %v1872 = vadd.f32 %v1870, %v1871
      %s1873 = vtos %v1872
      %s1874 = smul.f32 %s1873, 0.0078125
      %1875 = vrot.lane.b32.xlu0 %v1773, 112
      %v1876 = vpop.permute.xlu0 %1875
      %1877 = vrot.lane.b32.xlu0 %v1774, 112
      %v1878 = vpop.permute.xlu0 %1877
      %v1881 = vsel %vm721, %v1876, 0.0
      %v1882 = vsel %vm721, %v1878, 0.0
      %v1883 = vadd.f32 %v1881, %v1882
      %1884 = vadd.xlane.f32.xlu0 %v1883
      %v1885 = vpop.xlane.xlu0 %1884
      %v1886 = vrot.slane %v1885, 4
      %v1887 = vadd.f32 %v1885, %v1886
      %v1888 = vrot.slane %v1887, 2
      %v1889 = vadd.f32 %v1887, %v1888
      %v1890 = vrot.slane %v1889, 1
      %v1891 = vadd.f32 %v1889, %v1890
      %s1892 = vtos %v1891
      %s1893 = smul.f32 %s1892, 0.0078125
      %s1894 = smul.f32 %s1874, %s1874
      %s1895 = ssub.f32 %s1893, %s1894
      %s1896 = smax.f32 %s1895, 0.0
      %v1897 = vstv %s1874
      %v1898 = vsub.f32 %v1758, %v1897
      %v1899 = vsub.f32 %v1759, %v1897
      %s1900 = sadd.f32 %s1896, 1e-05
      %v1901 = vstv %s1900
      %v1902 = vrsqrt.pop %v1901
      %s1903 = vtos %v1902
      %v1904 = vstv %s1903
      %v1905 = vmul.f32 %v1898, %v1904
      %v1906 = vmul.f32 %v1899, %v1904
      %1907 = vrot.lane.b32.xlu0 %v1758, 104
      %v1908 = vpop.permute.xlu0 %1907
      %1909 = vrot.lane.b32.xlu0 %v1759, 104
      %v1910 = vpop.permute.xlu0 %1909
      %v1913 = vsel %vm721, %v1908, 0.0
      %v1914 = vsel %vm721, %v1910, 0.0
      %v1915 = vadd.f32 %v1913, %v1914
      %1916 = vadd.xlane.f32.xlu0 %v1915
      %v1917 = vpop.xlane.xlu0 %1916
      %v1918 = vrot.slane %v1917, 4
      %v1919 = vadd.f32 %v1917, %v1918
      %v1920 = vrot.slane %v1919, 2
      %v1921 = vadd.f32 %v1919, %v1920
      %v1922 = vrot.slane %v1921, 1
      %v1923 = vadd.f32 %v1921, %v1922
      %s1924 = vtos %v1923
      %s1925 = smul.f32 %s1924, 0.0078125
      %1926 = vrot.lane.b32.xlu0 %v1773, 104
      %v1927 = vpop.permute.xlu0 %1926
      %1928 = vrot.lane.b32.xlu0 %v1774, 104
      %v1929 = vpop.permute.xlu0 %1928
      %v1932 = vsel %vm721, %v1927, 0.0
      %v1933 = vsel %vm721, %v1929, 0.0
      %v1934 = vadd.f32 %v1932, %v1933
      %1935 = vadd.xlane.f32.xlu0 %v1934
      %v1936 = vpop.xlane.xlu0 %1935
      %v1937 = vrot.slane %v1936, 4
      %v1938 = vadd.f32 %v1936, %v1937
      %v1939 = vrot.slane %v1938, 2
      %v1940 = vadd.f32 %v1938, %v1939
      %v1941 = vrot.slane %v1940, 1
      %v1942 = vadd.f32 %v1940, %v1941
      %s1943 = vtos %v1942
      %s1944 = smul.f32 %s1943, 0.0078125
      %s1945 = smul.f32 %s1925, %s1925
      %s1946 = ssub.f32 %s1944, %s1945
      %s1947 = smax.f32 %s1946, 0.0
      %v1948 = vstv %s1925
      %v1949 = vsub.f32 %v1758, %v1948
      %v1950 = vsub.f32 %v1759, %v1948
      %s1951 = sadd.f32 %s1947, 1e-05
      %v1952 = vstv %s1951
      %v1953 = vrsqrt.pop %v1952
      %s1954 = vtos %v1953
      %v1955 = vstv %s1954
      %v1956 = vmul.f32 %v1949, %v1955
      %v1957 = vmul.f32 %v1950, %v1955
      %v1958 = vsel %vm721, %v1799, %v1854
      %v1959 = vsel %vm721, %v1800, %v1855
      %v1960 = vsel %vm922, %v1958, %v1905
      %v1961 = vsel %vm922, %v1959, %v1906
      %v1962 = vsel %vm925, %v1960, %v1956
      %v1963 = vsel %vm925, %v1961, %v1957
      %v1964 = vpack.c.bf16 %v1963, %v1962
      %v1966 = vsel %vm947, %v1964, 0
      %1968 = vmatprep.subr.bf16.mxu0 0
      %1969 = vmatpush1.bf16.msra.mxu0 %v943
      %1970 = vmatprep.subr.bf16.mxu0 0
      %1971 = vmatpush1.bf16.msra.mxu0 %v944
      %1972 = vmatprep.subr.bf16.mxu0 0
      %1973 = vmatpush1.bf16.msra.mxu0 0
      %1974 = vmatprep.subr.bf16.mxu0 0
      %1975 = vmatpush1.bf16.msra.mxu0 0
      %1976 = vmatprep.subr.bf16.mxu0 0
      %1977 = vmatpush1.bf16.msra.mxu0 0
      %1978 = vmatprep.subr.bf16.mxu0 0
      %1979 = vmatpush1.bf16.msra.mxu0 0
      %1980 = vmatprep.subr.bf16.mxu0 0
      %1981 = vmatpush1.bf16.msra.mxu0 0
      %1982 = vmatprep.subr.bf16.mxu0 0
      %1983 = vmatpush1.bf16.msra.mxu0 0
      %1984 = vmatprep.subr.bf16.mxu0 0
      %1985 = vmatpush1.bf16.msra.mxu0 0
      %1986 = vmatprep.subr.bf16.mxu0 0
      %1987 = vmatpush1.bf16.msra.mxu0 0
      %1988 = vmatprep.subr.bf16.mxu0 0
      %1989 = vmatpush1.bf16.msra.mxu0 0
      %1990 = vmatprep.subr.bf16.mxu0 0
      %1991 = vmatpush1.bf16.msra.mxu0 0
      %1992 = vmatprep.subr.bf16.mxu0 0
      %1993 = vmatpush1.bf16.msra.mxu0 0
      %1994 = vmatprep.subr.bf16.mxu0 0
      %1995 = vmatpush1.bf16.msra.mxu0 0
      %1996 = vmatprep.subr.bf16.mxu0 0
      %1997 = vmatpush1.bf16.msra.mxu0 0
      %1998 = vmatprep.subr.bf16.mxu0 0
      %1999 = vmatpush1.bf16.msra.mxu0 0
      %2000 = vmatprep.mubr.bf16.mxu0 0
      %2001 = vmatmul.mubr.bf16.gmra.mrb[0].mxu0 %v1966
      %v2002 = vpop.f32.mrb[0].mxu0
      %v2003 = vadd.f32 %v933, %v2002
      %v2004 = vpop.f32.mrb[0].mxu0
      %v2005 = vpop.f32.mrb[0].mxu0
      %v2006 = vadd.f32 %v933, %v2005
      %v2007 = vpop.f32.mrb[0].mxu0
      %2008 = vdwg.mxu0
      %v2009 = vtanh.pop %v2003
      %v2010 = vtanh.pop %v2006
      %v2011 = vadd.f32 %v2009, 1.0
      %v2012 = vadd.f32 %v2010, 1.0
      %v2013 = vmul.f32 %v2011, %v1018
      %v2014 = vmul.f32 %v2012, %v1019
      %2017 = vrot.lane.b32.xlu0 %v2009, 32
      %v2018 = vpop.permute.xlu0 %2017
      %2019 = vrot.lane.b32.xlu0 %v2010, 32
      %v2020 = vpop.permute.xlu0 %2019
      %v2023 = vmul.f32 %v2011, %v2018
      %v2024 = vmul.f32 %v2012, %v2020
      %2027 = vrot.lane.b32.xlu0 %v2023, 32
      %v2028 = vpop.permute.xlu0 %2027
      %2029 = vrot.lane.b32.xlu0 %v2024, 32
      %v2030 = vpop.permute.xlu0 %2029
      %v2033 = vadd.f32 %v2013, %v2028
      %v2034 = vadd.f32 %v2014, %v2030
      %v2035 = vmul.f32 %v2033, 0.5
      %v2036 = vmul.f32 %v2034, 0.5
      %2039 = vrot.lane.b32.xlu0 %v2035, 96
      %v2040 = vpop.permute.xlu0 %2039
      %2041 = vrot.lane.b32.xlu0 %v2036, 96
      %v2042 = vpop.permute.xlu0 %2041
      %v2045 = vsel %vm947, %v2040, 0.0
      %v2046 = vsel %vm947, %v2042, 0.0
      %v2047 = vadd.f32 %v2045, %v2046
      %2048 = vadd.xlane.f32.xlu0 %v2047
      %v2049 = vpop.xlane.xlu0 %2048
      %v2050 = vrot.slane %v2049, 4
      %v2051 = vadd.f32 %v2049, %v2050
      %v2052 = vrot.slane %v2051, 2
      %v2053 = vadd.f32 %v2051, %v2052
      %v2054 = vrot.slane %v2053, 1
      %v2055 = vadd.f32 %v2053, %v2054
      %s2056 = vtos %v2055
      %s2057 = smul.f32 %s2056, 0.001953125
      %v2058 = vmul.f32 %v2035, %v2035
      %v2059 = vmul.f32 %v2036, %v2036
      %2062 = vrot.lane.b32.xlu0 %v2058, 96
      %v2063 = vpop.permute.xlu0 %2062
      %2064 = vrot.lane.b32.xlu0 %v2059, 96
      %v2065 = vpop.permute.xlu0 %2064
      %v2068 = vsel %vm947, %v2063, 0.0
      %v2069 = vsel %vm947, %v2065, 0.0
      %v2070 = vadd.f32 %v2068, %v2069
      %2071 = vadd.xlane.f32.xlu0 %v2070
      %v2072 = vpop.xlane.xlu0 %2071
      %v2073 = vrot.slane %v2072, 4
      %v2074 = vadd.f32 %v2072, %v2073
      %v2075 = vrot.slane %v2074, 2
      %v2076 = vadd.f32 %v2074, %v2075
      %v2077 = vrot.slane %v2076, 1
      %v2078 = vadd.f32 %v2076, %v2077
      %s2079 = vtos %v2078
      %s2080 = smul.f32 %s2079, 0.001953125
      %s2081 = smul.f32 %s2057, %s2057
      %s2082 = ssub.f32 %s2080, %s2081
      %s2083 = smax.f32 %s2082, 0.0
      %s2084 = sadd.f32 %s2083, 1e-05
      %v2085 = vstv %s2084
      %v2086 = vrsqrt.pop %v2085
      %s2087 = vtos %v2086
      %v2088 = vstv %s2087
      %v2089 = vmul.f32 %v563, %v2088
      %v2090 = vstv %s2057
      %v2091 = vmul.f32 %v2090, %v2089
      %v2092 = vsub.f32 %v564, %v2091
      %v2093 = vmul.f32 %v2011, 0.5
      %v2094 = vmul.f32 %v2012, 0.5
      %v2096 = vlaneseq
      %v2097 = vshrl.u32 %v2096, 7
      %v2098 = vsub.s32 0, %v2097
      %v2099 = vrot.slane %v2089, %v2098
      %2100 = vrot.lane.b32.xlu0 %v2099, 32
      %v2101 = vpop.permute.xlu0 %2100
      %v2103 = vmul.f32 %v2035, %v2101
      %v2104 = vmul.f32 %v2036, %v2101
      %v2106 = vlaneseq
      %v2107 = vshrl.u32 %v2106, 7
      %v2108 = vsub.s32 0, %v2107
      %v2109 = vrot.slane %v2092, %v2108
      %2110 = vrot.lane.b32.xlu0 %v2109, 32
      %v2111 = vpop.permute.xlu0 %2110
      %v2113 = vadd.f32 %v2103, %v2111
      %v2114 = vadd.f32 %v2104, %v2111
      %v2115 = vtanh.pop %v2113
      %v2116 = vtanh.pop %v2114
      %2119 = vrot.lane.b32.xlu0 %v2115, 32
      %v2120 = vpop.permute.xlu0 %2119
      %2121 = vrot.lane.b32.xlu0 %v2116, 32
      %v2122 = vpop.permute.xlu0 %2121
      %v2125 = vmul.f32 %v2093, %v2120
      %v2126 = vmul.f32 %v2094, %v2122
      %2129 = vrot.lane.b32.xlu0 %v2125, 64
      %v2130 = vpop.permute.xlu0 %2129
      %2131 = vrot.lane.b32.xlu0 %v2126, 64
      %v2132 = vpop.permute.xlu0 %2131
      %v2135 = vadd.f32 %v543, %v2130
      %v2136 = vadd.f32 %v546, %v2132
      %2139 = vrot.lane.b32.xlu0 %v1664, 64
      %v2140 = vpop.permute.xlu0 %2139
      %2141 = vrot.lane.b32.xlu0 %v1665, 64
      %v2142 = vpop.permute.xlu0 %2141
      %v2145 = vadd.f32 %v2135, %v2140
      %v2146 = vadd.f32 %v2136, %v2142
      %v2147 = vmul.f32 %v2145, %v1136
      %v2148 = vmul.f32 %v2146, %v1137
      %v2149 = vrot.slane %v2145, 1
      %v2150 = vrot.slane %v2146, 1
      %v2151 = vsel %vm575, %v2149, %v2150
      %v2152 = vsel %vm575, %v2150, %v2149
      %v2153 = vmul.f32 %v2151, %v1145
      %v2154 = vmul.f32 %v2152, %v1146
      %v2155 = vrot.slane %v2145, 2
      %v2156 = vrot.slane %v2146, 2
      %v2157 = vsel %vm585, %v2155, %v2156
      %v2158 = vsel %vm585, %v2156, %v2155
      %v2159 = vmul.f32 %v2157, %v1154
      %v2160 = vmul.f32 %v2158, %v1155
      %v2161 = vrot.slane %v2145, 3
      %v2162 = vrot.slane %v2146, 3
      %v2163 = vsel %vm595, %v2161, %v2162
      %v2164 = vsel %vm595, %v2162, %v2161
      %v2165 = vmul.f32 %v2163, %v1163
      %v2166 = vmul.f32 %v2164, %v1164
      %v2167 = vrot.slane %v2145, 4
      %v2168 = vrot.slane %v2146, 4
      %v2169 = vsel %vm605, %v2167, %v2168
      %v2170 = vsel %vm605, %v2168, %v2167
      %v2171 = vmul.f32 %v2169, %v1172
      %v2172 = vmul.f32 %v2170, %v1173
      %v2173 = vadd.f32 %v2147, %v2171
      %v2174 = vadd.f32 %v2148, %v2172
      %v2175 = vrot.slane %v2145, 5
      %v2176 = vrot.slane %v2146, 5
      %v2177 = vsel %vm617, %v2175, %v2176
      %v2178 = vsel %vm617, %v2176, %v2175
      %v2179 = vmul.f32 %v2177, %v1183
      %v2180 = vmul.f32 %v2178, %v1184
      %v2181 = vadd.f32 %v2153, %v2179
      %v2182 = vadd.f32 %v2154, %v2180
      %v2183 = vrot.slane %v2145, 6
      %v2184 = vrot.slane %v2146, 6
      %v2185 = vsel %vm629, %v2183, %v2184
      %v2186 = vsel %vm629, %v2184, %v2183
      %v2187 = vmul.f32 %v2185, %v1194
      %v2188 = vmul.f32 %v2186, %v1195
      %v2189 = vadd.f32 %v2159, %v2187
      %v2190 = vadd.f32 %v2160, %v2188
      %v2191 = vrot.slane %v2145, 7
      %v2192 = vrot.slane %v2146, 7
      %v2193 = vsel %vm641, %v2191, %v2192
      %v2194 = vsel %vm641, %v2192, %v2191
      %v2195 = vmul.f32 %v2193, %v1205
      %v2196 = vmul.f32 %v2194, %v1206
      %v2197 = vadd.f32 %v2165, %v2195
      %v2198 = vadd.f32 %v2166, %v2196
      %v2199 = vmul.f32 %v2146, %v1212
      %v2200 = vmul.f32 %v2145, %v1213
      %v2201 = vadd.f32 %v2173, %v2199
      %v2202 = vadd.f32 %v2174, %v2200
      %v2203 = vmul.f32 %v2152, %v1219
      %v2204 = vmul.f32 %v2151, %v1220
      %v2205 = vadd.f32 %v2181, %v2203
      %v2206 = vadd.f32 %v2182, %v2204
      %v2207 = vmul.f32 %v2158, %v1226
      %v2208 = vmul.f32 %v2157, %v1227
      %v2209 = vadd.f32 %v2189, %v2207
      %v2210 = vadd.f32 %v2190, %v2208
      %v2211 = vmul.f32 %v2164, %v1233
      %v2212 = vmul.f32 %v2163, %v1234
      %v2213 = vadd.f32 %v2197, %v2211
      %v2214 = vadd.f32 %v2198, %v2212
      %v2215 = vmul.f32 %v2170, %v1240
      %v2216 = vmul.f32 %v2169, %v1241
      %v2217 = vadd.f32 %v2201, %v2215
      %v2218 = vadd.f32 %v2202, %v2216
      %v2219 = vmul.f32 %v2178, %v1247
      %v2220 = vmul.f32 %v2177, %v1248
      %v2221 = vadd.f32 %v2205, %v2219
      %v2222 = vadd.f32 %v2206, %v2220
      %v2223 = vmul.f32 %v2186, %v1254
      %v2224 = vmul.f32 %v2185, %v1255
      %v2225 = vadd.f32 %v2209, %v2223
      %v2226 = vadd.f32 %v2210, %v2224
      %v2227 = vmul.f32 %v2194, %v1261
      %v2228 = vmul.f32 %v2193, %v1262
      %v2229 = vadd.f32 %v2213, %v2227
      %v2230 = vadd.f32 %v2214, %v2228
      %v2231 = vadd.f32 %v2217, %v2221
      %v2232 = vadd.f32 %v2218, %v2222
      %v2233 = vadd.f32 %v2231, %v2225
      %v2234 = vadd.f32 %v2232, %v2226
      %v2235 = vadd.f32 %v2233, %v2229
      %v2236 = vadd.f32 %v2234, %v2230
      %v2237 = vadd.f32 %v2235, %v1277
      %v2238 = vadd.f32 %v2236, %v1277
      %v2239 = vsel %vm721, %v2237, 0.0
      %v2240 = vsel %vm721, %v2238, 0.0
      %v2241 = vadd.f32 %v2239, %v2240
      %2242 = vadd.xlane.f32.xlu0 %v2241
      %v2243 = vpop.xlane.xlu0 %2242
      %v2244 = vrot.slane %v2243, 4
      %v2245 = vadd.f32 %v2243, %v2244
      %v2246 = vrot.slane %v2245, 2
      %v2247 = vadd.f32 %v2245, %v2246
      %v2248 = vrot.slane %v2247, 1
      %v2249 = vadd.f32 %v2247, %v2248
      %s2250 = vtos %v2249
      %s2251 = smul.f32 %s2250, 0.0078125
      %v2252 = vmul.f32 %v2237, %v2237
      %v2253 = vmul.f32 %v2238, %v2238
      %v2254 = vsel %vm721, %v2252, 0.0
      %v2255 = vsel %vm721, %v2253, 0.0
      %v2256 = vadd.f32 %v2254, %v2255
      %2257 = vadd.xlane.f32.xlu0 %v2256
      %v2258 = vpop.xlane.xlu0 %2257
      %v2259 = vrot.slane %v2258, 4
      %v2260 = vadd.f32 %v2258, %v2259
      %v2261 = vrot.slane %v2260, 2
      %v2262 = vadd.f32 %v2260, %v2261
      %v2263 = vrot.slane %v2262, 1
      %v2264 = vadd.f32 %v2262, %v2263
      %s2265 = vtos %v2264
      %s2266 = smul.f32 %s2265, 0.0078125
      %s2267 = smul.f32 %s2251, %s2251
      %s2268 = ssub.f32 %s2266, %s2267
      %s2269 = smax.f32 %s2268, 0.0
      %v2270 = vstv %s2251
      %v2271 = vsub.f32 %v2237, %v2270
      %v2272 = vsub.f32 %v2238, %v2270
      %s2273 = sadd.f32 %s2269, 1e-05
      %v2274 = vstv %s2273
      %v2275 = vrsqrt.pop %v2274
      %s2276 = vtos %v2275
      %v2277 = vstv %s2276
      %v2278 = vmul.f32 %v2271, %v2277
      %v2279 = vmul.f32 %v2272, %v2277
      %2282 = vrot.lane.b32.xlu0 %v2237, 120
      %v2283 = vpop.permute.xlu0 %2282
      %2284 = vrot.lane.b32.xlu0 %v2238, 120
      %v2285 = vpop.permute.xlu0 %2284
      %v2288 = vsel %vm721, %v2283, 0.0
      %v2289 = vsel %vm721, %v2285, 0.0
      %v2290 = vadd.f32 %v2288, %v2289
      %2291 = vadd.xlane.f32.xlu0 %v2290
      %v2292 = vpop.xlane.xlu0 %2291
      %v2293 = vrot.slane %v2292, 4
      %v2294 = vadd.f32 %v2292, %v2293
      %v2295 = vrot.slane %v2294, 2
      %v2296 = vadd.f32 %v2294, %v2295
      %v2297 = vrot.slane %v2296, 1
      %v2298 = vadd.f32 %v2296, %v2297
      %s2299 = vtos %v2298
      %s2300 = smul.f32 %s2299, 0.0078125
      %2303 = vrot.lane.b32.xlu0 %v2252, 120
      %v2304 = vpop.permute.xlu0 %2303
      %2305 = vrot.lane.b32.xlu0 %v2253, 120
      %v2306 = vpop.permute.xlu0 %2305
      %v2309 = vsel %vm721, %v2304, 0.0
      %v2310 = vsel %vm721, %v2306, 0.0
      %v2311 = vadd.f32 %v2309, %v2310
      %2312 = vadd.xlane.f32.xlu0 %v2311
      %v2313 = vpop.xlane.xlu0 %2312
      %v2314 = vrot.slane %v2313, 4
      %v2315 = vadd.f32 %v2313, %v2314
      %v2316 = vrot.slane %v2315, 2
      %v2317 = vadd.f32 %v2315, %v2316
      %v2318 = vrot.slane %v2317, 1
      %v2319 = vadd.f32 %v2317, %v2318
      %s2320 = vtos %v2319
      %s2321 = smul.f32 %s2320, 0.0078125
      %s2322 = smul.f32 %s2300, %s2300
      %s2323 = ssub.f32 %s2321, %s2322
      %s2324 = smax.f32 %s2323, 0.0
      %v2325 = vstv %s2300
      %v2326 = vsub.f32 %v2237, %v2325
      %v2327 = vsub.f32 %v2238, %v2325
      %s2328 = sadd.f32 %s2324, 1e-05
      %v2329 = vstv %s2328
      %v2330 = vrsqrt.pop %v2329
      %s2331 = vtos %v2330
      %v2332 = vstv %s2331
      %v2333 = vmul.f32 %v2326, %v2332
      %v2334 = vmul.f32 %v2327, %v2332
      %2335 = vrot.lane.b32.xlu0 %v2237, 112
      %v2336 = vpop.permute.xlu0 %2335
      %2337 = vrot.lane.b32.xlu0 %v2238, 112
      %v2338 = vpop.permute.xlu0 %2337
      %v2341 = vsel %vm721, %v2336, 0.0
      %v2342 = vsel %vm721, %v2338, 0.0
      %v2343 = vadd.f32 %v2341, %v2342
      %2344 = vadd.xlane.f32.xlu0 %v2343
      %v2345 = vpop.xlane.xlu0 %2344
      %v2346 = vrot.slane %v2345, 4
      %v2347 = vadd.f32 %v2345, %v2346
      %v2348 = vrot.slane %v2347, 2
      %v2349 = vadd.f32 %v2347, %v2348
      %v2350 = vrot.slane %v2349, 1
      %v2351 = vadd.f32 %v2349, %v2350
      %s2352 = vtos %v2351
      %s2353 = smul.f32 %s2352, 0.0078125
      %2354 = vrot.lane.b32.xlu0 %v2252, 112
      %v2355 = vpop.permute.xlu0 %2354
      %2356 = vrot.lane.b32.xlu0 %v2253, 112
      %v2357 = vpop.permute.xlu0 %2356
      %v2360 = vsel %vm721, %v2355, 0.0
      %v2361 = vsel %vm721, %v2357, 0.0
      %v2362 = vadd.f32 %v2360, %v2361
      %2363 = vadd.xlane.f32.xlu0 %v2362
      %v2364 = vpop.xlane.xlu0 %2363
      %v2365 = vrot.slane %v2364, 4
      %v2366 = vadd.f32 %v2364, %v2365
      %v2367 = vrot.slane %v2366, 2
      %v2368 = vadd.f32 %v2366, %v2367
      %v2369 = vrot.slane %v2368, 1
      %v2370 = vadd.f32 %v2368, %v2369
      %s2371 = vtos %v2370
      %s2372 = smul.f32 %s2371, 0.0078125
      %s2373 = smul.f32 %s2353, %s2353
      %s2374 = ssub.f32 %s2372, %s2373
      %s2375 = smax.f32 %s2374, 0.0
      %v2376 = vstv %s2353
      %v2377 = vsub.f32 %v2237, %v2376
      %v2378 = vsub.f32 %v2238, %v2376
      %s2379 = sadd.f32 %s2375, 1e-05
      %v2380 = vstv %s2379
      %v2381 = vrsqrt.pop %v2380
      %s2382 = vtos %v2381
      %v2383 = vstv %s2382
      %v2384 = vmul.f32 %v2377, %v2383
      %v2385 = vmul.f32 %v2378, %v2383
      %2386 = vrot.lane.b32.xlu0 %v2237, 104
      %v2387 = vpop.permute.xlu0 %2386
      %2388 = vrot.lane.b32.xlu0 %v2238, 104
      %v2389 = vpop.permute.xlu0 %2388
      %v2392 = vsel %vm721, %v2387, 0.0
      %v2393 = vsel %vm721, %v2389, 0.0
      %v2394 = vadd.f32 %v2392, %v2393
      %2395 = vadd.xlane.f32.xlu0 %v2394
      %v2396 = vpop.xlane.xlu0 %2395
      %v2397 = vrot.slane %v2396, 4
      %v2398 = vadd.f32 %v2396, %v2397
      %v2399 = vrot.slane %v2398, 2
      %v2400 = vadd.f32 %v2398, %v2399
      %v2401 = vrot.slane %v2400, 1
      %v2402 = vadd.f32 %v2400, %v2401
      %s2403 = vtos %v2402
      %s2404 = smul.f32 %s2403, 0.0078125
      %2405 = vrot.lane.b32.xlu0 %v2252, 104
      %v2406 = vpop.permute.xlu0 %2405
      %2407 = vrot.lane.b32.xlu0 %v2253, 104
      %v2408 = vpop.permute.xlu0 %2407
      %v2411 = vsel %vm721, %v2406, 0.0
      %v2412 = vsel %vm721, %v2408, 0.0
      %v2413 = vadd.f32 %v2411, %v2412
      %2414 = vadd.xlane.f32.xlu0 %v2413
      %v2415 = vpop.xlane.xlu0 %2414
      %v2416 = vrot.slane %v2415, 4
      %v2417 = vadd.f32 %v2415, %v2416
      %v2418 = vrot.slane %v2417, 2
      %v2419 = vadd.f32 %v2417, %v2418
      %v2420 = vrot.slane %v2419, 1
      %v2421 = vadd.f32 %v2419, %v2420
      %s2422 = vtos %v2421
      %s2423 = smul.f32 %s2422, 0.0078125
      %s2424 = smul.f32 %s2404, %s2404
      %s2425 = ssub.f32 %s2423, %s2424
      %s2426 = smax.f32 %s2425, 0.0
      %v2427 = vstv %s2404
      %v2428 = vsub.f32 %v2237, %v2427
      %v2429 = vsub.f32 %v2238, %v2427
      %s2430 = sadd.f32 %s2426, 1e-05
      %v2431 = vstv %s2430
      %v2432 = vrsqrt.pop %v2431
      %s2433 = vtos %v2432
      %v2434 = vstv %s2433
      %v2435 = vmul.f32 %v2428, %v2434
      %v2436 = vmul.f32 %v2429, %v2434
      %v2437 = vsel %vm721, %v2278, %v2333
      %v2438 = vsel %vm721, %v2279, %v2334
      %v2439 = vsel %vm922, %v2437, %v2384
      %v2440 = vsel %vm922, %v2438, %v2385
      %v2441 = vsel %vm925, %v2439, %v2435
      %v2442 = vsel %vm925, %v2440, %v2436
      %v2443 = vpack.c.bf16 %v2442, %v2441
      %v2445 = vsel %vm947, %v2443, 0
      %2447 = vmatprep.subr.bf16.mxu0 0
      %2448 = vmatpush1.bf16.msra.mxu0 %v1500
      %2449 = vmatprep.subr.bf16.mxu0 0
      %2450 = vmatpush1.bf16.msra.mxu0 %v1501
      %2451 = vmatprep.subr.bf16.mxu0 0
      %2452 = vmatpush1.bf16.msra.mxu0 0
      %2453 = vmatprep.subr.bf16.mxu0 0
      %2454 = vmatpush1.bf16.msra.mxu0 0
      %2455 = vmatprep.subr.bf16.mxu0 0
      %2456 = vmatpush1.bf16.msra.mxu0 0
      %2457 = vmatprep.subr.bf16.mxu0 0
      %2458 = vmatpush1.bf16.msra.mxu0 0
      %2459 = vmatprep.subr.bf16.mxu0 0
      %2460 = vmatpush1.bf16.msra.mxu0 0
      %2461 = vmatprep.subr.bf16.mxu0 0
      %2462 = vmatpush1.bf16.msra.mxu0 0
      %2463 = vmatprep.subr.bf16.mxu0 0
      %2464 = vmatpush1.bf16.msra.mxu0 0
      %2465 = vmatprep.subr.bf16.mxu0 0
      %2466 = vmatpush1.bf16.msra.mxu0 0
      %2467 = vmatprep.subr.bf16.mxu0 0
      %2468 = vmatpush1.bf16.msra.mxu0 0
      %2469 = vmatprep.subr.bf16.mxu0 0
      %2470 = vmatpush1.bf16.msra.mxu0 0
      %2471 = vmatprep.subr.bf16.mxu0 0
      %2472 = vmatpush1.bf16.msra.mxu0 0
      %2473 = vmatprep.subr.bf16.mxu0 0
      %2474 = vmatpush1.bf16.msra.mxu0 0
      %2475 = vmatprep.subr.bf16.mxu0 0
      %2476 = vmatpush1.bf16.msra.mxu0 0
      %2477 = vmatprep.subr.bf16.mxu0 0
      %2478 = vmatpush1.bf16.msra.mxu0 0
      %2479 = vmatprep.mubr.bf16.mxu0 0
      %2480 = vmatmul.mubr.bf16.gmra.mrb[0].mxu0 %v2445
      %v2481 = vpop.f32.mrb[0].mxu0
      %v2482 = vadd.f32 %v1490, %v2481
      %v2483 = vpop.f32.mrb[0].mxu0
      %v2484 = vpop.f32.mrb[0].mxu0
      %v2485 = vadd.f32 %v1490, %v2484
      %v2486 = vpop.f32.mrb[0].mxu0
      %2487 = vdwg.mxu0
      %v2488 = vtanh.pop %v2482
      %v2489 = vtanh.pop %v2485
      %v2490 = vadd.f32 %v2488, 1.0
      %v2491 = vadd.f32 %v2489, 1.0
      %v2492 = vmul.f32 %v2490, %v1574
      %v2493 = vmul.f32 %v2491, %v1575
      %2496 = vrot.lane.b32.xlu0 %v2488, 32
      %v2497 = vpop.permute.xlu0 %2496
      %2498 = vrot.lane.b32.xlu0 %v2489, 32
      %v2499 = vpop.permute.xlu0 %2498
      %v2502 = vmul.f32 %v2490, %v2497
      %v2503 = vmul.f32 %v2491, %v2499
      %2506 = vrot.lane.b32.xlu0 %v2502, 32
      %v2507 = vpop.permute.xlu0 %2506
      %2508 = vrot.lane.b32.xlu0 %v2503, 32
      %v2509 = vpop.permute.xlu0 %2508
      %v2512 = vadd.f32 %v2492, %v2507
      %v2513 = vadd.f32 %v2493, %v2509
      %v2514 = vmul.f32 %v2512, 0.5
      %v2515 = vmul.f32 %v2513, 0.5
      %2518 = vrot.lane.b32.xlu0 %v2514, 96
      %v2519 = vpop.permute.xlu0 %2518
      %2520 = vrot.lane.b32.xlu0 %v2515, 96
      %v2521 = vpop.permute.xlu0 %2520
      %v2524 = vsel %vm947, %v2519, 0.0
      %v2525 = vsel %vm947, %v2521, 0.0
      %v2526 = vadd.f32 %v2524, %v2525
      %2527 = vadd.xlane.f32.xlu0 %v2526
      %v2528 = vpop.xlane.xlu0 %2527
      %v2529 = vrot.slane %v2528, 4
      %v2530 = vadd.f32 %v2528, %v2529
      %v2531 = vrot.slane %v2530, 2
      %v2532 = vadd.f32 %v2530, %v2531
      %v2533 = vrot.slane %v2532, 1
      %v2534 = vadd.f32 %v2532, %v2533
      %s2535 = vtos %v2534
      %s2536 = smul.f32 %s2535, 0.001953125
      %v2537 = vmul.f32 %v2514, %v2514
      %v2538 = vmul.f32 %v2515, %v2515
      %2541 = vrot.lane.b32.xlu0 %v2537, 96
      %v2542 = vpop.permute.xlu0 %2541
      %2543 = vrot.lane.b32.xlu0 %v2538, 96
      %v2544 = vpop.permute.xlu0 %2543
      %v2547 = vsel %vm947, %v2542, 0.0
      %v2548 = vsel %vm947, %v2544, 0.0
      %v2549 = vadd.f32 %v2547, %v2548
      %2550 = vadd.xlane.f32.xlu0 %v2549
      %v2551 = vpop.xlane.xlu0 %2550
      %v2552 = vrot.slane %v2551, 4
      %v2553 = vadd.f32 %v2551, %v2552
      %v2554 = vrot.slane %v2553, 2
      %v2555 = vadd.f32 %v2553, %v2554
      %v2556 = vrot.slane %v2555, 1
      %v2557 = vadd.f32 %v2555, %v2556
      %s2558 = vtos %v2557
      %s2559 = smul.f32 %s2558, 0.001953125
      %s2560 = smul.f32 %s2536, %s2536
      %s2561 = ssub.f32 %s2559, %s2560
      %s2562 = smax.f32 %s2561, 0.0
      %s2563 = sadd.f32 %s2562, 1e-05
      %v2564 = vstv %s2563
      %v2565 = vrsqrt.pop %v2564
      %s2566 = vtos %v2565
      %v2567 = vstv %s2566
      %v2568 = vmul.f32 %v1130, %v2567
      %v2569 = vstv %s2536
      %v2570 = vmul.f32 %v2569, %v2568
      %v2571 = vsub.f32 %v1132, %v2570
      %v2572 = vmul.f32 %v2490, 0.5
      %v2573 = vmul.f32 %v2491, 0.5
      %v2575 = vlaneseq
      %v2576 = vshrl.u32 %v2575, 7
      %v2577 = vsub.s32 0, %v2576
      %v2578 = vrot.slane %v2568, %v2577
      %2579 = vrot.lane.b32.xlu0 %v2578, 32
      %v2580 = vpop.permute.xlu0 %2579
      %v2582 = vmul.f32 %v2514, %v2580
      %v2583 = vmul.f32 %v2515, %v2580
      %v2585 = vlaneseq
      %v2586 = vshrl.u32 %v2585, 7
      %v2587 = vsub.s32 0, %v2586
      %v2588 = vrot.slane %v2571, %v2587
      %2589 = vrot.lane.b32.xlu0 %v2588, 32
      %v2590 = vpop.permute.xlu0 %2589
      %v2592 = vadd.f32 %v2582, %v2590
      %v2593 = vadd.f32 %v2583, %v2590
      %v2594 = vtanh.pop %v2592
      %v2595 = vtanh.pop %v2593
      %2598 = vrot.lane.b32.xlu0 %v2594, 32
      %v2599 = vpop.permute.xlu0 %2598
      %2600 = vrot.lane.b32.xlu0 %v2595, 32
      %v2601 = vpop.permute.xlu0 %2600
      %v2604 = vmul.f32 %v2572, %v2599
      %v2605 = vmul.f32 %v2573, %v2601
      %v2606 = vadd.f32 %v551, %v2130
      %v2607 = vadd.f32 %v554, %v2132
      %v2608 = vmul.f32 %v2606, %v567
      %v2609 = vmul.f32 %v2607, %v568
      %v2610 = vrot.slane %v2606, 1
      %v2611 = vrot.slane %v2607, 1
      %v2612 = vsel %vm575, %v2610, %v2611
      %v2613 = vsel %vm575, %v2611, %v2610
      %v2614 = vmul.f32 %v2612, %v579
      %v2615 = vmul.f32 %v2613, %v580
      %v2616 = vrot.slane %v2606, 2
      %v2617 = vrot.slane %v2607, 2
      %v2618 = vsel %vm585, %v2616, %v2617
      %v2619 = vsel %vm585, %v2617, %v2616
      %v2620 = vmul.f32 %v2618, %v589
      %v2621 = vmul.f32 %v2619, %v590
      %v2622 = vrot.slane %v2606, 3
      %v2623 = vrot.slane %v2607, 3
      %v2624 = vsel %vm595, %v2622, %v2623
      %v2625 = vsel %vm595, %v2623, %v2622
      %v2626 = vmul.f32 %v2624, %v599
      %v2627 = vmul.f32 %v2625, %v600
      %v2628 = vrot.slane %v2606, 4
      %v2629 = vrot.slane %v2607, 4
      %v2630 = vsel %vm605, %v2628, %v2629
      %v2631 = vsel %vm605, %v2629, %v2628
      %v2632 = vmul.f32 %v2630, %v609
      %v2633 = vmul.f32 %v2631, %v610
      %v2634 = vadd.f32 %v2608, %v2632
      %v2635 = vadd.f32 %v2609, %v2633
      %v2636 = vrot.slane %v2606, 5
      %v2637 = vrot.slane %v2607, 5
      %v2638 = vsel %vm617, %v2636, %v2637
      %v2639 = vsel %vm617, %v2637, %v2636
      %v2640 = vmul.f32 %v2638, %v621
      %v2641 = vmul.f32 %v2639, %v622
      %v2642 = vadd.f32 %v2614, %v2640
      %v2643 = vadd.f32 %v2615, %v2641
      %v2644 = vrot.slane %v2606, 6
      %v2645 = vrot.slane %v2607, 6
      %v2646 = vsel %vm629, %v2644, %v2645
      %v2647 = vsel %vm629, %v2645, %v2644
      %v2648 = vmul.f32 %v2646, %v633
      %v2649 = vmul.f32 %v2647, %v634
      %v2650 = vadd.f32 %v2620, %v2648
      %v2651 = vadd.f32 %v2621, %v2649
      %v2652 = vrot.slane %v2606, 7
      %v2653 = vrot.slane %v2607, 7
      %v2654 = vsel %vm641, %v2652, %v2653
      %v2655 = vsel %vm641, %v2653, %v2652
      %v2656 = vmul.f32 %v2654, %v645
      %v2657 = vmul.f32 %v2655, %v646
      %v2658 = vadd.f32 %v2626, %v2656
      %v2659 = vadd.f32 %v2627, %v2657
      %v2660 = vmul.f32 %v2607, %v652
      %v2661 = vmul.f32 %v2606, %v653
      %v2662 = vadd.f32 %v2634, %v2660
      %v2663 = vadd.f32 %v2635, %v2661
      %v2664 = vmul.f32 %v2613, %v659
      %v2665 = vmul.f32 %v2612, %v660
      %v2666 = vadd.f32 %v2642, %v2664
      %v2667 = vadd.f32 %v2643, %v2665
      %v2668 = vmul.f32 %v2619, %v666
      %v2669 = vmul.f32 %v2618, %v667
      %v2670 = vadd.f32 %v2650, %v2668
      %v2671 = vadd.f32 %v2651, %v2669
      %v2672 = vmul.f32 %v2625, %v673
      %v2673 = vmul.f32 %v2624, %v674
      %v2674 = vadd.f32 %v2658, %v2672
      %v2675 = vadd.f32 %v2659, %v2673
      %v2676 = vmul.f32 %v2631, %v680
      %v2677 = vmul.f32 %v2630, %v681
      %v2678 = vadd.f32 %v2662, %v2676
      %v2679 = vadd.f32 %v2663, %v2677
      %v2680 = vmul.f32 %v2639, %v687
      %v2681 = vmul.f32 %v2638, %v688
      %v2682 = vadd.f32 %v2666, %v2680
      %v2683 = vadd.f32 %v2667, %v2681
      %v2684 = vmul.f32 %v2647, %v694
      %v2685 = vmul.f32 %v2646, %v695
      %v2686 = vadd.f32 %v2670, %v2684
      %v2687 = vadd.f32 %v2671, %v2685
      %v2688 = vmul.f32 %v2655, %v701
      %v2689 = vmul.f32 %v2654, %v702
      %v2690 = vadd.f32 %v2674, %v2688
      %v2691 = vadd.f32 %v2675, %v2689
      %v2692 = vadd.f32 %v2678, %v2682
      %v2693 = vadd.f32 %v2679, %v2683
      %v2694 = vadd.f32 %v2692, %v2686
      %v2695 = vadd.f32 %v2693, %v2687
      %v2696 = vadd.f32 %v2694, %v2690
      %v2697 = vadd.f32 %v2695, %v2691
      %v2698 = vadd.f32 %v2696, %v717
      %v2699 = vadd.f32 %v2697, %v717
      %v2700 = vsel %vm721, %v2698, 0.0
      %v2701 = vsel %vm721, %v2699, 0.0
      %v2702 = vadd.f32 %v2700, %v2701
      %2703 = vadd.xlane.f32.xlu0 %v2702
      %v2704 = vpop.xlane.xlu0 %2703
      %v2705 = vrot.slane %v2704, 4
      %v2706 = vadd.f32 %v2704, %v2705
      %v2707 = vrot.slane %v2706, 2
      %v2708 = vadd.f32 %v2706, %v2707
      %v2709 = vrot.slane %v2708, 1
      %v2710 = vadd.f32 %v2708, %v2709
      %s2711 = vtos %v2710
      %s2712 = smul.f32 %s2711, 0.0078125
      %v2713 = vmul.f32 %v2698, %v2698
      %v2714 = vmul.f32 %v2699, %v2699
      %v2715 = vsel %vm721, %v2713, 0.0
      %v2716 = vsel %vm721, %v2714, 0.0
      %v2717 = vadd.f32 %v2715, %v2716
      %2718 = vadd.xlane.f32.xlu0 %v2717
      %v2719 = vpop.xlane.xlu0 %2718
      %v2720 = vrot.slane %v2719, 4
      %v2721 = vadd.f32 %v2719, %v2720
      %v2722 = vrot.slane %v2721, 2
      %v2723 = vadd.f32 %v2721, %v2722
      %v2724 = vrot.slane %v2723, 1
      %v2725 = vadd.f32 %v2723, %v2724
      %s2726 = vtos %v2725
      %s2727 = smul.f32 %s2726, 0.0078125
      %s2728 = smul.f32 %s2712, %s2712
      %s2729 = ssub.f32 %s2727, %s2728
      %s2730 = smax.f32 %s2729, 0.0
      %v2731 = vstv %s2712
      %v2732 = vsub.f32 %v2698, %v2731
      %v2733 = vsub.f32 %v2699, %v2731
      %s2734 = sadd.f32 %s2730, 1e-05
      %v2735 = vstv %s2734
      %v2736 = vrsqrt.pop %v2735
      %s2737 = vtos %v2736
      %v2738 = vstv %s2737
      %v2739 = vmul.f32 %v2732, %v2738
      %v2740 = vmul.f32 %v2733, %v2738
      %2743 = vrot.lane.b32.xlu0 %v2698, 120
      %v2744 = vpop.permute.xlu0 %2743
      %2745 = vrot.lane.b32.xlu0 %v2699, 120
      %v2746 = vpop.permute.xlu0 %2745
      %v2749 = vsel %vm721, %v2744, 0.0
      %v2750 = vsel %vm721, %v2746, 0.0
      %v2751 = vadd.f32 %v2749, %v2750
      %2752 = vadd.xlane.f32.xlu0 %v2751
      %v2753 = vpop.xlane.xlu0 %2752
      %v2754 = vrot.slane %v2753, 4
      %v2755 = vadd.f32 %v2753, %v2754
      %v2756 = vrot.slane %v2755, 2
      %v2757 = vadd.f32 %v2755, %v2756
      %v2758 = vrot.slane %v2757, 1
      %v2759 = vadd.f32 %v2757, %v2758
      %s2760 = vtos %v2759
      %s2761 = smul.f32 %s2760, 0.0078125
      %2764 = vrot.lane.b32.xlu0 %v2713, 120
      %v2765 = vpop.permute.xlu0 %2764
      %2766 = vrot.lane.b32.xlu0 %v2714, 120
      %v2767 = vpop.permute.xlu0 %2766
      %v2770 = vsel %vm721, %v2765, 0.0
      %v2771 = vsel %vm721, %v2767, 0.0
      %v2772 = vadd.f32 %v2770, %v2771
      %2773 = vadd.xlane.f32.xlu0 %v2772
      %v2774 = vpop.xlane.xlu0 %2773
      %v2775 = vrot.slane %v2774, 4
      %v2776 = vadd.f32 %v2774, %v2775
      %v2777 = vrot.slane %v2776, 2
      %v2778 = vadd.f32 %v2776, %v2777
      %v2779 = vrot.slane %v2778, 1
      %v2780 = vadd.f32 %v2778, %v2779
      %s2781 = vtos %v2780
      %s2782 = smul.f32 %s2781, 0.0078125
      %s2783 = smul.f32 %s2761, %s2761
      %s2784 = ssub.f32 %s2782, %s2783
      %s2785 = smax.f32 %s2784, 0.0
      %v2786 = vstv %s2761
      %v2787 = vsub.f32 %v2698, %v2786
      %v2788 = vsub.f32 %v2699, %v2786
      %s2789 = sadd.f32 %s2785, 1e-05
      %v2790 = vstv %s2789
      %v2791 = vrsqrt.pop %v2790
      %s2792 = vtos %v2791
      %v2793 = vstv %s2792
      %v2794 = vmul.f32 %v2787, %v2793
      %v2795 = vmul.f32 %v2788, %v2793
      %2796 = vrot.lane.b32.xlu0 %v2698, 112
      %v2797 = vpop.permute.xlu0 %2796
      %2798 = vrot.lane.b32.xlu0 %v2699, 112
      %v2799 = vpop.permute.xlu0 %2798
      %v2802 = vsel %vm721, %v2797, 0.0
      %v2803 = vsel %vm721, %v2799, 0.0
      %v2804 = vadd.f32 %v2802, %v2803
      %2805 = vadd.xlane.f32.xlu0 %v2804
      %v2806 = vpop.xlane.xlu0 %2805
      %v2807 = vrot.slane %v2806, 4
      %v2808 = vadd.f32 %v2806, %v2807
      %v2809 = vrot.slane %v2808, 2
      %v2810 = vadd.f32 %v2808, %v2809
      %v2811 = vrot.slane %v2810, 1
      %v2812 = vadd.f32 %v2810, %v2811
      %s2813 = vtos %v2812
      %s2814 = smul.f32 %s2813, 0.0078125
      %2815 = vrot.lane.b32.xlu0 %v2713, 112
      %v2816 = vpop.permute.xlu0 %2815
      %2817 = vrot.lane.b32.xlu0 %v2714, 112
      %v2818 = vpop.permute.xlu0 %2817
      %v2821 = vsel %vm721, %v2816, 0.0
      %v2822 = vsel %vm721, %v2818, 0.0
      %v2823 = vadd.f32 %v2821, %v2822
      %2824 = vadd.xlane.f32.xlu0 %v2823
      %v2825 = vpop.xlane.xlu0 %2824
      %v2826 = vrot.slane %v2825, 4
      %v2827 = vadd.f32 %v2825, %v2826
      %v2828 = vrot.slane %v2827, 2
      %v2829 = vadd.f32 %v2827, %v2828
      %v2830 = vrot.slane %v2829, 1
      %v2831 = vadd.f32 %v2829, %v2830
      %s2832 = vtos %v2831
      %s2833 = smul.f32 %s2832, 0.0078125
      %s2834 = smul.f32 %s2814, %s2814
      %s2835 = ssub.f32 %s2833, %s2834
      %s2836 = smax.f32 %s2835, 0.0
      %v2837 = vstv %s2814
      %v2838 = vsub.f32 %v2698, %v2837
      %v2839 = vsub.f32 %v2699, %v2837
      %s2840 = sadd.f32 %s2836, 1e-05
      %v2841 = vstv %s2840
      %v2842 = vrsqrt.pop %v2841
      %s2843 = vtos %v2842
      %v2844 = vstv %s2843
      %v2845 = vmul.f32 %v2838, %v2844
      %v2846 = vmul.f32 %v2839, %v2844
      %2847 = vrot.lane.b32.xlu0 %v2698, 104
      %v2848 = vpop.permute.xlu0 %2847
      %2849 = vrot.lane.b32.xlu0 %v2699, 104
      %v2850 = vpop.permute.xlu0 %2849
      %v2853 = vsel %vm721, %v2848, 0.0
      %v2854 = vsel %vm721, %v2850, 0.0
      %v2855 = vadd.f32 %v2853, %v2854
      %2856 = vadd.xlane.f32.xlu0 %v2855
      %v2857 = vpop.xlane.xlu0 %2856
      %v2858 = vrot.slane %v2857, 4
      %v2859 = vadd.f32 %v2857, %v2858
      %v2860 = vrot.slane %v2859, 2
      %v2861 = vadd.f32 %v2859, %v2860
      %v2862 = vrot.slane %v2861, 1
      %v2863 = vadd.f32 %v2861, %v2862
      %s2864 = vtos %v2863
      %s2865 = smul.f32 %s2864, 0.0078125
      %2866 = vrot.lane.b32.xlu0 %v2713, 104
      %v2867 = vpop.permute.xlu0 %2866
      %2868 = vrot.lane.b32.xlu0 %v2714, 104
      %v2869 = vpop.permute.xlu0 %2868
      %v2872 = vsel %vm721, %v2867, 0.0
      %v2873 = vsel %vm721, %v2869, 0.0
      %v2874 = vadd.f32 %v2872, %v2873
      %2875 = vadd.xlane.f32.xlu0 %v2874
      %v2876 = vpop.xlane.xlu0 %2875
      %v2877 = vrot.slane %v2876, 4
      %v2878 = vadd.f32 %v2876, %v2877
      %v2879 = vrot.slane %v2878, 2
      %v2880 = vadd.f32 %v2878, %v2879
      %v2881 = vrot.slane %v2880, 1
      %v2882 = vadd.f32 %v2880, %v2881
      %s2883 = vtos %v2882
      %s2884 = smul.f32 %s2883, 0.0078125
      %s2885 = smul.f32 %s2865, %s2865
      %s2886 = ssub.f32 %s2884, %s2885
      %s2887 = smax.f32 %s2886, 0.0
      %v2888 = vstv %s2865
      %v2889 = vsub.f32 %v2698, %v2888
      %v2890 = vsub.f32 %v2699, %v2888
      %s2891 = sadd.f32 %s2887, 1e-05
      %v2892 = vstv %s2891
      %v2893 = vrsqrt.pop %v2892
      %s2894 = vtos %v2893
      %v2895 = vstv %s2894
      %v2896 = vmul.f32 %v2889, %v2895
      %v2897 = vmul.f32 %v2890, %v2895
      %v2898 = vsel %vm721, %v2739, %v2794
      %v2899 = vsel %vm721, %v2740, %v2795
      %v2900 = vsel %vm922, %v2898, %v2845
      %v2901 = vsel %vm922, %v2899, %v2846
      %v2902 = vsel %vm925, %v2900, %v2896
      %v2903 = vsel %vm925, %v2901, %v2897
      %v2904 = vpack.c.bf16 %v2903, %v2902
      %v2906 = vsel %vm947, %v2904, 0
      %2908 = vmatprep.subr.bf16.mxu0 0
      %2909 = vmatpush1.bf16.msra.mxu0 %v943
      %2910 = vmatprep.subr.bf16.mxu0 0
      %2911 = vmatpush1.bf16.msra.mxu0 %v944
      %2912 = vmatprep.subr.bf16.mxu0 0
      %2913 = vmatpush1.bf16.msra.mxu0 0
      %2914 = vmatprep.subr.bf16.mxu0 0
      %2915 = vmatpush1.bf16.msra.mxu0 0
      %2916 = vmatprep.subr.bf16.mxu0 0
      %2917 = vmatpush1.bf16.msra.mxu0 0
      %2918 = vmatprep.subr.bf16.mxu0 0
      %2919 = vmatpush1.bf16.msra.mxu0 0
      %2920 = vmatprep.subr.bf16.mxu0 0
      %2921 = vmatpush1.bf16.msra.mxu0 0
      %2922 = vmatprep.subr.bf16.mxu0 0
      %2923 = vmatpush1.bf16.msra.mxu0 0
      %2924 = vmatprep.subr.bf16.mxu0 0
      %2925 = vmatpush1.bf16.msra.mxu0 0
      %2926 = vmatprep.subr.bf16.mxu0 0
      %2927 = vmatpush1.bf16.msra.mxu0 0
      %2928 = vmatprep.subr.bf16.mxu0 0
      %2929 = vmatpush1.bf16.msra.mxu0 0
      %2930 = vmatprep.subr.bf16.mxu0 0
      %2931 = vmatpush1.bf16.msra.mxu0 0
      %2932 = vmatprep.subr.bf16.mxu0 0
      %2933 = vmatpush1.bf16.msra.mxu0 0
      %2934 = vmatprep.subr.bf16.mxu0 0
      %2935 = vmatpush1.bf16.msra.mxu0 0
      %2936 = vmatprep.subr.bf16.mxu0 0
      %2937 = vmatpush1.bf16.msra.mxu0 0
      %2938 = vmatprep.subr.bf16.mxu0 0
      %2939 = vmatpush1.bf16.msra.mxu0 0
      %2940 = vmatprep.mubr.bf16.mxu0 0
      %2941 = vmatmul.mubr.bf16.gmra.mrb[0].mxu0 %v2906
      %v2942 = vpop.f32.mrb[0].mxu0
      %v2943 = vadd.f32 %v933, %v2942
      %v2944 = vpop.f32.mrb[0].mxu0
      %v2945 = vpop.f32.mrb[0].mxu0
      %v2946 = vadd.f32 %v933, %v2945
      %v2947 = vpop.f32.mrb[0].mxu0
      %2948 = vdwg.mxu0
      %v2949 = vtanh.pop %v2943
      %v2950 = vtanh.pop %v2946
      %v2951 = vadd.f32 %v2949, 1.0
      %v2952 = vadd.f32 %v2950, 1.0
      %v2953 = vmul.f32 %v2951, %v2035
      %v2954 = vmul.f32 %v2952, %v2036
      %2957 = vrot.lane.b32.xlu0 %v2949, 32
      %v2958 = vpop.permute.xlu0 %2957
      %2959 = vrot.lane.b32.xlu0 %v2950, 32
      %v2960 = vpop.permute.xlu0 %2959
      %v2963 = vmul.f32 %v2951, %v2958
      %v2964 = vmul.f32 %v2952, %v2960
      %2967 = vrot.lane.b32.xlu0 %v2963, 32
      %v2968 = vpop.permute.xlu0 %2967
      %2969 = vrot.lane.b32.xlu0 %v2964, 32
      %v2970 = vpop.permute.xlu0 %2969
      %v2973 = vadd.f32 %v2953, %v2968
      %v2974 = vadd.f32 %v2954, %v2970
      %v2975 = vmul.f32 %v2973, 0.5
      %v2976 = vmul.f32 %v2974, 0.5
      %2979 = vrot.lane.b32.xlu0 %v2975, 96
      %v2980 = vpop.permute.xlu0 %2979
      %2981 = vrot.lane.b32.xlu0 %v2976, 96
      %v2982 = vpop.permute.xlu0 %2981
      %v2985 = vsel %vm947, %v2980, 0.0
      %v2986 = vsel %vm947, %v2982, 0.0
      %v2987 = vadd.f32 %v2985, %v2986
      %2988 = vadd.xlane.f32.xlu0 %v2987
      %v2989 = vpop.xlane.xlu0 %2988
      %v2990 = vrot.slane %v2989, 4
      %v2991 = vadd.f32 %v2989, %v2990
      %v2992 = vrot.slane %v2991, 2
      %v2993 = vadd.f32 %v2991, %v2992
      %v2994 = vrot.slane %v2993, 1
      %v2995 = vadd.f32 %v2993, %v2994
      %s2996 = vtos %v2995
      %s2997 = smul.f32 %s2996, 0.001953125
      %v2998 = vmul.f32 %v2975, %v2975
      %v2999 = vmul.f32 %v2976, %v2976
      %3002 = vrot.lane.b32.xlu0 %v2998, 96
      %v3003 = vpop.permute.xlu0 %3002
      %3004 = vrot.lane.b32.xlu0 %v2999, 96
      %v3005 = vpop.permute.xlu0 %3004
      %v3008 = vsel %vm947, %v3003, 0.0
      %v3009 = vsel %vm947, %v3005, 0.0
      %v3010 = vadd.f32 %v3008, %v3009
      %3011 = vadd.xlane.f32.xlu0 %v3010
      %v3012 = vpop.xlane.xlu0 %3011
      %v3013 = vrot.slane %v3012, 4
      %v3014 = vadd.f32 %v3012, %v3013
      %v3015 = vrot.slane %v3014, 2
      %v3016 = vadd.f32 %v3014, %v3015
      %v3017 = vrot.slane %v3016, 1
      %v3018 = vadd.f32 %v3016, %v3017
      %s3019 = vtos %v3018
      %s3020 = smul.f32 %s3019, 0.001953125
      %s3021 = smul.f32 %s2997, %s2997
      %s3022 = ssub.f32 %s3020, %s3021
      %s3023 = smax.f32 %s3022, 0.0
      %s3024 = sadd.f32 %s3023, 1e-05
      %v3025 = vstv %s3024
      %v3026 = vrsqrt.pop %v3025
      %s3027 = vtos %v3026
      %v3028 = vstv %s3027
      %v3029 = vmul.f32 %v563, %v3028
      %v3030 = vstv %s2997
      %v3031 = vmul.f32 %v3030, %v3029
      %v3032 = vsub.f32 %v564, %v3031
      %v3033 = vmul.f32 %v2951, 0.5
      %v3034 = vmul.f32 %v2952, 0.5
      %v3036 = vlaneseq
      %v3037 = vshrl.u32 %v3036, 7
      %v3038 = vsub.s32 0, %v3037
      %v3039 = vrot.slane %v3029, %v3038
      %3040 = vrot.lane.b32.xlu0 %v3039, 32
      %v3041 = vpop.permute.xlu0 %3040
      %v3043 = vmul.f32 %v2975, %v3041
      %v3044 = vmul.f32 %v2976, %v3041
      %v3046 = vlaneseq
      %v3047 = vshrl.u32 %v3046, 7
      %v3048 = vsub.s32 0, %v3047
      %v3049 = vrot.slane %v3032, %v3048
      %3050 = vrot.lane.b32.xlu0 %v3049, 32
      %v3051 = vpop.permute.xlu0 %3050
      %v3053 = vadd.f32 %v3043, %v3051
      %v3054 = vadd.f32 %v3044, %v3051
      %v3055 = vtanh.pop %v3053
      %v3056 = vtanh.pop %v3054
      %3059 = vrot.lane.b32.xlu0 %v3055, 32
      %v3060 = vpop.permute.xlu0 %3059
      %3061 = vrot.lane.b32.xlu0 %v3056, 32
      %v3062 = vpop.permute.xlu0 %3061
      %v3065 = vmul.f32 %v3033, %v3060
      %v3066 = vmul.f32 %v3034, %v3062
      %3069 = vrot.lane.b32.xlu0 %v3065, 64
      %v3070 = vpop.permute.xlu0 %3069
      %3071 = vrot.lane.b32.xlu0 %v3066, 64
      %v3072 = vpop.permute.xlu0 %3071
      %v3075 = vadd.f32 %v551, %v3070
      %v3076 = vadd.f32 %v554, %v3072
      %3079 = vrot.lane.b32.xlu0 %v2604, 64
      %v3080 = vpop.permute.xlu0 %3079
      %3081 = vrot.lane.b32.xlu0 %v2605, 64
      %v3082 = vpop.permute.xlu0 %3081
      %v3085 = vadd.f32 %v3075, %v3080
      %v3086 = vadd.f32 %v3076, %v3082
      %v3087 = vmul.f32 %v3085, %v1136
      %v3088 = vmul.f32 %v3086, %v1137
      %v3089 = vrot.slane %v3085, 1
      %v3090 = vrot.slane %v3086, 1
      %v3091 = vsel %vm575, %v3089, %v3090
      %v3092 = vsel %vm575, %v3090, %v3089
      %v3093 = vmul.f32 %v3091, %v1145
      %v3094 = vmul.f32 %v3092, %v1146
      %v3095 = vrot.slane %v3085, 2
      %v3096 = vrot.slane %v3086, 2
      %v3097 = vsel %vm585, %v3095, %v3096
      %v3098 = vsel %vm585, %v3096, %v3095
      %v3099 = vmul.f32 %v3097, %v1154
      %v3100 = vmul.f32 %v3098, %v1155
      %v3101 = vrot.slane %v3085, 3
      %v3102 = vrot.slane %v3086, 3
      %v3103 = vsel %vm595, %v3101, %v3102
      %v3104 = vsel %vm595, %v3102, %v3101
      %v3105 = vmul.f32 %v3103, %v1163
      %v3106 = vmul.f32 %v3104, %v1164
      %v3107 = vrot.slane %v3085, 4
      %v3108 = vrot.slane %v3086, 4
      %v3109 = vsel %vm605, %v3107, %v3108
      %v3110 = vsel %vm605, %v3108, %v3107
      %v3111 = vmul.f32 %v3109, %v1172
      %v3112 = vmul.f32 %v3110, %v1173
      %v3113 = vadd.f32 %v3087, %v3111
      %v3114 = vadd.f32 %v3088, %v3112
      %v3115 = vrot.slane %v3085, 5
      %v3116 = vrot.slane %v3086, 5
      %v3117 = vsel %vm617, %v3115, %v3116
      %v3118 = vsel %vm617, %v3116, %v3115
      %v3119 = vmul.f32 %v3117, %v1183
      %v3120 = vmul.f32 %v3118, %v1184
      %v3121 = vadd.f32 %v3093, %v3119
      %v3122 = vadd.f32 %v3094, %v3120
      %v3123 = vrot.slane %v3085, 6
      %v3124 = vrot.slane %v3086, 6
      %v3125 = vsel %vm629, %v3123, %v3124
      %v3126 = vsel %vm629, %v3124, %v3123
      %v3127 = vmul.f32 %v3125, %v1194
      %v3128 = vmul.f32 %v3126, %v1195
      %v3129 = vadd.f32 %v3099, %v3127
      %v3130 = vadd.f32 %v3100, %v3128
      %v3131 = vrot.slane %v3085, 7
      %v3132 = vrot.slane %v3086, 7
      %v3133 = vsel %vm641, %v3131, %v3132
      %v3134 = vsel %vm641, %v3132, %v3131
      %v3135 = vmul.f32 %v3133, %v1205
      %v3136 = vmul.f32 %v3134, %v1206
      %v3137 = vadd.f32 %v3105, %v3135
      %v3138 = vadd.f32 %v3106, %v3136
      %v3139 = vmul.f32 %v3086, %v1212
      %v3140 = vmul.f32 %v3085, %v1213
      %v3141 = vadd.f32 %v3113, %v3139
      %v3142 = vadd.f32 %v3114, %v3140
      %v3143 = vmul.f32 %v3092, %v1219
      %v3144 = vmul.f32 %v3091, %v1220
      %v3145 = vadd.f32 %v3121, %v3143
      %v3146 = vadd.f32 %v3122, %v3144
      %v3147 = vmul.f32 %v3098, %v1226
      %v3148 = vmul.f32 %v3097, %v1227
      %v3149 = vadd.f32 %v3129, %v3147
      %v3150 = vadd.f32 %v3130, %v3148
      %v3151 = vmul.f32 %v3104, %v1233
      %v3152 = vmul.f32 %v3103, %v1234
      %v3153 = vadd.f32 %v3137, %v3151
      %v3154 = vadd.f32 %v3138, %v3152
      %v3155 = vmul.f32 %v3110, %v1240
      %v3156 = vmul.f32 %v3109, %v1241
      %v3157 = vadd.f32 %v3141, %v3155
      %v3158 = vadd.f32 %v3142, %v3156
      %v3159 = vmul.f32 %v3118, %v1247
      %v3160 = vmul.f32 %v3117, %v1248
      %v3161 = vadd.f32 %v3145, %v3159
      %v3162 = vadd.f32 %v3146, %v3160
      %v3163 = vmul.f32 %v3126, %v1254
      %v3164 = vmul.f32 %v3125, %v1255
      %v3165 = vadd.f32 %v3149, %v3163
      %v3166 = vadd.f32 %v3150, %v3164
      %v3167 = vmul.f32 %v3134, %v1261
      %v3168 = vmul.f32 %v3133, %v1262
      %v3169 = vadd.f32 %v3153, %v3167
      %v3170 = vadd.f32 %v3154, %v3168
      %v3171 = vadd.f32 %v3157, %v3161
      %v3172 = vadd.f32 %v3158, %v3162
      %v3173 = vadd.f32 %v3171, %v3165
      %v3174 = vadd.f32 %v3172, %v3166
      %v3175 = vadd.f32 %v3173, %v3169
      %v3176 = vadd.f32 %v3174, %v3170
      %v3177 = vadd.f32 %v3175, %v1277
      %v3178 = vadd.f32 %v3176, %v1277
      %v3179 = vsel %vm721, %v3177, 0.0
      %v3180 = vsel %vm721, %v3178, 0.0
      %v3181 = vadd.f32 %v3179, %v3180
      %3182 = vadd.xlane.f32.xlu0 %v3181
      %v3183 = vpop.xlane.xlu0 %3182
      %v3184 = vrot.slane %v3183, 4
      %v3185 = vadd.f32 %v3183, %v3184
      %v3186 = vrot.slane %v3185, 2
      %v3187 = vadd.f32 %v3185, %v3186
      %v3188 = vrot.slane %v3187, 1
      %v3189 = vadd.f32 %v3187, %v3188
      %s3190 = vtos %v3189
      %s3191 = smul.f32 %s3190, 0.0078125
      %v3192 = vmul.f32 %v3177, %v3177
      %v3193 = vmul.f32 %v3178, %v3178
      %v3194 = vsel %vm721, %v3192, 0.0
      %v3195 = vsel %vm721, %v3193, 0.0
      %v3196 = vadd.f32 %v3194, %v3195
      %3197 = vadd.xlane.f32.xlu0 %v3196
      %v3198 = vpop.xlane.xlu0 %3197
      %v3199 = vrot.slane %v3198, 4
      %v3200 = vadd.f32 %v3198, %v3199
      %v3201 = vrot.slane %v3200, 2
      %v3202 = vadd.f32 %v3200, %v3201
      %v3203 = vrot.slane %v3202, 1
      %v3204 = vadd.f32 %v3202, %v3203
      %s3205 = vtos %v3204
      %s3206 = smul.f32 %s3205, 0.0078125
      %s3207 = smul.f32 %s3191, %s3191
      %s3208 = ssub.f32 %s3206, %s3207
      %s3209 = smax.f32 %s3208, 0.0
      %v3210 = vstv %s3191
      %v3211 = vsub.f32 %v3177, %v3210
      %v3212 = vsub.f32 %v3178, %v3210
      %s3213 = sadd.f32 %s3209, 1e-05
      %v3214 = vstv %s3213
      %v3215 = vrsqrt.pop %v3214
      %s3216 = vtos %v3215
      %v3217 = vstv %s3216
      %v3218 = vmul.f32 %v3211, %v3217
      %v3219 = vmul.f32 %v3212, %v3217
      %3222 = vrot.lane.b32.xlu0 %v3177, 120
      %v3223 = vpop.permute.xlu0 %3222
      %3224 = vrot.lane.b32.xlu0 %v3178, 120
      %v3225 = vpop.permute.xlu0 %3224
      %v3228 = vsel %vm721, %v3223, 0.0
      %v3229 = vsel %vm721, %v3225, 0.0
      %v3230 = vadd.f32 %v3228, %v3229
      %3231 = vadd.xlane.f32.xlu0 %v3230
      %v3232 = vpop.xlane.xlu0 %3231
      %v3233 = vrot.slane %v3232, 4
      %v3234 = vadd.f32 %v3232, %v3233
      %v3235 = vrot.slane %v3234, 2
      %v3236 = vadd.f32 %v3234, %v3235
      %v3237 = vrot.slane %v3236, 1
      %v3238 = vadd.f32 %v3236, %v3237
      %s3239 = vtos %v3238
      %s3240 = smul.f32 %s3239, 0.0078125
      %3243 = vrot.lane.b32.xlu0 %v3192, 120
      %v3244 = vpop.permute.xlu0 %3243
      %3245 = vrot.lane.b32.xlu0 %v3193, 120
      %v3246 = vpop.permute.xlu0 %3245
      %v3249 = vsel %vm721, %v3244, 0.0
      %v3250 = vsel %vm721, %v3246, 0.0
      %v3251 = vadd.f32 %v3249, %v3250
      %3252 = vadd.xlane.f32.xlu0 %v3251
      %v3253 = vpop.xlane.xlu0 %3252
      %v3254 = vrot.slane %v3253, 4
      %v3255 = vadd.f32 %v3253, %v3254
      %v3256 = vrot.slane %v3255, 2
      %v3257 = vadd.f32 %v3255, %v3256
      %v3258 = vrot.slane %v3257, 1
      %v3259 = vadd.f32 %v3257, %v3258
      %s3260 = vtos %v3259
      %s3261 = smul.f32 %s3260, 0.0078125
      %s3262 = smul.f32 %s3240, %s3240
      %s3263 = ssub.f32 %s3261, %s3262
      %s3264 = smax.f32 %s3263, 0.0
      %v3265 = vstv %s3240
      %v3266 = vsub.f32 %v3177, %v3265
      %v3267 = vsub.f32 %v3178, %v3265
      %s3268 = sadd.f32 %s3264, 1e-05
      %v3269 = vstv %s3268
      %v3270 = vrsqrt.pop %v3269
      %s3271 = vtos %v3270
      %v3272 = vstv %s3271
      %v3273 = vmul.f32 %v3266, %v3272
      %v3274 = vmul.f32 %v3267, %v3272
      %3275 = vrot.lane.b32.xlu0 %v3177, 112
      %v3276 = vpop.permute.xlu0 %3275
      %3277 = vrot.lane.b32.xlu0 %v3178, 112
      %v3278 = vpop.permute.xlu0 %3277
      %v3281 = vsel %vm721, %v3276, 0.0
      %v3282 = vsel %vm721, %v3278, 0.0
      %v3283 = vadd.f32 %v3281, %v3282
      %3284 = vadd.xlane.f32.xlu0 %v3283
      %v3285 = vpop.xlane.xlu0 %3284
      %v3286 = vrot.slane %v3285, 4
      %v3287 = vadd.f32 %v3285, %v3286
      %v3288 = vrot.slane %v3287, 2
      %v3289 = vadd.f32 %v3287, %v3288
      %v3290 = vrot.slane %v3289, 1
      %v3291 = vadd.f32 %v3289, %v3290
      %s3292 = vtos %v3291
      %s3293 = smul.f32 %s3292, 0.0078125
      %3294 = vrot.lane.b32.xlu0 %v3192, 112
      %v3295 = vpop.permute.xlu0 %3294
      %3296 = vrot.lane.b32.xlu0 %v3193, 112
      %v3297 = vpop.permute.xlu0 %3296
      %v3300 = vsel %vm721, %v3295, 0.0
      %v3301 = vsel %vm721, %v3297, 0.0
      %v3302 = vadd.f32 %v3300, %v3301
      %3303 = vadd.xlane.f32.xlu0 %v3302
      %v3304 = vpop.xlane.xlu0 %3303
      %v3305 = vrot.slane %v3304, 4
      %v3306 = vadd.f32 %v3304, %v3305
      %v3307 = vrot.slane %v3306, 2
      %v3308 = vadd.f32 %v3306, %v3307
      %v3309 = vrot.slane %v3308, 1
      %v3310 = vadd.f32 %v3308, %v3309
      %s3311 = vtos %v3310
      %s3312 = smul.f32 %s3311, 0.0078125
      %s3313 = smul.f32 %s3293, %s3293
      %s3314 = ssub.f32 %s3312, %s3313
      %s3315 = smax.f32 %s3314, 0.0
      %v3316 = vstv %s3293
      %v3317 = vsub.f32 %v3177, %v3316
      %v3318 = vsub.f32 %v3178, %v3316
      %s3319 = sadd.f32 %s3315, 1e-05
      %v3320 = vstv %s3319
      %v3321 = vrsqrt.pop %v3320
      %s3322 = vtos %v3321
      %v3323 = vstv %s3322
      %v3324 = vmul.f32 %v3317, %v3323
      %v3325 = vmul.f32 %v3318, %v3323
      %3326 = vrot.lane.b32.xlu0 %v3177, 104
      %v3327 = vpop.permute.xlu0 %3326
      %3328 = vrot.lane.b32.xlu0 %v3178, 104
      %v3329 = vpop.permute.xlu0 %3328
      %v3332 = vsel %vm721, %v3327, 0.0
      %v3333 = vsel %vm721, %v3329, 0.0
      %v3334 = vadd.f32 %v3332, %v3333
      %3335 = vadd.xlane.f32.xlu0 %v3334
      %v3336 = vpop.xlane.xlu0 %3335
      %v3337 = vrot.slane %v3336, 4
      %v3338 = vadd.f32 %v3336, %v3337
      %v3339 = vrot.slane %v3338, 2
      %v3340 = vadd.f32 %v3338, %v3339
      %v3341 = vrot.slane %v3340, 1
      %v3342 = vadd.f32 %v3340, %v3341
      %s3343 = vtos %v3342
      %s3344 = smul.f32 %s3343, 0.0078125
      %3345 = vrot.lane.b32.xlu0 %v3192, 104
      %v3346 = vpop.permute.xlu0 %3345
      %3347 = vrot.lane.b32.xlu0 %v3193, 104
      %v3348 = vpop.permute.xlu0 %3347
      %v3351 = vsel %vm721, %v3346, 0.0
      %v3352 = vsel %vm721, %v3348, 0.0
      %v3353 = vadd.f32 %v3351, %v3352
      %3354 = vadd.xlane.f32.xlu0 %v3353
      %v3355 = vpop.xlane.xlu0 %3354
      %v3356 = vrot.slane %v3355, 4
      %v3357 = vadd.f32 %v3355, %v3356
      %v3358 = vrot.slane %v3357, 2
      %v3359 = vadd.f32 %v3357, %v3358
      %v3360 = vrot.slane %v3359, 1
      %v3361 = vadd.f32 %v3359, %v3360
      %s3362 = vtos %v3361
      %s3363 = smul.f32 %s3362, 0.0078125
      %s3364 = smul.f32 %s3344, %s3344
      %s3365 = ssub.f32 %s3363, %s3364
      %s3366 = smax.f32 %s3365, 0.0
      %v3367 = vstv %s3344
      %v3368 = vsub.f32 %v3177, %v3367
      %v3369 = vsub.f32 %v3178, %v3367
      %s3370 = sadd.f32 %s3366, 1e-05
      %v3371 = vstv %s3370
      %v3372 = vrsqrt.pop %v3371
      %s3373 = vtos %v3372
      %v3374 = vstv %s3373
      %v3375 = vmul.f32 %v3368, %v3374
      %v3376 = vmul.f32 %v3369, %v3374
      %v3377 = vsel %vm721, %v3218, %v3273
      %v3378 = vsel %vm721, %v3219, %v3274
      %v3379 = vsel %vm922, %v3377, %v3324
      %v3380 = vsel %vm922, %v3378, %v3325
      %v3381 = vsel %vm925, %v3379, %v3375
      %v3382 = vsel %vm925, %v3380, %v3376
      %v3383 = vpack.c.bf16 %v3382, %v3381
      %v3385 = vsel %vm947, %v3383, 0
      %3387 = vmatprep.subr.bf16.mxu0 0
      %3388 = vmatpush1.bf16.msra.mxu0 %v1500
      %3389 = vmatprep.subr.bf16.mxu0 0
      %3390 = vmatpush1.bf16.msra.mxu0 %v1501
      %3391 = vmatprep.subr.bf16.mxu0 0
      %3392 = vmatpush1.bf16.msra.mxu0 0
      %3393 = vmatprep.subr.bf16.mxu0 0
      %3394 = vmatpush1.bf16.msra.mxu0 0
      %3395 = vmatprep.subr.bf16.mxu0 0
      %3396 = vmatpush1.bf16.msra.mxu0 0
      %3397 = vmatprep.subr.bf16.mxu0 0
      %3398 = vmatpush1.bf16.msra.mxu0 0
      %3399 = vmatprep.subr.bf16.mxu0 0
      %3400 = vmatpush1.bf16.msra.mxu0 0
      %3401 = vmatprep.subr.bf16.mxu0 0
      %3402 = vmatpush1.bf16.msra.mxu0 0
      %3403 = vmatprep.subr.bf16.mxu0 0
      %3404 = vmatpush1.bf16.msra.mxu0 0
      %3405 = vmatprep.subr.bf16.mxu0 0
      %3406 = vmatpush1.bf16.msra.mxu0 0
      %3407 = vmatprep.subr.bf16.mxu0 0
      %3408 = vmatpush1.bf16.msra.mxu0 0
      %3409 = vmatprep.subr.bf16.mxu0 0
      %3410 = vmatpush1.bf16.msra.mxu0 0
      %3411 = vmatprep.subr.bf16.mxu0 0
      %3412 = vmatpush1.bf16.msra.mxu0 0
      %3413 = vmatprep.subr.bf16.mxu0 0
      %3414 = vmatpush1.bf16.msra.mxu0 0
      %3415 = vmatprep.subr.bf16.mxu0 0
      %3416 = vmatpush1.bf16.msra.mxu0 0
      %3417 = vmatprep.subr.bf16.mxu0 0
      %3418 = vmatpush1.bf16.msra.mxu0 0
      %3419 = vmatprep.mubr.bf16.mxu0 0
      %3420 = vmatmul.mubr.bf16.gmra.mrb[0].mxu0 %v3385
      %v3421 = vpop.f32.mrb[0].mxu0
      %v3422 = vadd.f32 %v1490, %v3421
      %v3423 = vpop.f32.mrb[0].mxu0
      %v3424 = vpop.f32.mrb[0].mxu0
      %v3425 = vadd.f32 %v1490, %v3424
      %v3426 = vpop.f32.mrb[0].mxu0
      %3427 = vdwg.mxu0
      %v3428 = vtanh.pop %v3422
      %v3429 = vtanh.pop %v3425
      %v3430 = vadd.f32 %v3428, 1.0
      %v3431 = vadd.f32 %v3429, 1.0
      %v3432 = vmul.f32 %v3430, %v2514
      %v3433 = vmul.f32 %v3431, %v2515
      %3436 = vrot.lane.b32.xlu0 %v3428, 32
      %v3437 = vpop.permute.xlu0 %3436
      %3438 = vrot.lane.b32.xlu0 %v3429, 32
      %v3439 = vpop.permute.xlu0 %3438
      %v3442 = vmul.f32 %v3430, %v3437
      %v3443 = vmul.f32 %v3431, %v3439
      %3446 = vrot.lane.b32.xlu0 %v3442, 32
      %v3447 = vpop.permute.xlu0 %3446
      %3448 = vrot.lane.b32.xlu0 %v3443, 32
      %v3449 = vpop.permute.xlu0 %3448
      %v3452 = vadd.f32 %v3432, %v3447
      %v3453 = vadd.f32 %v3433, %v3449
      %v3454 = vmul.f32 %v3452, 0.5
      %v3455 = vmul.f32 %v3453, 0.5
      %3458 = vrot.lane.b32.xlu0 %v3454, 96
      %v3459 = vpop.permute.xlu0 %3458
      %3460 = vrot.lane.b32.xlu0 %v3455, 96
      %v3461 = vpop.permute.xlu0 %3460
      %v3464 = vsel %vm947, %v3459, 0.0
      %v3465 = vsel %vm947, %v3461, 0.0
      %v3466 = vadd.f32 %v3464, %v3465
      %3467 = vadd.xlane.f32.xlu0 %v3466
      %v3468 = vpop.xlane.xlu0 %3467
      %v3469 = vrot.slane %v3468, 4
      %v3470 = vadd.f32 %v3468, %v3469
      %v3471 = vrot.slane %v3470, 2
      %v3472 = vadd.f32 %v3470, %v3471
      %v3473 = vrot.slane %v3472, 1
      %v3474 = vadd.f32 %v3472, %v3473
      %s3475 = vtos %v3474
      %s3476 = smul.f32 %s3475, 0.001953125
      %v3477 = vmul.f32 %v3454, %v3454
      %v3478 = vmul.f32 %v3455, %v3455
      %3481 = vrot.lane.b32.xlu0 %v3477, 96
      %v3482 = vpop.permute.xlu0 %3481
      %3483 = vrot.lane.b32.xlu0 %v3478, 96
      %v3484 = vpop.permute.xlu0 %3483
      %v3487 = vsel %vm947, %v3482, 0.0
      %v3488 = vsel %vm947, %v3484, 0.0
      %v3489 = vadd.f32 %v3487, %v3488
      %3490 = vadd.xlane.f32.xlu0 %v3489
      %v3491 = vpop.xlane.xlu0 %3490
      %v3492 = vrot.slane %v3491, 4
      %v3493 = vadd.f32 %v3491, %v3492
      %v3494 = vrot.slane %v3493, 2
      %v3495 = vadd.f32 %v3493, %v3494
      %v3496 = vrot.slane %v3495, 1
      %v3497 = vadd.f32 %v3495, %v3496
      %s3498 = vtos %v3497
      %s3499 = smul.f32 %s3498, 0.001953125
      %s3500 = smul.f32 %s3476, %s3476
      %s3501 = ssub.f32 %s3499, %s3500
      %s3502 = smax.f32 %s3501, 0.0
      %s3503 = sadd.f32 %s3502, 1e-05
      %v3504 = vstv %s3503
      %v3505 = vrsqrt.pop %v3504
      %s3506 = vtos %v3505
      %v3507 = vstv %s3506
      %v3508 = vmul.f32 %v1130, %v3507
      %v3509 = vstv %s3476
      %v3510 = vmul.f32 %v3509, %v3508
      %v3511 = vsub.f32 %v1132, %v3510
      %v3512 = vmul.f32 %v3430, 0.5
      %v3513 = vmul.f32 %v3431, 0.5
      %v3515 = vlaneseq
      %v3516 = vshrl.u32 %v3515, 7
      %v3517 = vsub.s32 0, %v3516
      %v3518 = vrot.slane %v3508, %v3517
      %3519 = vrot.lane.b32.xlu0 %v3518, 32
      %v3520 = vpop.permute.xlu0 %3519
      %v3522 = vmul.f32 %v3454, %v3520
      %v3523 = vmul.f32 %v3455, %v3520
      %v3525 = vlaneseq
      %v3526 = vshrl.u32 %v3525, 7
      %v3527 = vsub.s32 0, %v3526
      %v3528 = vrot.slane %v3511, %v3527
      %3529 = vrot.lane.b32.xlu0 %v3528, 32
      %v3530 = vpop.permute.xlu0 %3529
      %v3532 = vadd.f32 %v3522, %v3530
      %v3533 = vadd.f32 %v3523, %v3530
      %v3534 = vtanh.pop %v3532
      %v3535 = vtanh.pop %v3533
      %3538 = vrot.lane.b32.xlu0 %v3534, 32
      %v3539 = vpop.permute.xlu0 %3538
      %3540 = vrot.lane.b32.xlu0 %v3535, 32
      %v3541 = vpop.permute.xlu0 %3540
      %v3544 = vmul.f32 %v3512, %v3539
      %v3545 = vmul.f32 %v3513, %v3541
      %s3546 = scalar_lea.vmem %s4, 2
      %v3547 = vld [vmem:[%s3546] sm:$0x1]
      %s3548 = scalar_lea.vmem %s5, 32
      %v3549 = vld [vmem:[%s3548] sm:$0xf]
      %v3550 = vld [vmem:[%s3548 + $0x4] sm:$0xf]
      %v3551 = vld [vmem:[%s3548 + $0x8] sm:$0xf]
      %v3552 = vld [vmem:[%s3548 + $0xc] sm:$0xf]
      %s3553 = scalar_lea.vmem %s6, 2
      %v3554 = vld [vmem:[%s3553] sm:$0x1]
      %s3555 = scalar_lea.vmem %s7, 2
      %v3556 = vld [vmem:[%s3555] sm:$0x1]
      %s3557 = scalar_lea.vmem %s8, 2
      %v3558 = vld [vmem:[%s3557] sm:$0x1]
      %s3559 = scalar_lea.vmem %s3, 512
      %v3560 = vld [vmem:[%s3559] sm:$0xff]
      %v3561 = vld [vmem:[%s3559 + $0x8] sm:$0xff]
      %3564 = vrot.lane.b32.xlu0 %v3560, 64
      %v3565 = vpop.permute.xlu0 %3564
      %3566 = vrot.lane.b32.xlu0 %v3561, 64
      %v3567 = vpop.permute.xlu0 %3566
      %v3570 = vmul.f32 %v3065, %v3565
      %v3571 = vmul.f32 %v3066, %v3567
      %v3572 = vrot.slane %v3070, 1
      %v3573 = vrot.slane %v3072, 1
      %v3574 = vsel %vm575, %v3572, %v3573
      %v3575 = vsel %vm575, %v3573, %v3572
      %s3576 = scalar_lea.vmem %s3, 528
      %v3577 = vld [vmem:[%s3576] sm:$0xff]
      %v3578 = vld [vmem:[%s3576 + $0x8] sm:$0xff]
      %v3579 = vmul.f32 %v3574, %v3577
      %v3580 = vmul.f32 %v3575, %v3578
      %v3581 = vrot.slane %v3070, 2
      %v3582 = vrot.slane %v3072, 2
      %v3583 = vsel %vm585, %v3581, %v3582
      %v3584 = vsel %vm585, %v3582, %v3581
      %s3585 = scalar_lea.vmem %s3, 544
      %v3586 = vld [vmem:[%s3585] sm:$0xff]
      %v3587 = vld [vmem:[%s3585 + $0x8] sm:$0xff]
      %v3588 = vmul.f32 %v3583, %v3586
      %v3589 = vmul.f32 %v3584, %v3587
      %v3590 = vrot.slane %v3070, 3
      %v3591 = vrot.slane %v3072, 3
      %v3592 = vsel %vm595, %v3590, %v3591
      %v3593 = vsel %vm595, %v3591, %v3590
      %s3594 = scalar_lea.vmem %s3, 560
      %v3595 = vld [vmem:[%s3594] sm:$0xff]
      %v3596 = vld [vmem:[%s3594 + $0x8] sm:$0xff]
      %v3597 = vmul.f32 %v3592, %v3595
      %v3598 = vmul.f32 %v3593, %v3596
      %v3599 = vrot.slane %v3070, 4
      %v3600 = vrot.slane %v3072, 4
      %v3601 = vsel %vm605, %v3599, %v3600
      %v3602 = vsel %vm605, %v3600, %v3599
      %s3603 = scalar_lea.vmem %s3, 576
      %v3604 = vld [vmem:[%s3603] sm:$0xff]
      %v3605 = vld [vmem:[%s3603 + $0x8] sm:$0xff]
      %v3606 = vmul.f32 %v3601, %v3604
      %v3607 = vmul.f32 %v3602, %v3605
      %3610 = vrot.lane.b32.xlu0 %v3606, 64
      %v3611 = vpop.permute.xlu0 %3610
      %3612 = vrot.lane.b32.xlu0 %v3607, 64
      %v3613 = vpop.permute.xlu0 %3612
      %v3616 = vadd.f32 %v3570, %v3611
      %v3617 = vadd.f32 %v3571, %v3613
      %v3618 = vrot.slane %v3070, 5
      %v3619 = vrot.slane %v3072, 5
      %v3620 = vsel %vm617, %v3618, %v3619
      %v3621 = vsel %vm617, %v3619, %v3618
      %s3622 = scalar_lea.vmem %s3, 592
      %v3623 = vld [vmem:[%s3622] sm:$0xff]
      %v3624 = vld [vmem:[%s3622 + $0x8] sm:$0xff]
      %v3625 = vmul.f32 %v3620, %v3623
      %v3626 = vmul.f32 %v3621, %v3624
      %v3627 = vadd.f32 %v3579, %v3625
      %v3628 = vadd.f32 %v3580, %v3626
      %v3629 = vrot.slane %v3070, 6
      %v3630 = vrot.slane %v3072, 6
      %v3631 = vsel %vm629, %v3629, %v3630
      %v3632 = vsel %vm629, %v3630, %v3629
      %s3633 = scalar_lea.vmem %s3, 608
      %v3634 = vld [vmem:[%s3633] sm:$0xff]
      %v3635 = vld [vmem:[%s3633 + $0x8] sm:$0xff]
      %v3636 = vmul.f32 %v3631, %v3634
      %v3637 = vmul.f32 %v3632, %v3635
      %v3638 = vadd.f32 %v3588, %v3636
      %v3639 = vadd.f32 %v3589, %v3637
      %v3640 = vrot.slane %v3070, 7
      %v3641 = vrot.slane %v3072, 7
      %v3642 = vsel %vm641, %v3640, %v3641
      %v3643 = vsel %vm641, %v3641, %v3640
      %s3644 = scalar_lea.vmem %s3, 624
      %v3645 = vld [vmem:[%s3644] sm:$0xff]
      %v3646 = vld [vmem:[%s3644 + $0x8] sm:$0xff]
      %v3647 = vmul.f32 %v3642, %v3645
      %v3648 = vmul.f32 %v3643, %v3646
      %v3649 = vadd.f32 %v3597, %v3647
      %v3650 = vadd.f32 %v3598, %v3648
      %s3651 = scalar_lea.vmem %s3, 640
      %v3652 = vld [vmem:[%s3651] sm:$0xff]
      %v3653 = vld [vmem:[%s3651 + $0x8] sm:$0xff]
      %v3654 = vmul.f32 %v3072, %v3652
      %v3655 = vmul.f32 %v3070, %v3653
      %3658 = vrot.lane.b32.xlu0 %v3654, 64
      %v3659 = vpop.permute.xlu0 %3658
      %3660 = vrot.lane.b32.xlu0 %v3655, 64
      %v3661 = vpop.permute.xlu0 %3660
      %v3664 = vadd.f32 %v3616, %v3659
      %v3665 = vadd.f32 %v3617, %v3661
      %s3666 = scalar_lea.vmem %s3, 656
      %v3667 = vld [vmem:[%s3666] sm:$0xff]
      %v3668 = vld [vmem:[%s3666 + $0x8] sm:$0xff]
      %v3669 = vmul.f32 %v3575, %v3667
      %v3670 = vmul.f32 %v3574, %v3668
      %v3671 = vadd.f32 %v3627, %v3669
      %v3672 = vadd.f32 %v3628, %v3670
      %s3673 = scalar_lea.vmem %s3, 672
      %v3674 = vld [vmem:[%s3673] sm:$0xff]
      %v3675 = vld [vmem:[%s3673 + $0x8] sm:$0xff]
      %v3676 = vmul.f32 %v3584, %v3674
      %v3677 = vmul.f32 %v3583, %v3675
      %v3678 = vadd.f32 %v3638, %v3676
      %v3679 = vadd.f32 %v3639, %v3677
      %s3680 = scalar_lea.vmem %s3, 688
      %v3681 = vld [vmem:[%s3680] sm:$0xff]
      %v3682 = vld [vmem:[%s3680 + $0x8] sm:$0xff]
      %v3683 = vmul.f32 %v3593, %v3681
      %v3684 = vmul.f32 %v3592, %v3682
      %v3685 = vadd.f32 %v3649, %v3683
      %v3686 = vadd.f32 %v3650, %v3684
      %s3687 = scalar_lea.vmem %s3, 704
      %v3688 = vld [vmem:[%s3687] sm:$0xff]
      %v3689 = vld [vmem:[%s3687 + $0x8] sm:$0xff]
      %v3690 = vmul.f32 %v3602, %v3688
      %v3691 = vmul.f32 %v3601, %v3689
      %3694 = vrot.lane.b32.xlu0 %v3690, 64
      %v3695 = vpop.permute.xlu0 %3694
      %3696 = vrot.lane.b32.xlu0 %v3691, 64
      %v3697 = vpop.permute.xlu0 %3696
      %v3700 = vadd.f32 %v3664, %v3695
      %v3701 = vadd.f32 %v3665, %v3697
      %s3702 = scalar_lea.vmem %s3, 720
      %v3703 = vld [vmem:[%s3702] sm:$0xff]
      %v3704 = vld [vmem:[%s3702 + $0x8] sm:$0xff]
      %v3705 = vmul.f32 %v3621, %v3703
      %v3706 = vmul.f32 %v3620, %v3704
      %v3707 = vadd.f32 %v3671, %v3705
      %v3708 = vadd.f32 %v3672, %v3706
      %s3709 = scalar_lea.vmem %s3, 736
      %v3710 = vld [vmem:[%s3709] sm:$0xff]
      %v3711 = vld [vmem:[%s3709 + $0x8] sm:$0xff]
      %v3712 = vmul.f32 %v3632, %v3710
      %v3713 = vmul.f32 %v3631, %v3711
      %v3714 = vadd.f32 %v3678, %v3712
      %v3715 = vadd.f32 %v3679, %v3713
      %s3716 = scalar_lea.vmem %s3, 752
      %v3717 = vld [vmem:[%s3716] sm:$0xff]
      %v3718 = vld [vmem:[%s3716 + $0x8] sm:$0xff]
      %v3719 = vmul.f32 %v3643, %v3717
      %v3720 = vmul.f32 %v3642, %v3718
      %v3721 = vadd.f32 %v3685, %v3719
      %v3722 = vadd.f32 %v3686, %v3720
      %3725 = vrot.lane.b32.xlu0 %v3707, 64
      %v3726 = vpop.permute.xlu0 %3725
      %3727 = vrot.lane.b32.xlu0 %v3708, 64
      %v3728 = vpop.permute.xlu0 %3727
      %v3731 = vadd.f32 %v3700, %v3726
      %v3732 = vadd.f32 %v3701, %v3728
      %3735 = vrot.lane.b32.xlu0 %v3714, 64
      %v3736 = vpop.permute.xlu0 %3735
      %3737 = vrot.lane.b32.xlu0 %v3715, 64
      %v3738 = vpop.permute.xlu0 %3737
      %v3741 = vadd.f32 %v3731, %v3736
      %v3742 = vadd.f32 %v3732, %v3738
      %3745 = vrot.lane.b32.xlu0 %v3721, 64
      %v3746 = vpop.permute.xlu0 %3745
      %3747 = vrot.lane.b32.xlu0 %v3722, 64
      %v3748 = vpop.permute.xlu0 %3747
      %v3751 = vadd.f32 %v3741, %v3746
      %v3752 = vadd.f32 %v3742, %v3748
      %v3754 = vlaneseq
      %v3755 = vshrl.u32 %v3754, 7
      %v3756 = vsub.s32 0, %v3755
      %v3757 = vrot.slane %v3547, %v3756
      %3758 = vrot.lane.b32.xlu0 %v3757, 64
      %v3759 = vpop.permute.xlu0 %3758
      %v3761 = vadd.f32 %v3751, %v3759
      %v3762 = vadd.f32 %v3752, %v3759
      %3765 = vrot.lane.b32.xlu0 %v3761, 64
      %v3766 = vpop.permute.xlu0 %3765
      %3767 = vrot.lane.b32.xlu0 %v3762, 64
      %v3768 = vpop.permute.xlu0 %3767
      %v3771 = vsel %vm721, %v3766, 0.0
      %v3772 = vsel %vm721, %v3768, 0.0
      %v3773 = vadd.f32 %v3771, %v3772
      %3774 = vadd.xlane.f32.xlu0 %v3773
      %v3775 = vpop.xlane.xlu0 %3774
      %v3776 = vrot.slane %v3775, 4
      %v3777 = vadd.f32 %v3775, %v3776
      %v3778 = vrot.slane %v3777, 2
      %v3779 = vadd.f32 %v3777, %v3778
      %v3780 = vrot.slane %v3779, 1
      %v3781 = vadd.f32 %v3779, %v3780
      %s3782 = vtos %v3781
      %s3783 = smul.f32 %s3782, 0.0078125
      %v3784 = vmul.f32 %v3761, %v3761
      %v3785 = vmul.f32 %v3762, %v3762
      %3788 = vrot.lane.b32.xlu0 %v3784, 64
      %v3789 = vpop.permute.xlu0 %3788
      %3790 = vrot.lane.b32.xlu0 %v3785, 64
      %v3791 = vpop.permute.xlu0 %3790
      %v3794 = vsel %vm721, %v3789, 0.0
      %v3795 = vsel %vm721, %v3791, 0.0
      %v3796 = vadd.f32 %v3794, %v3795
      %3797 = vadd.xlane.f32.xlu0 %v3796
      %v3798 = vpop.xlane.xlu0 %3797
      %v3799 = vrot.slane %v3798, 4
      %v3800 = vadd.f32 %v3798, %v3799
      %v3801 = vrot.slane %v3800, 2
      %v3802 = vadd.f32 %v3800, %v3801
      %v3803 = vrot.slane %v3802, 1
      %v3804 = vadd.f32 %v3802, %v3803
      %s3805 = vtos %v3804
      %s3806 = smul.f32 %s3805, 0.0078125
      %s3807 = smul.f32 %s3783, %s3783
      %s3808 = ssub.f32 %s3806, %s3807
      %s3809 = smax.f32 %s3808, 0.0
      %v3810 = vstv %s3783
      %v3811 = vsub.f32 %v3761, %v3810
      %v3812 = vsub.f32 %v3762, %v3810
      %s3813 = sadd.f32 %s3809, 1e-05
      %v3814 = vstv %s3813
      %v3815 = vrsqrt.pop %v3814
      %s3816 = vtos %v3815
      %v3817 = vstv %s3816
      %v3818 = vmul.f32 %v3811, %v3817
      %v3819 = vmul.f32 %v3812, %v3817
      %3820 = vrot.lane.b32.xlu0 %v3761, 56
      %v3821 = vpop.permute.xlu0 %3820
      %3822 = vrot.lane.b32.xlu0 %v3762, 56
      %v3823 = vpop.permute.xlu0 %3822
      %v3826 = vsel %vm721, %v3821, 0.0
      %v3827 = vsel %vm721, %v3823, 0.0
      %v3828 = vadd.f32 %v3826, %v3827
      %3829 = vadd.xlane.f32.xlu0 %v3828
      %v3830 = vpop.xlane.xlu0 %3829
      %v3831 = vrot.slane %v3830, 4
      %v3832 = vadd.f32 %v3830, %v3831
      %v3833 = vrot.slane %v3832, 2
      %v3834 = vadd.f32 %v3832, %v3833
      %v3835 = vrot.slane %v3834, 1
      %v3836 = vadd.f32 %v3834, %v3835
      %s3837 = vtos %v3836
      %s3838 = smul.f32 %s3837, 0.0078125
      %3839 = vrot.lane.b32.xlu0 %v3784, 56
      %v3840 = vpop.permute.xlu0 %3839
      %3841 = vrot.lane.b32.xlu0 %v3785, 56
      %v3842 = vpop.permute.xlu0 %3841
      %v3845 = vsel %vm721, %v3840, 0.0
      %v3846 = vsel %vm721, %v3842, 0.0
      %v3847 = vadd.f32 %v3845, %v3846
      %3848 = vadd.xlane.f32.xlu0 %v3847
      %v3849 = vpop.xlane.xlu0 %3848
      %v3850 = vrot.slane %v3849, 4
      %v3851 = vadd.f32 %v3849, %v3850
      %v3852 = vrot.slane %v3851, 2
      %v3853 = vadd.f32 %v3851, %v3852
      %v3854 = vrot.slane %v3853, 1
      %v3855 = vadd.f32 %v3853, %v3854
      %s3856 = vtos %v3855
      %s3857 = smul.f32 %s3856, 0.0078125
      %s3858 = smul.f32 %s3838, %s3838
      %s3859 = ssub.f32 %s3857, %s3858
      %s3860 = smax.f32 %s3859, 0.0
      %v3861 = vstv %s3838
      %v3862 = vsub.f32 %v3761, %v3861
      %v3863 = vsub.f32 %v3762, %v3861
      %s3864 = sadd.f32 %s3860, 1e-05
      %v3865 = vstv %s3864
      %v3866 = vrsqrt.pop %v3865
      %s3867 = vtos %v3866
      %v3868 = vstv %s3867
      %v3869 = vmul.f32 %v3862, %v3868
      %v3870 = vmul.f32 %v3863, %v3868
      %3871 = vrot.lane.b32.xlu0 %v3761, 48
      %v3872 = vpop.permute.xlu0 %3871
      %3873 = vrot.lane.b32.xlu0 %v3762, 48
      %v3874 = vpop.permute.xlu0 %3873
      %v3877 = vsel %vm721, %v3872, 0.0
      %v3878 = vsel %vm721, %v3874, 0.0
      %v3879 = vadd.f32 %v3877, %v3878
      %3880 = vadd.xlane.f32.xlu0 %v3879
      %v3881 = vpop.xlane.xlu0 %3880
      %v3882 = vrot.slane %v3881, 4
      %v3883 = vadd.f32 %v3881, %v3882
      %v3884 = vrot.slane %v3883, 2
      %v3885 = vadd.f32 %v3883, %v3884
      %v3886 = vrot.slane %v3885, 1
      %v3887 = vadd.f32 %v3885, %v3886
      %s3888 = vtos %v3887
      %s3889 = smul.f32 %s3888, 0.0078125
      %3890 = vrot.lane.b32.xlu0 %v3784, 48
      %v3891 = vpop.permute.xlu0 %3890
      %3892 = vrot.lane.b32.xlu0 %v3785, 48
      %v3893 = vpop.permute.xlu0 %3892
      %v3896 = vsel %vm721, %v3891, 0.0
      %v3897 = vsel %vm721, %v3893, 0.0
      %v3898 = vadd.f32 %v3896, %v3897
      %3899 = vadd.xlane.f32.xlu0 %v3898
      %v3900 = vpop.xlane.xlu0 %3899
      %v3901 = vrot.slane %v3900, 4
      %v3902 = vadd.f32 %v3900, %v3901
      %v3903 = vrot.slane %v3902, 2
      %v3904 = vadd.f32 %v3902, %v3903
      %v3905 = vrot.slane %v3904, 1
      %v3906 = vadd.f32 %v3904, %v3905
      %s3907 = vtos %v3906
      %s3908 = smul.f32 %s3907, 0.0078125
      %s3909 = smul.f32 %s3889, %s3889
      %s3910 = ssub.f32 %s3908, %s3909
      %s3911 = smax.f32 %s3910, 0.0
      %v3912 = vstv %s3889
      %v3913 = vsub.f32 %v3761, %v3912
      %v3914 = vsub.f32 %v3762, %v3912
      %s3915 = sadd.f32 %s3911, 1e-05
      %v3916 = vstv %s3915
      %v3917 = vrsqrt.pop %v3916
      %s3918 = vtos %v3917
      %v3919 = vstv %s3918
      %v3920 = vmul.f32 %v3913, %v3919
      %v3921 = vmul.f32 %v3914, %v3919
      %3922 = vrot.lane.b32.xlu0 %v3761, 40
      %v3923 = vpop.permute.xlu0 %3922
      %3924 = vrot.lane.b32.xlu0 %v3762, 40
      %v3925 = vpop.permute.xlu0 %3924
      %v3928 = vsel %vm721, %v3923, 0.0
      %v3929 = vsel %vm721, %v3925, 0.0
      %v3930 = vadd.f32 %v3928, %v3929
      %3931 = vadd.xlane.f32.xlu0 %v3930
      %v3932 = vpop.xlane.xlu0 %3931
      %v3933 = vrot.slane %v3932, 4
      %v3934 = vadd.f32 %v3932, %v3933
      %v3935 = vrot.slane %v3934, 2
      %v3936 = vadd.f32 %v3934, %v3935
      %v3937 = vrot.slane %v3936, 1
      %v3938 = vadd.f32 %v3936, %v3937
      %s3939 = vtos %v3938
      %s3940 = smul.f32 %s3939, 0.0078125
      %3941 = vrot.lane.b32.xlu0 %v3784, 40
      %v3942 = vpop.permute.xlu0 %3941
      %3943 = vrot.lane.b32.xlu0 %v3785, 40
      %v3944 = vpop.permute.xlu0 %3943
      %v3947 = vsel %vm721, %v3942, 0.0
      %v3948 = vsel %vm721, %v3944, 0.0
      %v3949 = vadd.f32 %v3947, %v3948
      %3950 = vadd.xlane.f32.xlu0 %v3949
      %v3951 = vpop.xlane.xlu0 %3950
      %v3952 = vrot.slane %v3951, 4
      %v3953 = vadd.f32 %v3951, %v3952
      %v3954 = vrot.slane %v3953, 2
      %v3955 = vadd.f32 %v3953, %v3954
      %v3956 = vrot.slane %v3955, 1
      %v3957 = vadd.f32 %v3955, %v3956
      %s3958 = vtos %v3957
      %s3959 = smul.f32 %s3958, 0.0078125
      %s3960 = smul.f32 %s3940, %s3940
      %s3961 = ssub.f32 %s3959, %s3960
      %s3962 = smax.f32 %s3961, 0.0
      %v3963 = vstv %s3940
      %v3964 = vsub.f32 %v3761, %v3963
      %v3965 = vsub.f32 %v3762, %v3963
      %s3966 = sadd.f32 %s3962, 1e-05
      %v3967 = vstv %s3966
      %v3968 = vrsqrt.pop %v3967
      %s3969 = vtos %v3968
      %v3970 = vstv %s3969
      %v3971 = vmul.f32 %v3964, %v3970
      %v3972 = vmul.f32 %v3965, %v3970
      %3975 = vrot.lane.b32.xlu0 %v3818, 64
      %v3976 = vpop.permute.xlu0 %3975
      %3977 = vrot.lane.b32.xlu0 %v3819, 64
      %v3978 = vpop.permute.xlu0 %3977
      %3983 = vrot.lane.b32.xlu0 %v3869, 64
      %v3984 = vpop.permute.xlu0 %3983
      %3985 = vrot.lane.b32.xlu0 %v3870, 64
      %v3986 = vpop.permute.xlu0 %3985
      %3991 = vrot.lane.b32.xlu0 %v3920, 64
      %v3992 = vpop.permute.xlu0 %3991
      %3993 = vrot.lane.b32.xlu0 %v3921, 64
      %v3994 = vpop.permute.xlu0 %3993
      %3999 = vrot.lane.b32.xlu0 %v3971, 64
      %v4000 = vpop.permute.xlu0 %3999
      %4001 = vrot.lane.b32.xlu0 %v3972, 64
      %v4002 = vpop.permute.xlu0 %4001
      %v4005 = vsel %vm721, %v3976, %v3984
      %v4006 = vsel %vm721, %v3978, %v3986
      %v4007 = vsel %vm922, %v4005, %v3992
      %v4008 = vsel %vm922, %v4006, %v3994
      %v4009 = vsel %vm925, %v4007, %v4000
      %v4010 = vsel %vm925, %v4008, %v4002
      %v4011 = vpack.c.bf16 %v4010, %v4009
      %v4013 = vlaneseq
      %v4014 = vshrl.u32 %v4013, 7
      %v4015 = vsub.s32 0, %v4014
      %v4016 = vrot.slane %v3554, %v4015
      %v4022 = vunpack.c.l.b16 %v3549
      %v4023 = vunpack.c.l.b16 %v3550
      %v4024 = vunpack.c.l.b16 %v3551
      %v4025 = vunpack.c.l.b16 %v3552
      %v4026 = vpack.c.b16 %v4023, %v4022
      %v4027 = vpack.c.b16 %v4025, %v4024
      %v4031 = vsel %vm947, %v4011, 0
      %4033 = vmatprep.subr.bf16.mxu0 0
      %4034 = vmatpush1.bf16.msra.mxu0 %v4026
      %4035 = vmatprep.subr.bf16.mxu0 0
      %4036 = vmatpush1.bf16.msra.mxu0 %v4027
      %4037 = vmatprep.subr.bf16.mxu0 0
      %4038 = vmatpush1.bf16.msra.mxu0 0
      %4039 = vmatprep.subr.bf16.mxu0 0
      %4040 = vmatpush1.bf16.msra.mxu0 0
      %4041 = vmatprep.subr.bf16.mxu0 0
      %4042 = vmatpush1.bf16.msra.mxu0 0
      %4043 = vmatprep.subr.bf16.mxu0 0
      %4044 = vmatpush1.bf16.msra.mxu0 0
      %4045 = vmatprep.subr.bf16.mxu0 0
      %4046 = vmatpush1.bf16.msra.mxu0 0
      %4047 = vmatprep.subr.bf16.mxu0 0
      %4048 = vmatpush1.bf16.msra.mxu0 0
      %4049 = vmatprep.subr.bf16.mxu0 0
      %4050 = vmatpush1.bf16.msra.mxu0 0
      %4051 = vmatprep.subr.bf16.mxu0 0
      %4052 = vmatpush1.bf16.msra.mxu0 0
      %4053 = vmatprep.subr.bf16.mxu0 0
      %4054 = vmatpush1.bf16.msra.mxu0 0
      %4055 = vmatprep.subr.bf16.mxu0 0
      %4056 = vmatpush1.bf16.msra.mxu0 0
      %4057 = vmatprep.subr.bf16.mxu0 0
      %4058 = vmatpush1.bf16.msra.mxu0 0
      %4059 = vmatprep.subr.bf16.mxu0 0
      %4060 = vmatpush1.bf16.msra.mxu0 0
      %4061 = vmatprep.subr.bf16.mxu0 0
      %4062 = vmatpush1.bf16.msra.mxu0 0
      %4063 = vmatprep.subr.bf16.mxu0 0
      %4064 = vmatpush1.bf16.msra.mxu0 0
      %4065 = vmatprep.mubr.bf16.mxu0 0
      %4066 = vmatmul.mubr.bf16.gmra.mrb[0].mxu0 %v4031
      %v4067 = vpop.f32.mrb[0].mxu0
      %v4068 = vadd.f32 %v4016, %v4067
      %v4069 = vpop.f32.mrb[0].mxu0
      %v4070 = vpop.f32.mrb[0].mxu0
      %v4071 = vadd.f32 %v4016, %v4070
      %v4072 = vpop.f32.mrb[0].mxu0
      %4073 = vdwg.mxu0
      %v4074 = vtanh.pop %v4068
      %v4075 = vtanh.pop %v4071
      %v4076 = vadd.f32 %v4074, 1.0
      %v4077 = vadd.f32 %v4075, 1.0
      %v4078 = vmul.f32 %v4076, %v2975
      %v4079 = vmul.f32 %v4077, %v2976
      %4082 = vrot.lane.b32.xlu0 %v4074, 32
      %v4083 = vpop.permute.xlu0 %4082
      %4084 = vrot.lane.b32.xlu0 %v4075, 32
      %v4085 = vpop.permute.xlu0 %4084
      %v4088 = vmul.f32 %v4076, %v4083
      %v4089 = vmul.f32 %v4077, %v4085
      %4092 = vrot.lane.b32.xlu0 %v4088, 32
      %v4093 = vpop.permute.xlu0 %4092
      %4094 = vrot.lane.b32.xlu0 %v4089, 32
      %v4095 = vpop.permute.xlu0 %4094
      %v4098 = vadd.f32 %v4078, %v4093
      %v4099 = vadd.f32 %v4079, %v4095
      %v4100 = vmul.f32 %v4098, 0.5
      %v4101 = vmul.f32 %v4099, 0.5
      %4104 = vrot.lane.b32.xlu0 %v4100, 96
      %v4105 = vpop.permute.xlu0 %4104
      %4106 = vrot.lane.b32.xlu0 %v4101, 96
      %v4107 = vpop.permute.xlu0 %4106
      %v4110 = vsel %vm947, %v4105, 0.0
      %v4111 = vsel %vm947, %v4107, 0.0
      %v4112 = vadd.f32 %v4110, %v4111
      %4113 = vadd.xlane.f32.xlu0 %v4112
      %v4114 = vpop.xlane.xlu0 %4113
      %v4115 = vrot.slane %v4114, 4
      %v4116 = vadd.f32 %v4114, %v4115
      %v4117 = vrot.slane %v4116, 2
      %v4118 = vadd.f32 %v4116, %v4117
      %v4119 = vrot.slane %v4118, 1
      %v4120 = vadd.f32 %v4118, %v4119
      %s4121 = vtos %v4120
      %s4122 = smul.f32 %s4121, 0.001953125
      %v4123 = vmul.f32 %v4100, %v4100
      %v4124 = vmul.f32 %v4101, %v4101
      %4127 = vrot.lane.b32.xlu0 %v4123, 96
      %v4128 = vpop.permute.xlu0 %4127
      %4129 = vrot.lane.b32.xlu0 %v4124, 96
      %v4130 = vpop.permute.xlu0 %4129
      %v4133 = vsel %vm947, %v4128, 0.0
      %v4134 = vsel %vm947, %v4130, 0.0
      %v4135 = vadd.f32 %v4133, %v4134
      %4136 = vadd.xlane.f32.xlu0 %v4135
      %v4137 = vpop.xlane.xlu0 %4136
      %v4138 = vrot.slane %v4137, 4
      %v4139 = vadd.f32 %v4137, %v4138
      %v4140 = vrot.slane %v4139, 2
      %v4141 = vadd.f32 %v4139, %v4140
      %v4142 = vrot.slane %v4141, 1
      %v4143 = vadd.f32 %v4141, %v4142
      %s4144 = vtos %v4143
      %s4145 = smul.f32 %s4144, 0.001953125
      %s4146 = smul.f32 %s4122, %s4122
      %s4147 = ssub.f32 %s4145, %s4146
      %s4148 = smax.f32 %s4147, 0.0
      %s4149 = sadd.f32 %s4148, 1e-05
      %v4150 = vstv %s4149
      %v4151 = vrsqrt.pop %v4150
      %s4152 = vtos %v4151
      %v4153 = vstv %s4152
      %v4154 = vmul.f32 %v3556, %v4153
      %v4155 = vstv %s4122
      %v4156 = vmul.f32 %v4155, %v4154
      %v4157 = vsub.f32 %v3558, %v4156
      %v4158 = vmul.f32 %v4076, 0.5
      %v4159 = vmul.f32 %v4077, 0.5
      %v4161 = vlaneseq
      %v4162 = vshrl.u32 %v4161, 7
      %v4163 = vsub.s32 0, %v4162
      %v4164 = vrot.slane %v4154, %v4163
      %4165 = vrot.lane.b32.xlu0 %v4164, 32
      %v4166 = vpop.permute.xlu0 %4165
      %v4168 = vmul.f32 %v4100, %v4166
      %v4169 = vmul.f32 %v4101, %v4166
      %v4171 = vlaneseq
      %v4172 = vshrl.u32 %v4171, 7
      %v4173 = vsub.s32 0, %v4172
      %v4174 = vrot.slane %v4157, %v4173
      %4175 = vrot.lane.b32.xlu0 %v4174, 32
      %v4176 = vpop.permute.xlu0 %4175
      %v4178 = vadd.f32 %v4168, %v4176
      %v4179 = vadd.f32 %v4169, %v4176
      %v4180 = vtanh.pop %v4178
      %v4181 = vtanh.pop %v4179
      %4184 = vrot.lane.b32.xlu0 %v4180, 32
      %v4185 = vpop.permute.xlu0 %4184
      %4186 = vrot.lane.b32.xlu0 %v4181, 32
      %v4187 = vpop.permute.xlu0 %4186
      %v4190 = vmul.f32 %v4158, %v4185
      %v4191 = vmul.f32 %v4159, %v4187
      %s4192 = scalar_lea.vmem %s4, 3
      %v4193 = vld [vmem:[%s4192] sm:$0x1]
      %s4194 = scalar_lea.vmem %s5, 48
      %v4195 = vld [vmem:[%s4194] sm:$0xf]
      %v4196 = vld [vmem:[%s4194 + $0x4] sm:$0xf]
      %v4197 = vld [vmem:[%s4194 + $0x8] sm:$0xf]
      %v4198 = vld [vmem:[%s4194 + $0xc] sm:$0xf]
      %s4199 = scalar_lea.vmem %s6, 3
      %v4200 = vld [vmem:[%s4199] sm:$0x1]
      %s4201 = scalar_lea.vmem %s7, 3
      %v4202 = vld [vmem:[%s4201] sm:$0x1]
      %s4203 = scalar_lea.vmem %s8, 3
      %v4204 = vld [vmem:[%s4203] sm:$0x1]
      %v4205 = vadd.f32 %v4190, %v3544
      %v4206 = vadd.f32 %v4191, %v3545
      %s4207 = scalar_lea.vmem %s3, 768
      %v4208 = vld [vmem:[%s4207] sm:$0xff]
      %v4209 = vld [vmem:[%s4207 + $0x8] sm:$0xff]
      %4212 = vrot.lane.b32.xlu0 %v4208, 64
      %v4213 = vpop.permute.xlu0 %4212
      %4214 = vrot.lane.b32.xlu0 %v4209, 64
      %v4215 = vpop.permute.xlu0 %4214
      %v4218 = vmul.f32 %v4205, %v4213
      %v4219 = vmul.f32 %v4206, %v4215
      %4222 = vrot.lane.b32.xlu0 %v4205, 64
      %v4223 = vpop.permute.xlu0 %4222
      %4224 = vrot.lane.b32.xlu0 %v4206, 64
      %v4225 = vpop.permute.xlu0 %4224
      %v4228 = vrot.slane %v4223, 1
      %v4229 = vrot.slane %v4225, 1
      %v4230 = vsel %vm575, %v4228, %v4229
      %v4231 = vsel %vm575, %v4229, %v4228
      %s4232 = scalar_lea.vmem %s3, 784
      %v4233 = vld [vmem:[%s4232] sm:$0xff]
      %v4234 = vld [vmem:[%s4232 + $0x8] sm:$0xff]
      %v4235 = vmul.f32 %v4230, %v4233
      %v4236 = vmul.f32 %v4231, %v4234
      %v4237 = vrot.slane %v4223, 2
      %v4238 = vrot.slane %v4225, 2
      %v4239 = vsel %vm585, %v4237, %v4238
      %v4240 = vsel %vm585, %v4238, %v4237
      %s4241 = scalar_lea.vmem %s3, 800
      %v4242 = vld [vmem:[%s4241] sm:$0xff]
      %v4243 = vld [vmem:[%s4241 + $0x8] sm:$0xff]
      %v4244 = vmul.f32 %v4239, %v4242
      %v4245 = vmul.f32 %v4240, %v4243
      %v4246 = vrot.slane %v4223, 3
      %v4247 = vrot.slane %v4225, 3
      %v4248 = vsel %vm595, %v4246, %v4247
      %v4249 = vsel %vm595, %v4247, %v4246
      %s4250 = scalar_lea.vmem %s3, 816
      %v4251 = vld [vmem:[%s4250] sm:$0xff]
      %v4252 = vld [vmem:[%s4250 + $0x8] sm:$0xff]
      %v4253 = vmul.f32 %v4248, %v4251
      %v4254 = vmul.f32 %v4249, %v4252
      %v4255 = vrot.slane %v4223, 4
      %v4256 = vrot.slane %v4225, 4
      %v4257 = vsel %vm605, %v4255, %v4256
      %v4258 = vsel %vm605, %v4256, %v4255
      %s4259 = scalar_lea.vmem %s3, 832
      %v4260 = vld [vmem:[%s4259] sm:$0xff]
      %v4261 = vld [vmem:[%s4259 + $0x8] sm:$0xff]
      %v4262 = vmul.f32 %v4257, %v4260
      %v4263 = vmul.f32 %v4258, %v4261
      %4266 = vrot.lane.b32.xlu0 %v4262, 64
      %v4267 = vpop.permute.xlu0 %4266
      %4268 = vrot.lane.b32.xlu0 %v4263, 64
      %v4269 = vpop.permute.xlu0 %4268
      %v4272 = vadd.f32 %v4218, %v4267
      %v4273 = vadd.f32 %v4219, %v4269
      %v4274 = vrot.slane %v4223, 5
      %v4275 = vrot.slane %v4225, 5
      %v4276 = vsel %vm617, %v4274, %v4275
      %v4277 = vsel %vm617, %v4275, %v4274
      %s4278 = scalar_lea.vmem %s3, 848
      %v4279 = vld [vmem:[%s4278] sm:$0xff]
      %v4280 = vld [vmem:[%s4278 + $0x8] sm:$0xff]
      %v4281 = vmul.f32 %v4276, %v4279
      %v4282 = vmul.f32 %v4277, %v4280
      %v4283 = vadd.f32 %v4235, %v4281
      %v4284 = vadd.f32 %v4236, %v4282
      %v4285 = vrot.slane %v4223, 6
      %v4286 = vrot.slane %v4225, 6
      %v4287 = vsel %vm629, %v4285, %v4286
      %v4288 = vsel %vm629, %v4286, %v4285
      %s4289 = scalar_lea.vmem %s3, 864
      %v4290 = vld [vmem:[%s4289] sm:$0xff]
      %v4291 = vld [vmem:[%s4289 + $0x8] sm:$0xff]
      %v4292 = vmul.f32 %v4287, %v4290
      %v4293 = vmul.f32 %v4288, %v4291
      %v4294 = vadd.f32 %v4244, %v4292
      %v4295 = vadd.f32 %v4245, %v4293
      %v4296 = vrot.slane %v4223, 7
      %v4297 = vrot.slane %v4225, 7
      %v4298 = vsel %vm641, %v4296, %v4297
      %v4299 = vsel %vm641, %v4297, %v4296
      %s4300 = scalar_lea.vmem %s3, 880
      %v4301 = vld [vmem:[%s4300] sm:$0xff]
      %v4302 = vld [vmem:[%s4300 + $0x8] sm:$0xff]
      %v4303 = vmul.f32 %v4298, %v4301
      %v4304 = vmul.f32 %v4299, %v4302
      %v4305 = vadd.f32 %v4253, %v4303
      %v4306 = vadd.f32 %v4254, %v4304
      %s4307 = scalar_lea.vmem %s3, 896
      %v4308 = vld [vmem:[%s4307] sm:$0xff]
      %v4309 = vld [vmem:[%s4307 + $0x8] sm:$0xff]
      %v4310 = vmul.f32 %v4225, %v4308
      %v4311 = vmul.f32 %v4223, %v4309
      %4314 = vrot.lane.b32.xlu0 %v4310, 64
      %v4315 = vpop.permute.xlu0 %4314
      %4316 = vrot.lane.b32.xlu0 %v4311, 64
      %v4317 = vpop.permute.xlu0 %4316
      %v4320 = vadd.f32 %v4272, %v4315
      %v4321 = vadd.f32 %v4273, %v4317
      %s4322 = scalar_lea.vmem %s3, 912
      %v4323 = vld [vmem:[%s4322] sm:$0xff]
      %v4324 = vld [vmem:[%s4322 + $0x8] sm:$0xff]
      %v4325 = vmul.f32 %v4231, %v4323
      %v4326 = vmul.f32 %v4230, %v4324
      %v4327 = vadd.f32 %v4283, %v4325
      %v4328 = vadd.f32 %v4284, %v4326
      %s4329 = scalar_lea.vmem %s3, 928
      %v4330 = vld [vmem:[%s4329] sm:$0xff]
      %v4331 = vld [vmem:[%s4329 + $0x8] sm:$0xff]
      %v4332 = vmul.f32 %v4240, %v4330
      %v4333 = vmul.f32 %v4239, %v4331
      %v4334 = vadd.f32 %v4294, %v4332
      %v4335 = vadd.f32 %v4295, %v4333
      %s4336 = scalar_lea.vmem %s3, 944
      %v4337 = vld [vmem:[%s4336] sm:$0xff]
      %v4338 = vld [vmem:[%s4336 + $0x8] sm:$0xff]
      %v4339 = vmul.f32 %v4249, %v4337
      %v4340 = vmul.f32 %v4248, %v4338
      %v4341 = vadd.f32 %v4305, %v4339
      %v4342 = vadd.f32 %v4306, %v4340
      %s4343 = scalar_lea.vmem %s3, 960
      %v4344 = vld [vmem:[%s4343] sm:$0xff]
      %v4345 = vld [vmem:[%s4343 + $0x8] sm:$0xff]
      %v4346 = vmul.f32 %v4258, %v4344
      %v4347 = vmul.f32 %v4257, %v4345
      %4350 = vrot.lane.b32.xlu0 %v4346, 64
      %v4351 = vpop.permute.xlu0 %4350
      %4352 = vrot.lane.b32.xlu0 %v4347, 64
      %v4353 = vpop.permute.xlu0 %4352
      %v4356 = vadd.f32 %v4320, %v4351
      %v4357 = vadd.f32 %v4321, %v4353
      %s4358 = scalar_lea.vmem %s3, 976
      %v4359 = vld [vmem:[%s4358] sm:$0xff]
      %v4360 = vld [vmem:[%s4358 + $0x8] sm:$0xff]
      %v4361 = vmul.f32 %v4277, %v4359
      %v4362 = vmul.f32 %v4276, %v4360
      %v4363 = vadd.f32 %v4327, %v4361
      %v4364 = vadd.f32 %v4328, %v4362
      %s4365 = scalar_lea.vmem %s3, 992
      %v4366 = vld [vmem:[%s4365] sm:$0xff]
      %v4367 = vld [vmem:[%s4365 + $0x8] sm:$0xff]
      %v4368 = vmul.f32 %v4288, %v4366
      %v4369 = vmul.f32 %v4287, %v4367
      %v4370 = vadd.f32 %v4334, %v4368
      %v4371 = vadd.f32 %v4335, %v4369
      %s4372 = scalar_lea.vmem %s3, 1008
      %v4373 = vld [vmem:[%s4372] sm:$0xff]
      %v4374 = vld [vmem:[%s4372 + $0x8] sm:$0xff]
      %v4375 = vmul.f32 %v4299, %v4373
      %v4376 = vmul.f32 %v4298, %v4374
      %v4377 = vadd.f32 %v4341, %v4375
      %v4378 = vadd.f32 %v4342, %v4376
      %4381 = vrot.lane.b32.xlu0 %v4363, 64
      %v4382 = vpop.permute.xlu0 %4381
      %4383 = vrot.lane.b32.xlu0 %v4364, 64
      %v4384 = vpop.permute.xlu0 %4383
      %v4387 = vadd.f32 %v4356, %v4382
      %v4388 = vadd.f32 %v4357, %v4384
      %4391 = vrot.lane.b32.xlu0 %v4370, 64
      %v4392 = vpop.permute.xlu0 %4391
      %4393 = vrot.lane.b32.xlu0 %v4371, 64
      %v4394 = vpop.permute.xlu0 %4393
      %v4397 = vadd.f32 %v4387, %v4392
      %v4398 = vadd.f32 %v4388, %v4394
      %4401 = vrot.lane.b32.xlu0 %v4377, 64
      %v4402 = vpop.permute.xlu0 %4401
      %4403 = vrot.lane.b32.xlu0 %v4378, 64
      %v4404 = vpop.permute.xlu0 %4403
      %v4407 = vadd.f32 %v4397, %v4402
      %v4408 = vadd.f32 %v4398, %v4404
      %v4410 = vlaneseq
      %v4411 = vshrl.u32 %v4410, 7
      %v4412 = vsub.s32 0, %v4411
      %v4413 = vrot.slane %v4193, %v4412
      %4414 = vrot.lane.b32.xlu0 %v4413, 64
      %v4415 = vpop.permute.xlu0 %4414
      %v4417 = vadd.f32 %v4407, %v4415
      %v4418 = vadd.f32 %v4408, %v4415
      %4421 = vrot.lane.b32.xlu0 %v4417, 64
      %v4422 = vpop.permute.xlu0 %4421
      %4423 = vrot.lane.b32.xlu0 %v4418, 64
      %v4424 = vpop.permute.xlu0 %4423
      %v4427 = vsel %vm721, %v4422, 0.0
      %v4428 = vsel %vm721, %v4424, 0.0
      %v4429 = vadd.f32 %v4427, %v4428
      %4430 = vadd.xlane.f32.xlu0 %v4429
      %v4431 = vpop.xlane.xlu0 %4430
      %v4432 = vrot.slane %v4431, 4
      %v4433 = vadd.f32 %v4431, %v4432
      %v4434 = vrot.slane %v4433, 2
      %v4435 = vadd.f32 %v4433, %v4434
      %v4436 = vrot.slane %v4435, 1
      %v4437 = vadd.f32 %v4435, %v4436
      %s4438 = vtos %v4437
      %s4439 = smul.f32 %s4438, 0.0078125
      %v4440 = vmul.f32 %v4417, %v4417
      %v4441 = vmul.f32 %v4418, %v4418
      %4444 = vrot.lane.b32.xlu0 %v4440, 64
      %v4445 = vpop.permute.xlu0 %4444
      %4446 = vrot.lane.b32.xlu0 %v4441, 64
      %v4447 = vpop.permute.xlu0 %4446
      %v4450 = vsel %vm721, %v4445, 0.0
      %v4451 = vsel %vm721, %v4447, 0.0
      %v4452 = vadd.f32 %v4450, %v4451
      %4453 = vadd.xlane.f32.xlu0 %v4452
      %v4454 = vpop.xlane.xlu0 %4453
      %v4455 = vrot.slane %v4454, 4
      %v4456 = vadd.f32 %v4454, %v4455
      %v4457 = vrot.slane %v4456, 2
      %v4458 = vadd.f32 %v4456, %v4457
      %v4459 = vrot.slane %v4458, 1
      %v4460 = vadd.f32 %v4458, %v4459
      %s4461 = vtos %v4460
      %s4462 = smul.f32 %s4461, 0.0078125
      %s4463 = smul.f32 %s4439, %s4439
      %s4464 = ssub.f32 %s4462, %s4463
      %s4465 = smax.f32 %s4464, 0.0
      %v4466 = vstv %s4439
      %v4467 = vsub.f32 %v4417, %v4466
      %v4468 = vsub.f32 %v4418, %v4466
      %s4469 = sadd.f32 %s4465, 1e-05
      %v4470 = vstv %s4469
      %v4471 = vrsqrt.pop %v4470
      %s4472 = vtos %v4471
      %v4473 = vstv %s4472
      %v4474 = vmul.f32 %v4467, %v4473
      %v4475 = vmul.f32 %v4468, %v4473
      %4476 = vrot.lane.b32.xlu0 %v4417, 56
      %v4477 = vpop.permute.xlu0 %4476
      %4478 = vrot.lane.b32.xlu0 %v4418, 56
      %v4479 = vpop.permute.xlu0 %4478
      %v4482 = vsel %vm721, %v4477, 0.0
      %v4483 = vsel %vm721, %v4479, 0.0
      %v4484 = vadd.f32 %v4482, %v4483
      %4485 = vadd.xlane.f32.xlu0 %v4484
      %v4486 = vpop.xlane.xlu0 %4485
      %v4487 = vrot.slane %v4486, 4
      %v4488 = vadd.f32 %v4486, %v4487
      %v4489 = vrot.slane %v4488, 2
      %v4490 = vadd.f32 %v4488, %v4489
      %v4491 = vrot.slane %v4490, 1
      %v4492 = vadd.f32 %v4490, %v4491
      %s4493 = vtos %v4492
      %s4494 = smul.f32 %s4493, 0.0078125
      %4495 = vrot.lane.b32.xlu0 %v4440, 56
      %v4496 = vpop.permute.xlu0 %4495
      %4497 = vrot.lane.b32.xlu0 %v4441, 56
      %v4498 = vpop.permute.xlu0 %4497
      %v4501 = vsel %vm721, %v4496, 0.0
      %v4502 = vsel %vm721, %v4498, 0.0
      %v4503 = vadd.f32 %v4501, %v4502
      %4504 = vadd.xlane.f32.xlu0 %v4503
      %v4505 = vpop.xlane.xlu0 %4504
      %v4506 = vrot.slane %v4505, 4
      %v4507 = vadd.f32 %v4505, %v4506
      %v4508 = vrot.slane %v4507, 2
      %v4509 = vadd.f32 %v4507, %v4508
      %v4510 = vrot.slane %v4509, 1
      %v4511 = vadd.f32 %v4509, %v4510
      %s4512 = vtos %v4511
      %s4513 = smul.f32 %s4512, 0.0078125
      %s4514 = smul.f32 %s4494, %s4494
      %s4515 = ssub.f32 %s4513, %s4514
      %s4516 = smax.f32 %s4515, 0.0
      %v4517 = vstv %s4494
      %v4518 = vsub.f32 %v4417, %v4517
      %v4519 = vsub.f32 %v4418, %v4517
      %s4520 = sadd.f32 %s4516, 1e-05
      %v4521 = vstv %s4520
      %v4522 = vrsqrt.pop %v4521
      %s4523 = vtos %v4522
      %v4524 = vstv %s4523
      %v4525 = vmul.f32 %v4518, %v4524
      %v4526 = vmul.f32 %v4519, %v4524
      %4527 = vrot.lane.b32.xlu0 %v4417, 48
      %v4528 = vpop.permute.xlu0 %4527
      %4529 = vrot.lane.b32.xlu0 %v4418, 48
      %v4530 = vpop.permute.xlu0 %4529
      %v4533 = vsel %vm721, %v4528, 0.0
      %v4534 = vsel %vm721, %v4530, 0.0
      %v4535 = vadd.f32 %v4533, %v4534
      %4536 = vadd.xlane.f32.xlu0 %v4535
      %v4537 = vpop.xlane.xlu0 %4536
      %v4538 = vrot.slane %v4537, 4
      %v4539 = vadd.f32 %v4537, %v4538
      %v4540 = vrot.slane %v4539, 2
      %v4541 = vadd.f32 %v4539, %v4540
      %v4542 = vrot.slane %v4541, 1
      %v4543 = vadd.f32 %v4541, %v4542
      %s4544 = vtos %v4543
      %s4545 = smul.f32 %s4544, 0.0078125
      %4546 = vrot.lane.b32.xlu0 %v4440, 48
      %v4547 = vpop.permute.xlu0 %4546
      %4548 = vrot.lane.b32.xlu0 %v4441, 48
      %v4549 = vpop.permute.xlu0 %4548
      %v4552 = vsel %vm721, %v4547, 0.0
      %v4553 = vsel %vm721, %v4549, 0.0
      %v4554 = vadd.f32 %v4552, %v4553
      %4555 = vadd.xlane.f32.xlu0 %v4554
      %v4556 = vpop.xlane.xlu0 %4555
      %v4557 = vrot.slane %v4556, 4
      %v4558 = vadd.f32 %v4556, %v4557
      %v4559 = vrot.slane %v4558, 2
      %v4560 = vadd.f32 %v4558, %v4559
      %v4561 = vrot.slane %v4560, 1
      %v4562 = vadd.f32 %v4560, %v4561
      %s4563 = vtos %v4562
      %s4564 = smul.f32 %s4563, 0.0078125
      %s4565 = smul.f32 %s4545, %s4545
      %s4566 = ssub.f32 %s4564, %s4565
      %s4567 = smax.f32 %s4566, 0.0
      %v4568 = vstv %s4545
      %v4569 = vsub.f32 %v4417, %v4568
      %v4570 = vsub.f32 %v4418, %v4568
      %s4571 = sadd.f32 %s4567, 1e-05
      %v4572 = vstv %s4571
      %v4573 = vrsqrt.pop %v4572
      %s4574 = vtos %v4573
      %v4575 = vstv %s4574
      %v4576 = vmul.f32 %v4569, %v4575
      %v4577 = vmul.f32 %v4570, %v4575
      %4578 = vrot.lane.b32.xlu0 %v4417, 40
      %v4579 = vpop.permute.xlu0 %4578
      %4580 = vrot.lane.b32.xlu0 %v4418, 40
      %v4581 = vpop.permute.xlu0 %4580
      %v4584 = vsel %vm721, %v4579, 0.0
      %v4585 = vsel %vm721, %v4581, 0.0
      %v4586 = vadd.f32 %v4584, %v4585
      %4587 = vadd.xlane.f32.xlu0 %v4586
      %v4588 = vpop.xlane.xlu0 %4587
      %v4589 = vrot.slane %v4588, 4
      %v4590 = vadd.f32 %v4588, %v4589
      %v4591 = vrot.slane %v4590, 2
      %v4592 = vadd.f32 %v4590, %v4591
      %v4593 = vrot.slane %v4592, 1
      %v4594 = vadd.f32 %v4592, %v4593
      %s4595 = vtos %v4594
      %s4596 = smul.f32 %s4595, 0.0078125
      %4597 = vrot.lane.b32.xlu0 %v4440, 40
      %v4598 = vpop.permute.xlu0 %4597
      %4599 = vrot.lane.b32.xlu0 %v4441, 40
      %v4600 = vpop.permute.xlu0 %4599
      %v4603 = vsel %vm721, %v4598, 0.0
      %v4604 = vsel %vm721, %v4600, 0.0
      %v4605 = vadd.f32 %v4603, %v4604
      %4606 = vadd.xlane.f32.xlu0 %v4605
      %v4607 = vpop.xlane.xlu0 %4606
      %v4608 = vrot.slane %v4607, 4
      %v4609 = vadd.f32 %v4607, %v4608
      %v4610 = vrot.slane %v4609, 2
      %v4611 = vadd.f32 %v4609, %v4610
      %v4612 = vrot.slane %v4611, 1
      %v4613 = vadd.f32 %v4611, %v4612
      %s4614 = vtos %v4613
      %s4615 = smul.f32 %s4614, 0.0078125
      %s4616 = smul.f32 %s4596, %s4596
      %s4617 = ssub.f32 %s4615, %s4616
      %s4618 = smax.f32 %s4617, 0.0
      %v4619 = vstv %s4596
      %v4620 = vsub.f32 %v4417, %v4619
      %v4621 = vsub.f32 %v4418, %v4619
      %s4622 = sadd.f32 %s4618, 1e-05
      %v4623 = vstv %s4622
      %v4624 = vrsqrt.pop %v4623
      %s4625 = vtos %v4624
      %v4626 = vstv %s4625
      %v4627 = vmul.f32 %v4620, %v4626
      %v4628 = vmul.f32 %v4621, %v4626
      %4631 = vrot.lane.b32.xlu0 %v4474, 64
      %v4632 = vpop.permute.xlu0 %4631
      %4633 = vrot.lane.b32.xlu0 %v4475, 64
      %v4634 = vpop.permute.xlu0 %4633
      %4639 = vrot.lane.b32.xlu0 %v4525, 64
      %v4640 = vpop.permute.xlu0 %4639
      %4641 = vrot.lane.b32.xlu0 %v4526, 64
      %v4642 = vpop.permute.xlu0 %4641
      %4647 = vrot.lane.b32.xlu0 %v4576, 64
      %v4648 = vpop.permute.xlu0 %4647
      %4649 = vrot.lane.b32.xlu0 %v4577, 64
      %v4650 = vpop.permute.xlu0 %4649
      %4655 = vrot.lane.b32.xlu0 %v4627, 64
      %v4656 = vpop.permute.xlu0 %4655
      %4657 = vrot.lane.b32.xlu0 %v4628, 64
      %v4658 = vpop.permute.xlu0 %4657
      %v4661 = vsel %vm721, %v4632, %v4640
      %v4662 = vsel %vm721, %v4634, %v4642
      %v4663 = vsel %vm922, %v4661, %v4648
      %v4664 = vsel %vm922, %v4662, %v4650
      %v4665 = vsel %vm925, %v4663, %v4656
      %v4666 = vsel %vm925, %v4664, %v4658
      %v4667 = vpack.c.bf16 %v4666, %v4665
      %v4669 = vlaneseq
      %v4670 = vshrl.u32 %v4669, 7
      %v4671 = vsub.s32 0, %v4670
      %v4672 = vrot.slane %v4200, %v4671
      %v4678 = vunpack.c.l.b16 %v4195
      %v4679 = vunpack.c.l.b16 %v4196
      %v4680 = vunpack.c.l.b16 %v4197
      %v4681 = vunpack.c.l.b16 %v4198
      %v4682 = vpack.c.b16 %v4679, %v4678
      %v4683 = vpack.c.b16 %v4681, %v4680
      %v4687 = vsel %vm947, %v4667, 0
      %4689 = vmatprep.subr.bf16.mxu0 0
      %4690 = vmatpush1.bf16.msra.mxu0 %v4682
      %4691 = vmatprep.subr.bf16.mxu0 0
      %4692 = vmatpush1.bf16.msra.mxu0 %v4683
      %4693 = vmatprep.subr.bf16.mxu0 0
      %4694 = vmatpush1.bf16.msra.mxu0 0
      %4695 = vmatprep.subr.bf16.mxu0 0
      %4696 = vmatpush1.bf16.msra.mxu0 0
      %4697 = vmatprep.subr.bf16.mxu0 0
      %4698 = vmatpush1.bf16.msra.mxu0 0
      %4699 = vmatprep.subr.bf16.mxu0 0
      %4700 = vmatpush1.bf16.msra.mxu0 0
      %4701 = vmatprep.subr.bf16.mxu0 0
      %4702 = vmatpush1.bf16.msra.mxu0 0
      %4703 = vmatprep.subr.bf16.mxu0 0
      %4704 = vmatpush1.bf16.msra.mxu0 0
      %4705 = vmatprep.subr.bf16.mxu0 0
      %4706 = vmatpush1.bf16.msra.mxu0 0
      %4707 = vmatprep.subr.bf16.mxu0 0
      %4708 = vmatpush1.bf16.msra.mxu0 0
      %4709 = vmatprep.subr.bf16.mxu0 0
      %4710 = vmatpush1.bf16.msra.mxu0 0
      %4711 = vmatprep.subr.bf16.mxu0 0
      %4712 = vmatpush1.bf16.msra.mxu0 0
      %4713 = vmatprep.subr.bf16.mxu0 0
      %4714 = vmatpush1.bf16.msra.mxu0 0
      %4715 = vmatprep.subr.bf16.mxu0 0
      %4716 = vmatpush1.bf16.msra.mxu0 0
      %4717 = vmatprep.subr.bf16.mxu0 0
      %4718 = vmatpush1.bf16.msra.mxu0 0
      %4719 = vmatprep.subr.bf16.mxu0 0
      %4720 = vmatpush1.bf16.msra.mxu0 0
      %4721 = vmatprep.mubr.bf16.mxu0 0
      %4722 = vmatmul.mubr.bf16.gmra.mrb[0].mxu0 %v4687
      %v4723 = vpop.f32.mrb[0].mxu0
      %v4724 = vadd.f32 %v4672, %v4723
      %v4725 = vpop.f32.mrb[0].mxu0
      %v4726 = vpop.f32.mrb[0].mxu0
      %v4727 = vadd.f32 %v4672, %v4726
      %v4728 = vpop.f32.mrb[0].mxu0
      %4729 = vdwg.mxu0
      %v4730 = vtanh.pop %v4724
      %v4731 = vtanh.pop %v4727
      %v4732 = vadd.f32 %v4730, 1.0
      %v4733 = vadd.f32 %v4731, 1.0
      %v4734 = vmul.f32 %v4732, %v3454
      %v4735 = vmul.f32 %v4733, %v3455
      %4738 = vrot.lane.b32.xlu0 %v4730, 32
      %v4739 = vpop.permute.xlu0 %4738
      %4740 = vrot.lane.b32.xlu0 %v4731, 32
      %v4741 = vpop.permute.xlu0 %4740
      %v4744 = vmul.f32 %v4732, %v4739
      %v4745 = vmul.f32 %v4733, %v4741
      %4748 = vrot.lane.b32.xlu0 %v4744, 32
      %v4749 = vpop.permute.xlu0 %4748
      %4750 = vrot.lane.b32.xlu0 %v4745, 32
      %v4751 = vpop.permute.xlu0 %4750
      %v4754 = vadd.f32 %v4734, %v4749
      %v4755 = vadd.f32 %v4735, %v4751
      %v4756 = vmul.f32 %v4754, 0.5
      %v4757 = vmul.f32 %v4755, 0.5
      %4760 = vrot.lane.b32.xlu0 %v4756, 96
      %v4761 = vpop.permute.xlu0 %4760
      %4762 = vrot.lane.b32.xlu0 %v4757, 96
      %v4763 = vpop.permute.xlu0 %4762
      %v4766 = vsel %vm947, %v4761, 0.0
      %v4767 = vsel %vm947, %v4763, 0.0
      %v4768 = vadd.f32 %v4766, %v4767
      %4769 = vadd.xlane.f32.xlu0 %v4768
      %v4770 = vpop.xlane.xlu0 %4769
      %v4771 = vrot.slane %v4770, 4
      %v4772 = vadd.f32 %v4770, %v4771
      %v4773 = vrot.slane %v4772, 2
      %v4774 = vadd.f32 %v4772, %v4773
      %v4775 = vrot.slane %v4774, 1
      %v4776 = vadd.f32 %v4774, %v4775
      %s4777 = vtos %v4776
      %s4778 = smul.f32 %s4777, 0.001953125
      %v4779 = vmul.f32 %v4756, %v4756
      %v4780 = vmul.f32 %v4757, %v4757
      %4783 = vrot.lane.b32.xlu0 %v4779, 96
      %v4784 = vpop.permute.xlu0 %4783
      %4785 = vrot.lane.b32.xlu0 %v4780, 96
      %v4786 = vpop.permute.xlu0 %4785
      %v4789 = vsel %vm947, %v4784, 0.0
      %v4790 = vsel %vm947, %v4786, 0.0
      %v4791 = vadd.f32 %v4789, %v4790
      %4792 = vadd.xlane.f32.xlu0 %v4791
      %v4793 = vpop.xlane.xlu0 %4792
      %v4794 = vrot.slane %v4793, 4
      %v4795 = vadd.f32 %v4793, %v4794
      %v4796 = vrot.slane %v4795, 2
      %v4797 = vadd.f32 %v4795, %v4796
      %v4798 = vrot.slane %v4797, 1
      %v4799 = vadd.f32 %v4797, %v4798
      %s4800 = vtos %v4799
      %s4801 = smul.f32 %s4800, 0.001953125
      %s4802 = smul.f32 %s4778, %s4778
      %s4803 = ssub.f32 %s4801, %s4802
      %s4804 = smax.f32 %s4803, 0.0
      %s4805 = sadd.f32 %s4804, 1e-05
      %v4806 = vstv %s4805
      %v4807 = vrsqrt.pop %v4806
      %s4808 = vtos %v4807
      %v4809 = vstv %s4808
      %v4810 = vmul.f32 %v4202, %v4809
      %v4811 = vstv %s4778
      %v4812 = vmul.f32 %v4811, %v4810
      %v4813 = vsub.f32 %v4204, %v4812
      %v4814 = vmul.f32 %v4732, 0.5
      %v4815 = vmul.f32 %v4733, 0.5
      %v4817 = vlaneseq
      %v4818 = vshrl.u32 %v4817, 7
      %v4819 = vsub.s32 0, %v4818
      %v4820 = vrot.slane %v4810, %v4819
      %4821 = vrot.lane.b32.xlu0 %v4820, 32
      %v4822 = vpop.permute.xlu0 %4821
      %v4824 = vmul.f32 %v4756, %v4822
      %v4825 = vmul.f32 %v4757, %v4822
      %v4827 = vlaneseq
      %v4828 = vshrl.u32 %v4827, 7
      %v4829 = vsub.s32 0, %v4828
      %v4830 = vrot.slane %v4813, %v4829
      %4831 = vrot.lane.b32.xlu0 %v4830, 32
      %v4832 = vpop.permute.xlu0 %4831
      %v4834 = vadd.f32 %v4824, %v4832
      %v4835 = vadd.f32 %v4825, %v4832
      %v4836 = vtanh.pop %v4834
      %v4837 = vtanh.pop %v4835
      %4840 = vrot.lane.b32.xlu0 %v4836, 32
      %v4841 = vpop.permute.xlu0 %4840
      %4842 = vrot.lane.b32.xlu0 %v4837, 32
      %v4843 = vpop.permute.xlu0 %4842
      %v4846 = vmul.f32 %v4814, %v4841
      %v4847 = vmul.f32 %v4815, %v4843
      %v4848 = vadd.f32 %v4190, %v4846
      %v4849 = vadd.f32 %v4191, %v4847
      %v4850 = vmul.f32 %v4190, %v3565
      %v4851 = vmul.f32 %v4191, %v3567
      %4854 = vrot.lane.b32.xlu0 %v4190, 64
      %v4855 = vpop.permute.xlu0 %4854
      %4856 = vrot.lane.b32.xlu0 %v4191, 64
      %v4857 = vpop.permute.xlu0 %4856
      %v4860 = vrot.slane %v4855, 1
      %v4861 = vrot.slane %v4857, 1
      %v4862 = vsel %vm575, %v4860, %v4861
      %v4863 = vsel %vm575, %v4861, %v4860
      %v4864 = vmul.f32 %v4862, %v3577
      %v4865 = vmul.f32 %v4863, %v3578
      %v4866 = vrot.slane %v4855, 2
      %v4867 = vrot.slane %v4857, 2
      %v4868 = vsel %vm585, %v4866, %v4867
      %v4869 = vsel %vm585, %v4867, %v4866
      %v4870 = vmul.f32 %v4868, %v3586
      %v4871 = vmul.f32 %v4869, %v3587
      %v4872 = vrot.slane %v4855, 3
      %v4873 = vrot.slane %v4857, 3
      %v4874 = vsel %vm595, %v4872, %v4873
      %v4875 = vsel %vm595, %v4873, %v4872
      %v4876 = vmul.f32 %v4874, %v3595
      %v4877 = vmul.f32 %v4875, %v3596
      %v4878 = vrot.slane %v4855, 4
      %v4879 = vrot.slane %v4857, 4
      %v4880 = vsel %vm605, %v4878, %v4879
      %v4881 = vsel %vm605, %v4879, %v4878
      %v4882 = vmul.f32 %v4880, %v3604
      %v4883 = vmul.f32 %v4881, %v3605
      %4886 = vrot.lane.b32.xlu0 %v4882, 64
      %v4887 = vpop.permute.xlu0 %4886
      %4888 = vrot.lane.b32.xlu0 %v4883, 64
      %v4889 = vpop.permute.xlu0 %4888
      %v4892 = vadd.f32 %v4850, %v4887
      %v4893 = vadd.f32 %v4851, %v4889
      %v4894 = vrot.slane %v4855, 5
      %v4895 = vrot.slane %v4857, 5
      %v4896 = vsel %vm617, %v4894, %v4895
      %v4897 = vsel %vm617, %v4895, %v4894
      %v4898 = vmul.f32 %v4896, %v3623
      %v4899 = vmul.f32 %v4897, %v3624
      %v4900 = vadd.f32 %v4864, %v4898
      %v4901 = vadd.f32 %v4865, %v4899
      %v4902 = vrot.slane %v4855, 6
      %v4903 = vrot.slane %v4857, 6
      %v4904 = vsel %vm629, %v4902, %v4903
      %v4905 = vsel %vm629, %v4903, %v4902
      %v4906 = vmul.f32 %v4904, %v3634
      %v4907 = vmul.f32 %v4905, %v3635
      %v4908 = vadd.f32 %v4870, %v4906
      %v4909 = vadd.f32 %v4871, %v4907
      %v4910 = vrot.slane %v4855, 7
      %v4911 = vrot.slane %v4857, 7
      %v4912 = vsel %vm641, %v4910, %v4911
      %v4913 = vsel %vm641, %v4911, %v4910
      %v4914 = vmul.f32 %v4912, %v3645
      %v4915 = vmul.f32 %v4913, %v3646
      %v4916 = vadd.f32 %v4876, %v4914
      %v4917 = vadd.f32 %v4877, %v4915
      %v4918 = vmul.f32 %v4857, %v3652
      %v4919 = vmul.f32 %v4855, %v3653
      %4922 = vrot.lane.b32.xlu0 %v4918, 64
      %v4923 = vpop.permute.xlu0 %4922
      %4924 = vrot.lane.b32.xlu0 %v4919, 64
      %v4925 = vpop.permute.xlu0 %4924
      %v4928 = vadd.f32 %v4892, %v4923
      %v4929 = vadd.f32 %v4893, %v4925
      %v4930 = vmul.f32 %v4863, %v3667
      %v4931 = vmul.f32 %v4862, %v3668
      %v4932 = vadd.f32 %v4900, %v4930
      %v4933 = vadd.f32 %v4901, %v4931
      %v4934 = vmul.f32 %v4869, %v3674
      %v4935 = vmul.f32 %v4868, %v3675
      %v4936 = vadd.f32 %v4908, %v4934
      %v4937 = vadd.f32 %v4909, %v4935
      %v4938 = vmul.f32 %v4875, %v3681
      %v4939 = vmul.f32 %v4874, %v3682
      %v4940 = vadd.f32 %v4916, %v4938
      %v4941 = vadd.f32 %v4917, %v4939
      %v4942 = vmul.f32 %v4881, %v3688
      %v4943 = vmul.f32 %v4880, %v3689
      %4946 = vrot.lane.b32.xlu0 %v4942, 64
      %v4947 = vpop.permute.xlu0 %4946
      %4948 = vrot.lane.b32.xlu0 %v4943, 64
      %v4949 = vpop.permute.xlu0 %4948
      %v4952 = vadd.f32 %v4928, %v4947
      %v4953 = vadd.f32 %v4929, %v4949
      %v4954 = vmul.f32 %v4897, %v3703
      %v4955 = vmul.f32 %v4896, %v3704
      %v4956 = vadd.f32 %v4932, %v4954
      %v4957 = vadd.f32 %v4933, %v4955
      %v4958 = vmul.f32 %v4905, %v3710
      %v4959 = vmul.f32 %v4904, %v3711
      %v4960 = vadd.f32 %v4936, %v4958
      %v4961 = vadd.f32 %v4937, %v4959
      %v4962 = vmul.f32 %v4913, %v3717
      %v4963 = vmul.f32 %v4912, %v3718
      %v4964 = vadd.f32 %v4940, %v4962
      %v4965 = vadd.f32 %v4941, %v4963
      %4968 = vrot.lane.b32.xlu0 %v4956, 64
      %v4969 = vpop.permute.xlu0 %4968
      %4970 = vrot.lane.b32.xlu0 %v4957, 64
      %v4971 = vpop.permute.xlu0 %4970
      %v4974 = vadd.f32 %v4952, %v4969
      %v4975 = vadd.f32 %v4953, %v4971
      %4978 = vrot.lane.b32.xlu0 %v4960, 64
      %v4979 = vpop.permute.xlu0 %4978
      %4980 = vrot.lane.b32.xlu0 %v4961, 64
      %v4981 = vpop.permute.xlu0 %4980
      %v4984 = vadd.f32 %v4974, %v4979
      %v4985 = vadd.f32 %v4975, %v4981
      %4988 = vrot.lane.b32.xlu0 %v4964, 64
      %v4989 = vpop.permute.xlu0 %4988
      %4990 = vrot.lane.b32.xlu0 %v4965, 64
      %v4991 = vpop.permute.xlu0 %4990
      %v4994 = vadd.f32 %v4984, %v4989
      %v4995 = vadd.f32 %v4985, %v4991
      %v4996 = vadd.f32 %v4994, %v3759
      %v4997 = vadd.f32 %v4995, %v3759
      %5000 = vrot.lane.b32.xlu0 %v4996, 64
      %v5001 = vpop.permute.xlu0 %5000
      %5002 = vrot.lane.b32.xlu0 %v4997, 64
      %v5003 = vpop.permute.xlu0 %5002
      %v5006 = vsel %vm721, %v5001, 0.0
      %v5007 = vsel %vm721, %v5003, 0.0
      %v5008 = vadd.f32 %v5006, %v5007
      %5009 = vadd.xlane.f32.xlu0 %v5008
      %v5010 = vpop.xlane.xlu0 %5009
      %v5011 = vrot.slane %v5010, 4
      %v5012 = vadd.f32 %v5010, %v5011
      %v5013 = vrot.slane %v5012, 2
      %v5014 = vadd.f32 %v5012, %v5013
      %v5015 = vrot.slane %v5014, 1
      %v5016 = vadd.f32 %v5014, %v5015
      %s5017 = vtos %v5016
      %s5018 = smul.f32 %s5017, 0.0078125
      %v5019 = vmul.f32 %v4996, %v4996
      %v5020 = vmul.f32 %v4997, %v4997
      %5023 = vrot.lane.b32.xlu0 %v5019, 64
      %v5024 = vpop.permute.xlu0 %5023
      %5025 = vrot.lane.b32.xlu0 %v5020, 64
      %v5026 = vpop.permute.xlu0 %5025
      %v5029 = vsel %vm721, %v5024, 0.0
      %v5030 = vsel %vm721, %v5026, 0.0
      %v5031 = vadd.f32 %v5029, %v5030
      %5032 = vadd.xlane.f32.xlu0 %v5031
      %v5033 = vpop.xlane.xlu0 %5032
      %v5034 = vrot.slane %v5033, 4
      %v5035 = vadd.f32 %v5033, %v5034
      %v5036 = vrot.slane %v5035, 2
      %v5037 = vadd.f32 %v5035, %v5036
      %v5038 = vrot.slane %v5037, 1
      %v5039 = vadd.f32 %v5037, %v5038
      %s5040 = vtos %v5039
      %s5041 = smul.f32 %s5040, 0.0078125
      %s5042 = smul.f32 %s5018, %s5018
      %s5043 = ssub.f32 %s5041, %s5042
      %s5044 = smax.f32 %s5043, 0.0
      %v5045 = vstv %s5018
      %v5046 = vsub.f32 %v4996, %v5045
      %v5047 = vsub.f32 %v4997, %v5045
      %s5048 = sadd.f32 %s5044, 1e-05
      %v5049 = vstv %s5048
      %v5050 = vrsqrt.pop %v5049
      %s5051 = vtos %v5050
      %v5052 = vstv %s5051
      %v5053 = vmul.f32 %v5046, %v5052
      %v5054 = vmul.f32 %v5047, %v5052
      %5055 = vrot.lane.b32.xlu0 %v4996, 56
      %v5056 = vpop.permute.xlu0 %5055
      %5057 = vrot.lane.b32.xlu0 %v4997, 56
      %v5058 = vpop.permute.xlu0 %5057
      %v5061 = vsel %vm721, %v5056, 0.0
      %v5062 = vsel %vm721, %v5058, 0.0
      %v5063 = vadd.f32 %v5061, %v5062
      %5064 = vadd.xlane.f32.xlu0 %v5063
      %v5065 = vpop.xlane.xlu0 %5064
      %v5066 = vrot.slane %v5065, 4
      %v5067 = vadd.f32 %v5065, %v5066
      %v5068 = vrot.slane %v5067, 2
      %v5069 = vadd.f32 %v5067, %v5068
      %v5070 = vrot.slane %v5069, 1
      %v5071 = vadd.f32 %v5069, %v5070
      %s5072 = vtos %v5071
      %s5073 = smul.f32 %s5072, 0.0078125
      %5074 = vrot.lane.b32.xlu0 %v5019, 56
      %v5075 = vpop.permute.xlu0 %5074
      %5076 = vrot.lane.b32.xlu0 %v5020, 56
      %v5077 = vpop.permute.xlu0 %5076
      %v5080 = vsel %vm721, %v5075, 0.0
      %v5081 = vsel %vm721, %v5077, 0.0
      %v5082 = vadd.f32 %v5080, %v5081
      %5083 = vadd.xlane.f32.xlu0 %v5082
      %v5084 = vpop.xlane.xlu0 %5083
      %v5085 = vrot.slane %v5084, 4
      %v5086 = vadd.f32 %v5084, %v5085
      %v5087 = vrot.slane %v5086, 2
      %v5088 = vadd.f32 %v5086, %v5087
      %v5089 = vrot.slane %v5088, 1
      %v5090 = vadd.f32 %v5088, %v5089
      %s5091 = vtos %v5090
      %s5092 = smul.f32 %s5091, 0.0078125
      %s5093 = smul.f32 %s5073, %s5073
      %s5094 = ssub.f32 %s5092, %s5093
      %s5095 = smax.f32 %s5094, 0.0
      %v5096 = vstv %s5073
      %v5097 = vsub.f32 %v4996, %v5096
      %v5098 = vsub.f32 %v4997, %v5096
      %s5099 = sadd.f32 %s5095, 1e-05
      %v5100 = vstv %s5099
      %v5101 = vrsqrt.pop %v5100
      %s5102 = vtos %v5101
      %v5103 = vstv %s5102
      %v5104 = vmul.f32 %v5097, %v5103
      %v5105 = vmul.f32 %v5098, %v5103
      %5106 = vrot.lane.b32.xlu0 %v4996, 48
      %v5107 = vpop.permute.xlu0 %5106
      %5108 = vrot.lane.b32.xlu0 %v4997, 48
      %v5109 = vpop.permute.xlu0 %5108
      %v5112 = vsel %vm721, %v5107, 0.0
      %v5113 = vsel %vm721, %v5109, 0.0
      %v5114 = vadd.f32 %v5112, %v5113
      %5115 = vadd.xlane.f32.xlu0 %v5114
      %v5116 = vpop.xlane.xlu0 %5115
      %v5117 = vrot.slane %v5116, 4
      %v5118 = vadd.f32 %v5116, %v5117
      %v5119 = vrot.slane %v5118, 2
      %v5120 = vadd.f32 %v5118, %v5119
      %v5121 = vrot.slane %v5120, 1
      %v5122 = vadd.f32 %v5120, %v5121
      %s5123 = vtos %v5122
      %s5124 = smul.f32 %s5123, 0.0078125
      %5125 = vrot.lane.b32.xlu0 %v5019, 48
      %v5126 = vpop.permute.xlu0 %5125
      %5127 = vrot.lane.b32.xlu0 %v5020, 48
      %v5128 = vpop.permute.xlu0 %5127
      %v5131 = vsel %vm721, %v5126, 0.0
      %v5132 = vsel %vm721, %v5128, 0.0
      %v5133 = vadd.f32 %v5131, %v5132
      %5134 = vadd.xlane.f32.xlu0 %v5133
      %v5135 = vpop.xlane.xlu0 %5134
      %v5136 = vrot.slane %v5135, 4
      %v5137 = vadd.f32 %v5135, %v5136
      %v5138 = vrot.slane %v5137, 2
      %v5139 = vadd.f32 %v5137, %v5138
      %v5140 = vrot.slane %v5139, 1
      %v5141 = vadd.f32 %v5139, %v5140
      %s5142 = vtos %v5141
      %s5143 = smul.f32 %s5142, 0.0078125
      %s5144 = smul.f32 %s5124, %s5124
      %s5145 = ssub.f32 %s5143, %s5144
      %s5146 = smax.f32 %s5145, 0.0
      %v5147 = vstv %s5124
      %v5148 = vsub.f32 %v4996, %v5147
      %v5149 = vsub.f32 %v4997, %v5147
      %s5150 = sadd.f32 %s5146, 1e-05
      %v5151 = vstv %s5150
      %v5152 = vrsqrt.pop %v5151
      %s5153 = vtos %v5152
      %v5154 = vstv %s5153
      %v5155 = vmul.f32 %v5148, %v5154
      %v5156 = vmul.f32 %v5149, %v5154
      %5157 = vrot.lane.b32.xlu0 %v4996, 40
      %v5158 = vpop.permute.xlu0 %5157
      %5159 = vrot.lane.b32.xlu0 %v4997, 40
      %v5160 = vpop.permute.xlu0 %5159
      %v5163 = vsel %vm721, %v5158, 0.0
      %v5164 = vsel %vm721, %v5160, 0.0
      %v5165 = vadd.f32 %v5163, %v5164
      %5166 = vadd.xlane.f32.xlu0 %v5165
      %v5167 = vpop.xlane.xlu0 %5166
      %v5168 = vrot.slane %v5167, 4
      %v5169 = vadd.f32 %v5167, %v5168
      %v5170 = vrot.slane %v5169, 2
      %v5171 = vadd.f32 %v5169, %v5170
      %v5172 = vrot.slane %v5171, 1
      %v5173 = vadd.f32 %v5171, %v5172
      %s5174 = vtos %v5173
      %s5175 = smul.f32 %s5174, 0.0078125
      %5176 = vrot.lane.b32.xlu0 %v5019, 40
      %v5177 = vpop.permute.xlu0 %5176
      %5178 = vrot.lane.b32.xlu0 %v5020, 40
      %v5179 = vpop.permute.xlu0 %5178
      %v5182 = vsel %vm721, %v5177, 0.0
      %v5183 = vsel %vm721, %v5179, 0.0
      %v5184 = vadd.f32 %v5182, %v5183
      %5185 = vadd.xlane.f32.xlu0 %v5184
      %v5186 = vpop.xlane.xlu0 %5185
      %v5187 = vrot.slane %v5186, 4
      %v5188 = vadd.f32 %v5186, %v5187
      %v5189 = vrot.slane %v5188, 2
      %v5190 = vadd.f32 %v5188, %v5189
      %v5191 = vrot.slane %v5190, 1
      %v5192 = vadd.f32 %v5190, %v5191
      %s5193 = vtos %v5192
      %s5194 = smul.f32 %s5193, 0.0078125
      %s5195 = smul.f32 %s5175, %s5175
      %s5196 = ssub.f32 %s5194, %s5195
      %s5197 = smax.f32 %s5196, 0.0
      %v5198 = vstv %s5175
      %v5199 = vsub.f32 %v4996, %v5198
      %v5200 = vsub.f32 %v4997, %v5198
      %s5201 = sadd.f32 %s5197, 1e-05
      %v5202 = vstv %s5201
      %v5203 = vrsqrt.pop %v5202
      %s5204 = vtos %v5203
      %v5205 = vstv %s5204
      %v5206 = vmul.f32 %v5199, %v5205
      %v5207 = vmul.f32 %v5200, %v5205
      %5210 = vrot.lane.b32.xlu0 %v5053, 64
      %v5211 = vpop.permute.xlu0 %5210
      %5212 = vrot.lane.b32.xlu0 %v5054, 64
      %v5213 = vpop.permute.xlu0 %5212
      %5218 = vrot.lane.b32.xlu0 %v5104, 64
      %v5219 = vpop.permute.xlu0 %5218
      %5220 = vrot.lane.b32.xlu0 %v5105, 64
      %v5221 = vpop.permute.xlu0 %5220
      %5226 = vrot.lane.b32.xlu0 %v5155, 64
      %v5227 = vpop.permute.xlu0 %5226
      %5228 = vrot.lane.b32.xlu0 %v5156, 64
      %v5229 = vpop.permute.xlu0 %5228
      %5234 = vrot.lane.b32.xlu0 %v5206, 64
      %v5235 = vpop.permute.xlu0 %5234
      %5236 = vrot.lane.b32.xlu0 %v5207, 64
      %v5237 = vpop.permute.xlu0 %5236
      %v5240 = vsel %vm721, %v5211, %v5219
      %v5241 = vsel %vm721, %v5213, %v5221
      %v5242 = vsel %vm922, %v5240, %v5227
      %v5243 = vsel %vm922, %v5241, %v5229
      %v5244 = vsel %vm925, %v5242, %v5235
      %v5245 = vsel %vm925, %v5243, %v5237
      %v5246 = vpack.c.bf16 %v5245, %v5244
      %v5248 = vsel %vm947, %v5246, 0
      %5250 = vmatprep.subr.bf16.mxu0 0
      %5251 = vmatpush1.bf16.msra.mxu0 %v4026
      %5252 = vmatprep.subr.bf16.mxu0 0
      %5253 = vmatpush1.bf16.msra.mxu0 %v4027
      %5254 = vmatprep.subr.bf16.mxu0 0
      %5255 = vmatpush1.bf16.msra.mxu0 0
      %5256 = vmatprep.subr.bf16.mxu0 0
      %5257 = vmatpush1.bf16.msra.mxu0 0
      %5258 = vmatprep.subr.bf16.mxu0 0
      %5259 = vmatpush1.bf16.msra.mxu0 0
      %5260 = vmatprep.subr.bf16.mxu0 0
      %5261 = vmatpush1.bf16.msra.mxu0 0
      %5262 = vmatprep.subr.bf16.mxu0 0
      %5263 = vmatpush1.bf16.msra.mxu0 0
      %5264 = vmatprep.subr.bf16.mxu0 0
      %5265 = vmatpush1.bf16.msra.mxu0 0
      %5266 = vmatprep.subr.bf16.mxu0 0
      %5267 = vmatpush1.bf16.msra.mxu0 0
      %5268 = vmatprep.subr.bf16.mxu0 0
      %5269 = vmatpush1.bf16.msra.mxu0 0
      %5270 = vmatprep.subr.bf16.mxu0 0
      %5271 = vmatpush1.bf16.msra.mxu0 0
      %5272 = vmatprep.subr.bf16.mxu0 0
      %5273 = vmatpush1.bf16.msra.mxu0 0
      %5274 = vmatprep.subr.bf16.mxu0 0
      %5275 = vmatpush1.bf16.msra.mxu0 0
      %5276 = vmatprep.subr.bf16.mxu0 0
      %5277 = vmatpush1.bf16.msra.mxu0 0
      %5278 = vmatprep.subr.bf16.mxu0 0
      %5279 = vmatpush1.bf16.msra.mxu0 0
      %5280 = vmatprep.subr.bf16.mxu0 0
      %5281 = vmatpush1.bf16.msra.mxu0 0
      %5282 = vmatprep.mubr.bf16.mxu0 0
      %5283 = vmatmul.mubr.bf16.gmra.mrb[0].mxu0 %v5248
      %v5284 = vpop.f32.mrb[0].mxu0
      %v5285 = vadd.f32 %v4016, %v5284
      %v5286 = vpop.f32.mrb[0].mxu0
      %v5287 = vpop.f32.mrb[0].mxu0
      %v5288 = vadd.f32 %v4016, %v5287
      %v5289 = vpop.f32.mrb[0].mxu0
      %5290 = vdwg.mxu0
      %v5291 = vtanh.pop %v5285
      %v5292 = vtanh.pop %v5288
      %v5293 = vadd.f32 %v5291, 1.0
      %v5294 = vadd.f32 %v5292, 1.0
      %v5295 = vmul.f32 %v5293, %v4100
      %v5296 = vmul.f32 %v5294, %v4101
      %5299 = vrot.lane.b32.xlu0 %v5291, 32
      %v5300 = vpop.permute.xlu0 %5299
      %5301 = vrot.lane.b32.xlu0 %v5292, 32
      %v5302 = vpop.permute.xlu0 %5301
      %v5305 = vmul.f32 %v5293, %v5300
      %v5306 = vmul.f32 %v5294, %v5302
      %5309 = vrot.lane.b32.xlu0 %v5305, 32
      %v5310 = vpop.permute.xlu0 %5309
      %5311 = vrot.lane.b32.xlu0 %v5306, 32
      %v5312 = vpop.permute.xlu0 %5311
      %v5315 = vadd.f32 %v5295, %v5310
      %v5316 = vadd.f32 %v5296, %v5312
      %v5317 = vmul.f32 %v5315, 0.5
      %v5318 = vmul.f32 %v5316, 0.5
      %5321 = vrot.lane.b32.xlu0 %v5317, 96
      %v5322 = vpop.permute.xlu0 %5321
      %5323 = vrot.lane.b32.xlu0 %v5318, 96
      %v5324 = vpop.permute.xlu0 %5323
      %v5327 = vsel %vm947, %v5322, 0.0
      %v5328 = vsel %vm947, %v5324, 0.0
      %v5329 = vadd.f32 %v5327, %v5328
      %5330 = vadd.xlane.f32.xlu0 %v5329
      %v5331 = vpop.xlane.xlu0 %5330
      %v5332 = vrot.slane %v5331, 4
      %v5333 = vadd.f32 %v5331, %v5332
      %v5334 = vrot.slane %v5333, 2
      %v5335 = vadd.f32 %v5333, %v5334
      %v5336 = vrot.slane %v5335, 1
      %v5337 = vadd.f32 %v5335, %v5336
      %s5338 = vtos %v5337
      %s5339 = smul.f32 %s5338, 0.001953125
      %v5340 = vmul.f32 %v5317, %v5317
      %v5341 = vmul.f32 %v5318, %v5318
      %5344 = vrot.lane.b32.xlu0 %v5340, 96
      %v5345 = vpop.permute.xlu0 %5344
      %5346 = vrot.lane.b32.xlu0 %v5341, 96
      %v5347 = vpop.permute.xlu0 %5346
      %v5350 = vsel %vm947, %v5345, 0.0
      %v5351 = vsel %vm947, %v5347, 0.0
      %v5352 = vadd.f32 %v5350, %v5351
      %5353 = vadd.xlane.f32.xlu0 %v5352
      %v5354 = vpop.xlane.xlu0 %5353
      %v5355 = vrot.slane %v5354, 4
      %v5356 = vadd.f32 %v5354, %v5355
      %v5357 = vrot.slane %v5356, 2
      %v5358 = vadd.f32 %v5356, %v5357
      %v5359 = vrot.slane %v5358, 1
      %v5360 = vadd.f32 %v5358, %v5359
      %s5361 = vtos %v5360
      %s5362 = smul.f32 %s5361, 0.001953125
      %s5363 = smul.f32 %s5339, %s5339
      %s5364 = ssub.f32 %s5362, %s5363
      %s5365 = smax.f32 %s5364, 0.0
      %s5366 = sadd.f32 %s5365, 1e-05
      %v5367 = vstv %s5366
      %v5368 = vrsqrt.pop %v5367
      %s5369 = vtos %v5368
      %v5370 = vstv %s5369
      %v5371 = vmul.f32 %v3556, %v5370
      %v5372 = vstv %s5339
      %v5373 = vmul.f32 %v5372, %v5371
      %v5374 = vsub.f32 %v3558, %v5373
      %v5375 = vmul.f32 %v5293, 0.5
      %v5376 = vmul.f32 %v5294, 0.5
      %v5378 = vlaneseq
      %v5379 = vshrl.u32 %v5378, 7
      %v5380 = vsub.s32 0, %v5379
      %v5381 = vrot.slane %v5371, %v5380
      %5382 = vrot.lane.b32.xlu0 %v5381, 32
      %v5383 = vpop.permute.xlu0 %5382
      %v5385 = vmul.f32 %v5317, %v5383
      %v5386 = vmul.f32 %v5318, %v5383
      %v5388 = vlaneseq
      %v5389 = vshrl.u32 %v5388, 7
      %v5390 = vsub.s32 0, %v5389
      %v5391 = vrot.slane %v5374, %v5390
      %5392 = vrot.lane.b32.xlu0 %v5391, 32
      %v5393 = vpop.permute.xlu0 %5392
      %v5395 = vadd.f32 %v5385, %v5393
      %v5396 = vadd.f32 %v5386, %v5393
      %v5397 = vtanh.pop %v5395
      %v5398 = vtanh.pop %v5396
      %5401 = vrot.lane.b32.xlu0 %v5397, 32
      %v5402 = vpop.permute.xlu0 %5401
      %5403 = vrot.lane.b32.xlu0 %v5398, 32
      %v5404 = vpop.permute.xlu0 %5403
      %v5407 = vmul.f32 %v5375, %v5402
      %v5408 = vmul.f32 %v5376, %v5404
      %v5409 = vadd.f32 %v5407, %v4846
      %v5410 = vadd.f32 %v5408, %v4847
      %v5411 = vmul.f32 %v5409, %v4213
      %v5412 = vmul.f32 %v5410, %v4215
      %5415 = vrot.lane.b32.xlu0 %v5409, 64
      %v5416 = vpop.permute.xlu0 %5415
      %5417 = vrot.lane.b32.xlu0 %v5410, 64
      %v5418 = vpop.permute.xlu0 %5417
      %v5421 = vrot.slane %v5416, 1
      %v5422 = vrot.slane %v5418, 1
      %v5423 = vsel %vm575, %v5421, %v5422
      %v5424 = vsel %vm575, %v5422, %v5421
      %v5425 = vmul.f32 %v5423, %v4233
      %v5426 = vmul.f32 %v5424, %v4234
      %v5427 = vrot.slane %v5416, 2
      %v5428 = vrot.slane %v5418, 2
      %v5429 = vsel %vm585, %v5427, %v5428
      %v5430 = vsel %vm585, %v5428, %v5427
      %v5431 = vmul.f32 %v5429, %v4242
      %v5432 = vmul.f32 %v5430, %v4243
      %v5433 = vrot.slane %v5416, 3
      %v5434 = vrot.slane %v5418, 3
      %v5435 = vsel %vm595, %v5433, %v5434
      %v5436 = vsel %vm595, %v5434, %v5433
      %v5437 = vmul.f32 %v5435, %v4251
      %v5438 = vmul.f32 %v5436, %v4252
      %v5439 = vrot.slane %v5416, 4
      %v5440 = vrot.slane %v5418, 4
      %v5441 = vsel %vm605, %v5439, %v5440
      %v5442 = vsel %vm605, %v5440, %v5439
      %v5443 = vmul.f32 %v5441, %v4260
      %v5444 = vmul.f32 %v5442, %v4261
      %5447 = vrot.lane.b32.xlu0 %v5443, 64
      %v5448 = vpop.permute.xlu0 %5447
      %5449 = vrot.lane.b32.xlu0 %v5444, 64
      %v5450 = vpop.permute.xlu0 %5449
      %v5453 = vadd.f32 %v5411, %v5448
      %v5454 = vadd.f32 %v5412, %v5450
      %v5455 = vrot.slane %v5416, 5
      %v5456 = vrot.slane %v5418, 5
      %v5457 = vsel %vm617, %v5455, %v5456
      %v5458 = vsel %vm617, %v5456, %v5455
      %v5459 = vmul.f32 %v5457, %v4279
      %v5460 = vmul.f32 %v5458, %v4280
      %v5461 = vadd.f32 %v5425, %v5459
      %v5462 = vadd.f32 %v5426, %v5460
      %v5463 = vrot.slane %v5416, 6
      %v5464 = vrot.slane %v5418, 6
      %v5465 = vsel %vm629, %v5463, %v5464
      %v5466 = vsel %vm629, %v5464, %v5463
      %v5467 = vmul.f32 %v5465, %v4290
      %v5468 = vmul.f32 %v5466, %v4291
      %v5469 = vadd.f32 %v5431, %v5467
      %v5470 = vadd.f32 %v5432, %v5468
      %v5471 = vrot.slane %v5416, 7
      %v5472 = vrot.slane %v5418, 7
      %v5473 = vsel %vm641, %v5471, %v5472
      %v5474 = vsel %vm641, %v5472, %v5471
      %v5475 = vmul.f32 %v5473, %v4301
      %v5476 = vmul.f32 %v5474, %v4302
      %v5477 = vadd.f32 %v5437, %v5475
      %v5478 = vadd.f32 %v5438, %v5476
      %v5479 = vmul.f32 %v5418, %v4308
      %v5480 = vmul.f32 %v5416, %v4309
      %5483 = vrot.lane.b32.xlu0 %v5479, 64
      %v5484 = vpop.permute.xlu0 %5483
      %5485 = vrot.lane.b32.xlu0 %v5480, 64
      %v5486 = vpop.permute.xlu0 %5485
      %v5489 = vadd.f32 %v5453, %v5484
      %v5490 = vadd.f32 %v5454, %v5486
      %v5491 = vmul.f32 %v5424, %v4323
      %v5492 = vmul.f32 %v5423, %v4324
      %v5493 = vadd.f32 %v5461, %v5491
      %v5494 = vadd.f32 %v5462, %v5492
      %v5495 = vmul.f32 %v5430, %v4330
      %v5496 = vmul.f32 %v5429, %v4331
      %v5497 = vadd.f32 %v5469, %v5495
      %v5498 = vadd.f32 %v5470, %v5496
      %v5499 = vmul.f32 %v5436, %v4337
      %v5500 = vmul.f32 %v5435, %v4338
      %v5501 = vadd.f32 %v5477, %v5499
      %v5502 = vadd.f32 %v5478, %v5500
      %v5503 = vmul.f32 %v5442, %v4344
      %v5504 = vmul.f32 %v5441, %v4345
      %5507 = vrot.lane.b32.xlu0 %v5503, 64
      %v5508 = vpop.permute.xlu0 %5507
      %5509 = vrot.lane.b32.xlu0 %v5504, 64
      %v5510 = vpop.permute.xlu0 %5509
      %v5513 = vadd.f32 %v5489, %v5508
      %v5514 = vadd.f32 %v5490, %v5510
      %v5515 = vmul.f32 %v5458, %v4359
      %v5516 = vmul.f32 %v5457, %v4360
      %v5517 = vadd.f32 %v5493, %v5515
      %v5518 = vadd.f32 %v5494, %v5516
      %v5519 = vmul.f32 %v5466, %v4366
      %v5520 = vmul.f32 %v5465, %v4367
      %v5521 = vadd.f32 %v5497, %v5519
      %v5522 = vadd.f32 %v5498, %v5520
      %v5523 = vmul.f32 %v5474, %v4373
      %v5524 = vmul.f32 %v5473, %v4374
      %v5525 = vadd.f32 %v5501, %v5523
      %v5526 = vadd.f32 %v5502, %v5524
      %5529 = vrot.lane.b32.xlu0 %v5517, 64
      %v5530 = vpop.permute.xlu0 %5529
      %5531 = vrot.lane.b32.xlu0 %v5518, 64
      %v5532 = vpop.permute.xlu0 %5531
      %v5535 = vadd.f32 %v5513, %v5530
      %v5536 = vadd.f32 %v5514, %v5532
      %5539 = vrot.lane.b32.xlu0 %v5521, 64
      %v5540 = vpop.permute.xlu0 %5539
      %5541 = vrot.lane.b32.xlu0 %v5522, 64
      %v5542 = vpop.permute.xlu0 %5541
      %v5545 = vadd.f32 %v5535, %v5540
      %v5546 = vadd.f32 %v5536, %v5542
      %5549 = vrot.lane.b32.xlu0 %v5525, 64
      %v5550 = vpop.permute.xlu0 %5549
      %5551 = vrot.lane.b32.xlu0 %v5526, 64
      %v5552 = vpop.permute.xlu0 %5551
      %v5555 = vadd.f32 %v5545, %v5550
      %v5556 = vadd.f32 %v5546, %v5552
      %v5557 = vadd.f32 %v5555, %v4415
      %v5558 = vadd.f32 %v5556, %v4415
      %5561 = vrot.lane.b32.xlu0 %v5557, 64
      %v5562 = vpop.permute.xlu0 %5561
      %5563 = vrot.lane.b32.xlu0 %v5558, 64
      %v5564 = vpop.permute.xlu0 %5563
      %v5567 = vsel %vm721, %v5562, 0.0
      %v5568 = vsel %vm721, %v5564, 0.0
      %v5569 = vadd.f32 %v5567, %v5568
      %5570 = vadd.xlane.f32.xlu0 %v5569
      %v5571 = vpop.xlane.xlu0 %5570
      %v5572 = vrot.slane %v5571, 4
      %v5573 = vadd.f32 %v5571, %v5572
      %v5574 = vrot.slane %v5573, 2
      %v5575 = vadd.f32 %v5573, %v5574
      %v5576 = vrot.slane %v5575, 1
      %v5577 = vadd.f32 %v5575, %v5576
      %s5578 = vtos %v5577
      %s5579 = smul.f32 %s5578, 0.0078125
      %v5580 = vmul.f32 %v5557, %v5557
      %v5581 = vmul.f32 %v5558, %v5558
      %5584 = vrot.lane.b32.xlu0 %v5580, 64
      %v5585 = vpop.permute.xlu0 %5584
      %5586 = vrot.lane.b32.xlu0 %v5581, 64
      %v5587 = vpop.permute.xlu0 %5586
      %v5590 = vsel %vm721, %v5585, 0.0
      %v5591 = vsel %vm721, %v5587, 0.0
      %v5592 = vadd.f32 %v5590, %v5591
      %5593 = vadd.xlane.f32.xlu0 %v5592
      %v5594 = vpop.xlane.xlu0 %5593
      %v5595 = vrot.slane %v5594, 4
      %v5596 = vadd.f32 %v5594, %v5595
      %v5597 = vrot.slane %v5596, 2
      %v5598 = vadd.f32 %v5596, %v5597
      %v5599 = vrot.slane %v5598, 1
      %v5600 = vadd.f32 %v5598, %v5599
      %s5601 = vtos %v5600
      %s5602 = smul.f32 %s5601, 0.0078125
      %s5603 = smul.f32 %s5579, %s5579
      %s5604 = ssub.f32 %s5602, %s5603
      %s5605 = smax.f32 %s5604, 0.0
      %v5606 = vstv %s5579
      %v5607 = vsub.f32 %v5557, %v5606
      %v5608 = vsub.f32 %v5558, %v5606
      %s5609 = sadd.f32 %s5605, 1e-05
      %v5610 = vstv %s5609
      %v5611 = vrsqrt.pop %v5610
      %s5612 = vtos %v5611
      %v5613 = vstv %s5612
      %v5614 = vmul.f32 %v5607, %v5613
      %v5615 = vmul.f32 %v5608, %v5613
      %5616 = vrot.lane.b32.xlu0 %v5557, 56
      %v5617 = vpop.permute.xlu0 %5616
      %5618 = vrot.lane.b32.xlu0 %v5558, 56
      %v5619 = vpop.permute.xlu0 %5618
      %v5622 = vsel %vm721, %v5617, 0.0
      %v5623 = vsel %vm721, %v5619, 0.0
      %v5624 = vadd.f32 %v5622, %v5623
      %5625 = vadd.xlane.f32.xlu0 %v5624
      %v5626 = vpop.xlane.xlu0 %5625
      %v5627 = vrot.slane %v5626, 4
      %v5628 = vadd.f32 %v5626, %v5627
      %v5629 = vrot.slane %v5628, 2
      %v5630 = vadd.f32 %v5628, %v5629
      %v5631 = vrot.slane %v5630, 1
      %v5632 = vadd.f32 %v5630, %v5631
      %s5633 = vtos %v5632
      %s5634 = smul.f32 %s5633, 0.0078125
      %5635 = vrot.lane.b32.xlu0 %v5580, 56
      %v5636 = vpop.permute.xlu0 %5635
      %5637 = vrot.lane.b32.xlu0 %v5581, 56
      %v5638 = vpop.permute.xlu0 %5637
      %v5641 = vsel %vm721, %v5636, 0.0
      %v5642 = vsel %vm721, %v5638, 0.0
      %v5643 = vadd.f32 %v5641, %v5642
      %5644 = vadd.xlane.f32.xlu0 %v5643
      %v5645 = vpop.xlane.xlu0 %5644
      %v5646 = vrot.slane %v5645, 4
      %v5647 = vadd.f32 %v5645, %v5646
      %v5648 = vrot.slane %v5647, 2
      %v5649 = vadd.f32 %v5647, %v5648
      %v5650 = vrot.slane %v5649, 1
      %v5651 = vadd.f32 %v5649, %v5650
      %s5652 = vtos %v5651
      %s5653 = smul.f32 %s5652, 0.0078125
      %s5654 = smul.f32 %s5634, %s5634
      %s5655 = ssub.f32 %s5653, %s5654
      %s5656 = smax.f32 %s5655, 0.0
      %v5657 = vstv %s5634
      %v5658 = vsub.f32 %v5557, %v5657
      %v5659 = vsub.f32 %v5558, %v5657
      %s5660 = sadd.f32 %s5656, 1e-05
      %v5661 = vstv %s5660
      %v5662 = vrsqrt.pop %v5661
      %s5663 = vtos %v5662
      %v5664 = vstv %s5663
      %v5665 = vmul.f32 %v5658, %v5664
      %v5666 = vmul.f32 %v5659, %v5664
      %5667 = vrot.lane.b32.xlu0 %v5557, 48
      %v5668 = vpop.permute.xlu0 %5667
      %5669 = vrot.lane.b32.xlu0 %v5558, 48
      %v5670 = vpop.permute.xlu0 %5669
      %v5673 = vsel %vm721, %v5668, 0.0
      %v5674 = vsel %vm721, %v5670, 0.0
      %v5675 = vadd.f32 %v5673, %v5674
      %5676 = vadd.xlane.f32.xlu0 %v5675
      %v5677 = vpop.xlane.xlu0 %5676
      %v5678 = vrot.slane %v5677, 4
      %v5679 = vadd.f32 %v5677, %v5678
      %v5680 = vrot.slane %v5679, 2
      %v5681 = vadd.f32 %v5679, %v5680
      %v5682 = vrot.slane %v5681, 1
      %v5683 = vadd.f32 %v5681, %v5682
      %s5684 = vtos %v5683
      %s5685 = smul.f32 %s5684, 0.0078125
      %5686 = vrot.lane.b32.xlu0 %v5580, 48
      %v5687 = vpop.permute.xlu0 %5686
      %5688 = vrot.lane.b32.xlu0 %v5581, 48
      %v5689 = vpop.permute.xlu0 %5688
      %v5692 = vsel %vm721, %v5687, 0.0
      %v5693 = vsel %vm721, %v5689, 0.0
      %v5694 = vadd.f32 %v5692, %v5693
      %5695 = vadd.xlane.f32.xlu0 %v5694
      %v5696 = vpop.xlane.xlu0 %5695
      %v5697 = vrot.slane %v5696, 4
      %v5698 = vadd.f32 %v5696, %v5697
      %v5699 = vrot.slane %v5698, 2
      %v5700 = vadd.f32 %v5698, %v5699
      %v5701 = vrot.slane %v5700, 1
      %v5702 = vadd.f32 %v5700, %v5701
      %s5703 = vtos %v5702
      %s5704 = smul.f32 %s5703, 0.0078125
      %s5705 = smul.f32 %s5685, %s5685
      %s5706 = ssub.f32 %s5704, %s5705
      %s5707 = smax.f32 %s5706, 0.0
      %v5708 = vstv %s5685
      %v5709 = vsub.f32 %v5557, %v5708
      %v5710 = vsub.f32 %v5558, %v5708
      %s5711 = sadd.f32 %s5707, 1e-05
      %v5712 = vstv %s5711
      %v5713 = vrsqrt.pop %v5712
      %s5714 = vtos %v5713
      %v5715 = vstv %s5714
      %v5716 = vmul.f32 %v5709, %v5715
      %v5717 = vmul.f32 %v5710, %v5715
      %5718 = vrot.lane.b32.xlu0 %v5557, 40
      %v5719 = vpop.permute.xlu0 %5718
      %5720 = vrot.lane.b32.xlu0 %v5558, 40
      %v5721 = vpop.permute.xlu0 %5720
      %v5724 = vsel %vm721, %v5719, 0.0
      %v5725 = vsel %vm721, %v5721, 0.0
      %v5726 = vadd.f32 %v5724, %v5725
      %5727 = vadd.xlane.f32.xlu0 %v5726
      %v5728 = vpop.xlane.xlu0 %5727
      %v5729 = vrot.slane %v5728, 4
      %v5730 = vadd.f32 %v5728, %v5729
      %v5731 = vrot.slane %v5730, 2
      %v5732 = vadd.f32 %v5730, %v5731
      %v5733 = vrot.slane %v5732, 1
      %v5734 = vadd.f32 %v5732, %v5733
      %s5735 = vtos %v5734
      %s5736 = smul.f32 %s5735, 0.0078125
      %5737 = vrot.lane.b32.xlu0 %v5580, 40
      %v5738 = vpop.permute.xlu0 %5737
      %5739 = vrot.lane.b32.xlu0 %v5581, 40
      %v5740 = vpop.permute.xlu0 %5739
      %v5743 = vsel %vm721, %v5738, 0.0
      %v5744 = vsel %vm721, %v5740, 0.0
      %v5745 = vadd.f32 %v5743, %v5744
      %5746 = vadd.xlane.f32.xlu0 %v5745
      %v5747 = vpop.xlane.xlu0 %5746
      %v5748 = vrot.slane %v5747, 4
      %v5749 = vadd.f32 %v5747, %v5748
      %v5750 = vrot.slane %v5749, 2
      %v5751 = vadd.f32 %v5749, %v5750
      %v5752 = vrot.slane %v5751, 1
      %v5753 = vadd.f32 %v5751, %v5752
      %s5754 = vtos %v5753
      %s5755 = smul.f32 %s5754, 0.0078125
      %s5756 = smul.f32 %s5736, %s5736
      %s5757 = ssub.f32 %s5755, %s5756
      %s5758 = smax.f32 %s5757, 0.0
      %v5759 = vstv %s5736
      %v5760 = vsub.f32 %v5557, %v5759
      %v5761 = vsub.f32 %v5558, %v5759
      %s5762 = sadd.f32 %s5758, 1e-05
      %v5763 = vstv %s5762
      %v5764 = vrsqrt.pop %v5763
      %s5765 = vtos %v5764
      %v5766 = vstv %s5765
      %v5767 = vmul.f32 %v5760, %v5766
      %v5768 = vmul.f32 %v5761, %v5766
      %5771 = vrot.lane.b32.xlu0 %v5614, 64
      %v5772 = vpop.permute.xlu0 %5771
      %5773 = vrot.lane.b32.xlu0 %v5615, 64
      %v5774 = vpop.permute.xlu0 %5773
      %5779 = vrot.lane.b32.xlu0 %v5665, 64
      %v5780 = vpop.permute.xlu0 %5779
      %5781 = vrot.lane.b32.xlu0 %v5666, 64
      %v5782 = vpop.permute.xlu0 %5781
      %5787 = vrot.lane.b32.xlu0 %v5716, 64
      %v5788 = vpop.permute.xlu0 %5787
      %5789 = vrot.lane.b32.xlu0 %v5717, 64
      %v5790 = vpop.permute.xlu0 %5789
      %5795 = vrot.lane.b32.xlu0 %v5767, 64
      %v5796 = vpop.permute.xlu0 %5795
      %5797 = vrot.lane.b32.xlu0 %v5768, 64
      %v5798 = vpop.permute.xlu0 %5797
      %v5801 = vsel %vm721, %v5772, %v5780
      %v5802 = vsel %vm721, %v5774, %v5782
      %v5803 = vsel %vm922, %v5801, %v5788
      %v5804 = vsel %vm922, %v5802, %v5790
      %v5805 = vsel %vm925, %v5803, %v5796
      %v5806 = vsel %vm925, %v5804, %v5798
      %v5807 = vpack.c.bf16 %v5806, %v5805
      %v5809 = vsel %vm947, %v5807, 0
      %5811 = vmatprep.subr.bf16.mxu0 0
      %5812 = vmatpush1.bf16.msra.mxu0 %v4682
      %5813 = vmatprep.subr.bf16.mxu0 0
      %5814 = vmatpush1.bf16.msra.mxu0 %v4683
      %5815 = vmatprep.subr.bf16.mxu0 0
      %5816 = vmatpush1.bf16.msra.mxu0 0
      %5817 = vmatprep.subr.bf16.mxu0 0
      %5818 = vmatpush1.bf16.msra.mxu0 0
      %5819 = vmatprep.subr.bf16.mxu0 0
      %5820 = vmatpush1.bf16.msra.mxu0 0
      %5821 = vmatprep.subr.bf16.mxu0 0
      %5822 = vmatpush1.bf16.msra.mxu0 0
      %5823 = vmatprep.subr.bf16.mxu0 0
      %5824 = vmatpush1.bf16.msra.mxu0 0
      %5825 = vmatprep.subr.bf16.mxu0 0
      %5826 = vmatpush1.bf16.msra.mxu0 0
      %5827 = vmatprep.subr.bf16.mxu0 0
      %5828 = vmatpush1.bf16.msra.mxu0 0
      %5829 = vmatprep.subr.bf16.mxu0 0
      %5830 = vmatpush1.bf16.msra.mxu0 0
      %5831 = vmatprep.subr.bf16.mxu0 0
      %5832 = vmatpush1.bf16.msra.mxu0 0
      %5833 = vmatprep.subr.bf16.mxu0 0
      %5834 = vmatpush1.bf16.msra.mxu0 0
      %5835 = vmatprep.subr.bf16.mxu0 0
      %5836 = vmatpush1.bf16.msra.mxu0 0
      %5837 = vmatprep.subr.bf16.mxu0 0
      %5838 = vmatpush1.bf16.msra.mxu0 0
      %5839 = vmatprep.subr.bf16.mxu0 0
      %5840 = vmatpush1.bf16.msra.mxu0 0
      %5841 = vmatprep.subr.bf16.mxu0 0
      %5842 = vmatpush1.bf16.msra.mxu0 0
      %5843 = vmatprep.mubr.bf16.mxu0 0
      %5844 = vmatmul.mubr.bf16.gmra.mrb[0].mxu0 %v5809
      %v5845 = vpop.f32.mrb[0].mxu0
      %v5846 = vadd.f32 %v4672, %v5845
      %v5847 = vpop.f32.mrb[0].mxu0
      %v5848 = vpop.f32.mrb[0].mxu0
      %v5849 = vadd.f32 %v4672, %v5848
      %v5850 = vpop.f32.mrb[0].mxu0
      %5851 = vdwg.mxu0
      %v5852 = vtanh.pop %v5846
      %v5853 = vtanh.pop %v5849
      %v5854 = vadd.f32 %v5852, 1.0
      %v5855 = vadd.f32 %v5853, 1.0
      %v5856 = vmul.f32 %v5854, %v4756
      %v5857 = vmul.f32 %v5855, %v4757
      %5860 = vrot.lane.b32.xlu0 %v5852, 32
      %v5861 = vpop.permute.xlu0 %5860
      %5862 = vrot.lane.b32.xlu0 %v5853, 32
      %v5863 = vpop.permute.xlu0 %5862
      %v5866 = vmul.f32 %v5854, %v5861
      %v5867 = vmul.f32 %v5855, %v5863
      %5870 = vrot.lane.b32.xlu0 %v5866, 32
      %v5871 = vpop.permute.xlu0 %5870
      %5872 = vrot.lane.b32.xlu0 %v5867, 32
      %v5873 = vpop.permute.xlu0 %5872
      %v5876 = vadd.f32 %v5856, %v5871
      %v5877 = vadd.f32 %v5857, %v5873
      %v5878 = vmul.f32 %v5876, 0.5
      %v5879 = vmul.f32 %v5877, 0.5
      %5882 = vrot.lane.b32.xlu0 %v5878, 96
      %v5883 = vpop.permute.xlu0 %5882
      %5884 = vrot.lane.b32.xlu0 %v5879, 96
      %v5885 = vpop.permute.xlu0 %5884
      %v5888 = vsel %vm947, %v5883, 0.0
      %v5889 = vsel %vm947, %v5885, 0.0
      %v5890 = vadd.f32 %v5888, %v5889
      %5891 = vadd.xlane.f32.xlu0 %v5890
      %v5892 = vpop.xlane.xlu0 %5891
      %v5893 = vrot.slane %v5892, 4
      %v5894 = vadd.f32 %v5892, %v5893
      %v5895 = vrot.slane %v5894, 2
      %v5896 = vadd.f32 %v5894, %v5895
      %v5897 = vrot.slane %v5896, 1
      %v5898 = vadd.f32 %v5896, %v5897
      %s5899 = vtos %v5898
      %s5900 = smul.f32 %s5899, 0.001953125
      %v5901 = vmul.f32 %v5878, %v5878
      %v5902 = vmul.f32 %v5879, %v5879
      %5905 = vrot.lane.b32.xlu0 %v5901, 96
      %v5906 = vpop.permute.xlu0 %5905
      %5907 = vrot.lane.b32.xlu0 %v5902, 96
      %v5908 = vpop.permute.xlu0 %5907
      %v5911 = vsel %vm947, %v5906, 0.0
      %v5912 = vsel %vm947, %v5908, 0.0
      %v5913 = vadd.f32 %v5911, %v5912
      %5914 = vadd.xlane.f32.xlu0 %v5913
      %v5915 = vpop.xlane.xlu0 %5914
      %v5916 = vrot.slane %v5915, 4
      %v5917 = vadd.f32 %v5915, %v5916
      %v5918 = vrot.slane %v5917, 2
      %v5919 = vadd.f32 %v5917, %v5918
      %v5920 = vrot.slane %v5919, 1
      %v5921 = vadd.f32 %v5919, %v5920
      %s5922 = vtos %v5921
      %s5923 = smul.f32 %s5922, 0.001953125
      %s5924 = smul.f32 %s5900, %s5900
      %s5925 = ssub.f32 %s5923, %s5924
      %s5926 = smax.f32 %s5925, 0.0
      %s5927 = sadd.f32 %s5926, 1e-05
      %v5928 = vstv %s5927
      %v5929 = vrsqrt.pop %v5928
      %s5930 = vtos %v5929
      %v5931 = vstv %s5930
      %v5932 = vmul.f32 %v4202, %v5931
      %v5933 = vstv %s5900
      %v5934 = vmul.f32 %v5933, %v5932
      %v5935 = vsub.f32 %v4204, %v5934
      %v5936 = vmul.f32 %v5854, 0.5
      %v5937 = vmul.f32 %v5855, 0.5
      %v5939 = vlaneseq
      %v5940 = vshrl.u32 %v5939, 7
      %v5941 = vsub.s32 0, %v5940
      %v5942 = vrot.slane %v5932, %v5941
      %5943 = vrot.lane.b32.xlu0 %v5942, 32
      %v5944 = vpop.permute.xlu0 %5943
      %v5946 = vmul.f32 %v5878, %v5944
      %v5947 = vmul.f32 %v5879, %v5944
      %v5949 = vlaneseq
      %v5950 = vshrl.u32 %v5949, 7
      %v5951 = vsub.s32 0, %v5950
      %v5952 = vrot.slane %v5935, %v5951
      %5953 = vrot.lane.b32.xlu0 %v5952, 32
      %v5954 = vpop.permute.xlu0 %5953
      %v5956 = vadd.f32 %v5946, %v5954
      %v5957 = vadd.f32 %v5947, %v5954
      %v5958 = vtanh.pop %v5956
      %v5959 = vtanh.pop %v5957
      %5962 = vrot.lane.b32.xlu0 %v5958, 32
      %v5963 = vpop.permute.xlu0 %5962
      %5964 = vrot.lane.b32.xlu0 %v5959, 32
      %v5965 = vpop.permute.xlu0 %5964
      %v5968 = vmul.f32 %v5936, %v5963
      %v5969 = vmul.f32 %v5937, %v5965
      %v5970 = vadd.f32 %v5407, %v5968
      %v5971 = vadd.f32 %v5408, %v5969
      %v5972 = vpack.c.bf16 %v4849, %v4848
      %v5973 = vpack.c.bf16 %v5971, %v5970
      %v5974 = vld [vmem:[%s9] sm:$0xf]
      %v5975 = vld [vmem:[%s9 + $0x4] sm:$0xf]
      %v5976 = vld [vmem:[%s9 + $0x8] sm:$0xf]
      %v5977 = vld [vmem:[%s9 + $0xc] sm:$0xf]
      %v5978 = vld [vmem:[%s10] sm:$0x1]
      %v5980 = vlaneseq
      %v5981 = vshrl.u32 %v5980, 7
      %v5982 = vsub.s32 0, %v5981
      %v5983 = vrot.slane %v5978, %v5982
      %5987 = vrot.lane.b32.xlu0 %v5972, 64
      %v5988 = vpop.permute.xlu0 %5987
      %5989 = vrot.lane.b32.xlu0 %v5973, 64
      %v5990 = vpop.permute.xlu0 %5989
      %v5995 = vunpack.c.l.b16 %v5974
      %v5996 = vunpack.c.l.b16 %v5975
      %v5997 = vunpack.c.l.b16 %v5976
      %v5998 = vunpack.c.l.b16 %v5977
      %v5999 = vpack.c.b16 %v5996, %v5995
      %v6000 = vpack.c.b16 %v5998, %v5997
      %v6004 = vsel %vm947, %v5988, 0
      %v6007 = vsel %vm947, %v5990, 0
      %6009 = vmatprep.subr.bf16.mxu0 0
      %6010 = vmatpush1.bf16.msra.mxu0 %v5999
      %6011 = vmatprep.subr.bf16.mxu0 0
      %6012 = vmatpush1.bf16.msra.mxu0 %v6000
      %6013 = vmatprep.subr.bf16.mxu0 0
      %6014 = vmatpush1.bf16.msra.mxu0 0
      %6015 = vmatprep.subr.bf16.mxu0 0
      %6016 = vmatpush1.bf16.msra.mxu0 0
      %6017 = vmatprep.subr.bf16.mxu0 0
      %6018 = vmatpush1.bf16.msra.mxu0 0
      %6019 = vmatprep.subr.bf16.mxu0 0
      %6020 = vmatpush1.bf16.msra.mxu0 0
      %6021 = vmatprep.subr.bf16.mxu0 0
      %6022 = vmatpush1.bf16.msra.mxu0 0
      %6023 = vmatprep.subr.bf16.mxu0 0
      %6024 = vmatpush1.bf16.msra.mxu0 0
      %6025 = vmatprep.subr.bf16.mxu0 0
      %6026 = vmatpush1.bf16.msra.mxu0 0
      %6027 = vmatprep.subr.bf16.mxu0 0
      %6028 = vmatpush1.bf16.msra.mxu0 0
      %6029 = vmatprep.subr.bf16.mxu0 0
      %6030 = vmatpush1.bf16.msra.mxu0 0
      %6031 = vmatprep.subr.bf16.mxu0 0
      %6032 = vmatpush1.bf16.msra.mxu0 0
      %6033 = vmatprep.subr.bf16.mxu0 0
      %6034 = vmatpush1.bf16.msra.mxu0 0
      %6035 = vmatprep.subr.bf16.mxu0 0
      %6036 = vmatpush1.bf16.msra.mxu0 0
      %6037 = vmatprep.subr.bf16.mxu0 0
      %6038 = vmatpush1.bf16.msra.mxu0 0
      %6039 = vmatprep.subr.bf16.mxu0 0
      %6040 = vmatpush1.bf16.msra.mxu0 0
      %6041 = vmatprep.mubr.bf16.mxu0 0
      %6042 = vmatmul.mubr.bf16.gmra.mrb[0].mxu0 %v6004
      %v6043 = vpop.f32.mrb[0].mxu0
      %v6044 = vadd.f32 %v5983, %v6043
      %v6045 = vpop.f32.mrb[0].mxu0
      %v6046 = vpop.f32.mrb[0].mxu0
      %v6047 = vadd.f32 %v5983, %v6046
      %v6048 = vpop.f32.mrb[0].mxu0
      %6049 = vmatprep.mubr.bf16.mxu0 0
      %6050 = vmatmul.mubr.bf16.gmra.mrb[0].mxu0 %v6007
      %v6051 = vpop.f32.mrb[0].mxu0
      %v6052 = vadd.f32 %v5983, %v6051
      %v6053 = vpop.f32.mrb[0].mxu0
      %v6054 = vpop.f32.mrb[0].mxu0
      %v6055 = vadd.f32 %v5983, %v6054
      %v6056 = vpop.f32.mrb[0].mxu0
      %6057 = vdwg.mxu0
      %v6058 = vmul.f32 %v6044, 0.5
      %v6059 = vmul.f32 %v6047, 0.5
      %v6060 = vmul.f32 %v6052, 0.5
      %v6061 = vmul.f32 %v6055, 0.5
      %v6062 = vmul.f32 %v6044, 0.044715
      %v6063 = vmul.f32 %v6047, 0.044715
      %v6064 = vmul.f32 %v6052, 0.044715
      %v6065 = vmul.f32 %v6055, 0.044715
      %v6066 = vmul.f32 %v6062, %v6044
      %v6067 = vmul.f32 %v6063, %v6047
      %v6068 = vmul.f32 %v6064, %v6052
      %v6069 = vmul.f32 %v6065, %v6055
      %v6070 = vmul.f32 %v6066, %v6044
      %v6071 = vmul.f32 %v6067, %v6047
      %v6072 = vmul.f32 %v6068, %v6052
      %v6073 = vmul.f32 %v6069, %v6055
      %v6074 = vadd.f32 %v6044, %v6070
      %v6075 = vadd.f32 %v6047, %v6071
      %v6076 = vadd.f32 %v6052, %v6072
      %v6077 = vadd.f32 %v6055, %v6073
      %v6078 = vmul.f32 %v6074, 0.7978846
      %v6079 = vmul.f32 %v6075, 0.7978846
      %v6080 = vmul.f32 %v6076, 0.7978846
      %v6081 = vmul.f32 %v6077, 0.7978846
      %v6082 = vtanh.pop %v6078
      %v6083 = vtanh.pop %v6079
      %v6084 = vtanh.pop %v6080
      %v6085 = vtanh.pop %v6081
      %v6086 = vadd.f32 %v6082, 1.0
      %v6087 = vadd.f32 %v6083, 1.0
      %v6088 = vadd.f32 %v6084, 1.0
      %v6089 = vadd.f32 %v6085, 1.0
      %v6090 = vmul.f32 %v6058, %v6086
      %v6091 = vmul.f32 %v6059, %v6087
      %v6092 = vmul.f32 %v6060, %v6088
      %v6093 = vmul.f32 %v6061, %v6089
      %v6094 = vpack.c.bf16 %v6091, %v6090
      %v6095 = vpack.c.bf16 %v6093, %v6092
      %v6096 = vld [vmem:[%s11] sm:$0xff]
      %v6097 = vld [vmem:[%s11 + $0x8] sm:$0xff]
      %v6098 = vld [vmem:[%s11 + $0x10] sm:$0xff]
      %v6099 = vld [vmem:[%s11 + $0x18] sm:$0xff]
      %v6100 = vld [vmem:[%s11 + $0x20] sm:$0xff]
      %v6101 = vld [vmem:[%s11 + $0x28] sm:$0xff]
      %v6102 = vld [vmem:[%s11 + $0x30] sm:$0xff]
      %v6103 = vld [vmem:[%s11 + $0x38] sm:$0xff]
      %v6104 = vld [vmem:[%s11 + $0x40] sm:$0xff]
      %v6105 = vld [vmem:[%s11 + $0x48] sm:$0xff]
      %v6106 = vld [vmem:[%s11 + $0x50] sm:$0xff]
      %v6107 = vld [vmem:[%s11 + $0x58] sm:$0xff]
      %v6108 = vld [vmem:[%s11 + $0x60] sm:$0xff]
      %v6109 = vld [vmem:[%s11 + $0x68] sm:$0xff]
      %v6110 = vld [vmem:[%s11 + $0x70] sm:$0xff]
      %v6111 = vld [vmem:[%s11 + $0x78] sm:$0xff]
      %v6112 = vld [vmem:[%s12] sm:$0x3]
      %v6114 = vlaneseq
      %v6115 = vshrl.u32 %v6114, 7
      %v6116 = vsub.s32 0, %v6115
      %v6117 = vrot.slane %v6112, %v6116
      %v6118 = vlaneseq
      %v6119 = vshrl.u32 %v6118, 7
      %v6120 = vsub.s32 1, %v6119
      %v6121 = vrot.slane %v6112, %v6120
      %v6140 = vunpack.c.l.b16 %v6096
      %v6141 = vunpack.c.h.b16 %v6096
      %v6142 = vunpack.c.l.b16 %v6097
      %v6143 = vunpack.c.h.b16 %v6097
      %v6144 = vunpack.c.l.b16 %v6098
      %v6145 = vunpack.c.h.b16 %v6098
      %v6146 = vunpack.c.l.b16 %v6099
      %v6147 = vunpack.c.h.b16 %v6099
      %v6148 = vunpack.c.l.b16 %v6100
      %v6149 = vunpack.c.h.b16 %v6100
      %v6150 = vunpack.c.l.b16 %v6101
      %v6151 = vunpack.c.h.b16 %v6101
      %v6152 = vunpack.c.l.b16 %v6102
      %v6153 = vunpack.c.h.b16 %v6102
      %v6154 = vunpack.c.l.b16 %v6103
      %v6155 = vunpack.c.h.b16 %v6103
      %v6156 = vunpack.c.l.b16 %v6104
      %v6157 = vunpack.c.h.b16 %v6104
      %v6158 = vunpack.c.l.b16 %v6105
      %v6159 = vunpack.c.h.b16 %v6105
      %v6160 = vunpack.c.l.b16 %v6106
      %v6161 = vunpack.c.h.b16 %v6106
      %v6162 = vunpack.c.l.b16 %v6107
      %v6163 = vunpack.c.h.b16 %v6107
      %v6164 = vunpack.c.l.b16 %v6108
      %v6165 = vunpack.c.h.b16 %v6108
      %v6166 = vunpack.c.l.b16 %v6109
      %v6167 = vunpack.c.h.b16 %v6109
      %v6168 = vunpack.c.l.b16 %v6110
      %v6169 = vunpack.c.h.b16 %v6110
      %v6170 = vunpack.c.l.b16 %v6111
      %v6171 = vunpack.c.h.b16 %v6111
      %v6172 = vpack.c.b16 %v6142, %v6140
      %v6173 = vpack.c.b16 %v6143, %v6141
      %v6174 = vpack.c.b16 %v6146, %v6144
      %v6175 = vpack.c.b16 %v6147, %v6145
      %v6176 = vpack.c.b16 %v6150, %v6148
      %v6177 = vpack.c.b16 %v6151, %v6149
      %v6178 = vpack.c.b16 %v6154, %v6152
      %v6179 = vpack.c.b16 %v6155, %v6153
      %v6180 = vpack.c.b16 %v6158, %v6156
      %v6181 = vpack.c.b16 %v6159, %v6157
      %v6182 = vpack.c.b16 %v6162, %v6160
      %v6183 = vpack.c.b16 %v6163, %v6161
      %v6184 = vpack.c.b16 %v6166, %v6164
      %v6185 = vpack.c.b16 %v6167, %v6165
      %v6186 = vpack.c.b16 %v6170, %v6168
      %v6187 = vpack.c.b16 %v6171, %v6169
      %6204 = vmatprep.subr.bf16.mxu0 %v6173
      %6205 = vmatpush1.bf16.msra.mxu0 %v6172
      %6206 = vmatprep.subr.bf16.mxu0 %v6175
      %6207 = vmatpush1.bf16.msra.mxu0 %v6174
      %6208 = vmatprep.subr.bf16.mxu0 %v6177
      %6209 = vmatpush1.bf16.msra.mxu0 %v6176
      %6210 = vmatprep.subr.bf16.mxu0 %v6179
      %6211 = vmatpush1.bf16.msra.mxu0 %v6178
      %6212 = vmatprep.subr.bf16.mxu0 %v6181
      %6213 = vmatpush1.bf16.msra.mxu0 %v6180
      %6214 = vmatprep.subr.bf16.mxu0 %v6183
      %6215 = vmatpush1.bf16.msra.mxu0 %v6182
      %6216 = vmatprep.subr.bf16.mxu0 %v6185
      %6217 = vmatpush1.bf16.msra.mxu0 %v6184
      %6218 = vmatprep.subr.bf16.mxu0 %v6187
      %6219 = vmatpush1.bf16.msra.mxu0 %v6186
      %6220 = vmatprep.subr.bf16.mxu0 0
      %6221 = vmatpush1.bf16.msra.mxu0 0
      %6222 = vmatprep.subr.bf16.mxu0 0
      %6223 = vmatpush1.bf16.msra.mxu0 0
      %6224 = vmatprep.subr.bf16.mxu0 0
      %6225 = vmatpush1.bf16.msra.mxu0 0
      %6226 = vmatprep.subr.bf16.mxu0 0
      %6227 = vmatpush1.bf16.msra.mxu0 0
      %6228 = vmatprep.subr.bf16.mxu0 0
      %6229 = vmatpush1.bf16.msra.mxu0 0
      %6230 = vmatprep.subr.bf16.mxu0 0
      %6231 = vmatpush1.bf16.msra.mxu0 0
      %6232 = vmatprep.subr.bf16.mxu0 0
      %6233 = vmatpush1.bf16.msra.mxu0 0
      %6234 = vmatprep.subr.bf16.mxu0 0
      %6235 = vmatpush1.bf16.msra.mxu0 0
      %6236 = vmatprep.mubr.bf16.mxu0 0
      %6237 = vmatmul.mubr.bf16.gmra.mrb[0].mxu0 %v6094
      %v6238 = vpop.f32.mrb[0].mxu0
      %v6239 = vadd.f32 %v6117, %v6238
      %v6240 = vpop.f32.mrb[0].mxu0
      %v6241 = vadd.f32 %v6121, %v6240
      %v6242 = vpop.f32.mrb[0].mxu0
      %v6243 = vadd.f32 %v6117, %v6242
      %v6244 = vpop.f32.mrb[0].mxu0
      %v6245 = vadd.f32 %v6121, %v6244
      %6246 = vmatprep.mubr.bf16.mxu0 0
      %6247 = vmatmul.mubr.bf16.gmra.mrb[0].mxu0 %v6095
      %v6248 = vpop.f32.mrb[0].mxu0
      %v6249 = vadd.f32 %v6117, %v6248
      %v6250 = vpop.f32.mrb[0].mxu0
      %v6251 = vadd.f32 %v6121, %v6250
      %v6252 = vpop.f32.mrb[0].mxu0
      %v6253 = vadd.f32 %v6117, %v6252
      %v6254 = vpop.f32.mrb[0].mxu0
      %v6255 = vadd.f32 %v6121, %v6254
      %6256 = vdwg.mxu0
      %6257 = vst [vmem:[%s440] sm:$0xff] %v6239
      %6258 = vst [vmem:[%s440 + $0x8] sm:$0xff] %v6241
      %6259 = vst [vmem:[%s440 + $0x10] sm:$0xff] %v6243
      %6260 = vst [vmem:[%s440 + $0x18] sm:$0xff] %v6245
      %6261 = vst [vmem:[%s440 + $0x20] sm:$0xff] %v6249
      %6262 = vst [vmem:[%s440 + $0x28] sm:$0xff] %v6251
      %6263 = vst [vmem:[%s440 + $0x30] sm:$0xff] %v6253
      %6264 = vst [vmem:[%s440 + $0x38] sm:$0xff] %v6255
      %p6265 = scmp.lt.s32.totalorder %s24, 1
      %s6266 = scalar_select %p6265, %s24, 1
      %s6267 = smul.addr %s6266, 8
      %s6268 = smul.addr %s6267, 8
      %s6269 = scalar_lea.vmem %s13, %s6268
      // Predicated region
      $region73: #{encdec_swinlstm_forward.1} parent=71 // pred_check
        %p6270 = pneg %p320
      $region74: #{encdec_swinlstm_forward.1} parent=71 // pred_check_branch
        %6272 = sbr.rel (%p6270) target = $region76
      $region75: #{encdec_swinlstm_forward.1} parent=71 // pred_region
        _
      $region76: #{encdec_swinlstm_forward.1} parent=71 // pred_fallthru
        _
    $region72: #{encdec_swinlstm_forward.1} parent=5 // pred_fallthru
      _
    %p6273 = scmp.le.s32.totalorder 2, %s19
    // Predicated region
    $region77: #{encdec_swinlstm_forward.1} parent=5 // pred_check
      %p6274 = pneg %p6273
    $region78: #{encdec_swinlstm_forward.1} parent=5 // pred_check_branch
      %6276 = sbr.rel (%p6274) target = $region80
    $region79: #{encdec_swinlstm_forward.1} parent=5 // pred_region
      %s6277 = ssub.s32 %s19, 2
      // Predicated region
      $region81: #{encdec_swinlstm_forward.1} parent=79 // pred_check
        %p6278 = pneg %p326
      $region82: #{encdec_swinlstm_forward.1} parent=79 // pred_check_branch
        %6280 = sbr.rel (%p6278) target = $region84
      $region83: #{encdec_swinlstm_forward.1} parent=79 // pred_region
        %p6281 = scmp.lt.s32.totalorder %s25, 1
        %s6282 = scalar_select %p6281, %s25, 1
        %s6283 = smul.addr %s6282, 8
        %s6284 = smul.addr %s6283, 8
        %s6285 = scalar_lea.vmem %s13, %s6284
      $region84: #{encdec_swinlstm_forward.1} parent=79 // pred_fallthru
        _
    $region80: #{encdec_swinlstm_forward.1} parent=5 // pred_fallthru
      _
  $region6: #{encdec_swinlstm_forward.1} parent=0 // loop_footer
    %s23 = sadd.s32 1, %s19
  $region7: #{encdec_swinlstm_forward.1} parent=0 // loop_footer_branch
    %18 = sbr.rel target = $region3
  $region8: #{encdec_swinlstm_forward.1} parent=0 // loop_exit
    _

</llo_original>
